<compile_context>
chip_gen: v5e
topology: v5e:2x2
jax: 0.10.0
libtpu: 0.0.40
codegen_flags: <defaults>
</compile_context>

<pallas_src>
import functools
import math

import numpy as np

import jax
import jax.numpy as jnp
from jax.experimental import pallas as pl
from jax.experimental.pallas import tpu as pltpu

LEAKY_SLOPE = 0.01  # nn.LeakyReLU default negative_slope


def _leaky(v):
    return jnp.where(v >= 0, v, LEAKY_SLOPE * v)


# ----------------------------------------------------------------------------
# In-kernel building blocks (all on (C, H*W) f32 values -- spatial on lanes)
# ----------------------------------------------------------------------------
def _shift_flat(x, off):
    """result[:, n] = x[:, n + off] for 0 <= n + off < HW, else 0 (static off)."""
    if off == 0:
        return x
    c, hw = x.shape
    a = abs(off)
    if a >= hw:
        return jnp.zeros((c, hw), x.dtype)
    z = jnp.zeros((c, a), x.dtype)
    if off > 0:
        return jnp.concatenate([x[:, a:], z], axis=1)
    return jnp.concatenate([z, x[:, :hw - a]], axis=1)


def _conv_taps(x, w_ref, mask_ref, col_rows, *, ksz, dilate, W):
    """Same-size conv (centered taps, zero padding) as a sum of per-tap GEMMs.
    x: (Cin, HW) f32.  w_ref: (ksz*ksz, Cout, Cin) ref, tap-major, PyTorch
    cross-correlation order.  Dense, depthwise (diagonal W_tap) and 1x1 convs
    all share this path; each tap is an (Cout,Cin)x(Cin,HW) MXU matmul with a
    lane-dense (HW = H*W) output."""
    ctr = (ksz - 1) // 2
    # One wrap-killing premasked copy of x per distinct column offset.
    xcol = {0: x}
    for j in range(ksz):
        dx = (j - ctr) * dilate
        if dx not in xcol:
            xcol[dx] = x * mask_ref[pl.ds(col_rows[dx], 1), :]
    acc = None
    for i in range(ksz):
        dy = (i - ctr) * dilate
        for j in range(ksz):
            dx = (j - ctr) * dilate
            xs = _shift_flat(xcol[dx], dy * W + dx)
            p = jnp.dot(w_ref[i * ksz + j], xs,
                        preferred_element_type=jnp.float32)
            acc = p if acc is None else acc + p
    return acc


def _wlblock(x, w_refs, mask_ref, *, f_sz, dilate, W, col_rows, interior_row):
    """WLBlock on a (C, H*W) value: Conv2d -> L * ResBlockSepConv -> convOut.
    w_refs = [w_in, (dw1, pw1, dw2, pw2) * L, w_out], packed (taps, Cout, Cin)."""
    k_dw = 2 * f_sz - 1
    num_layers = (len(w_refs) - 2) // 4
    int_mask = (None if interior_row is None
                else mask_ref[pl.ds(interior_row, 1), :])

    x = _conv_taps(x, w_refs[0], mask_ref, col_rows,
                   ksz=f_sz, dilate=dilate, W=W)
    for l in range(num_layers):
        dw1, pw1, dw2, pw2 = w_refs[1 + 4 * l: 5 + 4 * l]
        # ResBlockSepConv: leaky(x + SepConv2(leaky(SepConv1(x))))
        t = _conv_taps(x, dw1, mask_ref, col_rows, ksz=k_dw, dilate=dilate, W=W)
        t = _conv_taps(t, pw1, mask_ref, col_rows, ksz=1, dilate=dilate, W=W)
        if int_mask is not None:
            t = t * int_mask           # SepConv crop -> zero-pad (dilate>1 only)
        t = _leaky(t)
        t = _conv_taps(t, dw2, mask_ref, col_rows, ksz=k_dw, dilate=dilate, W=W)
        t = _conv_taps(t, pw2, mask_ref, col_rows, ksz=1, dilate=dilate, W=W)
        if int_mask is not None:
            t = t * int_mask
        x = _leaky(x + t)
    return _conv_taps(x, w_refs[-1], mask_ref, col_rows,
                      ksz=f_sz, dilate=dilate, W=W)


def _make_subnet_kernel(n_pred_w, n_upd_w, *, f_sz, dilate, W,
                        col_rows, interior_row):
    """One fused kernel per LSR_Subnet: predictor WLBlock, lifting subtract,
    updator WLBlock, lifting add.  refs = (xc, xd, masks, *weights, xc_out,
    xd_out).  All intermediates stay in VMEM / vregs."""
    nw = n_pred_w + n_upd_w

    def kernel(*refs):
        xc_ref, xd_ref, mask_ref = refs[0], refs[1], refs[2]
        w_refs = refs[3:3 + nw]
        xc_out_ref, xd_out_ref = refs[3 + nw], refs[4 + nw]

        xc = xc_ref[0].astype(jnp.float32)          # (Cp, HW)
        xd = xd_ref[0].astype(jnp.float32)          # (Cu, HW)

        # Fxc = predictor(xc);  xd' = xd - Fxc   (lifting step fused in-kernel)
        fxc = _wlblock(xc, w_refs[:n_pred_w], mask_ref, f_sz=f_sz,
                       dilate=dilate, W=W, col_rows=col_rows,
                       interior_row=interior_row)
        xd_new = xd - fxc
        # Fxd = updator(xd');   xc' = xc + Fxd
        fxd = _wlblock(xd_new, w_refs[n_pred_w:], mask_ref, f_sz=f_sz,
                       dilate=dilate, W=W, col_rows=col_rows,
                       interior_row=interior_row)
        xc_new = xc + fxd

        xc_out_ref[0] = xc_new.astype(xc_out_ref.dtype)
        xd_out_ref[0] = xd_new.astype(xd_out_ref.dtype)

    return kernel


# ----------------------------------------------------------------------------
# Host-side static mask construction (depends only on static shapes)
# ----------------------------------------------------------------------------
def _build_masks(H, W, f_sz, dilate):
    HW = H * W
    px = np.arange(HW, dtype=np.int64) % W
    py = np.arange(HW, dtype=np.int64) // W
    k_dw = 2 * f_sz - 1
    ctr = (k_dw - 1) // 2
    # Depthwise column offsets are a superset of the dense-conv ones.
    dxs = sorted({(j - ctr) * dilate for j in range(k_dw)} - {0})
    rows, col_rows = [], {}
    for dx in dxs:
        keep = (px >= max(0, dx)) & (px < W + min(0, dx))
        col_rows[dx] = len(rows)
        rows.append(keep.astype(np.float32))
    m = (dilate - 1) * (f_sz - 2)         # SepConv crop == pad amount (f_sz==3)
    interior_row = None
    if m > 0:
        keep = (px >= m) & (px < W - m) & (py >= m) & (py < H - m)
        interior_row = len(rows)
        rows.append(keep.astype(np.float32))
    if not rows:                          # f_sz == 1 edge case: non-empty array
        rows.append(np.ones(HW, np.float32))
    return np.stack(rows), col_rows, interior_row


# ----------------------------------------------------------------------------
# Parameter handling (weights packed tap-major: (taps, Cout, Cin))
# ----------------------------------------------------------------------------
def _uniform(key, shape, bound):
    return jax.random.uniform(key, shape, jnp.float32, minval=-bound, maxval=bound)


def _init_dense(key, ksz, cin, cout, scale=1.0):
    bound = math.sqrt(6.0 / (cout * ksz * ksz))       # kaiming_uniform, fan_out
    return scale * _uniform(key, (ksz * ksz, cout, cin), bound)


def _init_depthwise_diag(key, ksz, ch):
    bound = math.sqrt(6.0 / (ch * ksz * ksz))
    taps = _uniform(key, (ksz * ksz, ch), bound)
    return jax.vmap(jnp.diag)(taps)                    # (taps, ch, ch) diagonal


def _init_pointwise(key, cin, cout):
    bound = math.sqrt(6.0 / cout)
    return _uniform(key, (1, cout, cin), bound)


def init_wlblock(key, in_ch, out_ch, f_ch, f_sz, num_layers):
    k_dw = 2 * f_sz - 1
    keys = jax.random.split(key, 2 + 4 * num_layers)
    params = {
        'w_in': _init_dense(keys[0], f_sz, in_ch, f_ch),
        # PyTorch zero-fills convOut (whole LSR becomes identity); scaled random
        # init used here so the compute path is exercised (documented deviation).
        'w_out': _init_dense(keys[1], f_sz, f_ch, out_ch, scale=0.05),
        'res': [],
    }
    for i in range(num_layers):
        k0, k1, k2, k3 = keys[2 + 4 * i: 6 + 4 * i]
        params['res'].append({
            'dw1': _init_depthwise_diag(k0, k_dw, f_ch),
            'pw1': _init_pointwise(k1, f_ch, f_ch),
            'dw2': _init_depthwise_diag(k2, k_dw, f_ch),
            'pw2': _init_pointwise(k3, f_ch, f_ch),
        })
    return params


def init_lsr(key, pin_ch, uin_ch, num_step, f_ch, f_sz, num_layers):
    params = []
    for step_key in jax.random.split(key, num_step):
        kp, ku = jax.random.split(step_key)
        params.append({
            'predictor': init_wlblock(kp, pin_ch, uin_ch, f_ch, f_sz, num_layers),
            'updator': init_wlblock(ku, uin_ch, pin_ch, f_ch, f_sz, num_layers),
        })
    return params


def _flatten_wlblock(p):
    flat = [p['w_in']]
    for layer in p['res']:
        flat += [layer['dw1'], layer['pw1'], layer['dw2'], layer['pw2']]
    flat.append(p['w_out'])
    return flat


# ----------------------------------------------------------------------------
# Forward pass (one pallas_call per live LSR_Subnet)
# ----------------------------------------------------------------------------
def lsr_subnet_apply(sub, xc, xd, masks, col_rows, interior_row, *,
                     W, f_sz, dilate):
    N, Cp, HW = xc.shape
    Cu = xd.shape[1]
    pred_w = _flatten_wlblock(sub['predictor'])
    upd_w = _flatten_wlblock(sub['updator'])
    weights = pred_w + upd_w

    kernel = _make_subnet_kernel(len(pred_w), len(upd_w), f_sz=f_sz,
                                 dilate=dilate, W=W, col_rows=col_rows,
                                 interior_row=interior_row)

    def io_spec(c):
        return pl.BlockSpec((1, c, HW), lambda n: (n, 0, 0))

    def full_spec(a):
        zeros = (0,) * a.ndim
        return pl.BlockSpec(a.shape, lambda n, _z=zeros: _z)

    grid_spec = pltpu.PrefetchScalarGridSpec(
        num_scalar_prefetch=0,
        grid=(N,),
        in_specs=[io_spec(Cp), io_spec(Cu), full_spec(masks)]
                 + [full_spec(w) for w in weights],
        out_specs=[io_spec(Cp), io_spec(Cu)],
    )
    return pl.pallas_call(
        kernel,
        out_shape=(jax.ShapeDtypeStruct((N, Cp, HW), xc.dtype),
                   jax.ShapeDtypeStruct((N, Cu, HW), xd.dtype)),
        grid_spec=grid_spec,
        compiler_params=pltpu.CompilerParams(
            dimension_semantics=("parallel",)),   # batch elems -> both TCs on v7x
    )(xc, xd, masks, *weights)


def lsr_forward(params, xc_nchw, xd_nchw, *, f_sz, dilate,
                skip_dead_subnets=True):
    # Configs for which the PyTorch module itself is shape-consistent (the
    # ResBlock residual add needs same-size SepConv outputs).
    assert f_sz % 2 == 1, "f_sz must be odd"
    assert (dilate - 1) * (f_sz - 3) == 0, "requires dilate==1 or f_sz==3"

    N, Cp, H, W = xc_nchw.shape
    Cu = xd_nchw.shape[1]
    # Free row-major reshapes (no transposes): NCHW -> (N, C, H*W).
    xc = xc_nchw.reshape(N, Cp, H * W)
    xd = xd_nchw.reshape(N, Cu, H * W)

    masks_np, col_rows, interior_row = _build_masks(H, W, f_sz, dilate)
    masks = jnp.asarray(masks_np)

    # PyTorch LSR.forward gives every subnet the ORIGINAL (xc, xd) and keeps
    # only the last subnet's result -> earlier subnets are dead code.  Skipping
    # them preserves forward semantics exactly (set skip_dead_subnets=False to
    # reproduce the wasteful loop literally).
    subnets = params[-1:] if skip_dead_subnets else params

    outc, outd = xc, xd
    for sub in subnets:
        outc, outd = lsr_subnet_apply(sub, xc, xd, masks, col_rows,
                                      interior_row, W=W, f_sz=f_sz,
                                      dilate=dilate)

    return outc.reshape(N, Cp, H, W), outd.reshape(N, Cu, H, W)


# ----------------------------------------------------------------------------
if __name__ == "__main__":
    # LSR(pin_ch, uin_ch, num_step, f_ch, f_sz, dilate, num_layers)
    pin_ch, uin_ch, num_step, f_ch, f_sz, dilate, num_layers = 4, 4, 2, 8, 3, 1, 1
    B, H, W = 2, 16, 16

    key = jax.random.PRNGKey(0)
    k_params, k_xc, k_xd = jax.random.split(key, 3)
    params = init_lsr(k_params, pin_ch, uin_ch, num_step, f_ch, f_sz, num_layers)

    xc = jax.random.normal(k_xc, (B, pin_ch, H, W), jnp.float32)
    xd = jax.random.normal(k_xd, (B, uin_ch, H, W), jnp.float32)

    fwd = jax.jit(functools.partial(lsr_forward, f_sz=f_sz, dilate=dilate))
    outc, outd = fwd(params, xc, xd)
    jax.block_until_ready((outc, outd))

    assert outc.shape == (B, pin_ch, H, W), outc.shape
    assert outd.shape == (B, uin_ch, H, W), outd.shape
    assert outc.dtype == jnp.float32 and outd.dtype == jnp.float32
    assert bool(jnp.all(jnp.isfinite(outc))) and bool(jnp.all(jnp.isfinite(outd)))
    print("KERNEL_OK")
</pallas_src>

<mosaic_0001>
module attributes {stable_mosaic.version = 11 : i64} {
  func.func @kernel(%arg0: i32, %arg1: memref<1x4x256xf32, #tpu.memory_space<vmem>>, %arg2: memref<1x4x256xf32, #tpu.memory_space<vmem>>, %arg3: memref<4x256xf32, #tpu.memory_space<vmem>>, %arg4: memref<9x8x4xf32, #tpu.memory_space<vmem>>, %arg5: memref<25x8x8xf32, #tpu.memory_space<vmem>>, %arg6: memref<1x8x8xf32, #tpu.memory_space<vmem>>, %arg7: memref<25x8x8xf32, #tpu.memory_space<vmem>>, %arg8: memref<1x8x8xf32, #tpu.memory_space<vmem>>, %arg9: memref<9x4x8xf32, #tpu.memory_space<vmem>>, %arg10: memref<9x8x4xf32, #tpu.memory_space<vmem>>, %arg11: memref<25x8x8xf32, #tpu.memory_space<vmem>>, %arg12: memref<1x8x8xf32, #tpu.memory_space<vmem>>, %arg13: memref<25x8x8xf32, #tpu.memory_space<vmem>>, %arg14: memref<1x8x8xf32, #tpu.memory_space<vmem>>, %arg15: memref<9x4x8xf32, #tpu.memory_space<vmem>>, %arg16: memref<1x4x256xf32, #tpu.memory_space<vmem>>, %arg17: memref<1x4x256xf32, #tpu.memory_space<vmem>>) attributes {dimension_semantics = [#tpu.dimension_semantics<parallel>], iteration_bounds = array<i64: 2>, scalar_prefetch = 0 : i64, scratch_operands = 0 : i64, tpu.core_type = #tpu.core_type<tc>, window_params = [{transform_indices = @transform_0, window_bounds = array<i64: 1, 4, 256>}, {transform_indices = @transform_1, window_bounds = array<i64: 1, 4, 256>}, {pipeline_mode = #tpu.pipeline_mode<synchronous>, transform_indices = @transform_2, window_bounds = array<i64: 4, 256>}, {pipeline_mode = #tpu.pipeline_mode<synchronous>, transform_indices = @transform_3, window_bounds = array<i64: 9, 8, 4>}, {pipeline_mode = #tpu.pipeline_mode<synchronous>, transform_indices = @transform_4, window_bounds = array<i64: 25, 8, 8>}, {pipeline_mode = #tpu.pipeline_mode<synchronous>, transform_indices = @transform_5, window_bounds = array<i64: 1, 8, 8>}, {pipeline_mode = #tpu.pipeline_mode<synchronous>, transform_indices = @transform_6, window_bounds = array<i64: 25, 8, 8>}, {pipeline_mode = #tpu.pipeline_mode<synchronous>, transform_indices = @transform_7, window_bounds = array<i64: 1, 8, 8>}, {pipeline_mode = #tpu.pipeline_mode<synchronous>, transform_indices = @transform_8, window_bounds = array<i64: 9, 4, 8>}, {pipeline_mode = #tpu.pipeline_mode<synchronous>, transform_indices = @transform_9, window_bounds = array<i64: 9, 8, 4>}, {pipeline_mode = #tpu.pipeline_mode<synchronous>, transform_indices = @transform_10, window_bounds = array<i64: 25, 8, 8>}, {pipeline_mode = #tpu.pipeline_mode<synchronous>, transform_indices = @transform_11, window_bounds = array<i64: 1, 8, 8>}, {pipeline_mode = #tpu.pipeline_mode<synchronous>, transform_indices = @transform_12, window_bounds = array<i64: 25, 8, 8>}, {pipeline_mode = #tpu.pipeline_mode<synchronous>, transform_indices = @transform_13, window_bounds = array<i64: 1, 8, 8>}, {pipeline_mode = #tpu.pipeline_mode<synchronous>, transform_indices = @transform_14, window_bounds = array<i64: 9, 4, 8>}, {transform_indices = @transform_15, window_bounds = array<i64: 1, 4, 256>}, {transform_indices = @transform_16, window_bounds = array<i64: 1, 4, 256>}]} {
    %c0 = arith.constant 0 : index
    %c0_0 = arith.constant 0 : index
    %c0_1 = arith.constant 0 : index
    %0 = vector.load %arg1[%c0, %c0_0, %c0_1] : memref<1x4x256xf32, #tpu.memory_space<vmem>>, vector<1x4x256xf32>
    %1 = vector.shape_cast %0 : vector<1x4x256xf32> to vector<4x256xf32>
    %c0_2 = arith.constant 0 : index
    %c0_3 = arith.constant 0 : index
    %c0_4 = arith.constant 0 : index
    %2 = vector.load %arg2[%c0_2, %c0_3, %c0_4] : memref<1x4x256xf32, #tpu.memory_space<vmem>>, vector<1x4x256xf32>
    %3 = vector.shape_cast %2 : vector<1x4x256xf32> to vector<4x256xf32>
    %c1 = arith.constant 1 : index
    %c0_5 = arith.constant 0 : index
    %4 = vector.load %arg3[%c1, %c0_5] : memref<4x256xf32, #tpu.memory_space<vmem>>, vector<1x256xf32>
    %5 = vector.broadcast %4 : vector<1x256xf32> to vector<4x256xf32>
    %6 = arith.mulf %1, %5 : vector<4x256xf32>
    %c2 = arith.constant 2 : index
    %c0_6 = arith.constant 0 : index
    %7 = vector.load %arg3[%c2, %c0_6] : memref<4x256xf32, #tpu.memory_space<vmem>>, vector<1x256xf32>
    %8 = vector.broadcast %7 : vector<1x256xf32> to vector<4x256xf32>
    %9 = arith.mulf %1, %8 : vector<4x256xf32>
    %cst = arith.constant 0.000000e+00 : f32
    %10 = vector.broadcast %cst : f32 to vector<4x17xf32>
    %11 = vector.extract_strided_slice %6 {offsets = [0, 0], sizes = [4, 239], strides = [1, 1]} : vector<4x256xf32> to vector<4x239xf32>
    %12 = tpu.concatenate %10, %11 in 1 : vector<4x17xf32>, vector<4x239xf32> -> vector<4x256xf32>
    %c0_7 = arith.constant 0 : index
    %c0_8 = arith.constant 0 : index
    %c0_9 = arith.constant 0 : index
    %13 = vector.load %arg4[%c0_7, %c0_8, %c0_9] : memref<9x8x4xf32, #tpu.memory_space<vmem>>, vector<1x8x4xf32>
    %14 = vector.shape_cast %13 : vector<1x8x4xf32> to vector<8x4xf32>
    %cst_10 = arith.constant dense<0.000000e+00> : vector<8x256xf32>
    %15 = tpu.matmul %14, %12, %cst_10 {dimension_numbers = #tpu.dot_dimension_numbers<[1], [0], [0], [1], [0, 0, 1, 1], [], []>} : vector<8x4xf32>, vector<4x256xf32>, vector<8x256xf32> -> vector<8x256xf32>
    %cst_11 = arith.constant 0.000000e+00 : f32
    %16 = vector.broadcast %cst_11 : f32 to vector<4x16xf32>
    %17 = vector.extract_strided_slice %1 {offsets = [0, 0], sizes = [4, 240], strides = [1, 1]} : vector<4x256xf32> to vector<4x240xf32>
    %18 = tpu.concatenate %16, %17 in 1 : vector<4x16xf32>, vector<4x240xf32> -> vector<4x256xf32>
    %c1_12 = arith.constant 1 : index
    %c0_13 = arith.constant 0 : index
    %c0_14 = arith.constant 0 : index
    %19 = vector.load %arg4[%c1_12, %c0_13, %c0_14] : memref<9x8x4xf32, #tpu.memory_space<vmem>>, vector<1x8x4xf32>
    %20 = vector.shape_cast %19 : vector<1x8x4xf32> to vector<8x4xf32>
    %cst_15 = arith.constant dense<0.000000e+00> : vector<8x256xf32>
    %21 = tpu.matmul %20, %18, %cst_15 {dimension_numbers = #tpu.dot_dimension_numbers<[1], [0], [0], [1], [0, 0, 1, 1], [], []>} : vector<8x4xf32>, vector<4x256xf32>, vector<8x256xf32> -> vector<8x256xf32>
    %22 = arith.addf %15, %21 : vector<8x256xf32>
    %cst_16 = arith.constant 0.000000e+00 : f32
    %23 = vector.broadcast %cst_16 : f32 to vector<4x15xf32>
    %24 = vector.extract_strided_slice %9 {offsets = [0, 0], sizes = [4, 241], strides = [1, 1]} : vector<4x256xf32> to vector<4x241xf32>
    %25 = tpu.concatenate %23, %24 in 1 : vector<4x15xf32>, vector<4x241xf32> -> vector<4x256xf32>
    %c2_17 = arith.constant 2 : index
    %c0_18 = arith.constant 0 : index
    %c0_19 = arith.constant 0 : index
    %26 = vector.load %arg4[%c2_17, %c0_18, %c0_19] : memref<9x8x4xf32, #tpu.memory_space<vmem>>, vector<1x8x4xf32>
    %27 = vector.shape_cast %26 : vector<1x8x4xf32> to vector<8x4xf32>
    %cst_20 = arith.constant dense<0.000000e+00> : vector<8x256xf32>
    %28 = tpu.matmul %27, %25, %cst_20 {dimension_numbers = #tpu.dot_dimension_numbers<[1], [0], [0], [1], [0, 0, 1, 1], [], []>} : vector<8x4xf32>, vector<4x256xf32>, vector<8x256xf32> -> vector<8x256xf32>
    %29 = arith.addf %22, %28 : vector<8x256xf32>
    %cst_21 = arith.constant 0.000000e+00 : f32
    %30 = vector.broadcast %cst_21 : f32 to vector<4x1xf32>
    %31 = vector.extract_strided_slice %6 {offsets = [0, 0], sizes = [4, 255], strides = [1, 1]} : vector<4x256xf32> to vector<4x255xf32>
    %32 = tpu.concatenate %30, %31 in 1 : vector<4x1xf32>, vector<4x255xf32> -> vector<4x256xf32>
    %c3 = arith.constant 3 : index
    %c0_22 = arith.constant 0 : index
    %c0_23 = arith.constant 0 : index
    %33 = vector.load %arg4[%c3, %c0_22, %c0_23] : memref<9x8x4xf32, #tpu.memory_space<vmem>>, vector<1x8x4xf32>
    %34 = vector.shape_cast %33 : vector<1x8x4xf32> to vector<8x4xf32>
    %cst_24 = arith.constant dense<0.000000e+00> : vector<8x256xf32>
    %35 = tpu.matmul %34, %32, %cst_24 {dimension_numbers = #tpu.dot_dimension_numbers<[1], [0], [0], [1], [0, 0, 1, 1], [], []>} : vector<8x4xf32>, vector<4x256xf32>, vector<8x256xf32> -> vector<8x256xf32>
    %36 = arith.addf %29, %35 : vector<8x256xf32>
    %c4 = arith.constant 4 : index
    %c0_25 = arith.constant 0 : index
    %c0_26 = arith.constant 0 : index
    %37 = vector.load %arg4[%c4, %c0_25, %c0_26] : memref<9x8x4xf32, #tpu.memory_space<vmem>>, vector<1x8x4xf32>
    %38 = vector.shape_cast %37 : vector<1x8x4xf32> to vector<8x4xf32>
    %cst_27 = arith.constant dense<0.000000e+00> : vector<8x256xf32>
    %39 = tpu.matmul %38, %1, %cst_27 {dimension_numbers = #tpu.dot_dimension_numbers<[1], [0], [0], [1], [0, 0, 1, 1], [], []>} : vector<8x4xf32>, vector<4x256xf32>, vector<8x256xf32> -> vector<8x256xf32>
    %40 = arith.addf %36, %39 : vector<8x256xf32>
    %cst_28 = arith.constant 0.000000e+00 : f32
    %41 = vector.broadcast %cst_28 : f32 to vector<4x1xf32>
    %42 = vector.extract_strided_slice %9 {offsets = [0, 1], sizes = [4, 255], strides = [1, 1]} : vector<4x256xf32> to vector<4x255xf32>
    %43 = tpu.concatenate %42, %41 in 1 : vector<4x255xf32>, vector<4x1xf32> -> vector<4x256xf32>
    %c5 = arith.constant 5 : index
    %c0_29 = arith.constant 0 : index
    %c0_30 = arith.constant 0 : index
    %44 = vector.load %arg4[%c5, %c0_29, %c0_30] : memref<9x8x4xf32, #tpu.memory_space<vmem>>, vector<1x8x4xf32>
    %45 = vector.shape_cast %44 : vector<1x8x4xf32> to vector<8x4xf32>
    %cst_31 = arith.constant dense<0.000000e+00> : vector<8x256xf32>
    %46 = tpu.matmul %45, %43, %cst_31 {dimension_numbers = #tpu.dot_dimension_numbers<[1], [0], [0], [1], [0, 0, 1, 1], [], []>} : vector<8x4xf32>, vector<4x256xf32>, vector<8x256xf32> -> vector<8x256xf32>
    %47 = arith.addf %40, %46 : vector<8x256xf32>
    %cst_32 = arith.constant 0.000000e+00 : f32
    %48 = vector.broadcast %cst_32 : f32 to vector<4x15xf32>
    %49 = vector.extract_strided_slice %6 {offsets = [0, 15], sizes = [4, 241], strides = [1, 1]} : vector<4x256xf32> to vector<4x241xf32>
    %50 = tpu.concatenate %49, %48 in 1 : vector<4x241xf32>, vector<4x15xf32> -> vector<4x256xf32>
    %c6 = arith.constant 6 : index
    %c0_33 = arith.constant 0 : index
    %c0_34 = arith.constant 0 : index
    %51 = vector.load %arg4[%c6, %c0_33, %c0_34] : memref<9x8x4xf32, #tpu.memory_space<vmem>>, vector<1x8x4xf32>
    %52 = vector.shape_cast %51 : vector<1x8x4xf32> to vector<8x4xf32>
    %cst_35 = arith.constant dense<0.000000e+00> : vector<8x256xf32>
    %53 = tpu.matmul %52, %50, %cst_35 {dimension_numbers = #tpu.dot_dimension_numbers<[1], [0], [0], [1], [0, 0, 1, 1], [], []>} : vector<8x4xf32>, vector<4x256xf32>, vector<8x256xf32> -> vector<8x256xf32>
    %54 = arith.addf %47, %53 : vector<8x256xf32>
    %cst_36 = arith.constant 0.000000e+00 : f32
    %55 = vector.broadcast %cst_36 : f32 to vector<4x16xf32>
    %56 = vector.extract_strided_slice %1 {offsets = [0, 16], sizes = [4, 240], strides = [1, 1]} : vector<4x256xf32> to vector<4x240xf32>
    %57 = tpu.concatenate %56, %55 in 1 : vector<4x240xf32>, vector<4x16xf32> -> vector<4x256xf32>
    %c7 = arith.constant 7 : index
    %c0_37 = arith.constant 0 : index
    %c0_38 = arith.constant 0 : index
    %58 = vector.load %arg4[%c7, %c0_37, %c0_38] : memref<9x8x4xf32, #tpu.memory_space<vmem>>, vector<1x8x4xf32>
    %59 = vector.shape_cast %58 : vector<1x8x4xf32> to vector<8x4xf32>
    %cst_39 = arith.constant dense<0.000000e+00> : vector<8x256xf32>
    %60 = tpu.matmul %59, %57, %cst_39 {dimension_numbers = #tpu.dot_dimension_numbers<[1], [0], [0], [1], [0, 0, 1, 1], [], []>} : vector<8x4xf32>, vector<4x256xf32>, vector<8x256xf32> -> vector<8x256xf32>
    %61 = arith.addf %54, %60 : vector<8x256xf32>
    %cst_40 = arith.constant 0.000000e+00 : f32
    %62 = vector.broadcast %cst_40 : f32 to vector<4x17xf32>
    %63 = vector.extract_strided_slice %9 {offsets = [0, 17], sizes = [4, 239], strides = [1, 1]} : vector<4x256xf32> to vector<4x239xf32>
    %64 = tpu.concatenate %63, %62 in 1 : vector<4x239xf32>, vector<4x17xf32> -> vector<4x256xf32>
    %c8 = arith.constant 8 : index
    %c0_41 = arith.constant 0 : index
    %c0_42 = arith.constant 0 : index
    %65 = vector.load %arg4[%c8, %c0_41, %c0_42] : memref<9x8x4xf32, #tpu.memory_space<vmem>>, vector<1x8x4xf32>
    %66 = vector.shape_cast %65 : vector<1x8x4xf32> to vector<8x4xf32>
    %cst_43 = arith.constant dense<0.000000e+00> : vector<8x256xf32>
    %67 = tpu.matmul %66, %64, %cst_43 {dimension_numbers = #tpu.dot_dimension_numbers<[1], [0], [0], [1], [0, 0, 1, 1], [], []>} : vector<8x4xf32>, vector<4x256xf32>, vector<8x256xf32> -> vector<8x256xf32>
    %68 = arith.addf %61, %67 : vector<8x256xf32>
    %c0_44 = arith.constant 0 : index
    %c0_45 = arith.constant 0 : index
    %69 = vector.load %arg3[%c0_44, %c0_45] : memref<4x256xf32, #tpu.memory_space<vmem>>, vector<1x256xf32>
    %70 = vector.broadcast %69 : vector<1x256xf32> to vector<8x256xf32>
    %71 = arith.mulf %68, %70 : vector<8x256xf32>
    %c1_46 = arith.constant 1 : index
    %c0_47 = arith.constant 0 : index
    %72 = vector.load %arg3[%c1_46, %c0_47] : memref<4x256xf32, #tpu.memory_space<vmem>>, vector<1x256xf32>
    %73 = vector.broadcast %72 : vector<1x256xf32> to vector<8x256xf32>
    %74 = arith.mulf %68, %73 : vector<8x256xf32>
    %c2_48 = arith.constant 2 : index
    %c0_49 = arith.constant 0 : index
    %75 = vector.load %arg3[%c2_48, %c0_49] : memref<4x256xf32, #tpu.memory_space<vmem>>, vector<1x256xf32>
    %76 = vector.broadcast %75 : vector<1x256xf32> to vector<8x256xf32>
    %77 = arith.mulf %68, %76 : vector<8x256xf32>
    %c3_50 = arith.constant 3 : index
    %c0_51 = arith.constant 0 : index
    %78 = vector.load %arg3[%c3_50, %c0_51] : memref<4x256xf32, #tpu.memory_space<vmem>>, vector<1x256xf32>
    %79 = vector.broadcast %78 : vector<1x256xf32> to vector<8x256xf32>
    %80 = arith.mulf %68, %79 : vector<8x256xf32>
    %cst_52 = arith.constant 0.000000e+00 : f32
    %81 = vector.broadcast %cst_52 : f32 to vector<8x34xf32>
    %82 = vector.extract_strided_slice %71 {offsets = [0, 0], sizes = [8, 222], strides = [1, 1]} : vector<8x256xf32> to vector<8x222xf32>
    %83 = tpu.concatenate %81, %82 in 1 : vector<8x34xf32>, vector<8x222xf32> -> vector<8x256xf32>
    %c0_53 = arith.constant 0 : index
    %c0_54 = arith.constant 0 : index
    %c0_55 = arith.constant 0 : index
    %84 = vector.load %arg5[%c0_53, %c0_54, %c0_55] : memref<25x8x8xf32, #tpu.memory_space<vmem>>, vector<1x8x8xf32>
    %85 = vector.shape_cast %84 : vector<1x8x8xf32> to vector<8x8xf32>
    %cst_56 = arith.constant dense<0.000000e+00> : vector<8x256xf32>
    %86 = tpu.matmul %85, %83, %cst_56 {dimension_numbers = #tpu.dot_dimension_numbers<[1], [0], [0], [1], [0, 0, 1, 1], [], []>} : vector<8x8xf32>, vector<8x256xf32>, vector<8x256xf32> -> vector<8x256xf32>
    %cst_57 = arith.constant 0.000000e+00 : f32
    %87 = vector.broadcast %cst_57 : f32 to vector<8x33xf32>
    %88 = vector.extract_strided_slice %74 {offsets = [0, 0], sizes = [8, 223], strides = [1, 1]} : vector<8x256xf32> to vector<8x223xf32>
    %89 = tpu.concatenate %87, %88 in 1 : vector<8x33xf32>, vector<8x223xf32> -> vector<8x256xf32>
    %c1_58 = arith.constant 1 : index
    %c0_59 = arith.constant 0 : index
    %c0_60 = arith.constant 0 : index
    %90 = vector.load %arg5[%c1_58, %c0_59, %c0_60] : memref<25x8x8xf32, #tpu.memory_space<vmem>>, vector<1x8x8xf32>
    %91 = vector.shape_cast %90 : vector<1x8x8xf32> to vector<8x8xf32>
    %cst_61 = arith.constant dense<0.000000e+00> : vector<8x256xf32>
    %92 = tpu.matmul %91, %89, %cst_61 {dimension_numbers = #tpu.dot_dimension_numbers<[1], [0], [0], [1], [0, 0, 1, 1], [], []>} : vector<8x8xf32>, vector<8x256xf32>, vector<8x256xf32> -> vector<8x256xf32>
    %93 = arith.addf %86, %92 : vector<8x256xf32>
    %cst_62 = arith.constant 0.000000e+00 : f32
    %94 = vector.broadcast %cst_62 : f32 to vector<8x32xf32>
    %95 = vector.extract_strided_slice %68 {offsets = [0, 0], sizes = [8, 224], strides = [1, 1]} : vector<8x256xf32> to vector<8x224xf32>
    %96 = tpu.concatenate %94, %95 in 1 : vector<8x32xf32>, vector<8x224xf32> -> vector<8x256xf32>
    %c2_63 = arith.constant 2 : index
    %c0_64 = arith.constant 0 : index
    %c0_65 = arith.constant 0 : index
    %97 = vector.load %arg5[%c2_63, %c0_64, %c0_65] : memref<25x8x8xf32, #tpu.memory_space<vmem>>, vector<1x8x8xf32>
    %98 = vector.shape_cast %97 : vector<1x8x8xf32> to vector<8x8xf32>
    %cst_66 = arith.constant dense<0.000000e+00> : vector<8x256xf32>
    %99 = tpu.matmul %98, %96, %cst_66 {dimension_numbers = #tpu.dot_dimension_numbers<[1], [0], [0], [1], [0, 0, 1, 1], [], []>} : vector<8x8xf32>, vector<8x256xf32>, vector<8x256xf32> -> vector<8x256xf32>
    %100 = arith.addf %93, %99 : vector<8x256xf32>
    %cst_67 = arith.constant 0.000000e+00 : f32
    %101 = vector.broadcast %cst_67 : f32 to vector<8x31xf32>
    %102 = vector.extract_strided_slice %77 {offsets = [0, 0], sizes = [8, 225], strides = [1, 1]} : vector<8x256xf32> to vector<8x225xf32>
    %103 = tpu.concatenate %101, %102 in 1 : vector<8x31xf32>, vector<8x225xf32> -> vector<8x256xf32>
    %c3_68 = arith.constant 3 : index
    %c0_69 = arith.constant 0 : index
    %c0_70 = arith.constant 0 : index
    %104 = vector.load %arg5[%c3_68, %c0_69, %c0_70] : memref<25x8x8xf32, #tpu.memory_space<vmem>>, vector<1x8x8xf32>
    %105 = vector.shape_cast %104 : vector<1x8x8xf32> to vector<8x8xf32>
    %cst_71 = arith.constant dense<0.000000e+00> : vector<8x256xf32>
    %106 = tpu.matmul %105, %103, %cst_71 {dimension_numbers = #tpu.dot_dimension_numbers<[1], [0], [0], [1], [0, 0, 1, 1], [], []>} : vector<8x8xf32>, vector<8x256xf32>, vector<8x256xf32> -> vector<8x256xf32>
    %107 = arith.addf %100, %106 : vector<8x256xf32>
    %cst_72 = arith.constant 0.000000e+00 : f32
    %108 = vector.broadcast %cst_72 : f32 to vector<8x30xf32>
    %109 = vector.extract_strided_slice %80 {offsets = [0, 0], sizes = [8, 226], strides = [1, 1]} : vector<8x256xf32> to vector<8x226xf32>
    %110 = tpu.concatenate %108, %109 in 1 : vector<8x30xf32>, vector<8x226xf32> -> vector<8x256xf32>
    %c4_73 = arith.constant 4 : index
    %c0_74 = arith.constant 0 : index
    %c0_75 = arith.constant 0 : index
    %111 = vector.load %arg5[%c4_73, %c0_74, %c0_75] : memref<25x8x8xf32, #tpu.memory_space<vmem>>, vector<1x8x8xf32>
    %112 = vector.shape_cast %111 : vector<1x8x8xf32> to vector<8x8xf32>
    %cst_76 = arith.constant dense<0.000000e+00> : vector<8x256xf32>
    %113 = tpu.matmul %112, %110, %cst_76 {dimension_numbers = #tpu.dot_dimension_numbers<[1], [0], [0], [1], [0, 0, 1, 1], [], []>} : vector<8x8xf32>, vector<8x256xf32>, vector<8x256xf32> -> vector<8x256xf32>
    %114 = arith.addf %107, %113 : vector<8x256xf32>
    %cst_77 = arith.constant 0.000000e+00 : f32
    %115 = vector.broadcast %cst_77 : f32 to vector<8x18xf32>
    %116 = vector.extract_strided_slice %71 {offsets = [0, 0], sizes = [8, 238], strides = [1, 1]} : vector<8x256xf32> to vector<8x238xf32>
    %117 = tpu.concatenate %115, %116 in 1 : vector<8x18xf32>, vector<8x238xf32> -> vector<8x256xf32>
    %c5_78 = arith.constant 5 : index
    %c0_79 = arith.constant 0 : index
    %c0_80 = arith.constant 0 : index
    %118 = vector.load %arg5[%c5_78, %c0_79, %c0_80] : memref<25x8x8xf32, #tpu.memory_space<vmem>>, vector<1x8x8xf32>
    %119 = vector.shape_cast %118 : vector<1x8x8xf32> to vector<8x8xf32>
    %cst_81 = arith.constant dense<0.000000e+00> : vector<8x256xf32>
    %120 = tpu.matmul %119, %117, %cst_81 {dimension_numbers = #tpu.dot_dimension_numbers<[1], [0], [0], [1], [0, 0, 1, 1], [], []>} : vector<8x8xf32>, vector<8x256xf32>, vector<8x256xf32> -> vector<8x256xf32>
    %121 = arith.addf %114, %120 : vector<8x256xf32>
    %cst_82 = arith.constant 0.000000e+00 : f32
    %122 = vector.broadcast %cst_82 : f32 to vector<8x17xf32>
    %123 = vector.extract_strided_slice %74 {offsets = [0, 0], sizes = [8, 239], strides = [1, 1]} : vector<8x256xf32> to vector<8x239xf32>
    %124 = tpu.concatenate %122, %123 in 1 : vector<8x17xf32>, vector<8x239xf32> -> vector<8x256xf32>
    %c6_83 = arith.constant 6 : index
    %c0_84 = arith.constant 0 : index
    %c0_85 = arith.constant 0 : index
    %125 = vector.load %arg5[%c6_83, %c0_84, %c0_85] : memref<25x8x8xf32, #tpu.memory_space<vmem>>, vector<1x8x8xf32>
    %126 = vector.shape_cast %125 : vector<1x8x8xf32> to vector<8x8xf32>
    %cst_86 = arith.constant dense<0.000000e+00> : vector<8x256xf32>
    %127 = tpu.matmul %126, %124, %cst_86 {dimension_numbers = #tpu.dot_dimension_numbers<[1], [0], [0], [1], [0, 0, 1, 1], [], []>} : vector<8x8xf32>, vector<8x256xf32>, vector<8x256xf32> -> vector<8x256xf32>
    %128 = arith.addf %121, %127 : vector<8x256xf32>
    %cst_87 = arith.constant 0.000000e+00 : f32
    %129 = vector.broadcast %cst_87 : f32 to vector<8x16xf32>
    %130 = vector.extract_strided_slice %68 {offsets = [0, 0], sizes = [8, 240], strides = [1, 1]} : vector<8x256xf32> to vector<8x240xf32>
    %131 = tpu.concatenate %129, %130 in 1 : vector<8x16xf32>, vector<8x240xf32> -> vector<8x256xf32>
    %c7_88 = arith.constant 7 : index
    %c0_89 = arith.constant 0 : index
    %c0_90 = arith.constant 0 : index
    %132 = vector.load %arg5[%c7_88, %c0_89, %c0_90] : memref<25x8x8xf32, #tpu.memory_space<vmem>>, vector<1x8x8xf32>
    %133 = vector.shape_cast %132 : vector<1x8x8xf32> to vector<8x8xf32>
    %cst_91 = arith.constant dense<0.000000e+00> : vector<8x256xf32>
    %134 = tpu.matmul %133, %131, %cst_91 {dimension_numbers = #tpu.dot_dimension_numbers<[1], [0], [0], [1], [0, 0, 1, 1], [], []>} : vector<8x8xf32>, vector<8x256xf32>, vector<8x256xf32> -> vector<8x256xf32>
    %135 = arith.addf %128, %134 : vector<8x256xf32>
    %cst_92 = arith.constant 0.000000e+00 : f32
    %136 = vector.broadcast %cst_92 : f32 to vector<8x15xf32>
    %137 = vector.extract_strided_slice %77 {offsets = [0, 0], sizes = [8, 241], strides = [1, 1]} : vector<8x256xf32> to vector<8x241xf32>
    %138 = tpu.concatenate %136, %137 in 1 : vector<8x15xf32>, vector<8x241xf32> -> vector<8x256xf32>
    %c8_93 = arith.constant 8 : index
    %c0_94 = arith.constant 0 : index
    %c0_95 = arith.constant 0 : index
    %139 = vector.load %arg5[%c8_93, %c0_94, %c0_95] : memref<25x8x8xf32, #tpu.memory_space<vmem>>, vector<1x8x8xf32>
    %140 = vector.shape_cast %139 : vector<1x8x8xf32> to vector<8x8xf32>
    %cst_96 = arith.constant dense<0.000000e+00> : vector<8x256xf32>
    %141 = tpu.matmul %140, %138, %cst_96 {dimension_numbers = #tpu.dot_dimension_numbers<[1], [0], [0], [1], [0, 0, 1, 1], [], []>} : vector<8x8xf32>, vector<8x256xf32>, vector<8x256xf32> -> vector<8x256xf32>
    %142 = arith.addf %135, %141 : vector<8x256xf32>
    %cst_97 = arith.constant 0.000000e+00 : f32
    %143 = vector.broadcast %cst_97 : f32 to vector<8x14xf32>
    %144 = vector.extract_strided_slice %80 {offsets = [0, 0], sizes = [8, 242], strides = [1, 1]} : vector<8x256xf32> to vector<8x242xf32>
    %145 = tpu.concatenate %143, %144 in 1 : vector<8x14xf32>, vector<8x242xf32> -> vector<8x256xf32>
    %c9 = arith.constant 9 : index
    %c0_98 = arith.constant 0 : index
    %c0_99 = arith.constant 0 : index
    %146 = vector.load %arg5[%c9, %c0_98, %c0_99] : memref<25x8x8xf32, #tpu.memory_space<vmem>>, vector<1x8x8xf32>
    %147 = vector.shape_cast %146 : vector<1x8x8xf32> to vector<8x8xf32>
    %cst_100 = arith.constant dense<0.000000e+00> : vector<8x256xf32>
    %148 = tpu.matmul %147, %145, %cst_100 {dimension_numbers = #tpu.dot_dimension_numbers<[1], [0], [0], [1], [0, 0, 1, 1], [], []>} : vector<8x8xf32>, vector<8x256xf32>, vector<8x256xf32> -> vector<8x256xf32>
    %149 = arith.addf %142, %148 : vector<8x256xf32>
    %cst_101 = arith.constant 0.000000e+00 : f32
    %150 = vector.broadcast %cst_101 : f32 to vector<8x2xf32>
    %151 = vector.extract_strided_slice %71 {offsets = [0, 0], sizes = [8, 254], strides = [1, 1]} : vector<8x256xf32> to vector<8x254xf32>
    %152 = tpu.concatenate %150, %151 in 1 : vector<8x2xf32>, vector<8x254xf32> -> vector<8x256xf32>
    %c10 = arith.constant 10 : index
    %c0_102 = arith.constant 0 : index
    %c0_103 = arith.constant 0 : index
    %153 = vector.load %arg5[%c10, %c0_102, %c0_103] : memref<25x8x8xf32, #tpu.memory_space<vmem>>, vector<1x8x8xf32>
    %154 = vector.shape_cast %153 : vector<1x8x8xf32> to vector<8x8xf32>
    %cst_104 = arith.constant dense<0.000000e+00> : vector<8x256xf32>
    %155 = tpu.matmul %154, %152, %cst_104 {dimension_numbers = #tpu.dot_dimension_numbers<[1], [0], [0], [1], [0, 0, 1, 1], [], []>} : vector<8x8xf32>, vector<8x256xf32>, vector<8x256xf32> -> vector<8x256xf32>
    %156 = arith.addf %149, %155 : vector<8x256xf32>
    %cst_105 = arith.constant 0.000000e+00 : f32
    %157 = vector.broadcast %cst_105 : f32 to vector<8x1xf32>
    %158 = vector.extract_strided_slice %74 {offsets = [0, 0], sizes = [8, 255], strides = [1, 1]} : vector<8x256xf32> to vector<8x255xf32>
    %159 = tpu.concatenate %157, %158 in 1 : vector<8x1xf32>, vector<8x255xf32> -> vector<8x256xf32>
    %c11 = arith.constant 11 : index
    %c0_106 = arith.constant 0 : index
    %c0_107 = arith.constant 0 : index
    %160 = vector.load %arg5[%c11, %c0_106, %c0_107] : memref<25x8x8xf32, #tpu.memory_space<vmem>>, vector<1x8x8xf32>
    %161 = vector.shape_cast %160 : vector<1x8x8xf32> to vector<8x8xf32>
    %cst_108 = arith.constant dense<0.000000e+00> : vector<8x256xf32>
    %162 = tpu.matmul %161, %159, %cst_108 {dimension_numbers = #tpu.dot_dimension_numbers<[1], [0], [0], [1], [0, 0, 1, 1], [], []>} : vector<8x8xf32>, vector<8x256xf32>, vector<8x256xf32> -> vector<8x256xf32>
    %163 = arith.addf %156, %162 : vector<8x256xf32>
    %c12 = arith.constant 12 : index
    %c0_109 = arith.constant 0 : index
    %c0_110 = arith.constant 0 : index
    %164 = vector.load %arg5[%c12, %c0_109, %c0_110] : memref<25x8x8xf32, #tpu.memory_space<vmem>>, vector<1x8x8xf32>
    %165 = vector.shape_cast %164 : vector<1x8x8xf32> to vector<8x8xf32>
    %cst_111 = arith.constant dense<0.000000e+00> : vector<8x256xf32>
    %166 = tpu.matmul %165, %68, %cst_111 {dimension_numbers = #tpu.dot_dimension_numbers<[1], [0], [0], [1], [0, 0, 1, 1], [], []>} : vector<8x8xf32>, vector<8x256xf32>, vector<8x256xf32> -> vector<8x256xf32>
    %167 = arith.addf %163, %166 : vector<8x256xf32>
    %cst_112 = arith.constant 0.000000e+00 : f32
    %168 = vector.broadcast %cst_112 : f32 to vector<8x1xf32>
    %169 = vector.extract_strided_slice %77 {offsets = [0, 1], sizes = [8, 255], strides = [1, 1]} : vector<8x256xf32> to vector<8x255xf32>
    %170 = tpu.concatenate %169, %168 in 1 : vector<8x255xf32>, vector<8x1xf32> -> vector<8x256xf32>
    %c13 = arith.constant 13 : index
    %c0_113 = arith.constant 0 : index
    %c0_114 = arith.constant 0 : index
    %171 = vector.load %arg5[%c13, %c0_113, %c0_114] : memref<25x8x8xf32, #tpu.memory_space<vmem>>, vector<1x8x8xf32>
    %172 = vector.shape_cast %171 : vector<1x8x8xf32> to vector<8x8xf32>
    %cst_115 = arith.constant dense<0.000000e+00> : vector<8x256xf32>
    %173 = tpu.matmul %172, %170, %cst_115 {dimension_numbers = #tpu.dot_dimension_numbers<[1], [0], [0], [1], [0, 0, 1, 1], [], []>} : vector<8x8xf32>, vector<8x256xf32>, vector<8x256xf32> -> vector<8x256xf32>
    %174 = arith.addf %167, %173 : vector<8x256xf32>
    %cst_116 = arith.constant 0.000000e+00 : f32
    %175 = vector.broadcast %cst_116 : f32 to vector<8x2xf32>
    %176 = vector.extract_strided_slice %80 {offsets = [0, 2], sizes = [8, 254], strides = [1, 1]} : vector<8x256xf32> to vector<8x254xf32>
    %177 = tpu.concatenate %176, %175 in 1 : vector<8x254xf32>, vector<8x2xf32> -> vector<8x256xf32>
    %c14 = arith.constant 14 : index
    %c0_117 = arith.constant 0 : index
    %c0_118 = arith.constant 0 : index
    %178 = vector.load %arg5[%c14, %c0_117, %c0_118] : memref<25x8x8xf32, #tpu.memory_space<vmem>>, vector<1x8x8xf32>
    %179 = vector.shape_cast %178 : vector<1x8x8xf32> to vector<8x8xf32>
    %cst_119 = arith.constant dense<0.000000e+00> : vector<8x256xf32>
    %180 = tpu.matmul %179, %177, %cst_119 {dimension_numbers = #tpu.dot_dimension_numbers<[1], [0], [0], [1], [0, 0, 1, 1], [], []>} : vector<8x8xf32>, vector<8x256xf32>, vector<8x256xf32> -> vector<8x256xf32>
    %181 = arith.addf %174, %180 : vector<8x256xf32>
    %cst_120 = arith.constant 0.000000e+00 : f32
    %182 = vector.broadcast %cst_120 : f32 to vector<8x14xf32>
    %183 = vector.extract_strided_slice %71 {offsets = [0, 14], sizes = [8, 242], strides = [1, 1]} : vector<8x256xf32> to vector<8x242xf32>
    %184 = tpu.concatenate %183, %182 in 1 : vector<8x242xf32>, vector<8x14xf32> -> vector<8x256xf32>
    %c15 = arith.constant 15 : index
    %c0_121 = arith.constant 0 : index
    %c0_122 = arith.constant 0 : index
    %185 = vector.load %arg5[%c15, %c0_121, %c0_122] : memref<25x8x8xf32, #tpu.memory_space<vmem>>, vector<1x8x8xf32>
    %186 = vector.shape_cast %185 : vector<1x8x8xf32> to vector<8x8xf32>
    %cst_123 = arith.constant dense<0.000000e+00> : vector<8x256xf32>
    %187 = tpu.matmul %186, %184, %cst_123 {dimension_numbers = #tpu.dot_dimension_numbers<[1], [0], [0], [1], [0, 0, 1, 1], [], []>} : vector<8x8xf32>, vector<8x256xf32>, vector<8x256xf32> -> vector<8x256xf32>
    %188 = arith.addf %181, %187 : vector<8x256xf32>
    %cst_124 = arith.constant 0.000000e+00 : f32
    %189 = vector.broadcast %cst_124 : f32 to vector<8x15xf32>
    %190 = vector.extract_strided_slice %74 {offsets = [0, 15], sizes = [8, 241], strides = [1, 1]} : vector<8x256xf32> to vector<8x241xf32>
    %191 = tpu.concatenate %190, %189 in 1 : vector<8x241xf32>, vector<8x15xf32> -> vector<8x256xf32>
    %c16 = arith.constant 16 : index
    %c0_125 = arith.constant 0 : index
    %c0_126 = arith.constant 0 : index
    %192 = vector.load %arg5[%c16, %c0_125, %c0_126] : memref<25x8x8xf32, #tpu.memory_space<vmem>>, vector<1x8x8xf32>
    %193 = vector.shape_cast %192 : vector<1x8x8xf32> to vector<8x8xf32>
    %cst_127 = arith.constant dense<0.000000e+00> : vector<8x256xf32>
    %194 = tpu.matmul %193, %191, %cst_127 {dimension_numbers = #tpu.dot_dimension_numbers<[1], [0], [0], [1], [0, 0, 1, 1], [], []>} : vector<8x8xf32>, vector<8x256xf32>, vector<8x256xf32> -> vector<8x256xf32>
    %195 = arith.addf %188, %194 : vector<8x256xf32>
    %cst_128 = arith.constant 0.000000e+00 : f32
    %196 = vector.broadcast %cst_128 : f32 to vector<8x16xf32>
    %197 = vector.extract_strided_slice %68 {offsets = [0, 16], sizes = [8, 240], strides = [1, 1]} : vector<8x256xf32> to vector<8x240xf32>
    %198 = tpu.concatenate %197, %196 in 1 : vector<8x240xf32>, vector<8x16xf32> -> vector<8x256xf32>
    %c17 = arith.constant 17 : index
    %c0_129 = arith.constant 0 : index
    %c0_130 = arith.constant 0 : index
    %199 = vector.load %arg5[%c17, %c0_129, %c0_130] : memref<25x8x8xf32, #tpu.memory_space<vmem>>, vector<1x8x8xf32>
    %200 = vector.shape_cast %199 : vector<1x8x8xf32> to vector<8x8xf32>
    %cst_131 = arith.constant dense<0.000000e+00> : vector<8x256xf32>
    %201 = tpu.matmul %200, %198, %cst_131 {dimension_numbers = #tpu.dot_dimension_numbers<[1], [0], [0], [1], [0, 0, 1, 1], [], []>} : vector<8x8xf32>, vector<8x256xf32>, vector<8x256xf32> -> vector<8x256xf32>
    %202 = arith.addf %195, %201 : vector<8x256xf32>
    %cst_132 = arith.constant 0.000000e+00 : f32
    %203 = vector.broadcast %cst_132 : f32 to vector<8x17xf32>
    %204 = vector.extract_strided_slice %77 {offsets = [0, 17], sizes = [8, 239], strides = [1, 1]} : vector<8x256xf32> to vector<8x239xf32>
    %205 = tpu.concatenate %204, %203 in 1 : vector<8x239xf32>, vector<8x17xf32> -> vector<8x256xf32>
    %c18 = arith.constant 18 : index
    %c0_133 = arith.constant 0 : index
    %c0_134 = arith.constant 0 : index
    %206 = vector.load %arg5[%c18, %c0_133, %c0_134] : memref<25x8x8xf32, #tpu.memory_space<vmem>>, vector<1x8x8xf32>
    %207 = vector.shape_cast %206 : vector<1x8x8xf32> to vector<8x8xf32>
    %cst_135 = arith.constant dense<0.000000e+00> : vector<8x256xf32>
    %208 = tpu.matmul %207, %205, %cst_135 {dimension_numbers = #tpu.dot_dimension_numbers<[1], [0], [0], [1], [0, 0, 1, 1], [], []>} : vector<8x8xf32>, vector<8x256xf32>, vector<8x256xf32> -> vector<8x256xf32>
    %209 = arith.addf %202, %208 : vector<8x256xf32>
    %cst_136 = arith.constant 0.000000e+00 : f32
    %210 = vector.broadcast %cst_136 : f32 to vector<8x18xf32>
    %211 = vector.extract_strided_slice %80 {offsets = [0, 18], sizes = [8, 238], strides = [1, 1]} : vector<8x256xf32> to vector<8x238xf32>
    %212 = tpu.concatenate %211, %210 in 1 : vector<8x238xf32>, vector<8x18xf32> -> vector<8x256xf32>
    %c19 = arith.constant 19 : index
    %c0_137 = arith.constant 0 : index
    %c0_138 = arith.constant 0 : index
    %213 = vector.load %arg5[%c19, %c0_137, %c0_138] : memref<25x8x8xf32, #tpu.memory_space<vmem>>, vector<1x8x8xf32>
    %214 = vector.shape_cast %213 : vector<1x8x8xf32> to vector<8x8xf32>
    %cst_139 = arith.constant dense<0.000000e+00> : vector<8x256xf32>
    %215 = tpu.matmul %214, %212, %cst_139 {dimension_numbers = #tpu.dot_dimension_numbers<[1], [0], [0], [1], [0, 0, 1, 1], [], []>} : vector<8x8xf32>, vector<8x256xf32>, vector<8x256xf32> -> vector<8x256xf32>
    %216 = arith.addf %209, %215 : vector<8x256xf32>
    %cst_140 = arith.constant 0.000000e+00 : f32
    %217 = vector.broadcast %cst_140 : f32 to vector<8x30xf32>
    %218 = vector.extract_strided_slice %71 {offsets = [0, 30], sizes = [8, 226], strides = [1, 1]} : vector<8x256xf32> to vector<8x226xf32>
    %219 = tpu.concatenate %218, %217 in 1 : vector<8x226xf32>, vector<8x30xf32> -> vector<8x256xf32>
    %c20 = arith.constant 20 : index
    %c0_141 = arith.constant 0 : index
    %c0_142 = arith.constant 0 : index
    %220 = vector.load %arg5[%c20, %c0_141, %c0_142] : memref<25x8x8xf32, #tpu.memory_space<vmem>>, vector<1x8x8xf32>
    %221 = vector.shape_cast %220 : vector<1x8x8xf32> to vector<8x8xf32>
    %cst_143 = arith.constant dense<0.000000e+00> : vector<8x256xf32>
    %222 = tpu.matmul %221, %219, %cst_143 {dimension_numbers = #tpu.dot_dimension_numbers<[1], [0], [0], [1], [0, 0, 1, 1], [], []>} : vector<8x8xf32>, vector<8x256xf32>, vector<8x256xf32> -> vector<8x256xf32>
    %223 = arith.addf %216, %222 : vector<8x256xf32>
    %cst_144 = arith.constant 0.000000e+00 : f32
    %224 = vector.broadcast %cst_144 : f32 to vector<8x31xf32>
    %225 = vector.extract_strided_slice %74 {offsets = [0, 31], sizes = [8, 225], strides = [1, 1]} : vector<8x256xf32> to vector<8x225xf32>
    %226 = tpu.concatenate %225, %224 in 1 : vector<8x225xf32>, vector<8x31xf32> -> vector<8x256xf32>
    %c21 = arith.constant 21 : index
    %c0_145 = arith.constant 0 : index
    %c0_146 = arith.constant 0 : index
    %227 = vector.load %arg5[%c21, %c0_145, %c0_146] : memref<25x8x8xf32, #tpu.memory_space<vmem>>, vector<1x8x8xf32>
    %228 = vector.shape_cast %227 : vector<1x8x8xf32> to vector<8x8xf32>
    %cst_147 = arith.constant dense<0.000000e+00> : vector<8x256xf32>
    %229 = tpu.matmul %228, %226, %cst_147 {dimension_numbers = #tpu.dot_dimension_numbers<[1], [0], [0], [1], [0, 0, 1, 1], [], []>} : vector<8x8xf32>, vector<8x256xf32>, vector<8x256xf32> -> vector<8x256xf32>
    %230 = arith.addf %223, %229 : vector<8x256xf32>
    %cst_148 = arith.constant 0.000000e+00 : f32
    %231 = vector.broadcast %cst_148 : f32 to vector<8x32xf32>
    %232 = vector.extract_strided_slice %68 {offsets = [0, 32], sizes = [8, 224], strides = [1, 1]} : vector<8x256xf32> to vector<8x224xf32>
    %233 = tpu.concatenate %232, %231 in 1 : vector<8x224xf32>, vector<8x32xf32> -> vector<8x256xf32>
    %c22 = arith.constant 22 : index
    %c0_149 = arith.constant 0 : index
    %c0_150 = arith.constant 0 : index
    %234 = vector.load %arg5[%c22, %c0_149, %c0_150] : memref<25x8x8xf32, #tpu.memory_space<vmem>>, vector<1x8x8xf32>
    %235 = vector.shape_cast %234 : vector<1x8x8xf32> to vector<8x8xf32>
    %cst_151 = arith.constant dense<0.000000e+00> : vector<8x256xf32>
    %236 = tpu.matmul %235, %233, %cst_151 {dimension_numbers = #tpu.dot_dimension_numbers<[1], [0], [0], [1], [0, 0, 1, 1], [], []>} : vector<8x8xf32>, vector<8x256xf32>, vector<8x256xf32> -> vector<8x256xf32>
    %237 = arith.addf %230, %236 : vector<8x256xf32>
    %cst_152 = arith.constant 0.000000e+00 : f32
    %238 = vector.broadcast %cst_152 : f32 to vector<8x33xf32>
    %239 = vector.extract_strided_slice %77 {offsets = [0, 33], sizes = [8, 223], strides = [1, 1]} : vector<8x256xf32> to vector<8x223xf32>
    %240 = tpu.concatenate %239, %238 in 1 : vector<8x223xf32>, vector<8x33xf32> -> vector<8x256xf32>
    %c23 = arith.constant 23 : index
    %c0_153 = arith.constant 0 : index
    %c0_154 = arith.constant 0 : index
    %241 = vector.load %arg5[%c23, %c0_153, %c0_154] : memref<25x8x8xf32, #tpu.memory_space<vmem>>, vector<1x8x8xf32>
    %242 = vector.shape_cast %241 : vector<1x8x8xf32> to vector<8x8xf32>
    %cst_155 = arith.constant dense<0.000000e+00> : vector<8x256xf32>
    %243 = tpu.matmul %242, %240, %cst_155 {dimension_numbers = #tpu.dot_dimension_numbers<[1], [0], [0], [1], [0, 0, 1, 1], [], []>} : vector<8x8xf32>, vector<8x256xf32>, vector<8x256xf32> -> vector<8x256xf32>
    %244 = arith.addf %237, %243 : vector<8x256xf32>
    %cst_156 = arith.constant 0.000000e+00 : f32
    %245 = vector.broadcast %cst_156 : f32 to vector<8x34xf32>
    %246 = vector.extract_strided_slice %80 {offsets = [0, 34], sizes = [8, 222], strides = [1, 1]} : vector<8x256xf32> to vector<8x222xf32>
    %247 = tpu.concatenate %246, %245 in 1 : vector<8x222xf32>, vector<8x34xf32> -> vector<8x256xf32>
    %c24 = arith.constant 24 : index
    %c0_157 = arith.constant 0 : index
    %c0_158 = arith.constant 0 : index
    %248 = vector.load %arg5[%c24, %c0_157, %c0_158] : memref<25x8x8xf32, #tpu.memory_space<vmem>>, vector<1x8x8xf32>
    %249 = vector.shape_cast %248 : vector<1x8x8xf32> to vector<8x8xf32>
    %cst_159 = arith.constant dense<0.000000e+00> : vector<8x256xf32>
    %250 = tpu.matmul %249, %247, %cst_159 {dimension_numbers = #tpu.dot_dimension_numbers<[1], [0], [0], [1], [0, 0, 1, 1], [], []>} : vector<8x8xf32>, vector<8x256xf32>, vector<8x256xf32> -> vector<8x256xf32>
    %251 = arith.addf %244, %250 : vector<8x256xf32>
    %c0_160 = arith.constant 0 : index
    %c0_161 = arith.constant 0 : index
    %c0_162 = arith.constant 0 : index
    %252 = vector.load %arg6[%c0_160, %c0_161, %c0_162] : memref<1x8x8xf32, #tpu.memory_space<vmem>>, vector<1x8x8xf32>
    %253 = vector.shape_cast %252 : vector<1x8x8xf32> to vector<8x8xf32>
    %cst_163 = arith.constant dense<0.000000e+00> : vector<8x256xf32>
    %254 = tpu.matmul %253, %251, %cst_163 {dimension_numbers = #tpu.dot_dimension_numbers<[1], [0], [0], [1], [0, 0, 1, 1], [], []>} : vector<8x8xf32>, vector<8x256xf32>, vector<8x256xf32> -> vector<8x256xf32>
    %cst_164 = arith.constant 0.000000e+00 : f32
    %255 = vector.broadcast %cst_164 : f32 to vector<8x256xf32>
    %256 = arith.cmpf oge, %254, %255 : vector<8x256xf32>
    %cst_165 = arith.constant 0.00999999977 : f32
    %257 = vector.broadcast %cst_165 : f32 to vector<8x256xf32>
    %258 = arith.mulf %257, %254 : vector<8x256xf32>
    %259 = arith.select %256, %254, %258 : vector<8x256xi1>, vector<8x256xf32>
    %c0_166 = arith.constant 0 : index
    %c0_167 = arith.constant 0 : index
    %260 = vector.load %arg3[%c0_166, %c0_167] : memref<4x256xf32, #tpu.memory_space<vmem>>, vector<1x256xf32>
    %261 = vector.broadcast %260 : vector<1x256xf32> to vector<8x256xf32>
    %262 = arith.mulf %259, %261 : vector<8x256xf32>
    %c1_168 = arith.constant 1 : index
    %c0_169 = arith.constant 0 : index
    %263 = vector.load %arg3[%c1_168, %c0_169] : memref<4x256xf32, #tpu.memory_space<vmem>>, vector<1x256xf32>
    %264 = vector.broadcast %263 : vector<1x256xf32> to vector<8x256xf32>
    %265 = arith.mulf %259, %264 : vector<8x256xf32>
    %c2_170 = arith.constant 2 : index
    %c0_171 = arith.constant 0 : index
    %266 = vector.load %arg3[%c2_170, %c0_171] : memref<4x256xf32, #tpu.memory_space<vmem>>, vector<1x256xf32>
    %267 = vector.broadcast %266 : vector<1x256xf32> to vector<8x256xf32>
    %268 = arith.mulf %259, %267 : vector<8x256xf32>
    %c3_172 = arith.constant 3 : index
    %c0_173 = arith.constant 0 : index
    %269 = vector.load %arg3[%c3_172, %c0_173] : memref<4x256xf32, #tpu.memory_space<vmem>>, vector<1x256xf32>
    %270 = vector.broadcast %269 : vector<1x256xf32> to vector<8x256xf32>
    %271 = arith.mulf %259, %270 : vector<8x256xf32>
    %cst_174 = arith.constant 0.000000e+00 : f32
    %272 = vector.broadcast %cst_174 : f32 to vector<8x34xf32>
    %273 = vector.extract_strided_slice %262 {offsets = [0, 0], sizes = [8, 222], strides = [1, 1]} : vector<8x256xf32> to vector<8x222xf32>
    %274 = tpu.concatenate %272, %273 in 1 : vector<8x34xf32>, vector<8x222xf32> -> vector<8x256xf32>
    %c0_175 = arith.constant 0 : index
    %c0_176 = arith.constant 0 : index
    %c0_177 = arith.constant 0 : index
    %275 = vector.load %arg7[%c0_175, %c0_176, %c0_177] : memref<25x8x8xf32, #tpu.memory_space<vmem>>, vector<1x8x8xf32>
    %276 = vector.shape_cast %275 : vector<1x8x8xf32> to vector<8x8xf32>
    %cst_178 = arith.constant dense<0.000000e+00> : vector<8x256xf32>
    %277 = tpu.matmul %276, %274, %cst_178 {dimension_numbers = #tpu.dot_dimension_numbers<[1], [0], [0], [1], [0, 0, 1, 1], [], []>} : vector<8x8xf32>, vector<8x256xf32>, vector<8x256xf32> -> vector<8x256xf32>
    %cst_179 = arith.constant 0.000000e+00 : f32
    %278 = vector.broadcast %cst_179 : f32 to vector<8x33xf32>
    %279 = vector.extract_strided_slice %265 {offsets = [0, 0], sizes = [8, 223], strides = [1, 1]} : vector<8x256xf32> to vector<8x223xf32>
    %280 = tpu.concatenate %278, %279 in 1 : vector<8x33xf32>, vector<8x223xf32> -> vector<8x256xf32>
    %c1_180 = arith.constant 1 : index
    %c0_181 = arith.constant 0 : index
    %c0_182 = arith.constant 0 : index
    %281 = vector.load %arg7[%c1_180, %c0_181, %c0_182] : memref<25x8x8xf32, #tpu.memory_space<vmem>>, vector<1x8x8xf32>
    %282 = vector.shape_cast %281 : vector<1x8x8xf32> to vector<8x8xf32>
    %cst_183 = arith.constant dense<0.000000e+00> : vector<8x256xf32>
    %283 = tpu.matmul %282, %280, %cst_183 {dimension_numbers = #tpu.dot_dimension_numbers<[1], [0], [0], [1], [0, 0, 1, 1], [], []>} : vector<8x8xf32>, vector<8x256xf32>, vector<8x256xf32> -> vector<8x256xf32>
    %284 = arith.addf %277, %283 : vector<8x256xf32>
    %cst_184 = arith.constant 0.000000e+00 : f32
    %285 = vector.broadcast %cst_184 : f32 to vector<8x32xf32>
    %286 = vector.extract_strided_slice %259 {offsets = [0, 0], sizes = [8, 224], strides = [1, 1]} : vector<8x256xf32> to vector<8x224xf32>
    %287 = tpu.concatenate %285, %286 in 1 : vector<8x32xf32>, vector<8x224xf32> -> vector<8x256xf32>
    %c2_185 = arith.constant 2 : index
    %c0_186 = arith.constant 0 : index
    %c0_187 = arith.constant 0 : index
    %288 = vector.load %arg7[%c2_185, %c0_186, %c0_187] : memref<25x8x8xf32, #tpu.memory_space<vmem>>, vector<1x8x8xf32>
    %289 = vector.shape_cast %288 : vector<1x8x8xf32> to vector<8x8xf32>
    %cst_188 = arith.constant dense<0.000000e+00> : vector<8x256xf32>
    %290 = tpu.matmul %289, %287, %cst_188 {dimension_numbers = #tpu.dot_dimension_numbers<[1], [0], [0], [1], [0, 0, 1, 1], [], []>} : vector<8x8xf32>, vector<8x256xf32>, vector<8x256xf32> -> vector<8x256xf32>
    %291 = arith.addf %284, %290 : vector<8x256xf32>
    %cst_189 = arith.constant 0.000000e+00 : f32
    %292 = vector.broadcast %cst_189 : f32 to vector<8x31xf32>
    %293 = vector.extract_strided_slice %268 {offsets = [0, 0], sizes = [8, 225], strides = [1, 1]} : vector<8x256xf32> to vector<8x225xf32>
    %294 = tpu.concatenate %292, %293 in 1 : vector<8x31xf32>, vector<8x225xf32> -> vector<8x256xf32>
    %c3_190 = arith.constant 3 : index
    %c0_191 = arith.constant 0 : index
    %c0_192 = arith.constant 0 : index
    %295 = vector.load %arg7[%c3_190, %c0_191, %c0_192] : memref<25x8x8xf32, #tpu.memory_space<vmem>>, vector<1x8x8xf32>
    %296 = vector.shape_cast %295 : vector<1x8x8xf32> to vector<8x8xf32>
    %cst_193 = arith.constant dense<0.000000e+00> : vector<8x256xf32>
    %297 = tpu.matmul %296, %294, %cst_193 {dimension_numbers = #tpu.dot_dimension_numbers<[1], [0], [0], [1], [0, 0, 1, 1], [], []>} : vector<8x8xf32>, vector<8x256xf32>, vector<8x256xf32> -> vector<8x256xf32>
    %298 = arith.addf %291, %297 : vector<8x256xf32>
    %cst_194 = arith.constant 0.000000e+00 : f32
    %299 = vector.broadcast %cst_194 : f32 to vector<8x30xf32>
    %300 = vector.extract_strided_slice %271 {offsets = [0, 0], sizes = [8, 226], strides = [1, 1]} : vector<8x256xf32> to vector<8x226xf32>
    %301 = tpu.concatenate %299, %300 in 1 : vector<8x30xf32>, vector<8x226xf32> -> vector<8x256xf32>
    %c4_195 = arith.constant 4 : index
    %c0_196 = arith.constant 0 : index
    %c0_197 = arith.constant 0 : index
    %302 = vector.load %arg7[%c4_195, %c0_196, %c0_197] : memref<25x8x8xf32, #tpu.memory_space<vmem>>, vector<1x8x8xf32>
    %303 = vector.shape_cast %302 : vector<1x8x8xf32> to vector<8x8xf32>
    %cst_198 = arith.constant dense<0.000000e+00> : vector<8x256xf32>
    %304 = tpu.matmul %303, %301, %cst_198 {dimension_numbers = #tpu.dot_dimension_numbers<[1], [0], [0], [1], [0, 0, 1, 1], [], []>} : vector<8x8xf32>, vector<8x256xf32>, vector<8x256xf32> -> vector<8x256xf32>
    %305 = arith.addf %298, %304 : vector<8x256xf32>
    %cst_199 = arith.constant 0.000000e+00 : f32
    %306 = vector.broadcast %cst_199 : f32 to vector<8x18xf32>
    %307 = vector.extract_strided_slice %262 {offsets = [0, 0], sizes = [8, 238], strides = [1, 1]} : vector<8x256xf32> to vector<8x238xf32>
    %308 = tpu.concatenate %306, %307 in 1 : vector<8x18xf32>, vector<8x238xf32> -> vector<8x256xf32>
    %c5_200 = arith.constant 5 : index
    %c0_201 = arith.constant 0 : index
    %c0_202 = arith.constant 0 : index
    %309 = vector.load %arg7[%c5_200, %c0_201, %c0_202] : memref<25x8x8xf32, #tpu.memory_space<vmem>>, vector<1x8x8xf32>
    %310 = vector.shape_cast %309 : vector<1x8x8xf32> to vector<8x8xf32>
    %cst_203 = arith.constant dense<0.000000e+00> : vector<8x256xf32>
    %311 = tpu.matmul %310, %308, %cst_203 {dimension_numbers = #tpu.dot_dimension_numbers<[1], [0], [0], [1], [0, 0, 1, 1], [], []>} : vector<8x8xf32>, vector<8x256xf32>, vector<8x256xf32> -> vector<8x256xf32>
    %312 = arith.addf %305, %311 : vector<8x256xf32>
    %cst_204 = arith.constant 0.000000e+00 : f32
    %313 = vector.broadcast %cst_204 : f32 to vector<8x17xf32>
    %314 = vector.extract_strided_slice %265 {offsets = [0, 0], sizes = [8, 239], strides = [1, 1]} : vector<8x256xf32> to vector<8x239xf32>
    %315 = tpu.concatenate %313, %314 in 1 : vector<8x17xf32>, vector<8x239xf32> -> vector<8x256xf32>
    %c6_205 = arith.constant 6 : index
    %c0_206 = arith.constant 0 : index
    %c0_207 = arith.constant 0 : index
    %316 = vector.load %arg7[%c6_205, %c0_206, %c0_207] : memref<25x8x8xf32, #tpu.memory_space<vmem>>, vector<1x8x8xf32>
    %317 = vector.shape_cast %316 : vector<1x8x8xf32> to vector<8x8xf32>
    %cst_208 = arith.constant dense<0.000000e+00> : vector<8x256xf32>
    %318 = tpu.matmul %317, %315, %cst_208 {dimension_numbers = #tpu.dot_dimension_numbers<[1], [0], [0], [1], [0, 0, 1, 1], [], []>} : vector<8x8xf32>, vector<8x256xf32>, vector<8x256xf32> -> vector<8x256xf32>
    %319 = arith.addf %312, %318 : vector<8x256xf32>
    %cst_209 = arith.constant 0.000000e+00 : f32
    %320 = vector.broadcast %cst_209 : f32 to vector<8x16xf32>
    %321 = vector.extract_strided_slice %259 {offsets = [0, 0], sizes = [8, 240], strides = [1, 1]} : vector<8x256xf32> to vector<8x240xf32>
    %322 = tpu.concatenate %320, %321 in 1 : vector<8x16xf32>, vector<8x240xf32> -> vector<8x256xf32>
    %c7_210 = arith.constant 7 : index
    %c0_211 = arith.constant 0 : index
    %c0_212 = arith.constant 0 : index
    %323 = vector.load %arg7[%c7_210, %c0_211, %c0_212] : memref<25x8x8xf32, #tpu.memory_space<vmem>>, vector<1x8x8xf32>
    %324 = vector.shape_cast %323 : vector<1x8x8xf32> to vector<8x8xf32>
    %cst_213 = arith.constant dense<0.000000e+00> : vector<8x256xf32>
    %325 = tpu.matmul %324, %322, %cst_213 {dimension_numbers = #tpu.dot_dimension_numbers<[1], [0], [0], [1], [0, 0, 1, 1], [], []>} : vector<8x8xf32>, vector<8x256xf32>, vector<8x256xf32> -> vector<8x256xf32>
    %326 = arith.addf %319, %325 : vector<8x256xf32>
    %cst_214 = arith.constant 0.000000e+00 : f32
    %327 = vector.broadcast %cst_214 : f32 to vector<8x15xf32>
    %328 = vector.extract_strided_slice %268 {offsets = [0, 0], sizes = [8, 241], strides = [1, 1]} : vector<8x256xf32> to vector<8x241xf32>
    %329 = tpu.concatenate %327, %328 in 1 : vector<8x15xf32>, vector<8x241xf32> -> vector<8x256xf32>
    %c8_215 = arith.constant 8 : index
    %c0_216 = arith.constant 0 : index
    %c0_217 = arith.constant 0 : index
    %330 = vector.load %arg7[%c8_215, %c0_216, %c0_217] : memref<25x8x8xf32, #tpu.memory_space<vmem>>, vector<1x8x8xf32>
    %331 = vector.shape_cast %330 : vector<1x8x8xf32> to vector<8x8xf32>
    %cst_218 = arith.constant dense<0.000000e+00> : vector<8x256xf32>
    %332 = tpu.matmul %331, %329, %cst_218 {dimension_numbers = #tpu.dot_dimension_numbers<[1], [0], [0], [1], [0, 0, 1, 1], [], []>} : vector<8x8xf32>, vector<8x256xf32>, vector<8x256xf32> -> vector<8x256xf32>
    %333 = arith.addf %326, %332 : vector<8x256xf32>
    %cst_219 = arith.constant 0.000000e+00 : f32
    %334 = vector.broadcast %cst_219 : f32 to vector<8x14xf32>
    %335 = vector.extract_strided_slice %271 {offsets = [0, 0], sizes = [8, 242], strides = [1, 1]} : vector<8x256xf32> to vector<8x242xf32>
    %336 = tpu.concatenate %334, %335 in 1 : vector<8x14xf32>, vector<8x242xf32> -> vector<8x256xf32>
    %c9_220 = arith.constant 9 : index
    %c0_221 = arith.constant 0 : index
    %c0_222 = arith.constant 0 : index
    %337 = vector.load %arg7[%c9_220, %c0_221, %c0_222] : memref<25x8x8xf32, #tpu.memory_space<vmem>>, vector<1x8x8xf32>
    %338 = vector.shape_cast %337 : vector<1x8x8xf32> to vector<8x8xf32>
    %cst_223 = arith.constant dense<0.000000e+00> : vector<8x256xf32>
    %339 = tpu.matmul %338, %336, %cst_223 {dimension_numbers = #tpu.dot_dimension_numbers<[1], [0], [0], [1], [0, 0, 1, 1], [], []>} : vector<8x8xf32>, vector<8x256xf32>, vector<8x256xf32> -> vector<8x256xf32>
    %340 = arith.addf %333, %339 : vector<8x256xf32>
    %cst_224 = arith.constant 0.000000e+00 : f32
    %341 = vector.broadcast %cst_224 : f32 to vector<8x2xf32>
    %342 = vector.extract_strided_slice %262 {offsets = [0, 0], sizes = [8, 254], strides = [1, 1]} : vector<8x256xf32> to vector<8x254xf32>
    %343 = tpu.concatenate %341, %342 in 1 : vector<8x2xf32>, vector<8x254xf32> -> vector<8x256xf32>
    %c10_225 = arith.constant 10 : index
    %c0_226 = arith.constant 0 : index
    %c0_227 = arith.constant 0 : index
    %344 = vector.load %arg7[%c10_225, %c0_226, %c0_227] : memref<25x8x8xf32, #tpu.memory_space<vmem>>, vector<1x8x8xf32>
    %345 = vector.shape_cast %344 : vector<1x8x8xf32> to vector<8x8xf32>
    %cst_228 = arith.constant dense<0.000000e+00> : vector<8x256xf32>
    %346 = tpu.matmul %345, %343, %cst_228 {dimension_numbers = #tpu.dot_dimension_numbers<[1], [0], [0], [1], [0, 0, 1, 1], [], []>} : vector<8x8xf32>, vector<8x256xf32>, vector<8x256xf32> -> vector<8x256xf32>
    %347 = arith.addf %340, %346 : vector<8x256xf32>
    %cst_229 = arith.constant 0.000000e+00 : f32
    %348 = vector.broadcast %cst_229 : f32 to vector<8x1xf32>
    %349 = vector.extract_strided_slice %265 {offsets = [0, 0], sizes = [8, 255], strides = [1, 1]} : vector<8x256xf32> to vector<8x255xf32>
    %350 = tpu.concatenate %348, %349 in 1 : vector<8x1xf32>, vector<8x255xf32> -> vector<8x256xf32>
    %c11_230 = arith.constant 11 : index
    %c0_231 = arith.constant 0 : index
    %c0_232 = arith.constant 0 : index
    %351 = vector.load %arg7[%c11_230, %c0_231, %c0_232] : memref<25x8x8xf32, #tpu.memory_space<vmem>>, vector<1x8x8xf32>
    %352 = vector.shape_cast %351 : vector<1x8x8xf32> to vector<8x8xf32>
    %cst_233 = arith.constant dense<0.000000e+00> : vector<8x256xf32>
    %353 = tpu.matmul %352, %350, %cst_233 {dimension_numbers = #tpu.dot_dimension_numbers<[1], [0], [0], [1], [0, 0, 1, 1], [], []>} : vector<8x8xf32>, vector<8x256xf32>, vector<8x256xf32> -> vector<8x256xf32>
    %354 = arith.addf %347, %353 : vector<8x256xf32>
    %c12_234 = arith.constant 12 : index
    %c0_235 = arith.constant 0 : index
    %c0_236 = arith.constant 0 : index
    %355 = vector.load %arg7[%c12_234, %c0_235, %c0_236] : memref<25x8x8xf32, #tpu.memory_space<vmem>>, vector<1x8x8xf32>
    %356 = vector.shape_cast %355 : vector<1x8x8xf32> to vector<8x8xf32>
    %cst_237 = arith.constant dense<0.000000e+00> : vector<8x256xf32>
    %357 = tpu.matmul %356, %259, %cst_237 {dimension_numbers = #tpu.dot_dimension_numbers<[1], [0], [0], [1], [0, 0, 1, 1], [], []>} : vector<8x8xf32>, vector<8x256xf32>, vector<8x256xf32> -> vector<8x256xf32>
    %358 = arith.addf %354, %357 : vector<8x256xf32>
    %cst_238 = arith.constant 0.000000e+00 : f32
    %359 = vector.broadcast %cst_238 : f32 to vector<8x1xf32>
    %360 = vector.extract_strided_slice %268 {offsets = [0, 1], sizes = [8, 255], strides = [1, 1]} : vector<8x256xf32> to vector<8x255xf32>
    %361 = tpu.concatenate %360, %359 in 1 : vector<8x255xf32>, vector<8x1xf32> -> vector<8x256xf32>
    %c13_239 = arith.constant 13 : index
    %c0_240 = arith.constant 0 : index
    %c0_241 = arith.constant 0 : index
    %362 = vector.load %arg7[%c13_239, %c0_240, %c0_241] : memref<25x8x8xf32, #tpu.memory_space<vmem>>, vector<1x8x8xf32>
    %363 = vector.shape_cast %362 : vector<1x8x8xf32> to vector<8x8xf32>
    %cst_242 = arith.constant dense<0.000000e+00> : vector<8x256xf32>
    %364 = tpu.matmul %363, %361, %cst_242 {dimension_numbers = #tpu.dot_dimension_numbers<[1], [0], [0], [1], [0, 0, 1, 1], [], []>} : vector<8x8xf32>, vector<8x256xf32>, vector<8x256xf32> -> vector<8x256xf32>
    %365 = arith.addf %358, %364 : vector<8x256xf32>
    %cst_243 = arith.constant 0.000000e+00 : f32
    %366 = vector.broadcast %cst_243 : f32 to vector<8x2xf32>
    %367 = vector.extract_strided_slice %271 {offsets = [0, 2], sizes = [8, 254], strides = [1, 1]} : vector<8x256xf32> to vector<8x254xf32>
    %368 = tpu.concatenate %367, %366 in 1 : vector<8x254xf32>, vector<8x2xf32> -> vector<8x256xf32>
    %c14_244 = arith.constant 14 : index
    %c0_245 = arith.constant 0 : index
    %c0_246 = arith.constant 0 : index
    %369 = vector.load %arg7[%c14_244, %c0_245, %c0_246] : memref<25x8x8xf32, #tpu.memory_space<vmem>>, vector<1x8x8xf32>
    %370 = vector.shape_cast %369 : vector<1x8x8xf32> to vector<8x8xf32>
    %cst_247 = arith.constant dense<0.000000e+00> : vector<8x256xf32>
    %371 = tpu.matmul %370, %368, %cst_247 {dimension_numbers = #tpu.dot_dimension_numbers<[1], [0], [0], [1], [0, 0, 1, 1], [], []>} : vector<8x8xf32>, vector<8x256xf32>, vector<8x256xf32> -> vector<8x256xf32>
    %372 = arith.addf %365, %371 : vector<8x256xf32>
    %cst_248 = arith.constant 0.000000e+00 : f32
    %373 = vector.broadcast %cst_248 : f32 to vector<8x14xf32>
    %374 = vector.extract_strided_slice %262 {offsets = [0, 14], sizes = [8, 242], strides = [1, 1]} : vector<8x256xf32> to vector<8x242xf32>
    %375 = tpu.concatenate %374, %373 in 1 : vector<8x242xf32>, vector<8x14xf32> -> vector<8x256xf32>
    %c15_249 = arith.constant 15 : index
    %c0_250 = arith.constant 0 : index
    %c0_251 = arith.constant 0 : index
    %376 = vector.load %arg7[%c15_249, %c0_250, %c0_251] : memref<25x8x8xf32, #tpu.memory_space<vmem>>, vector<1x8x8xf32>
    %377 = vector.shape_cast %376 : vector<1x8x8xf32> to vector<8x8xf32>
    %cst_252 = arith.constant dense<0.000000e+00> : vector<8x256xf32>
    %378 = tpu.matmul %377, %375, %cst_252 {dimension_numbers = #tpu.dot_dimension_numbers<[1], [0], [0], [1], [0, 0, 1, 1], [], []>} : vector<8x8xf32>, vector<8x256xf32>, vector<8x256xf32> -> vector<8x256xf32>
    %379 = arith.addf %372, %378 : vector<8x256xf32>
    %cst_253 = arith.constant 0.000000e+00 : f32
    %380 = vector.broadcast %cst_253 : f32 to vector<8x15xf32>
    %381 = vector.extract_strided_slice %265 {offsets = [0, 15], sizes = [8, 241], strides = [1, 1]} : vector<8x256xf32> to vector<8x241xf32>
    %382 = tpu.concatenate %381, %380 in 1 : vector<8x241xf32>, vector<8x15xf32> -> vector<8x256xf32>
    %c16_254 = arith.constant 16 : index
    %c0_255 = arith.constant 0 : index
    %c0_256 = arith.constant 0 : index
    %383 = vector.load %arg7[%c16_254, %c0_255, %c0_256] : memref<25x8x8xf32, #tpu.memory_space<vmem>>, vector<1x8x8xf32>
    %384 = vector.shape_cast %383 : vector<1x8x8xf32> to vector<8x8xf32>
    %cst_257 = arith.constant dense<0.000000e+00> : vector<8x256xf32>
    %385 = tpu.matmul %384, %382, %cst_257 {dimension_numbers = #tpu.dot_dimension_numbers<[1], [0], [0], [1], [0, 0, 1, 1], [], []>} : vector<8x8xf32>, vector<8x256xf32>, vector<8x256xf32> -> vector<8x256xf32>
    %386 = arith.addf %379, %385 : vector<8x256xf32>
    %cst_258 = arith.constant 0.000000e+00 : f32
    %387 = vector.broadcast %cst_258 : f32 to vector<8x16xf32>
    %388 = vector.extract_strided_slice %259 {offsets = [0, 16], sizes = [8, 240], strides = [1, 1]} : vector<8x256xf32> to vector<8x240xf32>
    %389 = tpu.concatenate %388, %387 in 1 : vector<8x240xf32>, vector<8x16xf32> -> vector<8x256xf32>
    %c17_259 = arith.constant 17 : index
    %c0_260 = arith.constant 0 : index
    %c0_261 = arith.constant 0 : index
    %390 = vector.load %arg7[%c17_259, %c0_260, %c0_261] : memref<25x8x8xf32, #tpu.memory_space<vmem>>, vector<1x8x8xf32>
    %391 = vector.shape_cast %390 : vector<1x8x8xf32> to vector<8x8xf32>
    %cst_262 = arith.constant dense<0.000000e+00> : vector<8x256xf32>
    %392 = tpu.matmul %391, %389, %cst_262 {dimension_numbers = #tpu.dot_dimension_numbers<[1], [0], [0], [1], [0, 0, 1, 1], [], []>} : vector<8x8xf32>, vector<8x256xf32>, vector<8x256xf32> -> vector<8x256xf32>
    %393 = arith.addf %386, %392 : vector<8x256xf32>
    %cst_263 = arith.constant 0.000000e+00 : f32
    %394 = vector.broadcast %cst_263 : f32 to vector<8x17xf32>
    %395 = vector.extract_strided_slice %268 {offsets = [0, 17], sizes = [8, 239], strides = [1, 1]} : vector<8x256xf32> to vector<8x239xf32>
    %396 = tpu.concatenate %395, %394 in 1 : vector<8x239xf32>, vector<8x17xf32> -> vector<8x256xf32>
    %c18_264 = arith.constant 18 : index
    %c0_265 = arith.constant 0 : index
    %c0_266 = arith.constant 0 : index
    %397 = vector.load %arg7[%c18_264, %c0_265, %c0_266] : memref<25x8x8xf32, #tpu.memory_space<vmem>>, vector<1x8x8xf32>
    %398 = vector.shape_cast %397 : vector<1x8x8xf32> to vector<8x8xf32>
    %cst_267 = arith.constant dense<0.000000e+00> : vector<8x256xf32>
    %399 = tpu.matmul %398, %396, %cst_267 {dimension_numbers = #tpu.dot_dimension_numbers<[1], [0], [0], [1], [0, 0, 1, 1], [], []>} : vector<8x8xf32>, vector<8x256xf32>, vector<8x256xf32> -> vector<8x256xf32>
    %400 = arith.addf %393, %399 : vector<8x256xf32>
    %cst_268 = arith.constant 0.000000e+00 : f32
    %401 = vector.broadcast %cst_268 : f32 to vector<8x18xf32>
    %402 = vector.extract_strided_slice %271 {offsets = [0, 18], sizes = [8, 238], strides = [1, 1]} : vector<8x256xf32> to vector<8x238xf32>
    %403 = tpu.concatenate %402, %401 in 1 : vector<8x238xf32>, vector<8x18xf32> -> vector<8x256xf32>
    %c19_269 = arith.constant 19 : index
    %c0_270 = arith.constant 0 : index
    %c0_271 = arith.constant 0 : index
    %404 = vector.load %arg7[%c19_269, %c0_270, %c0_271] : memref<25x8x8xf32, #tpu.memory_space<vmem>>, vector<1x8x8xf32>
    %405 = vector.shape_cast %404 : vector<1x8x8xf32> to vector<8x8xf32>
    %cst_272 = arith.constant dense<0.000000e+00> : vector<8x256xf32>
    %406 = tpu.matmul %405, %403, %cst_272 {dimension_numbers = #tpu.dot_dimension_numbers<[1], [0], [0], [1], [0, 0, 1, 1], [], []>} : vector<8x8xf32>, vector<8x256xf32>, vector<8x256xf32> -> vector<8x256xf32>
    %407 = arith.addf %400, %406 : vector<8x256xf32>
    %cst_273 = arith.constant 0.000000e+00 : f32
    %408 = vector.broadcast %cst_273 : f32 to vector<8x30xf32>
    %409 = vector.extract_strided_slice %262 {offsets = [0, 30], sizes = [8, 226], strides = [1, 1]} : vector<8x256xf32> to vector<8x226xf32>
    %410 = tpu.concatenate %409, %408 in 1 : vector<8x226xf32>, vector<8x30xf32> -> vector<8x256xf32>
    %c20_274 = arith.constant 20 : index
    %c0_275 = arith.constant 0 : index
    %c0_276 = arith.constant 0 : index
    %411 = vector.load %arg7[%c20_274, %c0_275, %c0_276] : memref<25x8x8xf32, #tpu.memory_space<vmem>>, vector<1x8x8xf32>
    %412 = vector.shape_cast %411 : vector<1x8x8xf32> to vector<8x8xf32>
    %cst_277 = arith.constant dense<0.000000e+00> : vector<8x256xf32>
    %413 = tpu.matmul %412, %410, %cst_277 {dimension_numbers = #tpu.dot_dimension_numbers<[1], [0], [0], [1], [0, 0, 1, 1], [], []>} : vector<8x8xf32>, vector<8x256xf32>, vector<8x256xf32> -> vector<8x256xf32>
    %414 = arith.addf %407, %413 : vector<8x256xf32>
    %cst_278 = arith.constant 0.000000e+00 : f32
    %415 = vector.broadcast %cst_278 : f32 to vector<8x31xf32>
    %416 = vector.extract_strided_slice %265 {offsets = [0, 31], sizes = [8, 225], strides = [1, 1]} : vector<8x256xf32> to vector<8x225xf32>
    %417 = tpu.concatenate %416, %415 in 1 : vector<8x225xf32>, vector<8x31xf32> -> vector<8x256xf32>
    %c21_279 = arith.constant 21 : index
    %c0_280 = arith.constant 0 : index
    %c0_281 = arith.constant 0 : index
    %418 = vector.load %arg7[%c21_279, %c0_280, %c0_281] : memref<25x8x8xf32, #tpu.memory_space<vmem>>, vector<1x8x8xf32>
    %419 = vector.shape_cast %418 : vector<1x8x8xf32> to vector<8x8xf32>
    %cst_282 = arith.constant dense<0.000000e+00> : vector<8x256xf32>
    %420 = tpu.matmul %419, %417, %cst_282 {dimension_numbers = #tpu.dot_dimension_numbers<[1], [0], [0], [1], [0, 0, 1, 1], [], []>} : vector<8x8xf32>, vector<8x256xf32>, vector<8x256xf32> -> vector<8x256xf32>
    %421 = arith.addf %414, %420 : vector<8x256xf32>
    %cst_283 = arith.constant 0.000000e+00 : f32
    %422 = vector.broadcast %cst_283 : f32 to vector<8x32xf32>
    %423 = vector.extract_strided_slice %259 {offsets = [0, 32], sizes = [8, 224], strides = [1, 1]} : vector<8x256xf32> to vector<8x224xf32>
    %424 = tpu.concatenate %423, %422 in 1 : vector<8x224xf32>, vector<8x32xf32> -> vector<8x256xf32>
    %c22_284 = arith.constant 22 : index
    %c0_285 = arith.constant 0 : index
    %c0_286 = arith.constant 0 : index
    %425 = vector.load %arg7[%c22_284, %c0_285, %c0_286] : memref<25x8x8xf32, #tpu.memory_space<vmem>>, vector<1x8x8xf32>
    %426 = vector.shape_cast %425 : vector<1x8x8xf32> to vector<8x8xf32>
    %cst_287 = arith.constant dense<0.000000e+00> : vector<8x256xf32>
    %427 = tpu.matmul %426, %424, %cst_287 {dimension_numbers = #tpu.dot_dimension_numbers<[1], [0], [0], [1], [0, 0, 1, 1], [], []>} : vector<8x8xf32>, vector<8x256xf32>, vector<8x256xf32> -> vector<8x256xf32>
    %428 = arith.addf %421, %427 : vector<8x256xf32>
    %cst_288 = arith.constant 0.000000e+00 : f32
    %429 = vector.broadcast %cst_288 : f32 to vector<8x33xf32>
    %430 = vector.extract_strided_slice %268 {offsets = [0, 33], sizes = [8, 223], strides = [1, 1]} : vector<8x256xf32> to vector<8x223xf32>
    %431 = tpu.concatenate %430, %429 in 1 : vector<8x223xf32>, vector<8x33xf32> -> vector<8x256xf32>
    %c23_289 = arith.constant 23 : index
    %c0_290 = arith.constant 0 : index
    %c0_291 = arith.constant 0 : index
    %432 = vector.load %arg7[%c23_289, %c0_290, %c0_291] : memref<25x8x8xf32, #tpu.memory_space<vmem>>, vector<1x8x8xf32>
    %433 = vector.shape_cast %432 : vector<1x8x8xf32> to vector<8x8xf32>
    %cst_292 = arith.constant dense<0.000000e+00> : vector<8x256xf32>
    %434 = tpu.matmul %433, %431, %cst_292 {dimension_numbers = #tpu.dot_dimension_numbers<[1], [0], [0], [1], [0, 0, 1, 1], [], []>} : vector<8x8xf32>, vector<8x256xf32>, vector<8x256xf32> -> vector<8x256xf32>
    %435 = arith.addf %428, %434 : vector<8x256xf32>
    %cst_293 = arith.constant 0.000000e+00 : f32
    %436 = vector.broadcast %cst_293 : f32 to vector<8x34xf32>
    %437 = vector.extract_strided_slice %271 {offsets = [0, 34], sizes = [8, 222], strides = [1, 1]} : vector<8x256xf32> to vector<8x222xf32>
    %438 = tpu.concatenate %437, %436 in 1 : vector<8x222xf32>, vector<8x34xf32> -> vector<8x256xf32>
    %c24_294 = arith.constant 24 : index
    %c0_295 = arith.constant 0 : index
    %c0_296 = arith.constant 0 : index
    %439 = vector.load %arg7[%c24_294, %c0_295, %c0_296] : memref<25x8x8xf32, #tpu.memory_space<vmem>>, vector<1x8x8xf32>
    %440 = vector.shape_cast %439 : vector<1x8x8xf32> to vector<8x8xf32>
    %cst_297 = arith.constant dense<0.000000e+00> : vector<8x256xf32>
    %441 = tpu.matmul %440, %438, %cst_297 {dimension_numbers = #tpu.dot_dimension_numbers<[1], [0], [0], [1], [0, 0, 1, 1], [], []>} : vector<8x8xf32>, vector<8x256xf32>, vector<8x256xf32> -> vector<8x256xf32>
    %442 = arith.addf %435, %441 : vector<8x256xf32>
    %c0_298 = arith.constant 0 : index
    %c0_299 = arith.constant 0 : index
    %c0_300 = arith.constant 0 : index
    %443 = vector.load %arg8[%c0_298, %c0_299, %c0_300] : memref<1x8x8xf32, #tpu.memory_space<vmem>>, vector<1x8x8xf32>
    %444 = vector.shape_cast %443 : vector<1x8x8xf32> to vector<8x8xf32>
    %cst_301 = arith.constant dense<0.000000e+00> : vector<8x256xf32>
    %445 = tpu.matmul %444, %442, %cst_301 {dimension_numbers = #tpu.dot_dimension_numbers<[1], [0], [0], [1], [0, 0, 1, 1], [], []>} : vector<8x8xf32>, vector<8x256xf32>, vector<8x256xf32> -> vector<8x256xf32>
    %446 = arith.addf %68, %445 : vector<8x256xf32>
    %cst_302 = arith.constant 0.000000e+00 : f32
    %447 = vector.broadcast %cst_302 : f32 to vector<8x256xf32>
    %448 = arith.cmpf oge, %446, %447 : vector<8x256xf32>
    %cst_303 = arith.constant 0.00999999977 : f32
    %449 = vector.broadcast %cst_303 : f32 to vector<8x256xf32>
    %450 = arith.mulf %449, %446 : vector<8x256xf32>
    %451 = arith.select %448, %446, %450 : vector<8x256xi1>, vector<8x256xf32>
    %c1_304 = arith.constant 1 : index
    %c0_305 = arith.constant 0 : index
    %452 = vector.load %arg3[%c1_304, %c0_305] : memref<4x256xf32, #tpu.memory_space<vmem>>, vector<1x256xf32>
    %453 = vector.broadcast %452 : vector<1x256xf32> to vector<8x256xf32>
    %454 = arith.mulf %451, %453 : vector<8x256xf32>
    %c2_306 = arith.constant 2 : index
    %c0_307 = arith.constant 0 : index
    %455 = vector.load %arg3[%c2_306, %c0_307] : memref<4x256xf32, #tpu.memory_space<vmem>>, vector<1x256xf32>
    %456 = vector.broadcast %455 : vector<1x256xf32> to vector<8x256xf32>
    %457 = arith.mulf %451, %456 : vector<8x256xf32>
    %cst_308 = arith.constant 0.000000e+00 : f32
    %458 = vector.broadcast %cst_308 : f32 to vector<8x17xf32>
    %459 = vector.extract_strided_slice %454 {offsets = [0, 0], sizes = [8, 239], strides = [1, 1]} : vector<8x256xf32> to vector<8x239xf32>
    %460 = tpu.concatenate %458, %459 in 1 : vector<8x17xf32>, vector<8x239xf32> -> vector<8x256xf32>
    %c0_309 = arith.constant 0 : index
    %c0_310 = arith.constant 0 : index
    %c0_311 = arith.constant 0 : index
    %461 = vector.load %arg9[%c0_309, %c0_310, %c0_311] : memref<9x4x8xf32, #tpu.memory_space<vmem>>, vector<1x4x8xf32>
    %462 = vector.shape_cast %461 : vector<1x4x8xf32> to vector<4x8xf32>
    %cst_312 = arith.constant dense<0.000000e+00> : vector<4x256xf32>
    %463 = tpu.matmul %462, %460, %cst_312 {dimension_numbers = #tpu.dot_dimension_numbers<[1], [0], [0], [1], [0, 0, 1, 1], [], []>} : vector<4x8xf32>, vector<8x256xf32>, vector<4x256xf32> -> vector<4x256xf32>
    %cst_313 = arith.constant 0.000000e+00 : f32
    %464 = vector.broadcast %cst_313 : f32 to vector<8x16xf32>
    %465 = vector.extract_strided_slice %451 {offsets = [0, 0], sizes = [8, 240], strides = [1, 1]} : vector<8x256xf32> to vector<8x240xf32>
    %466 = tpu.concatenate %464, %465 in 1 : vector<8x16xf32>, vector<8x240xf32> -> vector<8x256xf32>
    %c1_314 = arith.constant 1 : index
    %c0_315 = arith.constant 0 : index
    %c0_316 = arith.constant 0 : index
    %467 = vector.load %arg9[%c1_314, %c0_315, %c0_316] : memref<9x4x8xf32, #tpu.memory_space<vmem>>, vector<1x4x8xf32>
    %468 = vector.shape_cast %467 : vector<1x4x8xf32> to vector<4x8xf32>
    %cst_317 = arith.constant dense<0.000000e+00> : vector<4x256xf32>
    %469 = tpu.matmul %468, %466, %cst_317 {dimension_numbers = #tpu.dot_dimension_numbers<[1], [0], [0], [1], [0, 0, 1, 1], [], []>} : vector<4x8xf32>, vector<8x256xf32>, vector<4x256xf32> -> vector<4x256xf32>
    %470 = arith.addf %463, %469 : vector<4x256xf32>
    %cst_318 = arith.constant 0.000000e+00 : f32
    %471 = vector.broadcast %cst_318 : f32 to vector<8x15xf32>
    %472 = vector.extract_strided_slice %457 {offsets = [0, 0], sizes = [8, 241], strides = [1, 1]} : vector<8x256xf32> to vector<8x241xf32>
    %473 = tpu.concatenate %471, %472 in 1 : vector<8x15xf32>, vector<8x241xf32> -> vector<8x256xf32>
    %c2_319 = arith.constant 2 : index
    %c0_320 = arith.constant 0 : index
    %c0_321 = arith.constant 0 : index
    %474 = vector.load %arg9[%c2_319, %c0_320, %c0_321] : memref<9x4x8xf32, #tpu.memory_space<vmem>>, vector<1x4x8xf32>
    %475 = vector.shape_cast %474 : vector<1x4x8xf32> to vector<4x8xf32>
    %cst_322 = arith.constant dense<0.000000e+00> : vector<4x256xf32>
    %476 = tpu.matmul %475, %473, %cst_322 {dimension_numbers = #tpu.dot_dimension_numbers<[1], [0], [0], [1], [0, 0, 1, 1], [], []>} : vector<4x8xf32>, vector<8x256xf32>, vector<4x256xf32> -> vector<4x256xf32>
    %477 = arith.addf %470, %476 : vector<4x256xf32>
    %cst_323 = arith.constant 0.000000e+00 : f32
    %478 = vector.broadcast %cst_323 : f32 to vector<8x1xf32>
    %479 = vector.extract_strided_slice %454 {offsets = [0, 0], sizes = [8, 255], strides = [1, 1]} : vector<8x256xf32> to vector<8x255xf32>
    %480 = tpu.concatenate %478, %479 in 1 : vector<8x1xf32>, vector<8x255xf32> -> vector<8x256xf32>
    %c3_324 = arith.constant 3 : index
    %c0_325 = arith.constant 0 : index
    %c0_326 = arith.constant 0 : index
    %481 = vector.load %arg9[%c3_324, %c0_325, %c0_326] : memref<9x4x8xf32, #tpu.memory_space<vmem>>, vector<1x4x8xf32>
    %482 = vector.shape_cast %481 : vector<1x4x8xf32> to vector<4x8xf32>
    %cst_327 = arith.constant dense<0.000000e+00> : vector<4x256xf32>
    %483 = tpu.matmul %482, %480, %cst_327 {dimension_numbers = #tpu.dot_dimension_numbers<[1], [0], [0], [1], [0, 0, 1, 1], [], []>} : vector<4x8xf32>, vector<8x256xf32>, vector<4x256xf32> -> vector<4x256xf32>
    %484 = arith.addf %477, %483 : vector<4x256xf32>
    %c4_328 = arith.constant 4 : index
    %c0_329 = arith.constant 0 : index
    %c0_330 = arith.constant 0 : index
    %485 = vector.load %arg9[%c4_328, %c0_329, %c0_330] : memref<9x4x8xf32, #tpu.memory_space<vmem>>, vector<1x4x8xf32>
    %486 = vector.shape_cast %485 : vector<1x4x8xf32> to vector<4x8xf32>
    %cst_331 = arith.constant dense<0.000000e+00> : vector<4x256xf32>
    %487 = tpu.matmul %486, %451, %cst_331 {dimension_numbers = #tpu.dot_dimension_numbers<[1], [0], [0], [1], [0, 0, 1, 1], [], []>} : vector<4x8xf32>, vector<8x256xf32>, vector<4x256xf32> -> vector<4x256xf32>
    %488 = arith.addf %484, %487 : vector<4x256xf32>
    %cst_332 = arith.constant 0.000000e+00 : f32
    %489 = vector.broadcast %cst_332 : f32 to vector<8x1xf32>
    %490 = vector.extract_strided_slice %457 {offsets = [0, 1], sizes = [8, 255], strides = [1, 1]} : vector<8x256xf32> to vector<8x255xf32>
    %491 = tpu.concatenate %490, %489 in 1 : vector<8x255xf32>, vector<8x1xf32> -> vector<8x256xf32>
    %c5_333 = arith.constant 5 : index
    %c0_334 = arith.constant 0 : index
    %c0_335 = arith.constant 0 : index
    %492 = vector.load %arg9[%c5_333, %c0_334, %c0_335] : memref<9x4x8xf32, #tpu.memory_space<vmem>>, vector<1x4x8xf32>
    %493 = vector.shape_cast %492 : vector<1x4x8xf32> to vector<4x8xf32>
    %cst_336 = arith.constant dense<0.000000e+00> : vector<4x256xf32>
    %494 = tpu.matmul %493, %491, %cst_336 {dimension_numbers = #tpu.dot_dimension_numbers<[1], [0], [0], [1], [0, 0, 1, 1], [], []>} : vector<4x8xf32>, vector<8x256xf32>, vector<4x256xf32> -> vector<4x256xf32>
    %495 = arith.addf %488, %494 : vector<4x256xf32>
    %cst_337 = arith.constant 0.000000e+00 : f32
    %496 = vector.broadcast %cst_337 : f32 to vector<8x15xf32>
    %497 = vector.extract_strided_slice %454 {offsets = [0, 15], sizes = [8, 241], strides = [1, 1]} : vector<8x256xf32> to vector<8x241xf32>
    %498 = tpu.concatenate %497, %496 in 1 : vector<8x241xf32>, vector<8x15xf32> -> vector<8x256xf32>
    %c6_338 = arith.constant 6 : index
    %c0_339 = arith.constant 0 : index
    %c0_340 = arith.constant 0 : index
    %499 = vector.load %arg9[%c6_338, %c0_339, %c0_340] : memref<9x4x8xf32, #tpu.memory_space<vmem>>, vector<1x4x8xf32>
    %500 = vector.shape_cast %499 : vector<1x4x8xf32> to vector<4x8xf32>
    %cst_341 = arith.constant dense<0.000000e+00> : vector<4x256xf32>
    %501 = tpu.matmul %500, %498, %cst_341 {dimension_numbers = #tpu.dot_dimension_numbers<[1], [0], [0], [1], [0, 0, 1, 1], [], []>} : vector<4x8xf32>, vector<8x256xf32>, vector<4x256xf32> -> vector<4x256xf32>
    %502 = arith.addf %495, %501 : vector<4x256xf32>
    %cst_342 = arith.constant 0.000000e+00 : f32
    %503 = vector.broadcast %cst_342 : f32 to vector<8x16xf32>
    %504 = vector.extract_strided_slice %451 {offsets = [0, 16], sizes = [8, 240], strides = [1, 1]} : vector<8x256xf32> to vector<8x240xf32>
    %505 = tpu.concatenate %504, %503 in 1 : vector<8x240xf32>, vector<8x16xf32> -> vector<8x256xf32>
    %c7_343 = arith.constant 7 : index
    %c0_344 = arith.constant 0 : index
    %c0_345 = arith.constant 0 : index
    %506 = vector.load %arg9[%c7_343, %c0_344, %c0_345] : memref<9x4x8xf32, #tpu.memory_space<vmem>>, vector<1x4x8xf32>
    %507 = vector.shape_cast %506 : vector<1x4x8xf32> to vector<4x8xf32>
    %cst_346 = arith.constant dense<0.000000e+00> : vector<4x256xf32>
    %508 = tpu.matmul %507, %505, %cst_346 {dimension_numbers = #tpu.dot_dimension_numbers<[1], [0], [0], [1], [0, 0, 1, 1], [], []>} : vector<4x8xf32>, vector<8x256xf32>, vector<4x256xf32> -> vector<4x256xf32>
    %509 = arith.addf %502, %508 : vector<4x256xf32>
    %cst_347 = arith.constant 0.000000e+00 : f32
    %510 = vector.broadcast %cst_347 : f32 to vector<8x17xf32>
    %511 = vector.extract_strided_slice %457 {offsets = [0, 17], sizes = [8, 239], strides = [1, 1]} : vector<8x256xf32> to vector<8x239xf32>
    %512 = tpu.concatenate %511, %510 in 1 : vector<8x239xf32>, vector<8x17xf32> -> vector<8x256xf32>
    %c8_348 = arith.constant 8 : index
    %c0_349 = arith.constant 0 : index
    %c0_350 = arith.constant 0 : index
    %513 = vector.load %arg9[%c8_348, %c0_349, %c0_350] : memref<9x4x8xf32, #tpu.memory_space<vmem>>, vector<1x4x8xf32>
    %514 = vector.shape_cast %513 : vector<1x4x8xf32> to vector<4x8xf32>
    %cst_351 = arith.constant dense<0.000000e+00> : vector<4x256xf32>
    %515 = tpu.matmul %514, %512, %cst_351 {dimension_numbers = #tpu.dot_dimension_numbers<[1], [0], [0], [1], [0, 0, 1, 1], [], []>} : vector<4x8xf32>, vector<8x256xf32>, vector<4x256xf32> -> vector<4x256xf32>
    %516 = arith.addf %509, %515 : vector<4x256xf32>
    %517 = arith.subf %3, %516 : vector<4x256xf32>
    %c1_352 = arith.constant 1 : index
    %c0_353 = arith.constant 0 : index
    %518 = vector.load %arg3[%c1_352, %c0_353] : memref<4x256xf32, #tpu.memory_space<vmem>>, vector<1x256xf32>
    %519 = vector.broadcast %518 : vector<1x256xf32> to vector<4x256xf32>
    %520 = arith.mulf %517, %519 : vector<4x256xf32>
    %c2_354 = arith.constant 2 : index
    %c0_355 = arith.constant 0 : index
    %521 = vector.load %arg3[%c2_354, %c0_355] : memref<4x256xf32, #tpu.memory_space<vmem>>, vector<1x256xf32>
    %522 = vector.broadcast %521 : vector<1x256xf32> to vector<4x256xf32>
    %523 = arith.mulf %517, %522 : vector<4x256xf32>
    %cst_356 = arith.constant 0.000000e+00 : f32
    %524 = vector.broadcast %cst_356 : f32 to vector<4x17xf32>
    %525 = vector.extract_strided_slice %520 {offsets = [0, 0], sizes = [4, 239], strides = [1, 1]} : vector<4x256xf32> to vector<4x239xf32>
    %526 = tpu.concatenate %524, %525 in 1 : vector<4x17xf32>, vector<4x239xf32> -> vector<4x256xf32>
    %c0_357 = arith.constant 0 : index
    %c0_358 = arith.constant 0 : index
    %c0_359 = arith.constant 0 : index
    %527 = vector.load %arg10[%c0_357, %c0_358, %c0_359] : memref<9x8x4xf32, #tpu.memory_space<vmem>>, vector<1x8x4xf32>
    %528 = vector.shape_cast %527 : vector<1x8x4xf32> to vector<8x4xf32>
    %cst_360 = arith.constant dense<0.000000e+00> : vector<8x256xf32>
    %529 = tpu.matmul %528, %526, %cst_360 {dimension_numbers = #tpu.dot_dimension_numbers<[1], [0], [0], [1], [0, 0, 1, 1], [], []>} : vector<8x4xf32>, vector<4x256xf32>, vector<8x256xf32> -> vector<8x256xf32>
    %cst_361 = arith.constant 0.000000e+00 : f32
    %530 = vector.broadcast %cst_361 : f32 to vector<4x16xf32>
    %531 = vector.extract_strided_slice %517 {offsets = [0, 0], sizes = [4, 240], strides = [1, 1]} : vector<4x256xf32> to vector<4x240xf32>
    %532 = tpu.concatenate %530, %531 in 1 : vector<4x16xf32>, vector<4x240xf32> -> vector<4x256xf32>
    %c1_362 = arith.constant 1 : index
    %c0_363 = arith.constant 0 : index
    %c0_364 = arith.constant 0 : index
    %533 = vector.load %arg10[%c1_362, %c0_363, %c0_364] : memref<9x8x4xf32, #tpu.memory_space<vmem>>, vector<1x8x4xf32>
    %534 = vector.shape_cast %533 : vector<1x8x4xf32> to vector<8x4xf32>
    %cst_365 = arith.constant dense<0.000000e+00> : vector<8x256xf32>
    %535 = tpu.matmul %534, %532, %cst_365 {dimension_numbers = #tpu.dot_dimension_numbers<[1], [0], [0], [1], [0, 0, 1, 1], [], []>} : vector<8x4xf32>, vector<4x256xf32>, vector<8x256xf32> -> vector<8x256xf32>
    %536 = arith.addf %529, %535 : vector<8x256xf32>
    %cst_366 = arith.constant 0.000000e+00 : f32
    %537 = vector.broadcast %cst_366 : f32 to vector<4x15xf32>
    %538 = vector.extract_strided_slice %523 {offsets = [0, 0], sizes = [4, 241], strides = [1, 1]} : vector<4x256xf32> to vector<4x241xf32>
    %539 = tpu.concatenate %537, %538 in 1 : vector<4x15xf32>, vector<4x241xf32> -> vector<4x256xf32>
    %c2_367 = arith.constant 2 : index
    %c0_368 = arith.constant 0 : index
    %c0_369 = arith.constant 0 : index
    %540 = vector.load %arg10[%c2_367, %c0_368, %c0_369] : memref<9x8x4xf32, #tpu.memory_space<vmem>>, vector<1x8x4xf32>
    %541 = vector.shape_cast %540 : vector<1x8x4xf32> to vector<8x4xf32>
    %cst_370 = arith.constant dense<0.000000e+00> : vector<8x256xf32>
    %542 = tpu.matmul %541, %539, %cst_370 {dimension_numbers = #tpu.dot_dimension_numbers<[1], [0], [0], [1], [0, 0, 1, 1], [], []>} : vector<8x4xf32>, vector<4x256xf32>, vector<8x256xf32> -> vector<8x256xf32>
    %543 = arith.addf %536, %542 : vector<8x256xf32>
    %cst_371 = arith.constant 0.000000e+00 : f32
    %544 = vector.broadcast %cst_371 : f32 to vector<4x1xf32>
    %545 = vector.extract_strided_slice %520 {offsets = [0, 0], sizes = [4, 255], strides = [1, 1]} : vector<4x256xf32> to vector<4x255xf32>
    %546 = tpu.concatenate %544, %545 in 1 : vector<4x1xf32>, vector<4x255xf32> -> vector<4x256xf32>
    %c3_372 = arith.constant 3 : index
    %c0_373 = arith.constant 0 : index
    %c0_374 = arith.constant 0 : index
    %547 = vector.load %arg10[%c3_372, %c0_373, %c0_374] : memref<9x8x4xf32, #tpu.memory_space<vmem>>, vector<1x8x4xf32>
    %548 = vector.shape_cast %547 : vector<1x8x4xf32> to vector<8x4xf32>
    %cst_375 = arith.constant dense<0.000000e+00> : vector<8x256xf32>
    %549 = tpu.matmul %548, %546, %cst_375 {dimension_numbers = #tpu.dot_dimension_numbers<[1], [0], [0], [1], [0, 0, 1, 1], [], []>} : vector<8x4xf32>, vector<4x256xf32>, vector<8x256xf32> -> vector<8x256xf32>
    %550 = arith.addf %543, %549 : vector<8x256xf32>
    %c4_376 = arith.constant 4 : index
    %c0_377 = arith.constant 0 : index
    %c0_378 = arith.constant 0 : index
    %551 = vector.load %arg10[%c4_376, %c0_377, %c0_378] : memref<9x8x4xf32, #tpu.memory_space<vmem>>, vector<1x8x4xf32>
    %552 = vector.shape_cast %551 : vector<1x8x4xf32> to vector<8x4xf32>
    %cst_379 = arith.constant dense<0.000000e+00> : vector<8x256xf32>
    %553 = tpu.matmul %552, %517, %cst_379 {dimension_numbers = #tpu.dot_dimension_numbers<[1], [0], [0], [1], [0, 0, 1, 1], [], []>} : vector<8x4xf32>, vector<4x256xf32>, vector<8x256xf32> -> vector<8x256xf32>
    %554 = arith.addf %550, %553 : vector<8x256xf32>
    %cst_380 = arith.constant 0.000000e+00 : f32
    %555 = vector.broadcast %cst_380 : f32 to vector<4x1xf32>
    %556 = vector.extract_strided_slice %523 {offsets = [0, 1], sizes = [4, 255], strides = [1, 1]} : vector<4x256xf32> to vector<4x255xf32>
    %557 = tpu.concatenate %556, %555 in 1 : vector<4x255xf32>, vector<4x1xf32> -> vector<4x256xf32>
    %c5_381 = arith.constant 5 : index
    %c0_382 = arith.constant 0 : index
    %c0_383 = arith.constant 0 : index
    %558 = vector.load %arg10[%c5_381, %c0_382, %c0_383] : memref<9x8x4xf32, #tpu.memory_space<vmem>>, vector<1x8x4xf32>
    %559 = vector.shape_cast %558 : vector<1x8x4xf32> to vector<8x4xf32>
    %cst_384 = arith.constant dense<0.000000e+00> : vector<8x256xf32>
    %560 = tpu.matmul %559, %557, %cst_384 {dimension_numbers = #tpu.dot_dimension_numbers<[1], [0], [0], [1], [0, 0, 1, 1], [], []>} : vector<8x4xf32>, vector<4x256xf32>, vector<8x256xf32> -> vector<8x256xf32>
    %561 = arith.addf %554, %560 : vector<8x256xf32>
    %cst_385 = arith.constant 0.000000e+00 : f32
    %562 = vector.broadcast %cst_385 : f32 to vector<4x15xf32>
    %563 = vector.extract_strided_slice %520 {offsets = [0, 15], sizes = [4, 241], strides = [1, 1]} : vector<4x256xf32> to vector<4x241xf32>
    %564 = tpu.concatenate %563, %562 in 1 : vector<4x241xf32>, vector<4x15xf32> -> vector<4x256xf32>
    %c6_386 = arith.constant 6 : index
    %c0_387 = arith.constant 0 : index
    %c0_388 = arith.constant 0 : index
    %565 = vector.load %arg10[%c6_386, %c0_387, %c0_388] : memref<9x8x4xf32, #tpu.memory_space<vmem>>, vector<1x8x4xf32>
    %566 = vector.shape_cast %565 : vector<1x8x4xf32> to vector<8x4xf32>
    %cst_389 = arith.constant dense<0.000000e+00> : vector<8x256xf32>
    %567 = tpu.matmul %566, %564, %cst_389 {dimension_numbers = #tpu.dot_dimension_numbers<[1], [0], [0], [1], [0, 0, 1, 1], [], []>} : vector<8x4xf32>, vector<4x256xf32>, vector<8x256xf32> -> vector<8x256xf32>
    %568 = arith.addf %561, %567 : vector<8x256xf32>
    %cst_390 = arith.constant 0.000000e+00 : f32
    %569 = vector.broadcast %cst_390 : f32 to vector<4x16xf32>
    %570 = vector.extract_strided_slice %517 {offsets = [0, 16], sizes = [4, 240], strides = [1, 1]} : vector<4x256xf32> to vector<4x240xf32>
    %571 = tpu.concatenate %570, %569 in 1 : vector<4x240xf32>, vector<4x16xf32> -> vector<4x256xf32>
    %c7_391 = arith.constant 7 : index
    %c0_392 = arith.constant 0 : index
    %c0_393 = arith.constant 0 : index
    %572 = vector.load %arg10[%c7_391, %c0_392, %c0_393] : memref<9x8x4xf32, #tpu.memory_space<vmem>>, vector<1x8x4xf32>
    %573 = vector.shape_cast %572 : vector<1x8x4xf32> to vector<8x4xf32>
    %cst_394 = arith.constant dense<0.000000e+00> : vector<8x256xf32>
    %574 = tpu.matmul %573, %571, %cst_394 {dimension_numbers = #tpu.dot_dimension_numbers<[1], [0], [0], [1], [0, 0, 1, 1], [], []>} : vector<8x4xf32>, vector<4x256xf32>, vector<8x256xf32> -> vector<8x256xf32>
    %575 = arith.addf %568, %574 : vector<8x256xf32>
    %cst_395 = arith.constant 0.000000e+00 : f32
    %576 = vector.broadcast %cst_395 : f32 to vector<4x17xf32>
    %577 = vector.extract_strided_slice %523 {offsets = [0, 17], sizes = [4, 239], strides = [1, 1]} : vector<4x256xf32> to vector<4x239xf32>
    %578 = tpu.concatenate %577, %576 in 1 : vector<4x239xf32>, vector<4x17xf32> -> vector<4x256xf32>
    %c8_396 = arith.constant 8 : index
    %c0_397 = arith.constant 0 : index
    %c0_398 = arith.constant 0 : index
    %579 = vector.load %arg10[%c8_396, %c0_397, %c0_398] : memref<9x8x4xf32, #tpu.memory_space<vmem>>, vector<1x8x4xf32>
    %580 = vector.shape_cast %579 : vector<1x8x4xf32> to vector<8x4xf32>
    %cst_399 = arith.constant dense<0.000000e+00> : vector<8x256xf32>
    %581 = tpu.matmul %580, %578, %cst_399 {dimension_numbers = #tpu.dot_dimension_numbers<[1], [0], [0], [1], [0, 0, 1, 1], [], []>} : vector<8x4xf32>, vector<4x256xf32>, vector<8x256xf32> -> vector<8x256xf32>
    %582 = arith.addf %575, %581 : vector<8x256xf32>
    %c0_400 = arith.constant 0 : index
    %c0_401 = arith.constant 0 : index
    %583 = vector.load %arg3[%c0_400, %c0_401] : memref<4x256xf32, #tpu.memory_space<vmem>>, vector<1x256xf32>
    %584 = vector.broadcast %583 : vector<1x256xf32> to vector<8x256xf32>
    %585 = arith.mulf %582, %584 : vector<8x256xf32>
    %c1_402 = arith.constant 1 : index
    %c0_403 = arith.constant 0 : index
    %586 = vector.load %arg3[%c1_402, %c0_403] : memref<4x256xf32, #tpu.memory_space<vmem>>, vector<1x256xf32>
    %587 = vector.broadcast %586 : vector<1x256xf32> to vector<8x256xf32>
    %588 = arith.mulf %582, %587 : vector<8x256xf32>
    %c2_404 = arith.constant 2 : index
    %c0_405 = arith.constant 0 : index
    %589 = vector.load %arg3[%c2_404, %c0_405] : memref<4x256xf32, #tpu.memory_space<vmem>>, vector<1x256xf32>
    %590 = vector.broadcast %589 : vector<1x256xf32> to vector<8x256xf32>
    %591 = arith.mulf %582, %590 : vector<8x256xf32>
    %c3_406 = arith.constant 3 : index
    %c0_407 = arith.constant 0 : index
    %592 = vector.load %arg3[%c3_406, %c0_407] : memref<4x256xf32, #tpu.memory_space<vmem>>, vector<1x256xf32>
    %593 = vector.broadcast %592 : vector<1x256xf32> to vector<8x256xf32>
    %594 = arith.mulf %582, %593 : vector<8x256xf32>
    %cst_408 = arith.constant 0.000000e+00 : f32
    %595 = vector.broadcast %cst_408 : f32 to vector<8x34xf32>
    %596 = vector.extract_strided_slice %585 {offsets = [0, 0], sizes = [8, 222], strides = [1, 1]} : vector<8x256xf32> to vector<8x222xf32>
    %597 = tpu.concatenate %595, %596 in 1 : vector<8x34xf32>, vector<8x222xf32> -> vector<8x256xf32>
    %c0_409 = arith.constant 0 : index
    %c0_410 = arith.constant 0 : index
    %c0_411 = arith.constant 0 : index
    %598 = vector.load %arg11[%c0_409, %c0_410, %c0_411] : memref<25x8x8xf32, #tpu.memory_space<vmem>>, vector<1x8x8xf32>
    %599 = vector.shape_cast %598 : vector<1x8x8xf32> to vector<8x8xf32>
    %cst_412 = arith.constant dense<0.000000e+00> : vector<8x256xf32>
    %600 = tpu.matmul %599, %597, %cst_412 {dimension_numbers = #tpu.dot_dimension_numbers<[1], [0], [0], [1], [0, 0, 1, 1], [], []>} : vector<8x8xf32>, vector<8x256xf32>, vector<8x256xf32> -> vector<8x256xf32>
    %cst_413 = arith.constant 0.000000e+00 : f32
    %601 = vector.broadcast %cst_413 : f32 to vector<8x33xf32>
    %602 = vector.extract_strided_slice %588 {offsets = [0, 0], sizes = [8, 223], strides = [1, 1]} : vector<8x256xf32> to vector<8x223xf32>
    %603 = tpu.concatenate %601, %602 in 1 : vector<8x33xf32>, vector<8x223xf32> -> vector<8x256xf32>
    %c1_414 = arith.constant 1 : index
    %c0_415 = arith.constant 0 : index
    %c0_416 = arith.constant 0 : index
    %604 = vector.load %arg11[%c1_414, %c0_415, %c0_416] : memref<25x8x8xf32, #tpu.memory_space<vmem>>, vector<1x8x8xf32>
    %605 = vector.shape_cast %604 : vector<1x8x8xf32> to vector<8x8xf32>
    %cst_417 = arith.constant dense<0.000000e+00> : vector<8x256xf32>
    %606 = tpu.matmul %605, %603, %cst_417 {dimension_numbers = #tpu.dot_dimension_numbers<[1], [0], [0], [1], [0, 0, 1, 1], [], []>} : vector<8x8xf32>, vector<8x256xf32>, vector<8x256xf32> -> vector<8x256xf32>
    %607 = arith.addf %600, %606 : vector<8x256xf32>
    %cst_418 = arith.constant 0.000000e+00 : f32
    %608 = vector.broadcast %cst_418 : f32 to vector<8x32xf32>
    %609 = vector.extract_strided_slice %582 {offsets = [0, 0], sizes = [8, 224], strides = [1, 1]} : vector<8x256xf32> to vector<8x224xf32>
    %610 = tpu.concatenate %608, %609 in 1 : vector<8x32xf32>, vector<8x224xf32> -> vector<8x256xf32>
    %c2_419 = arith.constant 2 : index
    %c0_420 = arith.constant 0 : index
    %c0_421 = arith.constant 0 : index
    %611 = vector.load %arg11[%c2_419, %c0_420, %c0_421] : memref<25x8x8xf32, #tpu.memory_space<vmem>>, vector<1x8x8xf32>
    %612 = vector.shape_cast %611 : vector<1x8x8xf32> to vector<8x8xf32>
    %cst_422 = arith.constant dense<0.000000e+00> : vector<8x256xf32>
    %613 = tpu.matmul %612, %610, %cst_422 {dimension_numbers = #tpu.dot_dimension_numbers<[1], [0], [0], [1], [0, 0, 1, 1], [], []>} : vector<8x8xf32>, vector<8x256xf32>, vector<8x256xf32> -> vector<8x256xf32>
    %614 = arith.addf %607, %613 : vector<8x256xf32>
    %cst_423 = arith.constant 0.000000e+00 : f32
    %615 = vector.broadcast %cst_423 : f32 to vector<8x31xf32>
    %616 = vector.extract_strided_slice %591 {offsets = [0, 0], sizes = [8, 225], strides = [1, 1]} : vector<8x256xf32> to vector<8x225xf32>
    %617 = tpu.concatenate %615, %616 in 1 : vector<8x31xf32>, vector<8x225xf32> -> vector<8x256xf32>
    %c3_424 = arith.constant 3 : index
    %c0_425 = arith.constant 0 : index
    %c0_426 = arith.constant 0 : index
    %618 = vector.load %arg11[%c3_424, %c0_425, %c0_426] : memref<25x8x8xf32, #tpu.memory_space<vmem>>, vector<1x8x8xf32>
    %619 = vector.shape_cast %618 : vector<1x8x8xf32> to vector<8x8xf32>
    %cst_427 = arith.constant dense<0.000000e+00> : vector<8x256xf32>
    %620 = tpu.matmul %619, %617, %cst_427 {dimension_numbers = #tpu.dot_dimension_numbers<[1], [0], [0], [1], [0, 0, 1, 1], [], []>} : vector<8x8xf32>, vector<8x256xf32>, vector<8x256xf32> -> vector<8x256xf32>
    %621 = arith.addf %614, %620 : vector<8x256xf32>
    %cst_428 = arith.constant 0.000000e+00 : f32
    %622 = vector.broadcast %cst_428 : f32 to vector<8x30xf32>
    %623 = vector.extract_strided_slice %594 {offsets = [0, 0], sizes = [8, 226], strides = [1, 1]} : vector<8x256xf32> to vector<8x226xf32>
    %624 = tpu.concatenate %622, %623 in 1 : vector<8x30xf32>, vector<8x226xf32> -> vector<8x256xf32>
    %c4_429 = arith.constant 4 : index
    %c0_430 = arith.constant 0 : index
    %c0_431 = arith.constant 0 : index
    %625 = vector.load %arg11[%c4_429, %c0_430, %c0_431] : memref<25x8x8xf32, #tpu.memory_space<vmem>>, vector<1x8x8xf32>
    %626 = vector.shape_cast %625 : vector<1x8x8xf32> to vector<8x8xf32>
    %cst_432 = arith.constant dense<0.000000e+00> : vector<8x256xf32>
    %627 = tpu.matmul %626, %624, %cst_432 {dimension_numbers = #tpu.dot_dimension_numbers<[1], [0], [0], [1], [0, 0, 1, 1], [], []>} : vector<8x8xf32>, vector<8x256xf32>, vector<8x256xf32> -> vector<8x256xf32>
    %628 = arith.addf %621, %627 : vector<8x256xf32>
    %cst_433 = arith.constant 0.000000e+00 : f32
    %629 = vector.broadcast %cst_433 : f32 to vector<8x18xf32>
    %630 = vector.extract_strided_slice %585 {offsets = [0, 0], sizes = [8, 238], strides = [1, 1]} : vector<8x256xf32> to vector<8x238xf32>
    %631 = tpu.concatenate %629, %630 in 1 : vector<8x18xf32>, vector<8x238xf32> -> vector<8x256xf32>
    %c5_434 = arith.constant 5 : index
    %c0_435 = arith.constant 0 : index
    %c0_436 = arith.constant 0 : index
    %632 = vector.load %arg11[%c5_434, %c0_435, %c0_436] : memref<25x8x8xf32, #tpu.memory_space<vmem>>, vector<1x8x8xf32>
    %633 = vector.shape_cast %632 : vector<1x8x8xf32> to vector<8x8xf32>
    %cst_437 = arith.constant dense<0.000000e+00> : vector<8x256xf32>
    %634 = tpu.matmul %633, %631, %cst_437 {dimension_numbers = #tpu.dot_dimension_numbers<[1], [0], [0], [1], [0, 0, 1, 1], [], []>} : vector<8x8xf32>, vector<8x256xf32>, vector<8x256xf32> -> vector<8x256xf32>
    %635 = arith.addf %628, %634 : vector<8x256xf32>
    %cst_438 = arith.constant 0.000000e+00 : f32
    %636 = vector.broadcast %cst_438 : f32 to vector<8x17xf32>
    %637 = vector.extract_strided_slice %588 {offsets = [0, 0], sizes = [8, 239], strides = [1, 1]} : vector<8x256xf32> to vector<8x239xf32>
    %638 = tpu.concatenate %636, %637 in 1 : vector<8x17xf32>, vector<8x239xf32> -> vector<8x256xf32>
    %c6_439 = arith.constant 6 : index
    %c0_440 = arith.constant 0 : index
    %c0_441 = arith.constant 0 : index
    %639 = vector.load %arg11[%c6_439, %c0_440, %c0_441] : memref<25x8x8xf32, #tpu.memory_space<vmem>>, vector<1x8x8xf32>
    %640 = vector.shape_cast %639 : vector<1x8x8xf32> to vector<8x8xf32>
    %cst_442 = arith.constant dense<0.000000e+00> : vector<8x256xf32>
    %641 = tpu.matmul %640, %638, %cst_442 {dimension_numbers = #tpu.dot_dimension_numbers<[1], [0], [0], [1], [0, 0, 1, 1], [], []>} : vector<8x8xf32>, vector<8x256xf32>, vector<8x256xf32> -> vector<8x256xf32>
    %642 = arith.addf %635, %641 : vector<8x256xf32>
    %cst_443 = arith.constant 0.000000e+00 : f32
    %643 = vector.broadcast %cst_443 : f32 to vector<8x16xf32>
    %644 = vector.extract_strided_slice %582 {offsets = [0, 0], sizes = [8, 240], strides = [1, 1]} : vector<8x256xf32> to vector<8x240xf32>
    %645 = tpu.concatenate %643, %644 in 1 : vector<8x16xf32>, vector<8x240xf32> -> vector<8x256xf32>
    %c7_444 = arith.constant 7 : index
    %c0_445 = arith.constant 0 : index
    %c0_446 = arith.constant 0 : index
    %646 = vector.load %arg11[%c7_444, %c0_445, %c0_446] : memref<25x8x8xf32, #tpu.memory_space<vmem>>, vector<1x8x8xf32>
    %647 = vector.shape_cast %646 : vector<1x8x8xf32> to vector<8x8xf32>
    %cst_447 = arith.constant dense<0.000000e+00> : vector<8x256xf32>
    %648 = tpu.matmul %647, %645, %cst_447 {dimension_numbers = #tpu.dot_dimension_numbers<[1], [0], [0], [1], [0, 0, 1, 1], [], []>} : vector<8x8xf32>, vector<8x256xf32>, vector<8x256xf32> -> vector<8x256xf32>
    %649 = arith.addf %642, %648 : vector<8x256xf32>
    %cst_448 = arith.constant 0.000000e+00 : f32
    %650 = vector.broadcast %cst_448 : f32 to vector<8x15xf32>
    %651 = vector.extract_strided_slice %591 {offsets = [0, 0], sizes = [8, 241], strides = [1, 1]} : vector<8x256xf32> to vector<8x241xf32>
    %652 = tpu.concatenate %650, %651 in 1 : vector<8x15xf32>, vector<8x241xf32> -> vector<8x256xf32>
    %c8_449 = arith.constant 8 : index
    %c0_450 = arith.constant 0 : index
    %c0_451 = arith.constant 0 : index
    %653 = vector.load %arg11[%c8_449, %c0_450, %c0_451] : memref<25x8x8xf32, #tpu.memory_space<vmem>>, vector<1x8x8xf32>
    %654 = vector.shape_cast %653 : vector<1x8x8xf32> to vector<8x8xf32>
    %cst_452 = arith.constant dense<0.000000e+00> : vector<8x256xf32>
    %655 = tpu.matmul %654, %652, %cst_452 {dimension_numbers = #tpu.dot_dimension_numbers<[1], [0], [0], [1], [0, 0, 1, 1], [], []>} : vector<8x8xf32>, vector<8x256xf32>, vector<8x256xf32> -> vector<8x256xf32>
    %656 = arith.addf %649, %655 : vector<8x256xf32>
    %cst_453 = arith.constant 0.000000e+00 : f32
    %657 = vector.broadcast %cst_453 : f32 to vector<8x14xf32>
    %658 = vector.extract_strided_slice %594 {offsets = [0, 0], sizes = [8, 242], strides = [1, 1]} : vector<8x256xf32> to vector<8x242xf32>
    %659 = tpu.concatenate %657, %658 in 1 : vector<8x14xf32>, vector<8x242xf32> -> vector<8x256xf32>
    %c9_454 = arith.constant 9 : index
    %c0_455 = arith.constant 0 : index
    %c0_456 = arith.constant 0 : index
    %660 = vector.load %arg11[%c9_454, %c0_455, %c0_456] : memref<25x8x8xf32, #tpu.memory_space<vmem>>, vector<1x8x8xf32>
    %661 = vector.shape_cast %660 : vector<1x8x8xf32> to vector<8x8xf32>
    %cst_457 = arith.constant dense<0.000000e+00> : vector<8x256xf32>
    %662 = tpu.matmul %661, %659, %cst_457 {dimension_numbers = #tpu.dot_dimension_numbers<[1], [0], [0], [1], [0, 0, 1, 1], [], []>} : vector<8x8xf32>, vector<8x256xf32>, vector<8x256xf32> -> vector<8x256xf32>
    %663 = arith.addf %656, %662 : vector<8x256xf32>
    %cst_458 = arith.constant 0.000000e+00 : f32
    %664 = vector.broadcast %cst_458 : f32 to vector<8x2xf32>
    %665 = vector.extract_strided_slice %585 {offsets = [0, 0], sizes = [8, 254], strides = [1, 1]} : vector<8x256xf32> to vector<8x254xf32>
    %666 = tpu.concatenate %664, %665 in 1 : vector<8x2xf32>, vector<8x254xf32> -> vector<8x256xf32>
    %c10_459 = arith.constant 10 : index
    %c0_460 = arith.constant 0 : index
    %c0_461 = arith.constant 0 : index
    %667 = vector.load %arg11[%c10_459, %c0_460, %c0_461] : memref<25x8x8xf32, #tpu.memory_space<vmem>>, vector<1x8x8xf32>
    %668 = vector.shape_cast %667 : vector<1x8x8xf32> to vector<8x8xf32>
    %cst_462 = arith.constant dense<0.000000e+00> : vector<8x256xf32>
    %669 = tpu.matmul %668, %666, %cst_462 {dimension_numbers = #tpu.dot_dimension_numbers<[1], [0], [0], [1], [0, 0, 1, 1], [], []>} : vector<8x8xf32>, vector<8x256xf32>, vector<8x256xf32> -> vector<8x256xf32>
    %670 = arith.addf %663, %669 : vector<8x256xf32>
    %cst_463 = arith.constant 0.000000e+00 : f32
    %671 = vector.broadcast %cst_463 : f32 to vector<8x1xf32>
    %672 = vector.extract_strided_slice %588 {offsets = [0, 0], sizes = [8, 255], strides = [1, 1]} : vector<8x256xf32> to vector<8x255xf32>
    %673 = tpu.concatenate %671, %672 in 1 : vector<8x1xf32>, vector<8x255xf32> -> vector<8x256xf32>
    %c11_464 = arith.constant 11 : index
    %c0_465 = arith.constant 0 : index
    %c0_466 = arith.constant 0 : index
    %674 = vector.load %arg11[%c11_464, %c0_465, %c0_466] : memref<25x8x8xf32, #tpu.memory_space<vmem>>, vector<1x8x8xf32>
    %675 = vector.shape_cast %674 : vector<1x8x8xf32> to vector<8x8xf32>
    %cst_467 = arith.constant dense<0.000000e+00> : vector<8x256xf32>
    %676 = tpu.matmul %675, %673, %cst_467 {dimension_numbers = #tpu.dot_dimension_numbers<[1], [0], [0], [1], [0, 0, 1, 1], [], []>} : vector<8x8xf32>, vector<8x256xf32>, vector<8x256xf32> -> vector<8x256xf32>
    %677 = arith.addf %670, %676 : vector<8x256xf32>
    %c12_468 = arith.constant 12 : index
    %c0_469 = arith.constant 0 : index
    %c0_470 = arith.constant 0 : index
    %678 = vector.load %arg11[%c12_468, %c0_469, %c0_470] : memref<25x8x8xf32, #tpu.memory_space<vmem>>, vector<1x8x8xf32>
    %679 = vector.shape_cast %678 : vector<1x8x8xf32> to vector<8x8xf32>
    %cst_471 = arith.constant dense<0.000000e+00> : vector<8x256xf32>
    %680 = tpu.matmul %679, %582, %cst_471 {dimension_numbers = #tpu.dot_dimension_numbers<[1], [0], [0], [1], [0, 0, 1, 1], [], []>} : vector<8x8xf32>, vector<8x256xf32>, vector<8x256xf32> -> vector<8x256xf32>
    %681 = arith.addf %677, %680 : vector<8x256xf32>
    %cst_472 = arith.constant 0.000000e+00 : f32
    %682 = vector.broadcast %cst_472 : f32 to vector<8x1xf32>
    %683 = vector.extract_strided_slice %591 {offsets = [0, 1], sizes = [8, 255], strides = [1, 1]} : vector<8x256xf32> to vector<8x255xf32>
    %684 = tpu.concatenate %683, %682 in 1 : vector<8x255xf32>, vector<8x1xf32> -> vector<8x256xf32>
    %c13_473 = arith.constant 13 : index
    %c0_474 = arith.constant 0 : index
    %c0_475 = arith.constant 0 : index
    %685 = vector.load %arg11[%c13_473, %c0_474, %c0_475] : memref<25x8x8xf32, #tpu.memory_space<vmem>>, vector<1x8x8xf32>
    %686 = vector.shape_cast %685 : vector<1x8x8xf32> to vector<8x8xf32>
    %cst_476 = arith.constant dense<0.000000e+00> : vector<8x256xf32>
    %687 = tpu.matmul %686, %684, %cst_476 {dimension_numbers = #tpu.dot_dimension_numbers<[1], [0], [0], [1], [0, 0, 1, 1], [], []>} : vector<8x8xf32>, vector<8x256xf32>, vector<8x256xf32> -> vector<8x256xf32>
    %688 = arith.addf %681, %687 : vector<8x256xf32>
    %cst_477 = arith.constant 0.000000e+00 : f32
    %689 = vector.broadcast %cst_477 : f32 to vector<8x2xf32>
    %690 = vector.extract_strided_slice %594 {offsets = [0, 2], sizes = [8, 254], strides = [1, 1]} : vector<8x256xf32> to vector<8x254xf32>
    %691 = tpu.concatenate %690, %689 in 1 : vector<8x254xf32>, vector<8x2xf32> -> vector<8x256xf32>
    %c14_478 = arith.constant 14 : index
    %c0_479 = arith.constant 0 : index
    %c0_480 = arith.constant 0 : index
    %692 = vector.load %arg11[%c14_478, %c0_479, %c0_480] : memref<25x8x8xf32, #tpu.memory_space<vmem>>, vector<1x8x8xf32>
    %693 = vector.shape_cast %692 : vector<1x8x8xf32> to vector<8x8xf32>
    %cst_481 = arith.constant dense<0.000000e+00> : vector<8x256xf32>
    %694 = tpu.matmul %693, %691, %cst_481 {dimension_numbers = #tpu.dot_dimension_numbers<[1], [0], [0], [1], [0, 0, 1, 1], [], []>} : vector<8x8xf32>, vector<8x256xf32>, vector<8x256xf32> -> vector<8x256xf32>
    %695 = arith.addf %688, %694 : vector<8x256xf32>
    %cst_482 = arith.constant 0.000000e+00 : f32
    %696 = vector.broadcast %cst_482 : f32 to vector<8x14xf32>
    %697 = vector.extract_strided_slice %585 {offsets = [0, 14], sizes = [8, 242], strides = [1, 1]} : vector<8x256xf32> to vector<8x242xf32>
    %698 = tpu.concatenate %697, %696 in 1 : vector<8x242xf32>, vector<8x14xf32> -> vector<8x256xf32>
    %c15_483 = arith.constant 15 : index
    %c0_484 = arith.constant 0 : index
    %c0_485 = arith.constant 0 : index
    %699 = vector.load %arg11[%c15_483, %c0_484, %c0_485] : memref<25x8x8xf32, #tpu.memory_space<vmem>>, vector<1x8x8xf32>
    %700 = vector.shape_cast %699 : vector<1x8x8xf32> to vector<8x8xf32>
    %cst_486 = arith.constant dense<0.000000e+00> : vector<8x256xf32>
    %701 = tpu.matmul %700, %698, %cst_486 {dimension_numbers = #tpu.dot_dimension_numbers<[1], [0], [0], [1], [0, 0, 1, 1], [], []>} : vector<8x8xf32>, vector<8x256xf32>, vector<8x256xf32> -> vector<8x256xf32>
    %702 = arith.addf %695, %701 : vector<8x256xf32>
    %cst_487 = arith.constant 0.000000e+00 : f32
    %703 = vector.broadcast %cst_487 : f32 to vector<8x15xf32>
    %704 = vector.extract_strided_slice %588 {offsets = [0, 15], sizes = [8, 241], strides = [1, 1]} : vector<8x256xf32> to vector<8x241xf32>
    %705 = tpu.concatenate %704, %703 in 1 : vector<8x241xf32>, vector<8x15xf32> -> vector<8x256xf32>
    %c16_488 = arith.constant 16 : index
    %c0_489 = arith.constant 0 : index
    %c0_490 = arith.constant 0 : index
    %706 = vector.load %arg11[%c16_488, %c0_489, %c0_490] : memref<25x8x8xf32, #tpu.memory_space<vmem>>, vector<1x8x8xf32>
    %707 = vector.shape_cast %706 : vector<1x8x8xf32> to vector<8x8xf32>
    %cst_491 = arith.constant dense<0.000000e+00> : vector<8x256xf32>
    %708 = tpu.matmul %707, %705, %cst_491 {dimension_numbers = #tpu.dot_dimension_numbers<[1], [0], [0], [1], [0, 0, 1, 1], [], []>} : vector<8x8xf32>, vector<8x256xf32>, vector<8x256xf32> -> vector<8x256xf32>
    %709 = arith.addf %702, %708 : vector<8x256xf32>
    %cst_492 = arith.constant 0.000000e+00 : f32
    %710 = vector.broadcast %cst_492 : f32 to vector<8x16xf32>
    %711 = vector.extract_strided_slice %582 {offsets = [0, 16], sizes = [8, 240], strides = [1, 1]} : vector<8x256xf32> to vector<8x240xf32>
    %712 = tpu.concatenate %711, %710 in 1 : vector<8x240xf32>, vector<8x16xf32> -> vector<8x256xf32>
    %c17_493 = arith.constant 17 : index
    %c0_494 = arith.constant 0 : index
    %c0_495 = arith.constant 0 : index
    %713 = vector.load %arg11[%c17_493, %c0_494, %c0_495] : memref<25x8x8xf32, #tpu.memory_space<vmem>>, vector<1x8x8xf32>
    %714 = vector.shape_cast %713 : vector<1x8x8xf32> to vector<8x8xf32>
    %cst_496 = arith.constant dense<0.000000e+00> : vector<8x256xf32>
    %715 = tpu.matmul %714, %712, %cst_496 {dimension_numbers = #tpu.dot_dimension_numbers<[1], [0], [0], [1], [0, 0, 1, 1], [], []>} : vector<8x8xf32>, vector<8x256xf32>, vector<8x256xf32> -> vector<8x256xf32>
    %716 = arith.addf %709, %715 : vector<8x256xf32>
    %cst_497 = arith.constant 0.000000e+00 : f32
    %717 = vector.broadcast %cst_497 : f32 to vector<8x17xf32>
    %718 = vector.extract_strided_slice %591 {offsets = [0, 17], sizes = [8, 239], strides = [1, 1]} : vector<8x256xf32> to vector<8x239xf32>
    %719 = tpu.concatenate %718, %717 in 1 : vector<8x239xf32>, vector<8x17xf32> -> vector<8x256xf32>
    %c18_498 = arith.constant 18 : index
    %c0_499 = arith.constant 0 : index
    %c0_500 = arith.constant 0 : index
    %720 = vector.load %arg11[%c18_498, %c0_499, %c0_500] : memref<25x8x8xf32, #tpu.memory_space<vmem>>, vector<1x8x8xf32>
    %721 = vector.shape_cast %720 : vector<1x8x8xf32> to vector<8x8xf32>
    %cst_501 = arith.constant dense<0.000000e+00> : vector<8x256xf32>
    %722 = tpu.matmul %721, %719, %cst_501 {dimension_numbers = #tpu.dot_dimension_numbers<[1], [0], [0], [1], [0, 0, 1, 1], [], []>} : vector<8x8xf32>, vector<8x256xf32>, vector<8x256xf32> -> vector<8x256xf32>
    %723 = arith.addf %716, %722 : vector<8x256xf32>
    %cst_502 = arith.constant 0.000000e+00 : f32
    %724 = vector.broadcast %cst_502 : f32 to vector<8x18xf32>
    %725 = vector.extract_strided_slice %594 {offsets = [0, 18], sizes = [8, 238], strides = [1, 1]} : vector<8x256xf32> to vector<8x238xf32>
    %726 = tpu.concatenate %725, %724 in 1 : vector<8x238xf32>, vector<8x18xf32> -> vector<8x256xf32>
    %c19_503 = arith.constant 19 : index
    %c0_504 = arith.constant 0 : index
    %c0_505 = arith.constant 0 : index
    %727 = vector.load %arg11[%c19_503, %c0_504, %c0_505] : memref<25x8x8xf32, #tpu.memory_space<vmem>>, vector<1x8x8xf32>
    %728 = vector.shape_cast %727 : vector<1x8x8xf32> to vector<8x8xf32>
    %cst_506 = arith.constant dense<0.000000e+00> : vector<8x256xf32>
    %729 = tpu.matmul %728, %726, %cst_506 {dimension_numbers = #tpu.dot_dimension_numbers<[1], [0], [0], [1], [0, 0, 1, 1], [], []>} : vector<8x8xf32>, vector<8x256xf32>, vector<8x256xf32> -> vector<8x256xf32>
    %730 = arith.addf %723, %729 : vector<8x256xf32>
    %cst_507 = arith.constant 0.000000e+00 : f32
    %731 = vector.broadcast %cst_507 : f32 to vector<8x30xf32>
    %732 = vector.extract_strided_slice %585 {offsets = [0, 30], sizes = [8, 226], strides = [1, 1]} : vector<8x256xf32> to vector<8x226xf32>
    %733 = tpu.concatenate %732, %731 in 1 : vector<8x226xf32>, vector<8x30xf32> -> vector<8x256xf32>
    %c20_508 = arith.constant 20 : index
    %c0_509 = arith.constant 0 : index
    %c0_510 = arith.constant 0 : index
    %734 = vector.load %arg11[%c20_508, %c0_509, %c0_510] : memref<25x8x8xf32, #tpu.memory_space<vmem>>, vector<1x8x8xf32>
    %735 = vector.shape_cast %734 : vector<1x8x8xf32> to vector<8x8xf32>
    %cst_511 = arith.constant dense<0.000000e+00> : vector<8x256xf32>
    %736 = tpu.matmul %735, %733, %cst_511 {dimension_numbers = #tpu.dot_dimension_numbers<[1], [0], [0], [1], [0, 0, 1, 1], [], []>} : vector<8x8xf32>, vector<8x256xf32>, vector<8x256xf32> -> vector<8x256xf32>
    %737 = arith.addf %730, %736 : vector<8x256xf32>
    %cst_512 = arith.constant 0.000000e+00 : f32
    %738 = vector.broadcast %cst_512 : f32 to vector<8x31xf32>
    %739 = vector.extract_strided_slice %588 {offsets = [0, 31], sizes = [8, 225], strides = [1, 1]} : vector<8x256xf32> to vector<8x225xf32>
    %740 = tpu.concatenate %739, %738 in 1 : vector<8x225xf32>, vector<8x31xf32> -> vector<8x256xf32>
    %c21_513 = arith.constant 21 : index
    %c0_514 = arith.constant 0 : index
    %c0_515 = arith.constant 0 : index
    %741 = vector.load %arg11[%c21_513, %c0_514, %c0_515] : memref<25x8x8xf32, #tpu.memory_space<vmem>>, vector<1x8x8xf32>
    %742 = vector.shape_cast %741 : vector<1x8x8xf32> to vector<8x8xf32>
    %cst_516 = arith.constant dense<0.000000e+00> : vector<8x256xf32>
    %743 = tpu.matmul %742, %740, %cst_516 {dimension_numbers = #tpu.dot_dimension_numbers<[1], [0], [0], [1], [0, 0, 1, 1], [], []>} : vector<8x8xf32>, vector<8x256xf32>, vector<8x256xf32> -> vector<8x256xf32>
    %744 = arith.addf %737, %743 : vector<8x256xf32>
    %cst_517 = arith.constant 0.000000e+00 : f32
    %745 = vector.broadcast %cst_517 : f32 to vector<8x32xf32>
    %746 = vector.extract_strided_slice %582 {offsets = [0, 32], sizes = [8, 224], strides = [1, 1]} : vector<8x256xf32> to vector<8x224xf32>
    %747 = tpu.concatenate %746, %745 in 1 : vector<8x224xf32>, vector<8x32xf32> -> vector<8x256xf32>
    %c22_518 = arith.constant 22 : index
    %c0_519 = arith.constant 0 : index
    %c0_520 = arith.constant 0 : index
    %748 = vector.load %arg11[%c22_518, %c0_519, %c0_520] : memref<25x8x8xf32, #tpu.memory_space<vmem>>, vector<1x8x8xf32>
    %749 = vector.shape_cast %748 : vector<1x8x8xf32> to vector<8x8xf32>
    %cst_521 = arith.constant dense<0.000000e+00> : vector<8x256xf32>
    %750 = tpu.matmul %749, %747, %cst_521 {dimension_numbers = #tpu.dot_dimension_numbers<[1], [0], [0], [1], [0, 0, 1, 1], [], []>} : vector<8x8xf32>, vector<8x256xf32>, vector<8x256xf32> -> vector<8x256xf32>
    %751 = arith.addf %744, %750 : vector<8x256xf32>
    %cst_522 = arith.constant 0.000000e+00 : f32
    %752 = vector.broadcast %cst_522 : f32 to vector<8x33xf32>
    %753 = vector.extract_strided_slice %591 {offsets = [0, 33], sizes = [8, 223], strides = [1, 1]} : vector<8x256xf32> to vector<8x223xf32>
    %754 = tpu.concatenate %753, %752 in 1 : vector<8x223xf32>, vector<8x33xf32> -> vector<8x256xf32>
    %c23_523 = arith.constant 23 : index
    %c0_524 = arith.constant 0 : index
    %c0_525 = arith.constant 0 : index
    %755 = vector.load %arg11[%c23_523, %c0_524, %c0_525] : memref<25x8x8xf32, #tpu.memory_space<vmem>>, vector<1x8x8xf32>
    %756 = vector.shape_cast %755 : vector<1x8x8xf32> to vector<8x8xf32>
    %cst_526 = arith.constant dense<0.000000e+00> : vector<8x256xf32>
    %757 = tpu.matmul %756, %754, %cst_526 {dimension_numbers = #tpu.dot_dimension_numbers<[1], [0], [0], [1], [0, 0, 1, 1], [], []>} : vector<8x8xf32>, vector<8x256xf32>, vector<8x256xf32> -> vector<8x256xf32>
    %758 = arith.addf %751, %757 : vector<8x256xf32>
    %cst_527 = arith.constant 0.000000e+00 : f32
    %759 = vector.broadcast %cst_527 : f32 to vector<8x34xf32>
    %760 = vector.extract_strided_slice %594 {offsets = [0, 34], sizes = [8, 222], strides = [1, 1]} : vector<8x256xf32> to vector<8x222xf32>
    %761 = tpu.concatenate %760, %759 in 1 : vector<8x222xf32>, vector<8x34xf32> -> vector<8x256xf32>
    %c24_528 = arith.constant 24 : index
    %c0_529 = arith.constant 0 : index
    %c0_530 = arith.constant 0 : index
    %762 = vector.load %arg11[%c24_528, %c0_529, %c0_530] : memref<25x8x8xf32, #tpu.memory_space<vmem>>, vector<1x8x8xf32>
    %763 = vector.shape_cast %762 : vector<1x8x8xf32> to vector<8x8xf32>
    %cst_531 = arith.constant dense<0.000000e+00> : vector<8x256xf32>
    %764 = tpu.matmul %763, %761, %cst_531 {dimension_numbers = #tpu.dot_dimension_numbers<[1], [0], [0], [1], [0, 0, 1, 1], [], []>} : vector<8x8xf32>, vector<8x256xf32>, vector<8x256xf32> -> vector<8x256xf32>
    %765 = arith.addf %758, %764 : vector<8x256xf32>
    %c0_532 = arith.constant 0 : index
    %c0_533 = arith.constant 0 : index
    %c0_534 = arith.constant 0 : index
    %766 = vector.load %arg12[%c0_532, %c0_533, %c0_534] : memref<1x8x8xf32, #tpu.memory_space<vmem>>, vector<1x8x8xf32>
    %767 = vector.shape_cast %766 : vector<1x8x8xf32> to vector<8x8xf32>
    %cst_535 = arith.constant dense<0.000000e+00> : vector<8x256xf32>
    %768 = tpu.matmul %767, %765, %cst_535 {dimension_numbers = #tpu.dot_dimension_numbers<[1], [0], [0], [1], [0, 0, 1, 1], [], []>} : vector<8x8xf32>, vector<8x256xf32>, vector<8x256xf32> -> vector<8x256xf32>
    %cst_536 = arith.constant 0.000000e+00 : f32
    %769 = vector.broadcast %cst_536 : f32 to vector<8x256xf32>
    %770 = arith.cmpf oge, %768, %769 : vector<8x256xf32>
    %cst_537 = arith.constant 0.00999999977 : f32
    %771 = vector.broadcast %cst_537 : f32 to vector<8x256xf32>
    %772 = arith.mulf %771, %768 : vector<8x256xf32>
    %773 = arith.select %770, %768, %772 : vector<8x256xi1>, vector<8x256xf32>
    %c0_538 = arith.constant 0 : index
    %c0_539 = arith.constant 0 : index
    %774 = vector.load %arg3[%c0_538, %c0_539] : memref<4x256xf32, #tpu.memory_space<vmem>>, vector<1x256xf32>
    %775 = vector.broadcast %774 : vector<1x256xf32> to vector<8x256xf32>
    %776 = arith.mulf %773, %775 : vector<8x256xf32>
    %c1_540 = arith.constant 1 : index
    %c0_541 = arith.constant 0 : index
    %777 = vector.load %arg3[%c1_540, %c0_541] : memref<4x256xf32, #tpu.memory_space<vmem>>, vector<1x256xf32>
    %778 = vector.broadcast %777 : vector<1x256xf32> to vector<8x256xf32>
    %779 = arith.mulf %773, %778 : vector<8x256xf32>
    %c2_542 = arith.constant 2 : index
    %c0_543 = arith.constant 0 : index
    %780 = vector.load %arg3[%c2_542, %c0_543] : memref<4x256xf32, #tpu.memory_space<vmem>>, vector<1x256xf32>
    %781 = vector.broadcast %780 : vector<1x256xf32> to vector<8x256xf32>
    %782 = arith.mulf %773, %781 : vector<8x256xf32>
    %c3_544 = arith.constant 3 : index
    %c0_545 = arith.constant 0 : index
    %783 = vector.load %arg3[%c3_544, %c0_545] : memref<4x256xf32, #tpu.memory_space<vmem>>, vector<1x256xf32>
    %784 = vector.broadcast %783 : vector<1x256xf32> to vector<8x256xf32>
    %785 = arith.mulf %773, %784 : vector<8x256xf32>
    %cst_546 = arith.constant 0.000000e+00 : f32
    %786 = vector.broadcast %cst_546 : f32 to vector<8x34xf32>
    %787 = vector.extract_strided_slice %776 {offsets = [0, 0], sizes = [8, 222], strides = [1, 1]} : vector<8x256xf32> to vector<8x222xf32>
    %788 = tpu.concatenate %786, %787 in 1 : vector<8x34xf32>, vector<8x222xf32> -> vector<8x256xf32>
    %c0_547 = arith.constant 0 : index
    %c0_548 = arith.constant 0 : index
    %c0_549 = arith.constant 0 : index
    %789 = vector.load %arg13[%c0_547, %c0_548, %c0_549] : memref<25x8x8xf32, #tpu.memory_space<vmem>>, vector<1x8x8xf32>
    %790 = vector.shape_cast %789 : vector<1x8x8xf32> to vector<8x8xf32>
    %cst_550 = arith.constant dense<0.000000e+00> : vector<8x256xf32>
    %791 = tpu.matmul %790, %788, %cst_550 {dimension_numbers = #tpu.dot_dimension_numbers<[1], [0], [0], [1], [0, 0, 1, 1], [], []>} : vector<8x8xf32>, vector<8x256xf32>, vector<8x256xf32> -> vector<8x256xf32>
    %cst_551 = arith.constant 0.000000e+00 : f32
    %792 = vector.broadcast %cst_551 : f32 to vector<8x33xf32>
    %793 = vector.extract_strided_slice %779 {offsets = [0, 0], sizes = [8, 223], strides = [1, 1]} : vector<8x256xf32> to vector<8x223xf32>
    %794 = tpu.concatenate %792, %793 in 1 : vector<8x33xf32>, vector<8x223xf32> -> vector<8x256xf32>
    %c1_552 = arith.constant 1 : index
    %c0_553 = arith.constant 0 : index
    %c0_554 = arith.constant 0 : index
    %795 = vector.load %arg13[%c1_552, %c0_553, %c0_554] : memref<25x8x8xf32, #tpu.memory_space<vmem>>, vector<1x8x8xf32>
    %796 = vector.shape_cast %795 : vector<1x8x8xf32> to vector<8x8xf32>
    %cst_555 = arith.constant dense<0.000000e+00> : vector<8x256xf32>
    %797 = tpu.matmul %796, %794, %cst_555 {dimension_numbers = #tpu.dot_dimension_numbers<[1], [0], [0], [1], [0, 0, 1, 1], [], []>} : vector<8x8xf32>, vector<8x256xf32>, vector<8x256xf32> -> vector<8x256xf32>
    %798 = arith.addf %791, %797 : vector<8x256xf32>
    %cst_556 = arith.constant 0.000000e+00 : f32
    %799 = vector.broadcast %cst_556 : f32 to vector<8x32xf32>
    %800 = vector.extract_strided_slice %773 {offsets = [0, 0], sizes = [8, 224], strides = [1, 1]} : vector<8x256xf32> to vector<8x224xf32>
    %801 = tpu.concatenate %799, %800 in 1 : vector<8x32xf32>, vector<8x224xf32> -> vector<8x256xf32>
    %c2_557 = arith.constant 2 : index
    %c0_558 = arith.constant 0 : index
    %c0_559 = arith.constant 0 : index
    %802 = vector.load %arg13[%c2_557, %c0_558, %c0_559] : memref<25x8x8xf32, #tpu.memory_space<vmem>>, vector<1x8x8xf32>
    %803 = vector.shape_cast %802 : vector<1x8x8xf32> to vector<8x8xf32>
    %cst_560 = arith.constant dense<0.000000e+00> : vector<8x256xf32>
    %804 = tpu.matmul %803, %801, %cst_560 {dimension_numbers = #tpu.dot_dimension_numbers<[1], [0], [0], [1], [0, 0, 1, 1], [], []>} : vector<8x8xf32>, vector<8x256xf32>, vector<8x256xf32> -> vector<8x256xf32>
    %805 = arith.addf %798, %804 : vector<8x256xf32>
    %cst_561 = arith.constant 0.000000e+00 : f32
    %806 = vector.broadcast %cst_561 : f32 to vector<8x31xf32>
    %807 = vector.extract_strided_slice %782 {offsets = [0, 0], sizes = [8, 225], strides = [1, 1]} : vector<8x256xf32> to vector<8x225xf32>
    %808 = tpu.concatenate %806, %807 in 1 : vector<8x31xf32>, vector<8x225xf32> -> vector<8x256xf32>
    %c3_562 = arith.constant 3 : index
    %c0_563 = arith.constant 0 : index
    %c0_564 = arith.constant 0 : index
    %809 = vector.load %arg13[%c3_562, %c0_563, %c0_564] : memref<25x8x8xf32, #tpu.memory_space<vmem>>, vector<1x8x8xf32>
    %810 = vector.shape_cast %809 : vector<1x8x8xf32> to vector<8x8xf32>
    %cst_565 = arith.constant dense<0.000000e+00> : vector<8x256xf32>
    %811 = tpu.matmul %810, %808, %cst_565 {dimension_numbers = #tpu.dot_dimension_numbers<[1], [0], [0], [1], [0, 0, 1, 1], [], []>} : vector<8x8xf32>, vector<8x256xf32>, vector<8x256xf32> -> vector<8x256xf32>
    %812 = arith.addf %805, %811 : vector<8x256xf32>
    %cst_566 = arith.constant 0.000000e+00 : f32
    %813 = vector.broadcast %cst_566 : f32 to vector<8x30xf32>
    %814 = vector.extract_strided_slice %785 {offsets = [0, 0], sizes = [8, 226], strides = [1, 1]} : vector<8x256xf32> to vector<8x226xf32>
    %815 = tpu.concatenate %813, %814 in 1 : vector<8x30xf32>, vector<8x226xf32> -> vector<8x256xf32>
    %c4_567 = arith.constant 4 : index
    %c0_568 = arith.constant 0 : index
    %c0_569 = arith.constant 0 : index
    %816 = vector.load %arg13[%c4_567, %c0_568, %c0_569] : memref<25x8x8xf32, #tpu.memory_space<vmem>>, vector<1x8x8xf32>
    %817 = vector.shape_cast %816 : vector<1x8x8xf32> to vector<8x8xf32>
    %cst_570 = arith.constant dense<0.000000e+00> : vector<8x256xf32>
    %818 = tpu.matmul %817, %815, %cst_570 {dimension_numbers = #tpu.dot_dimension_numbers<[1], [0], [0], [1], [0, 0, 1, 1], [], []>} : vector<8x8xf32>, vector<8x256xf32>, vector<8x256xf32> -> vector<8x256xf32>
    %819 = arith.addf %812, %818 : vector<8x256xf32>
    %cst_571 = arith.constant 0.000000e+00 : f32
    %820 = vector.broadcast %cst_571 : f32 to vector<8x18xf32>
    %821 = vector.extract_strided_slice %776 {offsets = [0, 0], sizes = [8, 238], strides = [1, 1]} : vector<8x256xf32> to vector<8x238xf32>
    %822 = tpu.concatenate %820, %821 in 1 : vector<8x18xf32>, vector<8x238xf32> -> vector<8x256xf32>
    %c5_572 = arith.constant 5 : index
    %c0_573 = arith.constant 0 : index
    %c0_574 = arith.constant 0 : index
    %823 = vector.load %arg13[%c5_572, %c0_573, %c0_574] : memref<25x8x8xf32, #tpu.memory_space<vmem>>, vector<1x8x8xf32>
    %824 = vector.shape_cast %823 : vector<1x8x8xf32> to vector<8x8xf32>
    %cst_575 = arith.constant dense<0.000000e+00> : vector<8x256xf32>
    %825 = tpu.matmul %824, %822, %cst_575 {dimension_numbers = #tpu.dot_dimension_numbers<[1], [0], [0], [1], [0, 0, 1, 1], [], []>} : vector<8x8xf32>, vector<8x256xf32>, vector<8x256xf32> -> vector<8x256xf32>
    %826 = arith.addf %819, %825 : vector<8x256xf32>
    %cst_576 = arith.constant 0.000000e+00 : f32
    %827 = vector.broadcast %cst_576 : f32 to vector<8x17xf32>
    %828 = vector.extract_strided_slice %779 {offsets = [0, 0], sizes = [8, 239], strides = [1, 1]} : vector<8x256xf32> to vector<8x239xf32>
    %829 = tpu.concatenate %827, %828 in 1 : vector<8x17xf32>, vector<8x239xf32> -> vector<8x256xf32>
    %c6_577 = arith.constant 6 : index
    %c0_578 = arith.constant 0 : index
    %c0_579 = arith.constant 0 : index
    %830 = vector.load %arg13[%c6_577, %c0_578, %c0_579] : memref<25x8x8xf32, #tpu.memory_space<vmem>>, vector<1x8x8xf32>
    %831 = vector.shape_cast %830 : vector<1x8x8xf32> to vector<8x8xf32>
    %cst_580 = arith.constant dense<0.000000e+00> : vector<8x256xf32>
    %832 = tpu.matmul %831, %829, %cst_580 {dimension_numbers = #tpu.dot_dimension_numbers<[1], [0], [0], [1], [0, 0, 1, 1], [], []>} : vector<8x8xf32>, vector<8x256xf32>, vector<8x256xf32> -> vector<8x256xf32>
    %833 = arith.addf %826, %832 : vector<8x256xf32>
    %cst_581 = arith.constant 0.000000e+00 : f32
    %834 = vector.broadcast %cst_581 : f32 to vector<8x16xf32>
    %835 = vector.extract_strided_slice %773 {offsets = [0, 0], sizes = [8, 240], strides = [1, 1]} : vector<8x256xf32> to vector<8x240xf32>
    %836 = tpu.concatenate %834, %835 in 1 : vector<8x16xf32>, vector<8x240xf32> -> vector<8x256xf32>
    %c7_582 = arith.constant 7 : index
    %c0_583 = arith.constant 0 : index
    %c0_584 = arith.constant 0 : index
    %837 = vector.load %arg13[%c7_582, %c0_583, %c0_584] : memref<25x8x8xf32, #tpu.memory_space<vmem>>, vector<1x8x8xf32>
    %838 = vector.shape_cast %837 : vector<1x8x8xf32> to vector<8x8xf32>
    %cst_585 = arith.constant dense<0.000000e+00> : vector<8x256xf32>
    %839 = tpu.matmul %838, %836, %cst_585 {dimension_numbers = #tpu.dot_dimension_numbers<[1], [0], [0], [1], [0, 0, 1, 1], [], []>} : vector<8x8xf32>, vector<8x256xf32>, vector<8x256xf32> -> vector<8x256xf32>
    %840 = arith.addf %833, %839 : vector<8x256xf32>
    %cst_586 = arith.constant 0.000000e+00 : f32
    %841 = vector.broadcast %cst_586 : f32 to vector<8x15xf32>
    %842 = vector.extract_strided_slice %782 {offsets = [0, 0], sizes = [8, 241], strides = [1, 1]} : vector<8x256xf32> to vector<8x241xf32>
    %843 = tpu.concatenate %841, %842 in 1 : vector<8x15xf32>, vector<8x241xf32> -> vector<8x256xf32>
    %c8_587 = arith.constant 8 : index
    %c0_588 = arith.constant 0 : index
    %c0_589 = arith.constant 0 : index
    %844 = vector.load %arg13[%c8_587, %c0_588, %c0_589] : memref<25x8x8xf32, #tpu.memory_space<vmem>>, vector<1x8x8xf32>
    %845 = vector.shape_cast %844 : vector<1x8x8xf32> to vector<8x8xf32>
    %cst_590 = arith.constant dense<0.000000e+00> : vector<8x256xf32>
    %846 = tpu.matmul %845, %843, %cst_590 {dimension_numbers = #tpu.dot_dimension_numbers<[1], [0], [0], [1], [0, 0, 1, 1], [], []>} : vector<8x8xf32>, vector<8x256xf32>, vector<8x256xf32> -> vector<8x256xf32>
    %847 = arith.addf %840, %846 : vector<8x256xf32>
    %cst_591 = arith.constant 0.000000e+00 : f32
    %848 = vector.broadcast %cst_591 : f32 to vector<8x14xf32>
    %849 = vector.extract_strided_slice %785 {offsets = [0, 0], sizes = [8, 242], strides = [1, 1]} : vector<8x256xf32> to vector<8x242xf32>
    %850 = tpu.concatenate %848, %849 in 1 : vector<8x14xf32>, vector<8x242xf32> -> vector<8x256xf32>
    %c9_592 = arith.constant 9 : index
    %c0_593 = arith.constant 0 : index
    %c0_594 = arith.constant 0 : index
    %851 = vector.load %arg13[%c9_592, %c0_593, %c0_594] : memref<25x8x8xf32, #tpu.memory_space<vmem>>, vector<1x8x8xf32>
    %852 = vector.shape_cast %851 : vector<1x8x8xf32> to vector<8x8xf32>
    %cst_595 = arith.constant dense<0.000000e+00> : vector<8x256xf32>
    %853 = tpu.matmul %852, %850, %cst_595 {dimension_numbers = #tpu.dot_dimension_numbers<[1], [0], [0], [1], [0, 0, 1, 1], [], []>} : vector<8x8xf32>, vector<8x256xf32>, vector<8x256xf32> -> vector<8x256xf32>
    %854 = arith.addf %847, %853 : vector<8x256xf32>
    %cst_596 = arith.constant 0.000000e+00 : f32
    %855 = vector.broadcast %cst_596 : f32 to vector<8x2xf32>
    %856 = vector.extract_strided_slice %776 {offsets = [0, 0], sizes = [8, 254], strides = [1, 1]} : vector<8x256xf32> to vector<8x254xf32>
    %857 = tpu.concatenate %855, %856 in 1 : vector<8x2xf32>, vector<8x254xf32> -> vector<8x256xf32>
    %c10_597 = arith.constant 10 : index
    %c0_598 = arith.constant 0 : index
    %c0_599 = arith.constant 0 : index
    %858 = vector.load %arg13[%c10_597, %c0_598, %c0_599] : memref<25x8x8xf32, #tpu.memory_space<vmem>>, vector<1x8x8xf32>
    %859 = vector.shape_cast %858 : vector<1x8x8xf32> to vector<8x8xf32>
    %cst_600 = arith.constant dense<0.000000e+00> : vector<8x256xf32>
    %860 = tpu.matmul %859, %857, %cst_600 {dimension_numbers = #tpu.dot_dimension_numbers<[1], [0], [0], [1], [0, 0, 1, 1], [], []>} : vector<8x8xf32>, vector<8x256xf32>, vector<8x256xf32> -> vector<8x256xf32>
    %861 = arith.addf %854, %860 : vector<8x256xf32>
    %cst_601 = arith.constant 0.000000e+00 : f32
    %862 = vector.broadcast %cst_601 : f32 to vector<8x1xf32>
    %863 = vector.extract_strided_slice %779 {offsets = [0, 0], sizes = [8, 255], strides = [1, 1]} : vector<8x256xf32> to vector<8x255xf32>
    %864 = tpu.concatenate %862, %863 in 1 : vector<8x1xf32>, vector<8x255xf32> -> vector<8x256xf32>
    %c11_602 = arith.constant 11 : index
    %c0_603 = arith.constant 0 : index
    %c0_604 = arith.constant 0 : index
    %865 = vector.load %arg13[%c11_602, %c0_603, %c0_604] : memref<25x8x8xf32, #tpu.memory_space<vmem>>, vector<1x8x8xf32>
    %866 = vector.shape_cast %865 : vector<1x8x8xf32> to vector<8x8xf32>
    %cst_605 = arith.constant dense<0.000000e+00> : vector<8x256xf32>
    %867 = tpu.matmul %866, %864, %cst_605 {dimension_numbers = #tpu.dot_dimension_numbers<[1], [0], [0], [1], [0, 0, 1, 1], [], []>} : vector<8x8xf32>, vector<8x256xf32>, vector<8x256xf32> -> vector<8x256xf32>
    %868 = arith.addf %861, %867 : vector<8x256xf32>
    %c12_606 = arith.constant 12 : index
    %c0_607 = arith.constant 0 : index
    %c0_608 = arith.constant 0 : index
    %869 = vector.load %arg13[%c12_606, %c0_607, %c0_608] : memref<25x8x8xf32, #tpu.memory_space<vmem>>, vector<1x8x8xf32>
    %870 = vector.shape_cast %869 : vector<1x8x8xf32> to vector<8x8xf32>
    %cst_609 = arith.constant dense<0.000000e+00> : vector<8x256xf32>
    %871 = tpu.matmul %870, %773, %cst_609 {dimension_numbers = #tpu.dot_dimension_numbers<[1], [0], [0], [1], [0, 0, 1, 1], [], []>} : vector<8x8xf32>, vector<8x256xf32>, vector<8x256xf32> -> vector<8x256xf32>
    %872 = arith.addf %868, %871 : vector<8x256xf32>
    %cst_610 = arith.constant 0.000000e+00 : f32
    %873 = vector.broadcast %cst_610 : f32 to vector<8x1xf32>
    %874 = vector.extract_strided_slice %782 {offsets = [0, 1], sizes = [8, 255], strides = [1, 1]} : vector<8x256xf32> to vector<8x255xf32>
    %875 = tpu.concatenate %874, %873 in 1 : vector<8x255xf32>, vector<8x1xf32> -> vector<8x256xf32>
    %c13_611 = arith.constant 13 : index
    %c0_612 = arith.constant 0 : index
    %c0_613 = arith.constant 0 : index
    %876 = vector.load %arg13[%c13_611, %c0_612, %c0_613] : memref<25x8x8xf32, #tpu.memory_space<vmem>>, vector<1x8x8xf32>
    %877 = vector.shape_cast %876 : vector<1x8x8xf32> to vector<8x8xf32>
    %cst_614 = arith.constant dense<0.000000e+00> : vector<8x256xf32>
    %878 = tpu.matmul %877, %875, %cst_614 {dimension_numbers = #tpu.dot_dimension_numbers<[1], [0], [0], [1], [0, 0, 1, 1], [], []>} : vector<8x8xf32>, vector<8x256xf32>, vector<8x256xf32> -> vector<8x256xf32>
    %879 = arith.addf %872, %878 : vector<8x256xf32>
    %cst_615 = arith.constant 0.000000e+00 : f32
    %880 = vector.broadcast %cst_615 : f32 to vector<8x2xf32>
    %881 = vector.extract_strided_slice %785 {offsets = [0, 2], sizes = [8, 254], strides = [1, 1]} : vector<8x256xf32> to vector<8x254xf32>
    %882 = tpu.concatenate %881, %880 in 1 : vector<8x254xf32>, vector<8x2xf32> -> vector<8x256xf32>
    %c14_616 = arith.constant 14 : index
    %c0_617 = arith.constant 0 : index
    %c0_618 = arith.constant 0 : index
    %883 = vector.load %arg13[%c14_616, %c0_617, %c0_618] : memref<25x8x8xf32, #tpu.memory_space<vmem>>, vector<1x8x8xf32>
    %884 = vector.shape_cast %883 : vector<1x8x8xf32> to vector<8x8xf32>
    %cst_619 = arith.constant dense<0.000000e+00> : vector<8x256xf32>
    %885 = tpu.matmul %884, %882, %cst_619 {dimension_numbers = #tpu.dot_dimension_numbers<[1], [0], [0], [1], [0, 0, 1, 1], [], []>} : vector<8x8xf32>, vector<8x256xf32>, vector<8x256xf32> -> vector<8x256xf32>
    %886 = arith.addf %879, %885 : vector<8x256xf32>
    %cst_620 = arith.constant 0.000000e+00 : f32
    %887 = vector.broadcast %cst_620 : f32 to vector<8x14xf32>
    %888 = vector.extract_strided_slice %776 {offsets = [0, 14], sizes = [8, 242], strides = [1, 1]} : vector<8x256xf32> to vector<8x242xf32>
    %889 = tpu.concatenate %888, %887 in 1 : vector<8x242xf32>, vector<8x14xf32> -> vector<8x256xf32>
    %c15_621 = arith.constant 15 : index
    %c0_622 = arith.constant 0 : index
    %c0_623 = arith.constant 0 : index
    %890 = vector.load %arg13[%c15_621, %c0_622, %c0_623] : memref<25x8x8xf32, #tpu.memory_space<vmem>>, vector<1x8x8xf32>
    %891 = vector.shape_cast %890 : vector<1x8x8xf32> to vector<8x8xf32>
    %cst_624 = arith.constant dense<0.000000e+00> : vector<8x256xf32>
    %892 = tpu.matmul %891, %889, %cst_624 {dimension_numbers = #tpu.dot_dimension_numbers<[1], [0], [0], [1], [0, 0, 1, 1], [], []>} : vector<8x8xf32>, vector<8x256xf32>, vector<8x256xf32> -> vector<8x256xf32>
    %893 = arith.addf %886, %892 : vector<8x256xf32>
    %cst_625 = arith.constant 0.000000e+00 : f32
    %894 = vector.broadcast %cst_625 : f32 to vector<8x15xf32>
    %895 = vector.extract_strided_slice %779 {offsets = [0, 15], sizes = [8, 241], strides = [1, 1]} : vector<8x256xf32> to vector<8x241xf32>
    %896 = tpu.concatenate %895, %894 in 1 : vector<8x241xf32>, vector<8x15xf32> -> vector<8x256xf32>
    %c16_626 = arith.constant 16 : index
    %c0_627 = arith.constant 0 : index
    %c0_628 = arith.constant 0 : index
    %897 = vector.load %arg13[%c16_626, %c0_627, %c0_628] : memref<25x8x8xf32, #tpu.memory_space<vmem>>, vector<1x8x8xf32>
    %898 = vector.shape_cast %897 : vector<1x8x8xf32> to vector<8x8xf32>
    %cst_629 = arith.constant dense<0.000000e+00> : vector<8x256xf32>
    %899 = tpu.matmul %898, %896, %cst_629 {dimension_numbers = #tpu.dot_dimension_numbers<[1], [0], [0], [1], [0, 0, 1, 1], [], []>} : vector<8x8xf32>, vector<8x256xf32>, vector<8x256xf32> -> vector<8x256xf32>
    %900 = arith.addf %893, %899 : vector<8x256xf32>
    %cst_630 = arith.constant 0.000000e+00 : f32
    %901 = vector.broadcast %cst_630 : f32 to vector<8x16xf32>
    %902 = vector.extract_strided_slice %773 {offsets = [0, 16], sizes = [8, 240], strides = [1, 1]} : vector<8x256xf32> to vector<8x240xf32>
    %903 = tpu.concatenate %902, %901 in 1 : vector<8x240xf32>, vector<8x16xf32> -> vector<8x256xf32>
    %c17_631 = arith.constant 17 : index
    %c0_632 = arith.constant 0 : index
    %c0_633 = arith.constant 0 : index
    %904 = vector.load %arg13[%c17_631, %c0_632, %c0_633] : memref<25x8x8xf32, #tpu.memory_space<vmem>>, vector<1x8x8xf32>
    %905 = vector.shape_cast %904 : vector<1x8x8xf32> to vector<8x8xf32>
    %cst_634 = arith.constant dense<0.000000e+00> : vector<8x256xf32>
    %906 = tpu.matmul %905, %903, %cst_634 {dimension_numbers = #tpu.dot_dimension_numbers<[1], [0], [0], [1], [0, 0, 1, 1], [], []>} : vector<8x8xf32>, vector<8x256xf32>, vector<8x256xf32> -> vector<8x256xf32>
    %907 = arith.addf %900, %906 : vector<8x256xf32>
    %cst_635 = arith.constant 0.000000e+00 : f32
    %908 = vector.broadcast %cst_635 : f32 to vector<8x17xf32>
    %909 = vector.extract_strided_slice %782 {offsets = [0, 17], sizes = [8, 239], strides = [1, 1]} : vector<8x256xf32> to vector<8x239xf32>
    %910 = tpu.concatenate %909, %908 in 1 : vector<8x239xf32>, vector<8x17xf32> -> vector<8x256xf32>
    %c18_636 = arith.constant 18 : index
    %c0_637 = arith.constant 0 : index
    %c0_638 = arith.constant 0 : index
    %911 = vector.load %arg13[%c18_636, %c0_637, %c0_638] : memref<25x8x8xf32, #tpu.memory_space<vmem>>, vector<1x8x8xf32>
    %912 = vector.shape_cast %911 : vector<1x8x8xf32> to vector<8x8xf32>
    %cst_639 = arith.constant dense<0.000000e+00> : vector<8x256xf32>
    %913 = tpu.matmul %912, %910, %cst_639 {dimension_numbers = #tpu.dot_dimension_numbers<[1], [0], [0], [1], [0, 0, 1, 1], [], []>} : vector<8x8xf32>, vector<8x256xf32>, vector<8x256xf32> -> vector<8x256xf32>
    %914 = arith.addf %907, %913 : vector<8x256xf32>
    %cst_640 = arith.constant 0.000000e+00 : f32
    %915 = vector.broadcast %cst_640 : f32 to vector<8x18xf32>
    %916 = vector.extract_strided_slice %785 {offsets = [0, 18], sizes = [8, 238], strides = [1, 1]} : vector<8x256xf32> to vector<8x238xf32>
    %917 = tpu.concatenate %916, %915 in 1 : vector<8x238xf32>, vector<8x18xf32> -> vector<8x256xf32>
    %c19_641 = arith.constant 19 : index
    %c0_642 = arith.constant 0 : index
    %c0_643 = arith.constant 0 : index
    %918 = vector.load %arg13[%c19_641, %c0_642, %c0_643] : memref<25x8x8xf32, #tpu.memory_space<vmem>>, vector<1x8x8xf32>
    %919 = vector.shape_cast %918 : vector<1x8x8xf32> to vector<8x8xf32>
    %cst_644 = arith.constant dense<0.000000e+00> : vector<8x256xf32>
    %920 = tpu.matmul %919, %917, %cst_644 {dimension_numbers = #tpu.dot_dimension_numbers<[1], [0], [0], [1], [0, 0, 1, 1], [], []>} : vector<8x8xf32>, vector<8x256xf32>, vector<8x256xf32> -> vector<8x256xf32>
    %921 = arith.addf %914, %920 : vector<8x256xf32>
    %cst_645 = arith.constant 0.000000e+00 : f32
    %922 = vector.broadcast %cst_645 : f32 to vector<8x30xf32>
    %923 = vector.extract_strided_slice %776 {offsets = [0, 30], sizes = [8, 226], strides = [1, 1]} : vector<8x256xf32> to vector<8x226xf32>
    %924 = tpu.concatenate %923, %922 in 1 : vector<8x226xf32>, vector<8x30xf32> -> vector<8x256xf32>
    %c20_646 = arith.constant 20 : index
    %c0_647 = arith.constant 0 : index
    %c0_648 = arith.constant 0 : index
    %925 = vector.load %arg13[%c20_646, %c0_647, %c0_648] : memref<25x8x8xf32, #tpu.memory_space<vmem>>, vector<1x8x8xf32>
    %926 = vector.shape_cast %925 : vector<1x8x8xf32> to vector<8x8xf32>
    %cst_649 = arith.constant dense<0.000000e+00> : vector<8x256xf32>
    %927 = tpu.matmul %926, %924, %cst_649 {dimension_numbers = #tpu.dot_dimension_numbers<[1], [0], [0], [1], [0, 0, 1, 1], [], []>} : vector<8x8xf32>, vector<8x256xf32>, vector<8x256xf32> -> vector<8x256xf32>
    %928 = arith.addf %921, %927 : vector<8x256xf32>
    %cst_650 = arith.constant 0.000000e+00 : f32
    %929 = vector.broadcast %cst_650 : f32 to vector<8x31xf32>
    %930 = vector.extract_strided_slice %779 {offsets = [0, 31], sizes = [8, 225], strides = [1, 1]} : vector<8x256xf32> to vector<8x225xf32>
    %931 = tpu.concatenate %930, %929 in 1 : vector<8x225xf32>, vector<8x31xf32> -> vector<8x256xf32>
    %c21_651 = arith.constant 21 : index
    %c0_652 = arith.constant 0 : index
    %c0_653 = arith.constant 0 : index
    %932 = vector.load %arg13[%c21_651, %c0_652, %c0_653] : memref<25x8x8xf32, #tpu.memory_space<vmem>>, vector<1x8x8xf32>
    %933 = vector.shape_cast %932 : vector<1x8x8xf32> to vector<8x8xf32>
    %cst_654 = arith.constant dense<0.000000e+00> : vector<8x256xf32>
    %934 = tpu.matmul %933, %931, %cst_654 {dimension_numbers = #tpu.dot_dimension_numbers<[1], [0], [0], [1], [0, 0, 1, 1], [], []>} : vector<8x8xf32>, vector<8x256xf32>, vector<8x256xf32> -> vector<8x256xf32>
    %935 = arith.addf %928, %934 : vector<8x256xf32>
    %cst_655 = arith.constant 0.000000e+00 : f32
    %936 = vector.broadcast %cst_655 : f32 to vector<8x32xf32>
    %937 = vector.extract_strided_slice %773 {offsets = [0, 32], sizes = [8, 224], strides = [1, 1]} : vector<8x256xf32> to vector<8x224xf32>
    %938 = tpu.concatenate %937, %936 in 1 : vector<8x224xf32>, vector<8x32xf32> -> vector<8x256xf32>
    %c22_656 = arith.constant 22 : index
    %c0_657 = arith.constant 0 : index
    %c0_658 = arith.constant 0 : index
    %939 = vector.load %arg13[%c22_656, %c0_657, %c0_658] : memref<25x8x8xf32, #tpu.memory_space<vmem>>, vector<1x8x8xf32>
    %940 = vector.shape_cast %939 : vector<1x8x8xf32> to vector<8x8xf32>
    %cst_659 = arith.constant dense<0.000000e+00> : vector<8x256xf32>
    %941 = tpu.matmul %940, %938, %cst_659 {dimension_numbers = #tpu.dot_dimension_numbers<[1], [0], [0], [1], [0, 0, 1, 1], [], []>} : vector<8x8xf32>, vector<8x256xf32>, vector<8x256xf32> -> vector<8x256xf32>
    %942 = arith.addf %935, %941 : vector<8x256xf32>
    %cst_660 = arith.constant 0.000000e+00 : f32
    %943 = vector.broadcast %cst_660 : f32 to vector<8x33xf32>
    %944 = vector.extract_strided_slice %782 {offsets = [0, 33], sizes = [8, 223], strides = [1, 1]} : vector<8x256xf32> to vector<8x223xf32>
    %945 = tpu.concatenate %944, %943 in 1 : vector<8x223xf32>, vector<8x33xf32> -> vector<8x256xf32>
    %c23_661 = arith.constant 23 : index
    %c0_662 = arith.constant 0 : index
    %c0_663 = arith.constant 0 : index
    %946 = vector.load %arg13[%c23_661, %c0_662, %c0_663] : memref<25x8x8xf32, #tpu.memory_space<vmem>>, vector<1x8x8xf32>
    %947 = vector.shape_cast %946 : vector<1x8x8xf32> to vector<8x8xf32>
    %cst_664 = arith.constant dense<0.000000e+00> : vector<8x256xf32>
    %948 = tpu.matmul %947, %945, %cst_664 {dimension_numbers = #tpu.dot_dimension_numbers<[1], [0], [0], [1], [0, 0, 1, 1], [], []>} : vector<8x8xf32>, vector<8x256xf32>, vector<8x256xf32> -> vector<8x256xf32>
    %949 = arith.addf %942, %948 : vector<8x256xf32>
    %cst_665 = arith.constant 0.000000e+00 : f32
    %950 = vector.broadcast %cst_665 : f32 to vector<8x34xf32>
    %951 = vector.extract_strided_slice %785 {offsets = [0, 34], sizes = [8, 222], strides = [1, 1]} : vector<8x256xf32> to vector<8x222xf32>
    %952 = tpu.concatenate %951, %950 in 1 : vector<8x222xf32>, vector<8x34xf32> -> vector<8x256xf32>
    %c24_666 = arith.constant 24 : index
    %c0_667 = arith.constant 0 : index
    %c0_668 = arith.constant 0 : index
    %953 = vector.load %arg13[%c24_666, %c0_667, %c0_668] : memref<25x8x8xf32, #tpu.memory_space<vmem>>, vector<1x8x8xf32>
    %954 = vector.shape_cast %953 : vector<1x8x8xf32> to vector<8x8xf32>
    %cst_669 = arith.constant dense<0.000000e+00> : vector<8x256xf32>
    %955 = tpu.matmul %954, %952, %cst_669 {dimension_numbers = #tpu.dot_dimension_numbers<[1], [0], [0], [1], [0, 0, 1, 1], [], []>} : vector<8x8xf32>, vector<8x256xf32>, vector<8x256xf32> -> vector<8x256xf32>
    %956 = arith.addf %949, %955 : vector<8x256xf32>
    %c0_670 = arith.constant 0 : index
    %c0_671 = arith.constant 0 : index
    %c0_672 = arith.constant 0 : index
    %957 = vector.load %arg14[%c0_670, %c0_671, %c0_672] : memref<1x8x8xf32, #tpu.memory_space<vmem>>, vector<1x8x8xf32>
    %958 = vector.shape_cast %957 : vector<1x8x8xf32> to vector<8x8xf32>
    %cst_673 = arith.constant dense<0.000000e+00> : vector<8x256xf32>
    %959 = tpu.matmul %958, %956, %cst_673 {dimension_numbers = #tpu.dot_dimension_numbers<[1], [0], [0], [1], [0, 0, 1, 1], [], []>} : vector<8x8xf32>, vector<8x256xf32>, vector<8x256xf32> -> vector<8x256xf32>
    %960 = arith.addf %582, %959 : vector<8x256xf32>
    %cst_674 = arith.constant 0.000000e+00 : f32
    %961 = vector.broadcast %cst_674 : f32 to vector<8x256xf32>
    %962 = arith.cmpf oge, %960, %961 : vector<8x256xf32>
    %cst_675 = arith.constant 0.00999999977 : f32
    %963 = vector.broadcast %cst_675 : f32 to vector<8x256xf32>
    %964 = arith.mulf %963, %960 : vector<8x256xf32>
    %965 = arith.select %962, %960, %964 : vector<8x256xi1>, vector<8x256xf32>
    %c1_676 = arith.constant 1 : index
    %c0_677 = arith.constant 0 : index
    %966 = vector.load %arg3[%c1_676, %c0_677] : memref<4x256xf32, #tpu.memory_space<vmem>>, vector<1x256xf32>
    %967 = vector.broadcast %966 : vector<1x256xf32> to vector<8x256xf32>
    %968 = arith.mulf %965, %967 : vector<8x256xf32>
    %c2_678 = arith.constant 2 : index
    %c0_679 = arith.constant 0 : index
    %969 = vector.load %arg3[%c2_678, %c0_679] : memref<4x256xf32, #tpu.memory_space<vmem>>, vector<1x256xf32>
    %970 = vector.broadcast %969 : vector<1x256xf32> to vector<8x256xf32>
    %971 = arith.mulf %965, %970 : vector<8x256xf32>
    %cst_680 = arith.constant 0.000000e+00 : f32
    %972 = vector.broadcast %cst_680 : f32 to vector<8x17xf32>
    %973 = vector.extract_strided_slice %968 {offsets = [0, 0], sizes = [8, 239], strides = [1, 1]} : vector<8x256xf32> to vector<8x239xf32>
    %974 = tpu.concatenate %972, %973 in 1 : vector<8x17xf32>, vector<8x239xf32> -> vector<8x256xf32>
    %c0_681 = arith.constant 0 : index
    %c0_682 = arith.constant 0 : index
    %c0_683 = arith.constant 0 : index
    %975 = vector.load %arg15[%c0_681, %c0_682, %c0_683] : memref<9x4x8xf32, #tpu.memory_space<vmem>>, vector<1x4x8xf32>
    %976 = vector.shape_cast %975 : vector<1x4x8xf32> to vector<4x8xf32>
    %cst_684 = arith.constant dense<0.000000e+00> : vector<4x256xf32>
    %977 = tpu.matmul %976, %974, %cst_684 {dimension_numbers = #tpu.dot_dimension_numbers<[1], [0], [0], [1], [0, 0, 1, 1], [], []>} : vector<4x8xf32>, vector<8x256xf32>, vector<4x256xf32> -> vector<4x256xf32>
    %cst_685 = arith.constant 0.000000e+00 : f32
    %978 = vector.broadcast %cst_685 : f32 to vector<8x16xf32>
    %979 = vector.extract_strided_slice %965 {offsets = [0, 0], sizes = [8, 240], strides = [1, 1]} : vector<8x256xf32> to vector<8x240xf32>
    %980 = tpu.concatenate %978, %979 in 1 : vector<8x16xf32>, vector<8x240xf32> -> vector<8x256xf32>
    %c1_686 = arith.constant 1 : index
    %c0_687 = arith.constant 0 : index
    %c0_688 = arith.constant 0 : index
    %981 = vector.load %arg15[%c1_686, %c0_687, %c0_688] : memref<9x4x8xf32, #tpu.memory_space<vmem>>, vector<1x4x8xf32>
    %982 = vector.shape_cast %981 : vector<1x4x8xf32> to vector<4x8xf32>
    %cst_689 = arith.constant dense<0.000000e+00> : vector<4x256xf32>
    %983 = tpu.matmul %982, %980, %cst_689 {dimension_numbers = #tpu.dot_dimension_numbers<[1], [0], [0], [1], [0, 0, 1, 1], [], []>} : vector<4x8xf32>, vector<8x256xf32>, vector<4x256xf32> -> vector<4x256xf32>
    %984 = arith.addf %977, %983 : vector<4x256xf32>
    %cst_690 = arith.constant 0.000000e+00 : f32
    %985 = vector.broadcast %cst_690 : f32 to vector<8x15xf32>
    %986 = vector.extract_strided_slice %971 {offsets = [0, 0], sizes = [8, 241], strides = [1, 1]} : vector<8x256xf32> to vector<8x241xf32>
    %987 = tpu.concatenate %985, %986 in 1 : vector<8x15xf32>, vector<8x241xf32> -> vector<8x256xf32>
    %c2_691 = arith.constant 2 : index
    %c0_692 = arith.constant 0 : index
    %c0_693 = arith.constant 0 : index
    %988 = vector.load %arg15[%c2_691, %c0_692, %c0_693] : memref<9x4x8xf32, #tpu.memory_space<vmem>>, vector<1x4x8xf32>
    %989 = vector.shape_cast %988 : vector<1x4x8xf32> to vector<4x8xf32>
    %cst_694 = arith.constant dense<0.000000e+00> : vector<4x256xf32>
    %990 = tpu.matmul %989, %987, %cst_694 {dimension_numbers = #tpu.dot_dimension_numbers<[1], [0], [0], [1], [0, 0, 1, 1], [], []>} : vector<4x8xf32>, vector<8x256xf32>, vector<4x256xf32> -> vector<4x256xf32>
    %991 = arith.addf %984, %990 : vector<4x256xf32>
    %cst_695 = arith.constant 0.000000e+00 : f32
    %992 = vector.broadcast %cst_695 : f32 to vector<8x1xf32>
    %993 = vector.extract_strided_slice %968 {offsets = [0, 0], sizes = [8, 255], strides = [1, 1]} : vector<8x256xf32> to vector<8x255xf32>
    %994 = tpu.concatenate %992, %993 in 1 : vector<8x1xf32>, vector<8x255xf32> -> vector<8x256xf32>
    %c3_696 = arith.constant 3 : index
    %c0_697 = arith.constant 0 : index
    %c0_698 = arith.constant 0 : index
    %995 = vector.load %arg15[%c3_696, %c0_697, %c0_698] : memref<9x4x8xf32, #tpu.memory_space<vmem>>, vector<1x4x8xf32>
    %996 = vector.shape_cast %995 : vector<1x4x8xf32> to vector<4x8xf32>
    %cst_699 = arith.constant dense<0.000000e+00> : vector<4x256xf32>
    %997 = tpu.matmul %996, %994, %cst_699 {dimension_numbers = #tpu.dot_dimension_numbers<[1], [0], [0], [1], [0, 0, 1, 1], [], []>} : vector<4x8xf32>, vector<8x256xf32>, vector<4x256xf32> -> vector<4x256xf32>
    %998 = arith.addf %991, %997 : vector<4x256xf32>
    %c4_700 = arith.constant 4 : index
    %c0_701 = arith.constant 0 : index
    %c0_702 = arith.constant 0 : index
    %999 = vector.load %arg15[%c4_700, %c0_701, %c0_702] : memref<9x4x8xf32, #tpu.memory_space<vmem>>, vector<1x4x8xf32>
    %1000 = vector.shape_cast %999 : vector<1x4x8xf32> to vector<4x8xf32>
    %cst_703 = arith.constant dense<0.000000e+00> : vector<4x256xf32>
    %1001 = tpu.matmul %1000, %965, %cst_703 {dimension_numbers = #tpu.dot_dimension_numbers<[1], [0], [0], [1], [0, 0, 1, 1], [], []>} : vector<4x8xf32>, vector<8x256xf32>, vector<4x256xf32> -> vector<4x256xf32>
    %1002 = arith.addf %998, %1001 : vector<4x256xf32>
    %cst_704 = arith.constant 0.000000e+00 : f32
    %1003 = vector.broadcast %cst_704 : f32 to vector<8x1xf32>
    %1004 = vector.extract_strided_slice %971 {offsets = [0, 1], sizes = [8, 255], strides = [1, 1]} : vector<8x256xf32> to vector<8x255xf32>
    %1005 = tpu.concatenate %1004, %1003 in 1 : vector<8x255xf32>, vector<8x1xf32> -> vector<8x256xf32>
    %c5_705 = arith.constant 5 : index
    %c0_706 = arith.constant 0 : index
    %c0_707 = arith.constant 0 : index
    %1006 = vector.load %arg15[%c5_705, %c0_706, %c0_707] : memref<9x4x8xf32, #tpu.memory_space<vmem>>, vector<1x4x8xf32>
    %1007 = vector.shape_cast %1006 : vector<1x4x8xf32> to vector<4x8xf32>
    %cst_708 = arith.constant dense<0.000000e+00> : vector<4x256xf32>
    %1008 = tpu.matmul %1007, %1005, %cst_708 {dimension_numbers = #tpu.dot_dimension_numbers<[1], [0], [0], [1], [0, 0, 1, 1], [], []>} : vector<4x8xf32>, vector<8x256xf32>, vector<4x256xf32> -> vector<4x256xf32>
    %1009 = arith.addf %1002, %1008 : vector<4x256xf32>
    %cst_709 = arith.constant 0.000000e+00 : f32
    %1010 = vector.broadcast %cst_709 : f32 to vector<8x15xf32>
    %1011 = vector.extract_strided_slice %968 {offsets = [0, 15], sizes = [8, 241], strides = [1, 1]} : vector<8x256xf32> to vector<8x241xf32>
    %1012 = tpu.concatenate %1011, %1010 in 1 : vector<8x241xf32>, vector<8x15xf32> -> vector<8x256xf32>
    %c6_710 = arith.constant 6 : index
    %c0_711 = arith.constant 0 : index
    %c0_712 = arith.constant 0 : index
    %1013 = vector.load %arg15[%c6_710, %c0_711, %c0_712] : memref<9x4x8xf32, #tpu.memory_space<vmem>>, vector<1x4x8xf32>
    %1014 = vector.shape_cast %1013 : vector<1x4x8xf32> to vector<4x8xf32>
    %cst_713 = arith.constant dense<0.000000e+00> : vector<4x256xf32>
    %1015 = tpu.matmul %1014, %1012, %cst_713 {dimension_numbers = #tpu.dot_dimension_numbers<[1], [0], [0], [1], [0, 0, 1, 1], [], []>} : vector<4x8xf32>, vector<8x256xf32>, vector<4x256xf32> -> vector<4x256xf32>
    %1016 = arith.addf %1009, %1015 : vector<4x256xf32>
    %cst_714 = arith.constant 0.000000e+00 : f32
    %1017 = vector.broadcast %cst_714 : f32 to vector<8x16xf32>
    %1018 = vector.extract_strided_slice %965 {offsets = [0, 16], sizes = [8, 240], strides = [1, 1]} : vector<8x256xf32> to vector<8x240xf32>
    %1019 = tpu.concatenate %1018, %1017 in 1 : vector<8x240xf32>, vector<8x16xf32> -> vector<8x256xf32>
    %c7_715 = arith.constant 7 : index
    %c0_716 = arith.constant 0 : index
    %c0_717 = arith.constant 0 : index
    %1020 = vector.load %arg15[%c7_715, %c0_716, %c0_717] : memref<9x4x8xf32, #tpu.memory_space<vmem>>, vector<1x4x8xf32>
    %1021 = vector.shape_cast %1020 : vector<1x4x8xf32> to vector<4x8xf32>
    %cst_718 = arith.constant dense<0.000000e+00> : vector<4x256xf32>
    %1022 = tpu.matmul %1021, %1019, %cst_718 {dimension_numbers = #tpu.dot_dimension_numbers<[1], [0], [0], [1], [0, 0, 1, 1], [], []>} : vector<4x8xf32>, vector<8x256xf32>, vector<4x256xf32> -> vector<4x256xf32>
    %1023 = arith.addf %1016, %1022 : vector<4x256xf32>
    %cst_719 = arith.constant 0.000000e+00 : f32
    %1024 = vector.broadcast %cst_719 : f32 to vector<8x17xf32>
    %1025 = vector.extract_strided_slice %971 {offsets = [0, 17], sizes = [8, 239], strides = [1, 1]} : vector<8x256xf32> to vector<8x239xf32>
    %1026 = tpu.concatenate %1025, %1024 in 1 : vector<8x239xf32>, vector<8x17xf32> -> vector<8x256xf32>
    %c8_720 = arith.constant 8 : index
    %c0_721 = arith.constant 0 : index
    %c0_722 = arith.constant 0 : index
    %1027 = vector.load %arg15[%c8_720, %c0_721, %c0_722] : memref<9x4x8xf32, #tpu.memory_space<vmem>>, vector<1x4x8xf32>
    %1028 = vector.shape_cast %1027 : vector<1x4x8xf32> to vector<4x8xf32>
    %cst_723 = arith.constant dense<0.000000e+00> : vector<4x256xf32>
    %1029 = tpu.matmul %1028, %1026, %cst_723 {dimension_numbers = #tpu.dot_dimension_numbers<[1], [0], [0], [1], [0, 0, 1, 1], [], []>} : vector<4x8xf32>, vector<8x256xf32>, vector<4x256xf32> -> vector<4x256xf32>
    %1030 = arith.addf %1023, %1029 : vector<4x256xf32>
    %1031 = arith.addf %1, %1030 : vector<4x256xf32>
    %c0_724 = arith.constant 0 : index
    %c0_725 = arith.constant 0 : index
    %c0_726 = arith.constant 0 : index
    %1032 = vector.load %arg16[%c0_724, %c0_725, %c0_726] : memref<1x4x256xf32, #tpu.memory_space<vmem>>, vector<1x4x256xf32>
    %1033 = vector.shape_cast %1032 : vector<1x4x256xf32> to vector<4x256xf32>
    %1034 = vector.shape_cast %1031 : vector<4x256xf32> to vector<1x4x256xf32>
    tpu.vector_store %arg16[%c0_724, %c0_725, %c0_726], %1034 {strides = array<i32>} : memref<1x4x256xf32, #tpu.memory_space<vmem>>, vector<1x4x256xf32>,
    %c0_727 = arith.constant 0 : index
    %c0_728 = arith.constant 0 : index
    %c0_729 = arith.constant 0 : index
    %1035 = vector.load %arg17[%c0_727, %c0_728, %c0_729] : memref<1x4x256xf32, #tpu.memory_space<vmem>>, vector<1x4x256xf32>
    %1036 = vector.shape_cast %1035 : vector<1x4x256xf32> to vector<4x256xf32>
    %1037 = vector.shape_cast %517 : vector<4x256xf32> to vector<1x4x256xf32>
    tpu.vector_store %arg17[%c0_727, %c0_728, %c0_729], %1037 {strides = array<i32>} : memref<1x4x256xf32, #tpu.memory_space<vmem>>, vector<1x4x256xf32>,
    return
  }
  func.func @transform_0(%arg0: i32) -> (i32, i32, i32) {
    %c0_i32 = arith.constant 0 : i32
    %c0_i32_0 = arith.constant 0 : i32
    %c0_i32_1 = arith.constant 0 : i32
    return %arg0, %c0_i32, %c0_i32_0 : i32, i32, i32
  }
  func.func @transform_1(%arg0: i32) -> (i32, i32, i32) {
    %c0_i32 = arith.constant 0 : i32
    %c0_i32_0 = arith.constant 0 : i32
    %c0_i32_1 = arith.constant 0 : i32
    return %arg0, %c0_i32, %c0_i32_0 : i32, i32, i32
  }
  func.func @transform_2(%arg0: i32) -> (i32, i32) {
    %c0_i32 = arith.constant 0 : i32
    %c0_i32_0 = arith.constant 0 : i32
    %c0_i32_1 = arith.constant 0 : i32
    return %c0_i32, %c0_i32_0 : i32, i32
  }
  func.func @transform_3(%arg0: i32) -> (i32, i32, i32) {
    %c0_i32 = arith.constant 0 : i32
    %c0_i32_0 = arith.constant 0 : i32
    %c0_i32_1 = arith.constant 0 : i32
    %c0_i32_2 = arith.constant 0 : i32
    return %c0_i32, %c0_i32_0, %c0_i32_1 : i32, i32, i32
  }
  func.func @transform_4(%arg0: i32) -> (i32, i32, i32) {
    %c0_i32 = arith.constant 0 : i32
    %c0_i32_0 = arith.constant 0 : i32
    %c0_i32_1 = arith.constant 0 : i32
    %c0_i32_2 = arith.constant 0 : i32
    return %c0_i32, %c0_i32_0, %c0_i32_1 : i32, i32, i32
  }
  func.func @transform_5(%arg0: i32) -> (i32, i32, i32) {
    %c0_i32 = arith.constant 0 : i32
    %c0_i32_0 = arith.constant 0 : i32
    %c0_i32_1 = arith.constant 0 : i32
    %c0_i32_2 = arith.constant 0 : i32
    return %c0_i32, %c0_i32_0, %c0_i32_1 : i32, i32, i32
  }
  func.func @transform_6(%arg0: i32) -> (i32, i32, i32) {
    %c0_i32 = arith.constant 0 : i32
    %c0_i32_0 = arith.constant 0 : i32
    %c0_i32_1 = arith.constant 0 : i32
    %c0_i32_2 = arith.constant 0 : i32
    return %c0_i32, %c0_i32_0, %c0_i32_1 : i32, i32, i32
  }
  func.func @transform_7(%arg0: i32) -> (i32, i32, i32) {
    %c0_i32 = arith.constant 0 : i32
    %c0_i32_0 = arith.constant 0 : i32
    %c0_i32_1 = arith.constant 0 : i32
    %c0_i32_2 = arith.constant 0 : i32
    return %c0_i32, %c0_i32_0, %c0_i32_1 : i32, i32, i32
  }
  func.func @transform_8(%arg0: i32) -> (i32, i32, i32) {
    %c0_i32 = arith.constant 0 : i32
    %c0_i32_0 = arith.constant 0 : i32
    %c0_i32_1 = arith.constant 0 : i32
    %c0_i32_2 = arith.constant 0 : i32
    return %c0_i32, %c0_i32_0, %c0_i32_1 : i32, i32, i32
  }
  func.func @transform_9(%arg0: i32) -> (i32, i32, i32) {
    %c0_i32 = arith.constant 0 : i32
    %c0_i32_0 = arith.constant 0 : i32
    %c0_i32_1 = arith.constant 0 : i32
    %c0_i32_2 = arith.constant 0 : i32
    return %c0_i32, %c0_i32_0, %c0_i32_1 : i32, i32, i32
  }
  func.func @transform_10(%arg0: i32) -> (i32, i32, i32) {
    %c0_i32 = arith.constant 0 : i32
    %c0_i32_0 = arith.constant 0 : i32
    %c0_i32_1 = arith.constant 0 : i32
    %c0_i32_2 = arith.constant 0 : i32
    return %c0_i32, %c0_i32_0, %c0_i32_1 : i32, i32, i32
  }
  func.func @transform_11(%arg0: i32) -> (i32, i32, i32) {
    %c0_i32 = arith.constant 0 : i32
    %c0_i32_0 = arith.constant 0 : i32
    %c0_i32_1 = arith.constant 0 : i32
    %c0_i32_2 = arith.constant 0 : i32
    return %c0_i32, %c0_i32_0, %c0_i32_1 : i32, i32, i32
  }
  func.func @transform_12(%arg0: i32) -> (i32, i32, i32) {
    %c0_i32 = arith.constant 0 : i32
    %c0_i32_0 = arith.constant 0 : i32
    %c0_i32_1 = arith.constant 0 : i32
    %c0_i32_2 = arith.constant 0 : i32
    return %c0_i32, %c0_i32_0, %c0_i32_1 : i32, i32, i32
  }
  func.func @transform_13(%arg0: i32) -> (i32, i32, i32) {
    %c0_i32 = arith.constant 0 : i32
    %c0_i32_0 = arith.constant 0 : i32
    %c0_i32_1 = arith.constant 0 : i32
    %c0_i32_2 = arith.constant 0 : i32
    return %c0_i32, %c0_i32_0, %c0_i32_1 : i32, i32, i32
  }
  func.func @transform_14(%arg0: i32) -> (i32, i32, i32) {
    %c0_i32 = arith.constant 0 : i32
    %c0_i32_0 = arith.constant 0 : i32
    %c0_i32_1 = arith.constant 0 : i32
    %c0_i32_2 = arith.constant 0 : i32
    return %c0_i32, %c0_i32_0, %c0_i32_1 : i32, i32, i32
  }
  func.func @transform_15(%arg0: i32) -> (i32, i32, i32) {
    %c0_i32 = arith.constant 0 : i32
    %c0_i32_0 = arith.constant 0 : i32
    %c0_i32_1 = arith.constant 0 : i32
    return %arg0, %c0_i32, %c0_i32_0 : i32, i32, i32
  }
  func.func @transform_16(%arg0: i32) -> (i32, i32, i32) {
    %c0_i32 = arith.constant 0 : i32
    %c0_i32_0 = arith.constant 0 : i32
    %c0_i32_1 = arith.constant 0 : i32
    return %arg0, %c0_i32, %c0_i32_0 : i32, i32, i32
  }
}

</mosaic_0001>

<llo_original>
// kernel: lsr_forward.1
$region0: #{lsr_forward.1}
  #allocation0 [shape = 'u32[]', space=smem, size = 0x4, offset = 0x4, fixed_abs, tag = 'smem constant byte address 0x4 - core index']
  #allocation1 [shape = 'u32[72,128]{1,0:T(1,128)}', space=vmem, size = 0x9000, scoped, tag = 'internal scratch']
  %s0 = inlined_call_operand.vmem [shape: f32[2,4,256], index: 0, kind: input, shape index: {}]
  %s1 = inlined_call_operand.vmem [shape: f32[2,4,256], index: 1, kind: input, shape index: {}]
  %s2 = inlined_call_operand.vmem [shape: f32[4,256], index: 2, kind: input, shape index: {}]
  %s3 = inlined_call_operand.vmem [shape: f32[9,8,4], index: 3, kind: input, shape index: {}]
  %s4 = inlined_call_operand.vmem [shape: f32[25,8,8], index: 4, kind: input, shape index: {}]
  %s5 = inlined_call_operand.vmem [shape: f32[1,8,8], index: 5, kind: input, shape index: {}]
  %s6 = inlined_call_operand.vmem [shape: f32[25,8,8], index: 6, kind: input, shape index: {}]
  %s7 = inlined_call_operand.vmem [shape: f32[1,8,8], index: 7, kind: input, shape index: {}]
  %s8 = inlined_call_operand.vmem [shape: f32[9,4,8], index: 8, kind: input, shape index: {}]
  %s9 = inlined_call_operand.vmem [shape: f32[9,8,4], index: 9, kind: input, shape index: {}]
  %s10 = inlined_call_operand.vmem [shape: f32[25,8,8], index: 10, kind: input, shape index: {}]
  %s11 = inlined_call_operand.vmem [shape: f32[1,8,8], index: 11, kind: input, shape index: {}]
  %s12 = inlined_call_operand.vmem [shape: f32[25,8,8], index: 12, kind: input, shape index: {}]
  %s13 = inlined_call_operand.vmem [shape: f32[1,8,8], index: 13, kind: input, shape index: {}]
  %s14 = inlined_call_operand.vmem [shape: f32[9,4,8], index: 14, kind: input, shape index: {}]
  %s15 = inlined_call_operand.vmem [shape: f32[2,4,256], index: 15, kind: output, shape index: {0}]
  %s16 = inlined_call_operand.vmem [shape: f32[2,4,256], index: 16, kind: output, shape index: {1}]
  %17 = xla_tuple %s15, %s16
  %s18 = sld [smem:[#allocation0]]
  $region101: #{lsr_forward.1} parent=0
    _
  %s20 = ssub.s32 1, %s18
  %s21 = scalar_select 0, %s20, %s18
  loop: start=0, step=1, limit=4
  $region2: #{lsr_forward.1} parent=0 // loop_pre_header
    _
  $region3: #{lsr_forward.1} parent=0 // loop_header
    %s23 = sphi 0, %s27
    %p24 = scmp.ge.s32.totalorder %s23, 4
    %s33 = sphi 0, %s35
    %s36 = sphi 0, %s33
    %s37 = sphi 0, %s36
    %s53 = sphi 0, %s37
    %s59 = sphi 0, %s61
    %s62 = sphi 0, %s59
    %s63 = sphi 0, %s62
    %s79 = sphi 0, %s63
    %s83 = sphi 0, %s83
    %s85 = sphi 0, %s83
    %s86 = sphi 0, %s85
    %s100 = sphi 0, %s86
    %s104 = sphi 0, %s104
    %s106 = sphi 0, %s104
    %s107 = sphi 0, %s106
    %s121 = sphi 0, %s107
    %s125 = sphi 0, %s125
    %s127 = sphi 0, %s125
    %s128 = sphi 0, %s127
    %s142 = sphi 0, %s128
    %s146 = sphi 0, %s146
    %s148 = sphi 0, %s146
    %s149 = sphi 0, %s148
    %s163 = sphi 0, %s149
    %s167 = sphi 0, %s167
    %s169 = sphi 0, %s167
    %s170 = sphi 0, %s169
    %s184 = sphi 0, %s170
    %s188 = sphi 0, %s188
    %s190 = sphi 0, %s188
    %s191 = sphi 0, %s190
    %s205 = sphi 0, %s191
    %s209 = sphi 0, %s209
    %s211 = sphi 0, %s209
    %s212 = sphi 0, %s211
    %s226 = sphi 0, %s212
    %s230 = sphi 0, %s230
    %s232 = sphi 0, %s230
    %s233 = sphi 0, %s232
    %s247 = sphi 0, %s233
    %s251 = sphi 0, %s251
    %s253 = sphi 0, %s251
    %s254 = sphi 0, %s253
    %s268 = sphi 0, %s254
    %s272 = sphi 0, %s272
    %s274 = sphi 0, %s272
    %s275 = sphi 0, %s274
    %s289 = sphi 0, %s275
    %s293 = sphi 0, %s293
    %s295 = sphi 0, %s293
    %s296 = sphi 0, %s295
    %s310 = sphi 0, %s296
    %s314 = sphi 0, %s314
    %s316 = sphi 0, %s314
    %s317 = sphi 0, %s316
    %s331 = sphi 0, %s317
    %s335 = sphi 0, %s335
    %s337 = sphi 0, %s335
    %s338 = sphi 0, %s337
    %s352 = sphi 0, %s338
    %s358 = sphi 0, %s360
    %s361 = sphi 0, %s358
    %s362 = sphi 0, %s361
    %s378 = sphi 0, %s362
    %s384 = sphi 0, %s386
    %s387 = sphi 0, %s384
    %s388 = sphi 0, %s387
    %s404 = sphi 0, %s388
  $region4: #{lsr_forward.1} parent=0 // loop_header_branch
    %26 = sbr.rel (%p24) target = $region8
  $region5: #{lsr_forward.1} parent=0 // loop_body
    %s28 = ssub.s32 %s23, 1
    %s29 = ssub.s32 %s23, 2
    %s30 = sadd.s32 %s23, 1
    %s31 = ssub.s32 %s23, %s30
    %p32 = scmp.eq.s32.totalorder %s31, 0
    %s34 = sadd.s32 %s33, 1
    %s35 = scalar_select %p32, %s33, %s34
    %p38 = pneg %p32
    %p39 = scmp.eq.s32.totalorder %s23, 1
    %p40 = por %p38, %p39
    %p41 = scmp.ne.s32.totalorder %s33, %s36
    %p42 = scmp.eq.s32.totalorder %s23, 0
    %p43 = por %p41, %p42
    %p44 = scmp.ne.s32.totalorder %s33, %s36
    %p45 = scmp.eq.s32.totalorder %s28, 1
    %p46 = por %p44, %p45
    %p47 = scmp.ne.s32.totalorder %s36, %s37
    %p48 = scmp.eq.s32.totalorder %s28, 0
    %p49 = por %p47, %p48
    %p50 = scmp.ne.s32.totalorder %s36, %s37
    %p51 = scmp.eq.s32.totalorder %s29, 1
    %p52 = por %p50, %p51
    %p54 = scmp.ne.s32.totalorder %s37, %s53
    %p55 = scmp.eq.s32.totalorder %s29, 0
    %p56 = por %p54, %p55
    %s57 = ssub.s32 %s23, %s30
    %p58 = scmp.eq.s32.totalorder %s57, 0
    %s60 = sadd.s32 %s59, 1
    %s61 = scalar_select %p58, %s59, %s60
    %p64 = pneg %p58
    %p65 = scmp.eq.s32.totalorder %s23, 1
    %p66 = por %p64, %p65
    %p67 = scmp.ne.s32.totalorder %s59, %s62
    %p68 = scmp.eq.s32.totalorder %s23, 0
    %p69 = por %p67, %p68
    %p70 = scmp.ne.s32.totalorder %s59, %s62
    %p71 = scmp.eq.s32.totalorder %s28, 1
    %p72 = por %p70, %p71
    %p73 = scmp.ne.s32.totalorder %s62, %s63
    %p74 = scmp.eq.s32.totalorder %s28, 0
    %p75 = por %p73, %p74
    %p76 = scmp.ne.s32.totalorder %s62, %s63
    %p77 = scmp.eq.s32.totalorder %s29, 1
    %p78 = por %p76, %p77
    %p80 = scmp.ne.s32.totalorder %s63, %s79
    %p81 = scmp.eq.s32.totalorder %s29, 0
    %p82 = por %p80, %p81
    %s84 = sadd.s32 %s83, 1
    %p87 = scmp.eq.s32.totalorder %s23, 1
    %p88 = scmp.ne.s32.totalorder %s83, %s85
    %p89 = scmp.eq.s32.totalorder %s23, 0
    %p90 = por %p88, %p89
    %p91 = scmp.ne.s32.totalorder %s83, %s85
    %p92 = scmp.eq.s32.totalorder %s28, 1
    %p93 = por %p91, %p92
    %p94 = scmp.ne.s32.totalorder %s85, %s86
    %p95 = scmp.eq.s32.totalorder %s28, 0
    %p96 = por %p94, %p95
    %p97 = scmp.ne.s32.totalorder %s85, %s86
    %p98 = scmp.eq.s32.totalorder %s29, 1
    %p99 = por %p97, %p98
    %p101 = scmp.ne.s32.totalorder %s86, %s100
    %p102 = scmp.eq.s32.totalorder %s29, 0
    %p103 = por %p101, %p102
    %s105 = sadd.s32 %s104, 1
    %p108 = scmp.eq.s32.totalorder %s23, 1
    %p109 = scmp.ne.s32.totalorder %s104, %s106
    %p110 = scmp.eq.s32.totalorder %s23, 0
    %p111 = por %p109, %p110
    %p112 = scmp.ne.s32.totalorder %s104, %s106
    %p113 = scmp.eq.s32.totalorder %s28, 1
    %p114 = por %p112, %p113
    %p115 = scmp.ne.s32.totalorder %s106, %s107
    %p116 = scmp.eq.s32.totalorder %s28, 0
    %p117 = por %p115, %p116
    %p118 = scmp.ne.s32.totalorder %s106, %s107
    %p119 = scmp.eq.s32.totalorder %s29, 1
    %p120 = por %p118, %p119
    %p122 = scmp.ne.s32.totalorder %s107, %s121
    %p123 = scmp.eq.s32.totalorder %s29, 0
    %p124 = por %p122, %p123
    %s126 = sadd.s32 %s125, 1
    %p129 = scmp.eq.s32.totalorder %s23, 1
    %p130 = scmp.ne.s32.totalorder %s125, %s127
    %p131 = scmp.eq.s32.totalorder %s23, 0
    %p132 = por %p130, %p131
    %p133 = scmp.ne.s32.totalorder %s125, %s127
    %p134 = scmp.eq.s32.totalorder %s28, 1
    %p135 = por %p133, %p134
    %p136 = scmp.ne.s32.totalorder %s127, %s128
    %p137 = scmp.eq.s32.totalorder %s28, 0
    %p138 = por %p136, %p137
    %p139 = scmp.ne.s32.totalorder %s127, %s128
    %p140 = scmp.eq.s32.totalorder %s29, 1
    %p141 = por %p139, %p140
    %p143 = scmp.ne.s32.totalorder %s128, %s142
    %p144 = scmp.eq.s32.totalorder %s29, 0
    %p145 = por %p143, %p144
    %s147 = sadd.s32 %s146, 1
    %p150 = scmp.eq.s32.totalorder %s23, 1
    %p151 = scmp.ne.s32.totalorder %s146, %s148
    %p152 = scmp.eq.s32.totalorder %s23, 0
    %p153 = por %p151, %p152
    %p154 = scmp.ne.s32.totalorder %s146, %s148
    %p155 = scmp.eq.s32.totalorder %s28, 1
    %p156 = por %p154, %p155
    %p157 = scmp.ne.s32.totalorder %s148, %s149
    %p158 = scmp.eq.s32.totalorder %s28, 0
    %p159 = por %p157, %p158
    %p160 = scmp.ne.s32.totalorder %s148, %s149
    %p161 = scmp.eq.s32.totalorder %s29, 1
    %p162 = por %p160, %p161
    %p164 = scmp.ne.s32.totalorder %s149, %s163
    %p165 = scmp.eq.s32.totalorder %s29, 0
    %p166 = por %p164, %p165
    %s168 = sadd.s32 %s167, 1
    %p171 = scmp.eq.s32.totalorder %s23, 1
    %p172 = scmp.ne.s32.totalorder %s167, %s169
    %p173 = scmp.eq.s32.totalorder %s23, 0
    %p174 = por %p172, %p173
    %p175 = scmp.ne.s32.totalorder %s167, %s169
    %p176 = scmp.eq.s32.totalorder %s28, 1
    %p177 = por %p175, %p176
    %p178 = scmp.ne.s32.totalorder %s169, %s170
    %p179 = scmp.eq.s32.totalorder %s28, 0
    %p180 = por %p178, %p179
    %p181 = scmp.ne.s32.totalorder %s169, %s170
    %p182 = scmp.eq.s32.totalorder %s29, 1
    %p183 = por %p181, %p182
    %p185 = scmp.ne.s32.totalorder %s170, %s184
    %p186 = scmp.eq.s32.totalorder %s29, 0
    %p187 = por %p185, %p186
    %s189 = sadd.s32 %s188, 1
    %p192 = scmp.eq.s32.totalorder %s23, 1
    %p193 = scmp.ne.s32.totalorder %s188, %s190
    %p194 = scmp.eq.s32.totalorder %s23, 0
    %p195 = por %p193, %p194
    %p196 = scmp.ne.s32.totalorder %s188, %s190
    %p197 = scmp.eq.s32.totalorder %s28, 1
    %p198 = por %p196, %p197
    %p199 = scmp.ne.s32.totalorder %s190, %s191
    %p200 = scmp.eq.s32.totalorder %s28, 0
    %p201 = por %p199, %p200
    %p202 = scmp.ne.s32.totalorder %s190, %s191
    %p203 = scmp.eq.s32.totalorder %s29, 1
    %p204 = por %p202, %p203
    %p206 = scmp.ne.s32.totalorder %s191, %s205
    %p207 = scmp.eq.s32.totalorder %s29, 0
    %p208 = por %p206, %p207
    %s210 = sadd.s32 %s209, 1
    %p213 = scmp.eq.s32.totalorder %s23, 1
    %p214 = scmp.ne.s32.totalorder %s209, %s211
    %p215 = scmp.eq.s32.totalorder %s23, 0
    %p216 = por %p214, %p215
    %p217 = scmp.ne.s32.totalorder %s209, %s211
    %p218 = scmp.eq.s32.totalorder %s28, 1
    %p219 = por %p217, %p218
    %p220 = scmp.ne.s32.totalorder %s211, %s212
    %p221 = scmp.eq.s32.totalorder %s28, 0
    %p222 = por %p220, %p221
    %p223 = scmp.ne.s32.totalorder %s211, %s212
    %p224 = scmp.eq.s32.totalorder %s29, 1
    %p225 = por %p223, %p224
    %p227 = scmp.ne.s32.totalorder %s212, %s226
    %p228 = scmp.eq.s32.totalorder %s29, 0
    %p229 = por %p227, %p228
    %s231 = sadd.s32 %s230, 1
    %p234 = scmp.eq.s32.totalorder %s23, 1
    %p235 = scmp.ne.s32.totalorder %s230, %s232
    %p236 = scmp.eq.s32.totalorder %s23, 0
    %p237 = por %p235, %p236
    %p238 = scmp.ne.s32.totalorder %s230, %s232
    %p239 = scmp.eq.s32.totalorder %s28, 1
    %p240 = por %p238, %p239
    %p241 = scmp.ne.s32.totalorder %s232, %s233
    %p242 = scmp.eq.s32.totalorder %s28, 0
    %p243 = por %p241, %p242
    %p244 = scmp.ne.s32.totalorder %s232, %s233
    %p245 = scmp.eq.s32.totalorder %s29, 1
    %p246 = por %p244, %p245
    %p248 = scmp.ne.s32.totalorder %s233, %s247
    %p249 = scmp.eq.s32.totalorder %s29, 0
    %p250 = por %p248, %p249
    %s252 = sadd.s32 %s251, 1
    %p255 = scmp.eq.s32.totalorder %s23, 1
    %p256 = scmp.ne.s32.totalorder %s251, %s253
    %p257 = scmp.eq.s32.totalorder %s23, 0
    %p258 = por %p256, %p257
    %p259 = scmp.ne.s32.totalorder %s251, %s253
    %p260 = scmp.eq.s32.totalorder %s28, 1
    %p261 = por %p259, %p260
    %p262 = scmp.ne.s32.totalorder %s253, %s254
    %p263 = scmp.eq.s32.totalorder %s28, 0
    %p264 = por %p262, %p263
    %p265 = scmp.ne.s32.totalorder %s253, %s254
    %p266 = scmp.eq.s32.totalorder %s29, 1
    %p267 = por %p265, %p266
    %p269 = scmp.ne.s32.totalorder %s254, %s268
    %p270 = scmp.eq.s32.totalorder %s29, 0
    %p271 = por %p269, %p270
    %s273 = sadd.s32 %s272, 1
    %p276 = scmp.eq.s32.totalorder %s23, 1
    %p277 = scmp.ne.s32.totalorder %s272, %s274
    %p278 = scmp.eq.s32.totalorder %s23, 0
    %p279 = por %p277, %p278
    %p280 = scmp.ne.s32.totalorder %s272, %s274
    %p281 = scmp.eq.s32.totalorder %s28, 1
    %p282 = por %p280, %p281
    %p283 = scmp.ne.s32.totalorder %s274, %s275
    %p284 = scmp.eq.s32.totalorder %s28, 0
    %p285 = por %p283, %p284
    %p286 = scmp.ne.s32.totalorder %s274, %s275
    %p287 = scmp.eq.s32.totalorder %s29, 1
    %p288 = por %p286, %p287
    %p290 = scmp.ne.s32.totalorder %s275, %s289
    %p291 = scmp.eq.s32.totalorder %s29, 0
    %p292 = por %p290, %p291
    %s294 = sadd.s32 %s293, 1
    %p297 = scmp.eq.s32.totalorder %s23, 1
    %p298 = scmp.ne.s32.totalorder %s293, %s295
    %p299 = scmp.eq.s32.totalorder %s23, 0
    %p300 = por %p298, %p299
    %p301 = scmp.ne.s32.totalorder %s293, %s295
    %p302 = scmp.eq.s32.totalorder %s28, 1
    %p303 = por %p301, %p302
    %p304 = scmp.ne.s32.totalorder %s295, %s296
    %p305 = scmp.eq.s32.totalorder %s28, 0
    %p306 = por %p304, %p305
    %p307 = scmp.ne.s32.totalorder %s295, %s296
    %p308 = scmp.eq.s32.totalorder %s29, 1
    %p309 = por %p307, %p308
    %p311 = scmp.ne.s32.totalorder %s296, %s310
    %p312 = scmp.eq.s32.totalorder %s29, 0
    %p313 = por %p311, %p312
    %s315 = sadd.s32 %s314, 1
    %p318 = scmp.eq.s32.totalorder %s23, 1
    %p319 = scmp.ne.s32.totalorder %s314, %s316
    %p320 = scmp.eq.s32.totalorder %s23, 0
    %p321 = por %p319, %p320
    %p322 = scmp.ne.s32.totalorder %s314, %s316
    %p323 = scmp.eq.s32.totalorder %s28, 1
    %p324 = por %p322, %p323
    %p325 = scmp.ne.s32.totalorder %s316, %s317
    %p326 = scmp.eq.s32.totalorder %s28, 0
    %p327 = por %p325, %p326
    %p328 = scmp.ne.s32.totalorder %s316, %s317
    %p329 = scmp.eq.s32.totalorder %s29, 1
    %p330 = por %p328, %p329
    %p332 = scmp.ne.s32.totalorder %s317, %s331
    %p333 = scmp.eq.s32.totalorder %s29, 0
    %p334 = por %p332, %p333
    %s336 = sadd.s32 %s335, 1
    %p339 = scmp.eq.s32.totalorder %s23, 1
    %p340 = scmp.ne.s32.totalorder %s335, %s337
    %p341 = scmp.eq.s32.totalorder %s23, 0
    %p342 = por %p340, %p341
    %p343 = scmp.ne.s32.totalorder %s335, %s337
    %p344 = scmp.eq.s32.totalorder %s28, 1
    %p345 = por %p343, %p344
    %p346 = scmp.ne.s32.totalorder %s337, %s338
    %p347 = scmp.eq.s32.totalorder %s28, 0
    %p348 = por %p346, %p347
    %p349 = scmp.ne.s32.totalorder %s337, %s338
    %p350 = scmp.eq.s32.totalorder %s29, 1
    %p351 = por %p349, %p350
    %p353 = scmp.ne.s32.totalorder %s338, %s352
    %p354 = scmp.eq.s32.totalorder %s29, 0
    %p355 = por %p353, %p354
    %s356 = ssub.s32 %s23, %s30
    %p357 = scmp.eq.s32.totalorder %s356, 0
    %s359 = sadd.s32 %s358, 1
    %s360 = scalar_select %p357, %s358, %s359
    %p363 = pneg %p357
    %p364 = scmp.eq.s32.totalorder %s23, 1
    %p365 = por %p363, %p364
    %p366 = scmp.ne.s32.totalorder %s358, %s361
    %p367 = scmp.eq.s32.totalorder %s23, 0
    %p368 = por %p366, %p367
    %p369 = scmp.ne.s32.totalorder %s358, %s361
    %p370 = scmp.eq.s32.totalorder %s28, 1
    %p371 = por %p369, %p370
    %p372 = scmp.ne.s32.totalorder %s361, %s362
    %p373 = scmp.eq.s32.totalorder %s28, 0
    %p374 = por %p372, %p373
    %p375 = scmp.ne.s32.totalorder %s361, %s362
    %p376 = scmp.eq.s32.totalorder %s29, 1
    %p377 = por %p375, %p376
    %p379 = scmp.ne.s32.totalorder %s362, %s378
    %p380 = scmp.eq.s32.totalorder %s29, 0
    %p381 = por %p379, %p380
    %s382 = ssub.s32 %s23, %s30
    %p383 = scmp.eq.s32.totalorder %s382, 0
    %s385 = sadd.s32 %s384, 1
    %s386 = scalar_select %p383, %s384, %s385
    %p389 = pneg %p383
    %p390 = scmp.eq.s32.totalorder %s23, 1
    %p391 = por %p389, %p390
    %p392 = scmp.ne.s32.totalorder %s384, %s387
    %p393 = scmp.eq.s32.totalorder %s23, 0
    %p394 = por %p392, %p393
    %p395 = scmp.ne.s32.totalorder %s384, %s387
    %p396 = scmp.eq.s32.totalorder %s28, 1
    %p397 = por %p395, %p396
    %p398 = scmp.ne.s32.totalorder %s387, %s388
    %p399 = scmp.eq.s32.totalorder %s28, 0
    %p400 = por %p398, %p399
    %p401 = scmp.ne.s32.totalorder %s387, %s388
    %p402 = scmp.eq.s32.totalorder %s29, 1
    %p403 = por %p401, %p402
    %p405 = scmp.ne.s32.totalorder %s388, %s404
    %p406 = scmp.eq.s32.totalorder %s29, 0
    %p407 = por %p405, %p406
    %p408 = scmp.le.s32.totalorder 1, %s23
    %p409 = scmp.lt.s32.totalorder %s23, 3
    %p410 = pnand %p408, %p409
    %p411 = pneg %p410
    // Predicated region
    $region9: #{lsr_forward.1} parent=5 // pred_check
      _
    $region10: #{lsr_forward.1} parent=5 // pred_check_branch
      %413 = sbr.rel (%p410) target = $region12
    $region11: #{lsr_forward.1} parent=5 // pred_region
      %s414 = ssub.s32 %s23, 1
      // Predicated region
      $region13: #{lsr_forward.1} parent=11 // pred_check
        %p415 = pneg %p96
      $region14: #{lsr_forward.1} parent=11 // pred_check_branch
        %417 = sbr.rel (%p415) target = $region16
      $region15: #{lsr_forward.1} parent=11 // pred_region
        _
      $region16: #{lsr_forward.1} parent=11 // pred_fallthru
        _
      // Predicated region
      $region17: #{lsr_forward.1} parent=11 // pred_check
        %p418 = pneg %p117
      $region18: #{lsr_forward.1} parent=11 // pred_check_branch
        %420 = sbr.rel (%p418) target = $region20
      $region19: #{lsr_forward.1} parent=11 // pred_region
        _
      $region20: #{lsr_forward.1} parent=11 // pred_fallthru
        _
      // Predicated region
      $region21: #{lsr_forward.1} parent=11 // pred_check
        %p421 = pneg %p138
      $region22: #{lsr_forward.1} parent=11 // pred_check_branch
        %423 = sbr.rel (%p421) target = $region24
      $region23: #{lsr_forward.1} parent=11 // pred_region
        _
      $region24: #{lsr_forward.1} parent=11 // pred_fallthru
        _
      // Predicated region
      $region25: #{lsr_forward.1} parent=11 // pred_check
        %p424 = pneg %p159
      $region26: #{lsr_forward.1} parent=11 // pred_check_branch
        %426 = sbr.rel (%p424) target = $region28
      $region27: #{lsr_forward.1} parent=11 // pred_region
        _
      $region28: #{lsr_forward.1} parent=11 // pred_fallthru
        _
      // Predicated region
      $region29: #{lsr_forward.1} parent=11 // pred_check
        %p427 = pneg %p180
      $region30: #{lsr_forward.1} parent=11 // pred_check_branch
        %429 = sbr.rel (%p427) target = $region32
      $region31: #{lsr_forward.1} parent=11 // pred_region
        _
      $region32: #{lsr_forward.1} parent=11 // pred_fallthru
        _
      // Predicated region
      $region33: #{lsr_forward.1} parent=11 // pred_check
        %p430 = pneg %p201
      $region34: #{lsr_forward.1} parent=11 // pred_check_branch
        %432 = sbr.rel (%p430) target = $region36
      $region35: #{lsr_forward.1} parent=11 // pred_region
        _
      $region36: #{lsr_forward.1} parent=11 // pred_fallthru
        _
      // Predicated region
      $region37: #{lsr_forward.1} parent=11 // pred_check
        %p433 = pneg %p222
      $region38: #{lsr_forward.1} parent=11 // pred_check_branch
        %435 = sbr.rel (%p433) target = $region40
      $region39: #{lsr_forward.1} parent=11 // pred_region
        _
      $region40: #{lsr_forward.1} parent=11 // pred_fallthru
        _
      // Predicated region
      $region41: #{lsr_forward.1} parent=11 // pred_check
        %p436 = pneg %p243
      $region42: #{lsr_forward.1} parent=11 // pred_check_branch
        %438 = sbr.rel (%p436) target = $region44
      $region43: #{lsr_forward.1} parent=11 // pred_region
        _
      $region44: #{lsr_forward.1} parent=11 // pred_fallthru
        _
      // Predicated region
      $region45: #{lsr_forward.1} parent=11 // pred_check
        %p439 = pneg %p264
      $region46: #{lsr_forward.1} parent=11 // pred_check_branch
        %441 = sbr.rel (%p439) target = $region48
      $region47: #{lsr_forward.1} parent=11 // pred_region
        _
      $region48: #{lsr_forward.1} parent=11 // pred_fallthru
        _
      // Predicated region
      $region49: #{lsr_forward.1} parent=11 // pred_check
        %p442 = pneg %p285
      $region50: #{lsr_forward.1} parent=11 // pred_check_branch
        %444 = sbr.rel (%p442) target = $region52
      $region51: #{lsr_forward.1} parent=11 // pred_region
        _
      $region52: #{lsr_forward.1} parent=11 // pred_fallthru
        _
      // Predicated region
      $region53: #{lsr_forward.1} parent=11 // pred_check
        %p445 = pneg %p306
      $region54: #{lsr_forward.1} parent=11 // pred_check_branch
        %447 = sbr.rel (%p445) target = $region56
      $region55: #{lsr_forward.1} parent=11 // pred_region
        _
      $region56: #{lsr_forward.1} parent=11 // pred_fallthru
        _
      // Predicated region
      $region57: #{lsr_forward.1} parent=11 // pred_check
        %p448 = pneg %p327
      $region58: #{lsr_forward.1} parent=11 // pred_check_branch
        %450 = sbr.rel (%p448) target = $region60
      $region59: #{lsr_forward.1} parent=11 // pred_region
        _
      $region60: #{lsr_forward.1} parent=11 // pred_fallthru
        _
      // Predicated region
      $region61: #{lsr_forward.1} parent=11 // pred_check
        %p451 = pneg %p348
      $region62: #{lsr_forward.1} parent=11 // pred_check_branch
        %453 = sbr.rel (%p451) target = $region64
      $region63: #{lsr_forward.1} parent=11 // pred_region
        _
      $region64: #{lsr_forward.1} parent=11 // pred_fallthru
        _
    $region12: #{lsr_forward.1} parent=5 // pred_fallthru
      _
    %p454 = scmp.lt.s32.totalorder %s23, 2
    // Predicated region
    $region65: #{lsr_forward.1} parent=5 // pred_check
      %p455 = pneg %p454
    $region66: #{lsr_forward.1} parent=5 // pred_check_branch
      %457 = sbr.rel (%p455) target = $region68
    $region67: #{lsr_forward.1} parent=5 // pred_region
      // Predicated region
      $region69: #{lsr_forward.1} parent=67 // pred_check
        %p458 = pneg %p43
      $region70: #{lsr_forward.1} parent=67 // pred_check_branch
        %460 = sbr.rel (%p458) target = $region72
      $region71: #{lsr_forward.1} parent=67 // pred_region
        %p461 = scmp.lt.s32.totalorder %s23, 1
        %s462 = scalar_select %p461, %s23, 1
        %s463 = smul.addr %s462, 2
        %s464 = smul.addr %s463, 4
        %s465 = scalar_lea.vmem %s0, %s464
      $region72: #{lsr_forward.1} parent=67 // pred_fallthru
        _
      // Predicated region
      $region73: #{lsr_forward.1} parent=67 // pred_check
        %p466 = pneg %p69
      $region74: #{lsr_forward.1} parent=67 // pred_check_branch
        %468 = sbr.rel (%p466) target = $region76
      $region75: #{lsr_forward.1} parent=67 // pred_region
        %p469 = scmp.lt.s32.totalorder %s23, 1
        %s470 = scalar_select %p469, %s23, 1
        %s471 = smul.addr %s470, 2
        %s472 = smul.addr %s471, 4
        %s473 = scalar_lea.vmem %s1, %s472
      $region76: #{lsr_forward.1} parent=67 // pred_fallthru
        _
    $region68: #{lsr_forward.1} parent=5 // pred_fallthru
      _
    %p474 = scmp.le.s32.totalorder 1, %s23
    %p475 = scmp.lt.s32.totalorder %s23, 3
    %p476 = pnand %p474, %p475
    %p477 = pneg %p476
    // Predicated region
    $region77: #{lsr_forward.1} parent=5 // pred_check
      _
    $region78: #{lsr_forward.1} parent=5 // pred_check_branch
      %479 = sbr.rel (%p476) target = $region80
    $region79: #{lsr_forward.1} parent=5 // pred_region
      %s480 = ssub.s32 %s23, 1
      %p481 = scmp.lt.s32.totalorder %s28, 1
      %s482 = scalar_select %p481, %s28, 1
      %s483 = smul.addr %s482, 2
      %s484 = smul.addr %s483, 4
      %s485 = scalar_lea.vmem %s0, %s484
      %p486 = pneg %p49
      %p487 = pneg %p46
      %p488 = scmp.lt.s32.totalorder %s28, 1
      %s489 = scalar_select %p488, %s28, 1
      %s490 = smul.addr %s489, 2
      %s491 = smul.addr %s490, 4
      %s492 = scalar_lea.vmem %s1, %s491
      %p493 = pneg %p75
      %p494 = pneg %p72
      %p495 = pneg %p96
      %p496 = pneg %p93
      %p497 = pneg %p117
      %p498 = pneg %p114
      %p499 = pneg %p138
      %p500 = pneg %p135
      %p501 = pneg %p159
      %p502 = pneg %p156
      %p503 = pneg %p180
      %p504 = pneg %p177
      %p505 = pneg %p201
      %p506 = pneg %p198
      %p507 = pneg %p222
      %p508 = pneg %p219
      %p509 = pneg %p243
      %p510 = pneg %p240
      %p511 = pneg %p264
      %p512 = pneg %p261
      %p513 = pneg %p285
      %p514 = pneg %p282
      %p515 = pneg %p306
      %p516 = pneg %p303
      %p517 = pneg %p327
      %p518 = pneg %p324
      %p519 = pneg %p348
      %p520 = pneg %p345
      %p521 = pneg %p374
      %p522 = pneg %p371
      %p523 = scmp.lt.s32.totalorder %s28, 1
      %s524 = scalar_select %p523, %s28, 1
      %s525 = smul.addr %s524, 2
      %s526 = smul.addr %s525, 4
      %s527 = scalar_lea.vmem %s15, %s526
      %p528 = pneg %p400
      %p529 = pneg %p397
      %p530 = scmp.lt.s32.totalorder %s28, 1
      %s531 = scalar_select %p530, %s28, 1
      %s532 = smul.addr %s531, 2
      %s533 = smul.addr %s532, 4
      %s534 = scalar_lea.vmem %s16, %s533
      %p535 = scmp.lt.s32.totalorder %s28, 1
      %s536 = scalar_select %p535, %s28, 1
      %s537 = smul.addr %s536, 2
      %s538 = smul.addr %s537, 4
      %s539 = scalar_lea.vmem %s0, %s538
      %p540 = scmp.lt.s32.totalorder %s28, 1
      %s541 = scalar_select %p540, %s28, 1
      %s542 = smul.addr %s541, 2
      %s543 = smul.addr %s542, 4
      %s544 = scalar_lea.vmem %s1, %s543
      %p545 = scmp.lt.s32.totalorder %s28, 1
      %s546 = scalar_select %p545, %s28, 1
      %s547 = smul.addr %s546, 2
      %s548 = smul.addr %s547, 4
      %s549 = scalar_lea.vmem %s15, %s548
      %p550 = scmp.lt.s32.totalorder %s28, 1
      %s551 = scalar_select %p550, %s28, 1
      %s552 = smul.addr %s551, 2
      %s553 = smul.addr %s552, 4
      %s554 = scalar_lea.vmem %s16, %s553
      %v555 = vld [vmem:[%s539] sm:$0xff]
      %v556 = vld [vmem:[%s544] sm:$0xff]
      %s557 = scalar_lea.vmem %s2, 1
      %v558 = vld [vmem:[%s557] ss:$4 sm:$0x3]
      %v560 = vperm.slane %v558, 0
      %v561 = vperm.slane %v558, 1
      %v562 = vrot.slane %v561, 4
      %vm563 = vcmask 1043456
      %v564 = vsel %vm563, %v560, %v562
      %v566 = vmul.f32 %v555, %v564
      %s567 = scalar_lea.vmem %s2, 2
      %v568 = vld [vmem:[%s567] ss:$4 sm:$0x3]
      %v570 = vperm.slane %v568, 0
      %v571 = vperm.slane %v568, 1
      %v572 = vrot.slane %v571, 4
      %v573 = vsel %vm563, %v570, %v572
      %v575 = vmul.f32 %v555, %v573
      %577 = vst [vmem:[#allocation1] ss:$2 sm:$0xff] %v566
      %v578 = vld.sshfl [vmem:[#allocation1] sm:$0xff pattern:$0x75316420]
      %v579 = vld.sshfl [vmem:[#allocation1 + $0x8] sm:$0xff pattern:$0x75316420]
      %580 = vrot.lane.b32.xlu0 %v578, 17
      %v581 = vpop.permute.xlu0 %580
      %582 = vrot.lane.b32.xlu0 %v579, 17
      %v583 = vpop.permute.xlu0 %582
      %vm584 = vcmask 138240
      %v585 = vsel %vm584, %v581, %v583
      %v587 = vsel %vm584, 0.0, %v581
      %v588 = vld [vmem:[%s3] sm:$0xff]
      %590 = vst [vmem:[#allocation1] ss:$2 sm:$0xff] %v555
      %v591 = vld.sshfl [vmem:[#allocation1] sm:$0xff pattern:$0x75316420]
      %v592 = vld.sshfl [vmem:[#allocation1 + $0x8] sm:$0xff pattern:$0x75316420]
      %593 = vrot.lane.b32.xlu0 %v591, 16
      %v594 = vpop.permute.xlu0 %593
      %595 = vrot.lane.b32.xlu0 %v592, 16
      %v596 = vpop.permute.xlu0 %595
      %vm597 = vcmask 130048
      %v598 = vsel %vm597, %v594, %v596
      %v600 = vsel %vm597, 0.0, %v594
      %s601 = scalar_lea.vmem %s3, 8
      %v602 = vld [vmem:[%s601] sm:$0xff]
      %vm603 = vcmask 31744
      %v605 = vsel %vm603, %v602, 0
      %v608 = vsel %vm563, %v600, 0
      %v610 = vsel %vm563, %v598, 0
      %612 = vmatpush.msra.mxu0 0.0
      %613 = vmatpush.msra.mxu0 0.0
      %614 = vmatpush.msra.mxu0 0.0
      %615 = vmatpush.msra.mxu0 0.0
      %616 = vmatpush.msra.mxu0 0.0
      %617 = vmatpush.msra.mxu0 0.0
      %618 = vmatpush.msra.mxu0 0.0
      %619 = vmatpush.msra.mxu0 0.0
      %620 = vmatpush.msra.mxu0 0.0
      %621 = vmatpush.msra.mxu0 0.0
      %622 = vmatpush.msra.mxu0 0.0
      %623 = vmatpush.msra.mxu0 0.0
      %624 = vmatpush.msra.mxu0 0.0
      %625 = vmatpush.msra.mxu0 0.0
      %626 = vmatpush.msra.mxu0 0.0
      %627 = vmatpush.msra.mxu0 %v608
      %628 = vmatmul.f32.gmra.mxu0 %v605
      %v629 = vpop.f32.mrf.mxu0
      %v630 = vadd.f32 0.0, %v629
      %631 = vdwg.mxu0
      %632 = vmatpush.msra.mxu0 0.0
      %633 = vmatpush.msra.mxu0 0.0
      %634 = vmatpush.msra.mxu0 0.0
      %635 = vmatpush.msra.mxu0 0.0
      %636 = vmatpush.msra.mxu0 0.0
      %637 = vmatpush.msra.mxu0 0.0
      %638 = vmatpush.msra.mxu0 0.0
      %639 = vmatpush.msra.mxu0 0.0
      %640 = vmatpush.msra.mxu0 0.0
      %641 = vmatpush.msra.mxu0 0.0
      %642 = vmatpush.msra.mxu0 0.0
      %643 = vmatpush.msra.mxu0 0.0
      %644 = vmatpush.msra.mxu0 0.0
      %645 = vmatpush.msra.mxu0 0.0
      %646 = vmatpush.msra.mxu0 0.0
      %647 = vmatpush.msra.mxu0 %v610
      %648 = vmatmul.f32.gmra.mxu0 %v605
      %v649 = vpop.f32.mrf.mxu0
      %v650 = vadd.f32 0.0, %v649
      %651 = vdwg.mxu0
      %v653 = vsel %vm603, %v588, 0
      %v656 = vsel %vm563, %v587, 0
      %v658 = vsel %vm563, %v585, 0
      %660 = vmatpush.msra.mxu0 0.0
      %661 = vmatpush.msra.mxu0 0.0
      %662 = vmatpush.msra.mxu0 0.0
      %663 = vmatpush.msra.mxu0 0.0
      %664 = vmatpush.msra.mxu0 0.0
      %665 = vmatpush.msra.mxu0 0.0
      %666 = vmatpush.msra.mxu0 0.0
      %667 = vmatpush.msra.mxu0 0.0
      %668 = vmatpush.msra.mxu0 0.0
      %669 = vmatpush.msra.mxu0 0.0
      %670 = vmatpush.msra.mxu0 0.0
      %671 = vmatpush.msra.mxu0 0.0
      %672 = vmatpush.msra.mxu0 0.0
      %673 = vmatpush.msra.mxu0 0.0
      %674 = vmatpush.msra.mxu0 0.0
      %675 = vmatpush.msra.mxu0 %v656
      %676 = vmatmul.f32.gmra.mxu0 %v653
      %v677 = vpop.f32.mrf.mxu0
      %v678 = vadd.f32 %v630, %v677
      %679 = vdwg.mxu0
      %680 = vmatpush.msra.mxu0 0.0
      %681 = vmatpush.msra.mxu0 0.0
      %682 = vmatpush.msra.mxu0 0.0
      %683 = vmatpush.msra.mxu0 0.0
      %684 = vmatpush.msra.mxu0 0.0
      %685 = vmatpush.msra.mxu0 0.0
      %686 = vmatpush.msra.mxu0 0.0
      %687 = vmatpush.msra.mxu0 0.0
      %688 = vmatpush.msra.mxu0 0.0
      %689 = vmatpush.msra.mxu0 0.0
      %690 = vmatpush.msra.mxu0 0.0
      %691 = vmatpush.msra.mxu0 0.0
      %692 = vmatpush.msra.mxu0 0.0
      %693 = vmatpush.msra.mxu0 0.0
      %694 = vmatpush.msra.mxu0 0.0
      %695 = vmatpush.msra.mxu0 %v658
      %696 = vmatmul.f32.gmra.mxu0 %v653
      %v697 = vpop.f32.mrf.mxu0
      %v698 = vadd.f32 %v650, %v697
      %699 = vdwg.mxu0
      %701 = vst [vmem:[#allocation1] ss:$2 sm:$0xff] %v575
      %v702 = vld.sshfl [vmem:[#allocation1] sm:$0xff pattern:$0x75316420]
      %v703 = vld.sshfl [vmem:[#allocation1 + $0x8] sm:$0xff pattern:$0x75316420]
      %704 = vrot.lane.b32.xlu0 %v702, 15
      %v705 = vpop.permute.xlu0 %704
      %706 = vrot.lane.b32.xlu0 %v703, 15
      %v707 = vpop.permute.xlu0 %706
      %vm708 = vcmask 121856
      %v709 = vsel %vm708, %v705, %v707
      %v711 = vsel %vm708, 0.0, %v705
      %s712 = scalar_lea.vmem %s3, 16
      %v713 = vld [vmem:[%s712] sm:$0xff]
      %v715 = vsel %vm603, %v713, 0
      %v718 = vsel %vm563, %v711, 0
      %v720 = vsel %vm563, %v709, 0
      %722 = vmatpush.msra.mxu0 0.0
      %723 = vmatpush.msra.mxu0 0.0
      %724 = vmatpush.msra.mxu0 0.0
      %725 = vmatpush.msra.mxu0 0.0
      %726 = vmatpush.msra.mxu0 0.0
      %727 = vmatpush.msra.mxu0 0.0
      %728 = vmatpush.msra.mxu0 0.0
      %729 = vmatpush.msra.mxu0 0.0
      %730 = vmatpush.msra.mxu0 0.0
      %731 = vmatpush.msra.mxu0 0.0
      %732 = vmatpush.msra.mxu0 0.0
      %733 = vmatpush.msra.mxu0 0.0
      %734 = vmatpush.msra.mxu0 0.0
      %735 = vmatpush.msra.mxu0 0.0
      %736 = vmatpush.msra.mxu0 0.0
      %737 = vmatpush.msra.mxu0 %v718
      %738 = vmatmul.f32.gmra.mxu0 %v715
      %v739 = vpop.f32.mrf.mxu0
      %v740 = vadd.f32 0.0, %v739
      %741 = vdwg.mxu0
      %742 = vmatpush.msra.mxu0 0.0
      %743 = vmatpush.msra.mxu0 0.0
      %744 = vmatpush.msra.mxu0 0.0
      %745 = vmatpush.msra.mxu0 0.0
      %746 = vmatpush.msra.mxu0 0.0
      %747 = vmatpush.msra.mxu0 0.0
      %748 = vmatpush.msra.mxu0 0.0
      %749 = vmatpush.msra.mxu0 0.0
      %750 = vmatpush.msra.mxu0 0.0
      %751 = vmatpush.msra.mxu0 0.0
      %752 = vmatpush.msra.mxu0 0.0
      %753 = vmatpush.msra.mxu0 0.0
      %754 = vmatpush.msra.mxu0 0.0
      %755 = vmatpush.msra.mxu0 0.0
      %756 = vmatpush.msra.mxu0 0.0
      %757 = vmatpush.msra.mxu0 %v720
      %758 = vmatmul.f32.gmra.mxu0 %v715
      %v759 = vpop.f32.mrf.mxu0
      %v760 = vadd.f32 0.0, %v759
      %761 = vdwg.mxu0
      %v762 = vadd.f32 %v678, %v740
      %v763 = vadd.f32 %v698, %v760
      %764 = vst [vmem:[#allocation1] ss:$2 sm:$0xff] %v566
      %v765 = vld.sshfl [vmem:[#allocation1] sm:$0xff pattern:$0x75316420]
      %v766 = vld.sshfl [vmem:[#allocation1 + $0x8] sm:$0xff pattern:$0x75316420]
      %767 = vrot.lane.b32.xlu0 %v765, 1
      %v768 = vpop.permute.xlu0 %767
      %769 = vrot.lane.b32.xlu0 %v766, 1
      %v770 = vpop.permute.xlu0 %769
      %vm771 = vcmask 7168
      %v772 = vsel %vm771, %v768, %v770
      %v774 = vsel %vm771, 0.0, %v768
      %s775 = scalar_lea.vmem %s3, 24
      %v776 = vld [vmem:[%s775] sm:$0xff]
      %v778 = vsel %vm603, %v776, 0
      %v781 = vsel %vm563, %v774, 0
      %v783 = vsel %vm563, %v772, 0
      %785 = vmatpush.msra.mxu0 0.0
      %786 = vmatpush.msra.mxu0 0.0
      %787 = vmatpush.msra.mxu0 0.0
      %788 = vmatpush.msra.mxu0 0.0
      %789 = vmatpush.msra.mxu0 0.0
      %790 = vmatpush.msra.mxu0 0.0
      %791 = vmatpush.msra.mxu0 0.0
      %792 = vmatpush.msra.mxu0 0.0
      %793 = vmatpush.msra.mxu0 0.0
      %794 = vmatpush.msra.mxu0 0.0
      %795 = vmatpush.msra.mxu0 0.0
      %796 = vmatpush.msra.mxu0 0.0
      %797 = vmatpush.msra.mxu0 0.0
      %798 = vmatpush.msra.mxu0 0.0
      %799 = vmatpush.msra.mxu0 0.0
      %800 = vmatpush.msra.mxu0 %v781
      %801 = vmatmul.f32.gmra.mxu0 %v778
      %v802 = vpop.f32.mrf.mxu0
      %v803 = vadd.f32 0.0, %v802
      %804 = vdwg.mxu0
      %805 = vmatpush.msra.mxu0 0.0
      %806 = vmatpush.msra.mxu0 0.0
      %807 = vmatpush.msra.mxu0 0.0
      %808 = vmatpush.msra.mxu0 0.0
      %809 = vmatpush.msra.mxu0 0.0
      %810 = vmatpush.msra.mxu0 0.0
      %811 = vmatpush.msra.mxu0 0.0
      %812 = vmatpush.msra.mxu0 0.0
      %813 = vmatpush.msra.mxu0 0.0
      %814 = vmatpush.msra.mxu0 0.0
      %815 = vmatpush.msra.mxu0 0.0
      %816 = vmatpush.msra.mxu0 0.0
      %817 = vmatpush.msra.mxu0 0.0
      %818 = vmatpush.msra.mxu0 0.0
      %819 = vmatpush.msra.mxu0 0.0
      %820 = vmatpush.msra.mxu0 %v783
      %821 = vmatmul.f32.gmra.mxu0 %v778
      %v822 = vpop.f32.mrf.mxu0
      %v823 = vadd.f32 0.0, %v822
      %824 = vdwg.mxu0
      %v825 = vadd.f32 %v762, %v803
      %v826 = vadd.f32 %v763, %v823
      %s827 = scalar_lea.vmem %s3, 32
      %v828 = vld [vmem:[%s827] sm:$0xff]
      %829 = vst [vmem:[#allocation1] ss:$2 sm:$0xff] %v555
      %v830 = vld.sshfl [vmem:[#allocation1] sm:$0xff pattern:$0x75316420]
      %v831 = vld.sshfl [vmem:[#allocation1 + $0x8] sm:$0xff pattern:$0x75316420]
      %v833 = vsel %vm603, %v828, 0
      %v835 = vsel %vm563, %v830, 0
      %v837 = vsel %vm563, %v831, 0
      %839 = vmatpush.msra.mxu0 0.0
      %840 = vmatpush.msra.mxu0 0.0
      %841 = vmatpush.msra.mxu0 0.0
      %842 = vmatpush.msra.mxu0 0.0
      %843 = vmatpush.msra.mxu0 0.0
      %844 = vmatpush.msra.mxu0 0.0
      %845 = vmatpush.msra.mxu0 0.0
      %846 = vmatpush.msra.mxu0 0.0
      %847 = vmatpush.msra.mxu0 0.0
      %848 = vmatpush.msra.mxu0 0.0
      %849 = vmatpush.msra.mxu0 0.0
      %850 = vmatpush.msra.mxu0 0.0
      %851 = vmatpush.msra.mxu0 0.0
      %852 = vmatpush.msra.mxu0 0.0
      %853 = vmatpush.msra.mxu0 0.0
      %854 = vmatpush.msra.mxu0 %v835
      %855 = vmatmul.f32.gmra.mxu0 %v833
      %v856 = vpop.f32.mrf.mxu0
      %v857 = vadd.f32 0.0, %v856
      %858 = vdwg.mxu0
      %859 = vmatpush.msra.mxu0 0.0
      %860 = vmatpush.msra.mxu0 0.0
      %861 = vmatpush.msra.mxu0 0.0
      %862 = vmatpush.msra.mxu0 0.0
      %863 = vmatpush.msra.mxu0 0.0
      %864 = vmatpush.msra.mxu0 0.0
      %865 = vmatpush.msra.mxu0 0.0
      %866 = vmatpush.msra.mxu0 0.0
      %867 = vmatpush.msra.mxu0 0.0
      %868 = vmatpush.msra.mxu0 0.0
      %869 = vmatpush.msra.mxu0 0.0
      %870 = vmatpush.msra.mxu0 0.0
      %871 = vmatpush.msra.mxu0 0.0
      %872 = vmatpush.msra.mxu0 0.0
      %873 = vmatpush.msra.mxu0 0.0
      %874 = vmatpush.msra.mxu0 %v837
      %875 = vmatmul.f32.gmra.mxu0 %v833
      %v876 = vpop.f32.mrf.mxu0
      %v877 = vadd.f32 0.0, %v876
      %878 = vdwg.mxu0
      %v879 = vadd.f32 %v825, %v857
      %v880 = vadd.f32 %v826, %v877
      %881 = vst [vmem:[#allocation1] ss:$2 sm:$0xff] %v575
      %v882 = vld.sshfl [vmem:[#allocation1] sm:$0xff pattern:$0x75316420]
      %v883 = vld.sshfl [vmem:[#allocation1 + $0x8] sm:$0xff pattern:$0x75316420]
      %884 = vrot.lane.b32.xlu0 %v882, 127
      %v885 = vpop.permute.xlu0 %884
      %886 = vrot.lane.b32.xlu0 %v883, 127
      %v887 = vpop.permute.xlu0 %886
      %vm888 = vcmask 1039360
      %v889 = vsel %vm888, %v885, %v887
      %v891 = vsel %vm888, %v887, 0.0
      %s892 = scalar_lea.vmem %s3, 40
      %v893 = vld [vmem:[%s892] sm:$0xff]
      %v895 = vsel %vm603, %v893, 0
      %v897 = vsel %vm563, %v889, 0
      %v900 = vsel %vm563, %v891, 0
      %902 = vmatpush.msra.mxu0 0.0
      %903 = vmatpush.msra.mxu0 0.0
      %904 = vmatpush.msra.mxu0 0.0
      %905 = vmatpush.msra.mxu0 0.0
      %906 = vmatpush.msra.mxu0 0.0
      %907 = vmatpush.msra.mxu0 0.0
      %908 = vmatpush.msra.mxu0 0.0
      %909 = vmatpush.msra.mxu0 0.0
      %910 = vmatpush.msra.mxu0 0.0
      %911 = vmatpush.msra.mxu0 0.0
      %912 = vmatpush.msra.mxu0 0.0
      %913 = vmatpush.msra.mxu0 0.0
      %914 = vmatpush.msra.mxu0 0.0
      %915 = vmatpush.msra.mxu0 0.0
      %916 = vmatpush.msra.mxu0 0.0
      %917 = vmatpush.msra.mxu0 %v897
      %918 = vmatmul.f32.gmra.mxu0 %v895
      %v919 = vpop.f32.mrf.mxu0
      %v920 = vadd.f32 0.0, %v919
      %921 = vdwg.mxu0
      %922 = vmatpush.msra.mxu0 0.0
      %923 = vmatpush.msra.mxu0 0.0
      %924 = vmatpush.msra.mxu0 0.0
      %925 = vmatpush.msra.mxu0 0.0
      %926 = vmatpush.msra.mxu0 0.0
      %927 = vmatpush.msra.mxu0 0.0
      %928 = vmatpush.msra.mxu0 0.0
      %929 = vmatpush.msra.mxu0 0.0
      %930 = vmatpush.msra.mxu0 0.0
      %931 = vmatpush.msra.mxu0 0.0
      %932 = vmatpush.msra.mxu0 0.0
      %933 = vmatpush.msra.mxu0 0.0
      %934 = vmatpush.msra.mxu0 0.0
      %935 = vmatpush.msra.mxu0 0.0
      %936 = vmatpush.msra.mxu0 0.0
      %937 = vmatpush.msra.mxu0 %v900
      %938 = vmatmul.f32.gmra.mxu0 %v895
      %v939 = vpop.f32.mrf.mxu0
      %v940 = vadd.f32 0.0, %v939
      %941 = vdwg.mxu0
      %v942 = vadd.f32 %v879, %v920
      %v943 = vadd.f32 %v880, %v940
      %944 = vst [vmem:[#allocation1] ss:$2 sm:$0xff] %v566
      %v945 = vld.sshfl [vmem:[#allocation1] sm:$0xff pattern:$0x75316420]
      %v946 = vld.sshfl [vmem:[#allocation1 + $0x8] sm:$0xff pattern:$0x75316420]
      %947 = vrot.lane.b32.xlu0 %v945, 113
      %v948 = vpop.permute.xlu0 %947
      %949 = vrot.lane.b32.xlu0 %v946, 113
      %v950 = vpop.permute.xlu0 %949
      %vm951 = vcmask 924672
      %v952 = vsel %vm951, %v948, %v950
      %v954 = vsel %vm951, %v950, 0.0
      %s955 = scalar_lea.vmem %s3, 48
      %v956 = vld [vmem:[%s955] sm:$0xff]
      %v958 = vsel %vm603, %v956, 0
      %v960 = vsel %vm563, %v952, 0
      %v963 = vsel %vm563, %v954, 0
      %965 = vmatpush.msra.mxu0 0.0
      %966 = vmatpush.msra.mxu0 0.0
      %967 = vmatpush.msra.mxu0 0.0
      %968 = vmatpush.msra.mxu0 0.0
      %969 = vmatpush.msra.mxu0 0.0
      %970 = vmatpush.msra.mxu0 0.0
      %971 = vmatpush.msra.mxu0 0.0
      %972 = vmatpush.msra.mxu0 0.0
      %973 = vmatpush.msra.mxu0 0.0
      %974 = vmatpush.msra.mxu0 0.0
      %975 = vmatpush.msra.mxu0 0.0
      %976 = vmatpush.msra.mxu0 0.0
      %977 = vmatpush.msra.mxu0 0.0
      %978 = vmatpush.msra.mxu0 0.0
      %979 = vmatpush.msra.mxu0 0.0
      %980 = vmatpush.msra.mxu0 %v960
      %981 = vmatmul.f32.gmra.mxu0 %v958
      %v982 = vpop.f32.mrf.mxu0
      %v983 = vadd.f32 0.0, %v982
      %984 = vdwg.mxu0
      %985 = vmatpush.msra.mxu0 0.0
      %986 = vmatpush.msra.mxu0 0.0
      %987 = vmatpush.msra.mxu0 0.0
      %988 = vmatpush.msra.mxu0 0.0
      %989 = vmatpush.msra.mxu0 0.0
      %990 = vmatpush.msra.mxu0 0.0
      %991 = vmatpush.msra.mxu0 0.0
      %992 = vmatpush.msra.mxu0 0.0
      %993 = vmatpush.msra.mxu0 0.0
      %994 = vmatpush.msra.mxu0 0.0
      %995 = vmatpush.msra.mxu0 0.0
      %996 = vmatpush.msra.mxu0 0.0
      %997 = vmatpush.msra.mxu0 0.0
      %998 = vmatpush.msra.mxu0 0.0
      %999 = vmatpush.msra.mxu0 0.0
      %1000 = vmatpush.msra.mxu0 %v963
      %1001 = vmatmul.f32.gmra.mxu0 %v958
      %v1002 = vpop.f32.mrf.mxu0
      %v1003 = vadd.f32 0.0, %v1002
      %1004 = vdwg.mxu0
      %v1005 = vadd.f32 %v942, %v983
      %v1006 = vadd.f32 %v943, %v1003
      %1007 = vst [vmem:[#allocation1] ss:$2 sm:$0xff] %v555
      %v1008 = vld.sshfl [vmem:[#allocation1] sm:$0xff pattern:$0x75316420]
      %v1009 = vld.sshfl [vmem:[#allocation1 + $0x8] sm:$0xff pattern:$0x75316420]
      %1010 = vrot.lane.b32.xlu0 %v1008, 112
      %v1011 = vpop.permute.xlu0 %1010
      %1012 = vrot.lane.b32.xlu0 %v1009, 112
      %v1013 = vpop.permute.xlu0 %1012
      %vm1014 = vcmask 916480
      %v1015 = vsel %vm1014, %v1011, %v1013
      %v1017 = vsel %vm1014, %v1013, 0.0
      %s1018 = scalar_lea.vmem %s3, 56
      %v1019 = vld [vmem:[%s1018] sm:$0xff]
      %v1021 = vsel %vm603, %v1019, 0
      %v1023 = vsel %vm563, %v1015, 0
      %v1026 = vsel %vm563, %v1017, 0
      %1028 = vmatpush.msra.mxu0 0.0
      %1029 = vmatpush.msra.mxu0 0.0
      %1030 = vmatpush.msra.mxu0 0.0
      %1031 = vmatpush.msra.mxu0 0.0
      %1032 = vmatpush.msra.mxu0 0.0
      %1033 = vmatpush.msra.mxu0 0.0
      %1034 = vmatpush.msra.mxu0 0.0
      %1035 = vmatpush.msra.mxu0 0.0
      %1036 = vmatpush.msra.mxu0 0.0
      %1037 = vmatpush.msra.mxu0 0.0
      %1038 = vmatpush.msra.mxu0 0.0
      %1039 = vmatpush.msra.mxu0 0.0
      %1040 = vmatpush.msra.mxu0 0.0
      %1041 = vmatpush.msra.mxu0 0.0
      %1042 = vmatpush.msra.mxu0 0.0
      %1043 = vmatpush.msra.mxu0 %v1023
      %1044 = vmatmul.f32.gmra.mxu0 %v1021
      %v1045 = vpop.f32.mrf.mxu0
      %v1046 = vadd.f32 0.0, %v1045
      %1047 = vdwg.mxu0
      %1048 = vmatpush.msra.mxu0 0.0
      %1049 = vmatpush.msra.mxu0 0.0
      %1050 = vmatpush.msra.mxu0 0.0
      %1051 = vmatpush.msra.mxu0 0.0
      %1052 = vmatpush.msra.mxu0 0.0
      %1053 = vmatpush.msra.mxu0 0.0
      %1054 = vmatpush.msra.mxu0 0.0
      %1055 = vmatpush.msra.mxu0 0.0
      %1056 = vmatpush.msra.mxu0 0.0
      %1057 = vmatpush.msra.mxu0 0.0
      %1058 = vmatpush.msra.mxu0 0.0
      %1059 = vmatpush.msra.mxu0 0.0
      %1060 = vmatpush.msra.mxu0 0.0
      %1061 = vmatpush.msra.mxu0 0.0
      %1062 = vmatpush.msra.mxu0 0.0
      %1063 = vmatpush.msra.mxu0 %v1026
      %1064 = vmatmul.f32.gmra.mxu0 %v1021
      %v1065 = vpop.f32.mrf.mxu0
      %v1066 = vadd.f32 0.0, %v1065
      %1067 = vdwg.mxu0
      %v1068 = vadd.f32 %v1005, %v1046
      %v1069 = vadd.f32 %v1006, %v1066
      %1070 = vst [vmem:[#allocation1] ss:$2 sm:$0xff] %v575
      %v1071 = vld.sshfl [vmem:[#allocation1] sm:$0xff pattern:$0x75316420]
      %v1072 = vld.sshfl [vmem:[#allocation1 + $0x8] sm:$0xff pattern:$0x75316420]
      %1073 = vrot.lane.b32.xlu0 %v1071, 111
      %v1074 = vpop.permute.xlu0 %1073
      %1075 = vrot.lane.b32.xlu0 %v1072, 111
      %v1076 = vpop.permute.xlu0 %1075
      %vm1077 = vcmask 908288
      %v1078 = vsel %vm1077, %v1074, %v1076
      %v1080 = vsel %vm1077, %v1076, 0.0
      %s1081 = scalar_lea.vmem %s3, 64
      %v1082 = vld [vmem:[%s1081] sm:$0xff]
      %v1084 = vsel %vm603, %v1082, 0
      %v1086 = vsel %vm563, %v1078, 0
      %v1089 = vsel %vm563, %v1080, 0
      %1091 = vmatpush.msra.mxu0 0.0
      %1092 = vmatpush.msra.mxu0 0.0
      %1093 = vmatpush.msra.mxu0 0.0
      %1094 = vmatpush.msra.mxu0 0.0
      %1095 = vmatpush.msra.mxu0 0.0
      %1096 = vmatpush.msra.mxu0 0.0
      %1097 = vmatpush.msra.mxu0 0.0
      %1098 = vmatpush.msra.mxu0 0.0
      %1099 = vmatpush.msra.mxu0 0.0
      %1100 = vmatpush.msra.mxu0 0.0
      %1101 = vmatpush.msra.mxu0 0.0
      %1102 = vmatpush.msra.mxu0 0.0
      %1103 = vmatpush.msra.mxu0 0.0
      %1104 = vmatpush.msra.mxu0 0.0
      %1105 = vmatpush.msra.mxu0 0.0
      %1106 = vmatpush.msra.mxu0 %v1086
      %1107 = vmatmul.f32.gmra.mxu0 %v1084
      %v1108 = vpop.f32.mrf.mxu0
      %v1109 = vadd.f32 0.0, %v1108
      %1110 = vdwg.mxu0
      %1111 = vmatpush.msra.mxu0 0.0
      %1112 = vmatpush.msra.mxu0 0.0
      %1113 = vmatpush.msra.mxu0 0.0
      %1114 = vmatpush.msra.mxu0 0.0
      %1115 = vmatpush.msra.mxu0 0.0
      %1116 = vmatpush.msra.mxu0 0.0
      %1117 = vmatpush.msra.mxu0 0.0
      %1118 = vmatpush.msra.mxu0 0.0
      %1119 = vmatpush.msra.mxu0 0.0
      %1120 = vmatpush.msra.mxu0 0.0
      %1121 = vmatpush.msra.mxu0 0.0
      %1122 = vmatpush.msra.mxu0 0.0
      %1123 = vmatpush.msra.mxu0 0.0
      %1124 = vmatpush.msra.mxu0 0.0
      %1125 = vmatpush.msra.mxu0 0.0
      %1126 = vmatpush.msra.mxu0 %v1089
      %1127 = vmatmul.f32.gmra.mxu0 %v1084
      %v1128 = vpop.f32.mrf.mxu0
      %v1129 = vadd.f32 0.0, %v1128
      %1130 = vdwg.mxu0
      %v1131 = vadd.f32 %v1068, %v1109
      %v1132 = vadd.f32 %v1069, %v1129
      %v1133 = vld [vmem:[%s2] ss:$4 sm:$0x3]
      %v1135 = vperm.slane %v1133, 0
      %v1136 = vperm.slane %v1133, 1
      %v1139 = vmul.f32 %v1131, %v1135
      %v1140 = vmul.f32 %v1132, %v1136
      %v1143 = vmul.f32 %v1131, %v560
      %v1144 = vmul.f32 %v1132, %v561
      %v1147 = vmul.f32 %v1131, %v570
      %v1148 = vmul.f32 %v1132, %v571
      %s1149 = scalar_lea.vmem %s2, 3
      %v1150 = vld [vmem:[%s1149] ss:$4 sm:$0x3]
      %v1152 = vperm.slane %v1150, 0
      %v1153 = vperm.slane %v1150, 1
      %v1156 = vmul.f32 %v1131, %v1152
      %v1157 = vmul.f32 %v1132, %v1153
      %1160 = vrot.lane.b32.xlu0 %v1139, 34
      %v1161 = vpop.permute.xlu0 %1160
      %1162 = vrot.lane.b32.xlu0 %v1140, 34
      %v1163 = vpop.permute.xlu0 %1162
      %vm1164 = vcmask 277504
      %v1165 = vsel %vm1164, %v1161, %v1163
      %v1168 = vsel %vm1164, 0.0, %v1161
      %v1169 = vld [vmem:[%s4] sm:$0xff]
      %1172 = vrot.lane.b32.xlu0 %v1143, 33
      %v1173 = vpop.permute.xlu0 %1172
      %1174 = vrot.lane.b32.xlu0 %v1144, 33
      %v1175 = vpop.permute.xlu0 %1174
      %vm1176 = vcmask 269312
      %v1177 = vsel %vm1176, %v1173, %v1175
      %v1180 = vsel %vm1176, 0.0, %v1173
      %s1181 = scalar_lea.vmem %s4, 8
      %v1182 = vld [vmem:[%s1181] sm:$0xff]
      %vm1183 = vcmask 64512
      %v1185 = vsel %vm1183, %v1182, 0
      %1187 = vmatpush.msra.mxu0 0.0
      %1188 = vmatpush.msra.mxu0 0.0
      %1189 = vmatpush.msra.mxu0 0.0
      %1190 = vmatpush.msra.mxu0 0.0
      %1191 = vmatpush.msra.mxu0 0.0
      %1192 = vmatpush.msra.mxu0 0.0
      %1193 = vmatpush.msra.mxu0 0.0
      %1194 = vmatpush.msra.mxu0 0.0
      %1195 = vmatpush.msra.mxu0 0.0
      %1196 = vmatpush.msra.mxu0 0.0
      %1197 = vmatpush.msra.mxu0 0.0
      %1198 = vmatpush.msra.mxu0 0.0
      %1199 = vmatpush.msra.mxu0 0.0
      %1200 = vmatpush.msra.mxu0 0.0
      %1201 = vmatpush.msra.mxu0 0.0
      %1202 = vmatpush.msra.mxu0 %v1180
      %1203 = vmatmul.f32.gmra.mxu0 %v1185
      %v1204 = vpop.f32.mrf.mxu0
      %v1205 = vadd.f32 0.0, %v1204
      %1206 = vdwg.mxu0
      %1207 = vmatpush.msra.mxu0 0.0
      %1208 = vmatpush.msra.mxu0 0.0
      %1209 = vmatpush.msra.mxu0 0.0
      %1210 = vmatpush.msra.mxu0 0.0
      %1211 = vmatpush.msra.mxu0 0.0
      %1212 = vmatpush.msra.mxu0 0.0
      %1213 = vmatpush.msra.mxu0 0.0
      %1214 = vmatpush.msra.mxu0 0.0
      %1215 = vmatpush.msra.mxu0 0.0
      %1216 = vmatpush.msra.mxu0 0.0
      %1217 = vmatpush.msra.mxu0 0.0
      %1218 = vmatpush.msra.mxu0 0.0
      %1219 = vmatpush.msra.mxu0 0.0
      %1220 = vmatpush.msra.mxu0 0.0
      %1221 = vmatpush.msra.mxu0 0.0
      %1222 = vmatpush.msra.mxu0 %v1177
      %1223 = vmatmul.f32.gmra.mxu0 %v1185
      %v1224 = vpop.f32.mrf.mxu0
      %v1225 = vadd.f32 0.0, %v1224
      %1226 = vdwg.mxu0
      %v1228 = vsel %vm1183, %v1169, 0
      %1230 = vmatpush.msra.mxu0 0.0
      %1231 = vmatpush.msra.mxu0 0.0
      %1232 = vmatpush.msra.mxu0 0.0
      %1233 = vmatpush.msra.mxu0 0.0
      %1234 = vmatpush.msra.mxu0 0.0
      %1235 = vmatpush.msra.mxu0 0.0
      %1236 = vmatpush.msra.mxu0 0.0
      %1237 = vmatpush.msra.mxu0 0.0
      %1238 = vmatpush.msra.mxu0 0.0
      %1239 = vmatpush.msra.mxu0 0.0
      %1240 = vmatpush.msra.mxu0 0.0
      %1241 = vmatpush.msra.mxu0 0.0
      %1242 = vmatpush.msra.mxu0 0.0
      %1243 = vmatpush.msra.mxu0 0.0
      %1244 = vmatpush.msra.mxu0 0.0
      %1245 = vmatpush.msra.mxu0 %v1168
      %1246 = vmatmul.f32.gmra.mxu0 %v1228
      %v1247 = vpop.f32.mrf.mxu0
      %v1248 = vadd.f32 %v1205, %v1247
      %1249 = vdwg.mxu0
      %1250 = vmatpush.msra.mxu0 0.0
      %1251 = vmatpush.msra.mxu0 0.0
      %1252 = vmatpush.msra.mxu0 0.0
      %1253 = vmatpush.msra.mxu0 0.0
      %1254 = vmatpush.msra.mxu0 0.0
      %1255 = vmatpush.msra.mxu0 0.0
      %1256 = vmatpush.msra.mxu0 0.0
      %1257 = vmatpush.msra.mxu0 0.0
      %1258 = vmatpush.msra.mxu0 0.0
      %1259 = vmatpush.msra.mxu0 0.0
      %1260 = vmatpush.msra.mxu0 0.0
      %1261 = vmatpush.msra.mxu0 0.0
      %1262 = vmatpush.msra.mxu0 0.0
      %1263 = vmatpush.msra.mxu0 0.0
      %1264 = vmatpush.msra.mxu0 0.0
      %1265 = vmatpush.msra.mxu0 %v1165
      %1266 = vmatmul.f32.gmra.mxu0 %v1228
      %v1267 = vpop.f32.mrf.mxu0
      %v1268 = vadd.f32 %v1225, %v1267
      %1269 = vdwg.mxu0
      %1272 = vrot.lane.b32.xlu0 %v1131, 32
      %v1273 = vpop.permute.xlu0 %1272
      %1274 = vrot.lane.b32.xlu0 %v1132, 32
      %v1275 = vpop.permute.xlu0 %1274
      %vm1276 = vcmask 261120
      %v1277 = vsel %vm1276, %v1273, %v1275
      %v1280 = vsel %vm1276, 0.0, %v1273
      %s1281 = scalar_lea.vmem %s4, 16
      %v1282 = vld [vmem:[%s1281] sm:$0xff]
      %v1284 = vsel %vm1183, %v1282, 0
      %1286 = vmatpush.msra.mxu0 0.0
      %1287 = vmatpush.msra.mxu0 0.0
      %1288 = vmatpush.msra.mxu0 0.0
      %1289 = vmatpush.msra.mxu0 0.0
      %1290 = vmatpush.msra.mxu0 0.0
      %1291 = vmatpush.msra.mxu0 0.0
      %1292 = vmatpush.msra.mxu0 0.0
      %1293 = vmatpush.msra.mxu0 0.0
      %1294 = vmatpush.msra.mxu0 0.0
      %1295 = vmatpush.msra.mxu0 0.0
      %1296 = vmatpush.msra.mxu0 0.0
      %1297 = vmatpush.msra.mxu0 0.0
      %1298 = vmatpush.msra.mxu0 0.0
      %1299 = vmatpush.msra.mxu0 0.0
      %1300 = vmatpush.msra.mxu0 0.0
      %1301 = vmatpush.msra.mxu0 %v1280
      %1302 = vmatmul.f32.gmra.mxu0 %v1284
      %v1303 = vpop.f32.mrf.mxu0
      %v1304 = vadd.f32 0.0, %v1303
      %1305 = vdwg.mxu0
      %1306 = vmatpush.msra.mxu0 0.0
      %1307 = vmatpush.msra.mxu0 0.0
      %1308 = vmatpush.msra.mxu0 0.0
      %1309 = vmatpush.msra.mxu0 0.0
      %1310 = vmatpush.msra.mxu0 0.0
      %1311 = vmatpush.msra.mxu0 0.0
      %1312 = vmatpush.msra.mxu0 0.0
      %1313 = vmatpush.msra.mxu0 0.0
      %1314 = vmatpush.msra.mxu0 0.0
      %1315 = vmatpush.msra.mxu0 0.0
      %1316 = vmatpush.msra.mxu0 0.0
      %1317 = vmatpush.msra.mxu0 0.0
      %1318 = vmatpush.msra.mxu0 0.0
      %1319 = vmatpush.msra.mxu0 0.0
      %1320 = vmatpush.msra.mxu0 0.0
      %1321 = vmatpush.msra.mxu0 %v1277
      %1322 = vmatmul.f32.gmra.mxu0 %v1284
      %v1323 = vpop.f32.mrf.mxu0
      %v1324 = vadd.f32 0.0, %v1323
      %1325 = vdwg.mxu0
      %v1326 = vadd.f32 %v1248, %v1304
      %v1327 = vadd.f32 %v1268, %v1324
      %1330 = vrot.lane.b32.xlu0 %v1147, 31
      %v1331 = vpop.permute.xlu0 %1330
      %1332 = vrot.lane.b32.xlu0 %v1148, 31
      %v1333 = vpop.permute.xlu0 %1332
      %vm1334 = vcmask 252928
      %v1335 = vsel %vm1334, %v1331, %v1333
      %v1338 = vsel %vm1334, 0.0, %v1331
      %s1339 = scalar_lea.vmem %s4, 24
      %v1340 = vld [vmem:[%s1339] sm:$0xff]
      %v1342 = vsel %vm1183, %v1340, 0
      %1344 = vmatpush.msra.mxu0 0.0
      %1345 = vmatpush.msra.mxu0 0.0
      %1346 = vmatpush.msra.mxu0 0.0
      %1347 = vmatpush.msra.mxu0 0.0
      %1348 = vmatpush.msra.mxu0 0.0
      %1349 = vmatpush.msra.mxu0 0.0
      %1350 = vmatpush.msra.mxu0 0.0
      %1351 = vmatpush.msra.mxu0 0.0
      %1352 = vmatpush.msra.mxu0 0.0
      %1353 = vmatpush.msra.mxu0 0.0
      %1354 = vmatpush.msra.mxu0 0.0
      %1355 = vmatpush.msra.mxu0 0.0
      %1356 = vmatpush.msra.mxu0 0.0
      %1357 = vmatpush.msra.mxu0 0.0
      %1358 = vmatpush.msra.mxu0 0.0
      %1359 = vmatpush.msra.mxu0 %v1338
      %1360 = vmatmul.f32.gmra.mxu0 %v1342
      %v1361 = vpop.f32.mrf.mxu0
      %v1362 = vadd.f32 0.0, %v1361
      %1363 = vdwg.mxu0
      %1364 = vmatpush.msra.mxu0 0.0
      %1365 = vmatpush.msra.mxu0 0.0
      %1366 = vmatpush.msra.mxu0 0.0
      %1367 = vmatpush.msra.mxu0 0.0
      %1368 = vmatpush.msra.mxu0 0.0
      %1369 = vmatpush.msra.mxu0 0.0
      %1370 = vmatpush.msra.mxu0 0.0
      %1371 = vmatpush.msra.mxu0 0.0
      %1372 = vmatpush.msra.mxu0 0.0
      %1373 = vmatpush.msra.mxu0 0.0
      %1374 = vmatpush.msra.mxu0 0.0
      %1375 = vmatpush.msra.mxu0 0.0
      %1376 = vmatpush.msra.mxu0 0.0
      %1377 = vmatpush.msra.mxu0 0.0
      %1378 = vmatpush.msra.mxu0 0.0
      %1379 = vmatpush.msra.mxu0 %v1335
      %1380 = vmatmul.f32.gmra.mxu0 %v1342
      %v1381 = vpop.f32.mrf.mxu0
      %v1382 = vadd.f32 0.0, %v1381
      %1383 = vdwg.mxu0
      %v1384 = vadd.f32 %v1326, %v1362
      %v1385 = vadd.f32 %v1327, %v1382
      %1388 = vrot.lane.b32.xlu0 %v1156, 30
      %v1389 = vpop.permute.xlu0 %1388
      %1390 = vrot.lane.b32.xlu0 %v1157, 30
      %v1391 = vpop.permute.xlu0 %1390
      %vm1392 = vcmask 244736
      %v1393 = vsel %vm1392, %v1389, %v1391
      %v1396 = vsel %vm1392, 0.0, %v1389
      %s1397 = scalar_lea.vmem %s4, 32
      %v1398 = vld [vmem:[%s1397] sm:$0xff]
      %v1400 = vsel %vm1183, %v1398, 0
      %1402 = vmatpush.msra.mxu0 0.0
      %1403 = vmatpush.msra.mxu0 0.0
      %1404 = vmatpush.msra.mxu0 0.0
      %1405 = vmatpush.msra.mxu0 0.0
      %1406 = vmatpush.msra.mxu0 0.0
      %1407 = vmatpush.msra.mxu0 0.0
      %1408 = vmatpush.msra.mxu0 0.0
      %1409 = vmatpush.msra.mxu0 0.0
      %1410 = vmatpush.msra.mxu0 0.0
      %1411 = vmatpush.msra.mxu0 0.0
      %1412 = vmatpush.msra.mxu0 0.0
      %1413 = vmatpush.msra.mxu0 0.0
      %1414 = vmatpush.msra.mxu0 0.0
      %1415 = vmatpush.msra.mxu0 0.0
      %1416 = vmatpush.msra.mxu0 0.0
      %1417 = vmatpush.msra.mxu0 %v1396
      %1418 = vmatmul.f32.gmra.mxu0 %v1400
      %v1419 = vpop.f32.mrf.mxu0
      %v1420 = vadd.f32 0.0, %v1419
      %1421 = vdwg.mxu0
      %1422 = vmatpush.msra.mxu0 0.0
      %1423 = vmatpush.msra.mxu0 0.0
      %1424 = vmatpush.msra.mxu0 0.0
      %1425 = vmatpush.msra.mxu0 0.0
      %1426 = vmatpush.msra.mxu0 0.0
      %1427 = vmatpush.msra.mxu0 0.0
      %1428 = vmatpush.msra.mxu0 0.0
      %1429 = vmatpush.msra.mxu0 0.0
      %1430 = vmatpush.msra.mxu0 0.0
      %1431 = vmatpush.msra.mxu0 0.0
      %1432 = vmatpush.msra.mxu0 0.0
      %1433 = vmatpush.msra.mxu0 0.0
      %1434 = vmatpush.msra.mxu0 0.0
      %1435 = vmatpush.msra.mxu0 0.0
      %1436 = vmatpush.msra.mxu0 0.0
      %1437 = vmatpush.msra.mxu0 %v1393
      %1438 = vmatmul.f32.gmra.mxu0 %v1400
      %v1439 = vpop.f32.mrf.mxu0
      %v1440 = vadd.f32 0.0, %v1439
      %1441 = vdwg.mxu0
      %v1442 = vadd.f32 %v1384, %v1420
      %v1443 = vadd.f32 %v1385, %v1440
      %1444 = vrot.lane.b32.xlu0 %v1139, 18
      %v1445 = vpop.permute.xlu0 %1444
      %1446 = vrot.lane.b32.xlu0 %v1140, 18
      %v1447 = vpop.permute.xlu0 %1446
      %vm1448 = vcmask 146432
      %v1449 = vsel %vm1448, %v1445, %v1447
      %v1452 = vsel %vm1448, 0.0, %v1445
      %s1453 = scalar_lea.vmem %s4, 40
      %v1454 = vld [vmem:[%s1453] sm:$0xff]
      %v1456 = vsel %vm1183, %v1454, 0
      %1458 = vmatpush.msra.mxu0 0.0
      %1459 = vmatpush.msra.mxu0 0.0
      %1460 = vmatpush.msra.mxu0 0.0
      %1461 = vmatpush.msra.mxu0 0.0
      %1462 = vmatpush.msra.mxu0 0.0
      %1463 = vmatpush.msra.mxu0 0.0
      %1464 = vmatpush.msra.mxu0 0.0
      %1465 = vmatpush.msra.mxu0 0.0
      %1466 = vmatpush.msra.mxu0 0.0
      %1467 = vmatpush.msra.mxu0 0.0
      %1468 = vmatpush.msra.mxu0 0.0
      %1469 = vmatpush.msra.mxu0 0.0
      %1470 = vmatpush.msra.mxu0 0.0
      %1471 = vmatpush.msra.mxu0 0.0
      %1472 = vmatpush.msra.mxu0 0.0
      %1473 = vmatpush.msra.mxu0 %v1452
      %1474 = vmatmul.f32.gmra.mxu0 %v1456
      %v1475 = vpop.f32.mrf.mxu0
      %v1476 = vadd.f32 0.0, %v1475
      %1477 = vdwg.mxu0
      %1478 = vmatpush.msra.mxu0 0.0
      %1479 = vmatpush.msra.mxu0 0.0
      %1480 = vmatpush.msra.mxu0 0.0
      %1481 = vmatpush.msra.mxu0 0.0
      %1482 = vmatpush.msra.mxu0 0.0
      %1483 = vmatpush.msra.mxu0 0.0
      %1484 = vmatpush.msra.mxu0 0.0
      %1485 = vmatpush.msra.mxu0 0.0
      %1486 = vmatpush.msra.mxu0 0.0
      %1487 = vmatpush.msra.mxu0 0.0
      %1488 = vmatpush.msra.mxu0 0.0
      %1489 = vmatpush.msra.mxu0 0.0
      %1490 = vmatpush.msra.mxu0 0.0
      %1491 = vmatpush.msra.mxu0 0.0
      %1492 = vmatpush.msra.mxu0 0.0
      %1493 = vmatpush.msra.mxu0 %v1449
      %1494 = vmatmul.f32.gmra.mxu0 %v1456
      %v1495 = vpop.f32.mrf.mxu0
      %v1496 = vadd.f32 0.0, %v1495
      %1497 = vdwg.mxu0
      %v1498 = vadd.f32 %v1442, %v1476
      %v1499 = vadd.f32 %v1443, %v1496
      %1500 = vrot.lane.b32.xlu0 %v1143, 17
      %v1501 = vpop.permute.xlu0 %1500
      %1502 = vrot.lane.b32.xlu0 %v1144, 17
      %v1503 = vpop.permute.xlu0 %1502
      %v1504 = vsel %vm584, %v1501, %v1503
      %v1507 = vsel %vm584, 0.0, %v1501
      %s1508 = scalar_lea.vmem %s4, 48
      %v1509 = vld [vmem:[%s1508] sm:$0xff]
      %v1511 = vsel %vm1183, %v1509, 0
      %1513 = vmatpush.msra.mxu0 0.0
      %1514 = vmatpush.msra.mxu0 0.0
      %1515 = vmatpush.msra.mxu0 0.0
      %1516 = vmatpush.msra.mxu0 0.0
      %1517 = vmatpush.msra.mxu0 0.0
      %1518 = vmatpush.msra.mxu0 0.0
      %1519 = vmatpush.msra.mxu0 0.0
      %1520 = vmatpush.msra.mxu0 0.0
      %1521 = vmatpush.msra.mxu0 0.0
      %1522 = vmatpush.msra.mxu0 0.0
      %1523 = vmatpush.msra.mxu0 0.0
      %1524 = vmatpush.msra.mxu0 0.0
      %1525 = vmatpush.msra.mxu0 0.0
      %1526 = vmatpush.msra.mxu0 0.0
      %1527 = vmatpush.msra.mxu0 0.0
      %1528 = vmatpush.msra.mxu0 %v1507
      %1529 = vmatmul.f32.gmra.mxu0 %v1511
      %v1530 = vpop.f32.mrf.mxu0
      %v1531 = vadd.f32 0.0, %v1530
      %1532 = vdwg.mxu0
      %1533 = vmatpush.msra.mxu0 0.0
      %1534 = vmatpush.msra.mxu0 0.0
      %1535 = vmatpush.msra.mxu0 0.0
      %1536 = vmatpush.msra.mxu0 0.0
      %1537 = vmatpush.msra.mxu0 0.0
      %1538 = vmatpush.msra.mxu0 0.0
      %1539 = vmatpush.msra.mxu0 0.0
      %1540 = vmatpush.msra.mxu0 0.0
      %1541 = vmatpush.msra.mxu0 0.0
      %1542 = vmatpush.msra.mxu0 0.0
      %1543 = vmatpush.msra.mxu0 0.0
      %1544 = vmatpush.msra.mxu0 0.0
      %1545 = vmatpush.msra.mxu0 0.0
      %1546 = vmatpush.msra.mxu0 0.0
      %1547 = vmatpush.msra.mxu0 0.0
      %1548 = vmatpush.msra.mxu0 %v1504
      %1549 = vmatmul.f32.gmra.mxu0 %v1511
      %v1550 = vpop.f32.mrf.mxu0
      %v1551 = vadd.f32 0.0, %v1550
      %1552 = vdwg.mxu0
      %v1553 = vadd.f32 %v1498, %v1531
      %v1554 = vadd.f32 %v1499, %v1551
      %1555 = vrot.lane.b32.xlu0 %v1131, 16
      %v1556 = vpop.permute.xlu0 %1555
      %1557 = vrot.lane.b32.xlu0 %v1132, 16
      %v1558 = vpop.permute.xlu0 %1557
      %v1559 = vsel %vm597, %v1556, %v1558
      %v1562 = vsel %vm597, 0.0, %v1556
      %s1563 = scalar_lea.vmem %s4, 56
      %v1564 = vld [vmem:[%s1563] sm:$0xff]
      %v1566 = vsel %vm1183, %v1564, 0
      %1568 = vmatpush.msra.mxu0 0.0
      %1569 = vmatpush.msra.mxu0 0.0
      %1570 = vmatpush.msra.mxu0 0.0
      %1571 = vmatpush.msra.mxu0 0.0
      %1572 = vmatpush.msra.mxu0 0.0
      %1573 = vmatpush.msra.mxu0 0.0
      %1574 = vmatpush.msra.mxu0 0.0
      %1575 = vmatpush.msra.mxu0 0.0
      %1576 = vmatpush.msra.mxu0 0.0
      %1577 = vmatpush.msra.mxu0 0.0
      %1578 = vmatpush.msra.mxu0 0.0
      %1579 = vmatpush.msra.mxu0 0.0
      %1580 = vmatpush.msra.mxu0 0.0
      %1581 = vmatpush.msra.mxu0 0.0
      %1582 = vmatpush.msra.mxu0 0.0
      %1583 = vmatpush.msra.mxu0 %v1562
      %1584 = vmatmul.f32.gmra.mxu0 %v1566
      %v1585 = vpop.f32.mrf.mxu0
      %v1586 = vadd.f32 0.0, %v1585
      %1587 = vdwg.mxu0
      %1588 = vmatpush.msra.mxu0 0.0
      %1589 = vmatpush.msra.mxu0 0.0
      %1590 = vmatpush.msra.mxu0 0.0
      %1591 = vmatpush.msra.mxu0 0.0
      %1592 = vmatpush.msra.mxu0 0.0
      %1593 = vmatpush.msra.mxu0 0.0
      %1594 = vmatpush.msra.mxu0 0.0
      %1595 = vmatpush.msra.mxu0 0.0
      %1596 = vmatpush.msra.mxu0 0.0
      %1597 = vmatpush.msra.mxu0 0.0
      %1598 = vmatpush.msra.mxu0 0.0
      %1599 = vmatpush.msra.mxu0 0.0
      %1600 = vmatpush.msra.mxu0 0.0
      %1601 = vmatpush.msra.mxu0 0.0
      %1602 = vmatpush.msra.mxu0 0.0
      %1603 = vmatpush.msra.mxu0 %v1559
      %1604 = vmatmul.f32.gmra.mxu0 %v1566
      %v1605 = vpop.f32.mrf.mxu0
      %v1606 = vadd.f32 0.0, %v1605
      %1607 = vdwg.mxu0
      %v1608 = vadd.f32 %v1553, %v1586
      %v1609 = vadd.f32 %v1554, %v1606
      %1610 = vrot.lane.b32.xlu0 %v1147, 15
      %v1611 = vpop.permute.xlu0 %1610
      %1612 = vrot.lane.b32.xlu0 %v1148, 15
      %v1613 = vpop.permute.xlu0 %1612
      %v1614 = vsel %vm708, %v1611, %v1613
      %v1617 = vsel %vm708, 0.0, %v1611
      %s1618 = scalar_lea.vmem %s4, 64
      %v1619 = vld [vmem:[%s1618] sm:$0xff]
      %v1621 = vsel %vm1183, %v1619, 0
      %1623 = vmatpush.msra.mxu0 0.0
      %1624 = vmatpush.msra.mxu0 0.0
      %1625 = vmatpush.msra.mxu0 0.0
      %1626 = vmatpush.msra.mxu0 0.0
      %1627 = vmatpush.msra.mxu0 0.0
      %1628 = vmatpush.msra.mxu0 0.0
      %1629 = vmatpush.msra.mxu0 0.0
      %1630 = vmatpush.msra.mxu0 0.0
      %1631 = vmatpush.msra.mxu0 0.0
      %1632 = vmatpush.msra.mxu0 0.0
      %1633 = vmatpush.msra.mxu0 0.0
      %1634 = vmatpush.msra.mxu0 0.0
      %1635 = vmatpush.msra.mxu0 0.0
      %1636 = vmatpush.msra.mxu0 0.0
      %1637 = vmatpush.msra.mxu0 0.0
      %1638 = vmatpush.msra.mxu0 %v1617
      %1639 = vmatmul.f32.gmra.mxu0 %v1621
      %v1640 = vpop.f32.mrf.mxu0
      %v1641 = vadd.f32 0.0, %v1640
      %1642 = vdwg.mxu0
      %1643 = vmatpush.msra.mxu0 0.0
      %1644 = vmatpush.msra.mxu0 0.0
      %1645 = vmatpush.msra.mxu0 0.0
      %1646 = vmatpush.msra.mxu0 0.0
      %1647 = vmatpush.msra.mxu0 0.0
      %1648 = vmatpush.msra.mxu0 0.0
      %1649 = vmatpush.msra.mxu0 0.0
      %1650 = vmatpush.msra.mxu0 0.0
      %1651 = vmatpush.msra.mxu0 0.0
      %1652 = vmatpush.msra.mxu0 0.0
      %1653 = vmatpush.msra.mxu0 0.0
      %1654 = vmatpush.msra.mxu0 0.0
      %1655 = vmatpush.msra.mxu0 0.0
      %1656 = vmatpush.msra.mxu0 0.0
      %1657 = vmatpush.msra.mxu0 0.0
      %1658 = vmatpush.msra.mxu0 %v1614
      %1659 = vmatmul.f32.gmra.mxu0 %v1621
      %v1660 = vpop.f32.mrf.mxu0
      %v1661 = vadd.f32 0.0, %v1660
      %1662 = vdwg.mxu0
      %v1663 = vadd.f32 %v1608, %v1641
      %v1664 = vadd.f32 %v1609, %v1661
      %1665 = vrot.lane.b32.xlu0 %v1156, 14
      %v1666 = vpop.permute.xlu0 %1665
      %1667 = vrot.lane.b32.xlu0 %v1157, 14
      %v1668 = vpop.permute.xlu0 %1667
      %vm1669 = vcmask 113664
      %v1670 = vsel %vm1669, %v1666, %v1668
      %v1673 = vsel %vm1669, 0.0, %v1666
      %s1674 = scalar_lea.vmem %s4, 72
      %v1675 = vld [vmem:[%s1674] sm:$0xff]
      %v1677 = vsel %vm1183, %v1675, 0
      %1679 = vmatpush.msra.mxu0 0.0
      %1680 = vmatpush.msra.mxu0 0.0
      %1681 = vmatpush.msra.mxu0 0.0
      %1682 = vmatpush.msra.mxu0 0.0
      %1683 = vmatpush.msra.mxu0 0.0
      %1684 = vmatpush.msra.mxu0 0.0
      %1685 = vmatpush.msra.mxu0 0.0
      %1686 = vmatpush.msra.mxu0 0.0
      %1687 = vmatpush.msra.mxu0 0.0
      %1688 = vmatpush.msra.mxu0 0.0
      %1689 = vmatpush.msra.mxu0 0.0
      %1690 = vmatpush.msra.mxu0 0.0
      %1691 = vmatpush.msra.mxu0 0.0
      %1692 = vmatpush.msra.mxu0 0.0
      %1693 = vmatpush.msra.mxu0 0.0
      %1694 = vmatpush.msra.mxu0 %v1673
      %1695 = vmatmul.f32.gmra.mxu0 %v1677
      %v1696 = vpop.f32.mrf.mxu0
      %v1697 = vadd.f32 0.0, %v1696
      %1698 = vdwg.mxu0
      %1699 = vmatpush.msra.mxu0 0.0
      %1700 = vmatpush.msra.mxu0 0.0
      %1701 = vmatpush.msra.mxu0 0.0
      %1702 = vmatpush.msra.mxu0 0.0
      %1703 = vmatpush.msra.mxu0 0.0
      %1704 = vmatpush.msra.mxu0 0.0
      %1705 = vmatpush.msra.mxu0 0.0
      %1706 = vmatpush.msra.mxu0 0.0
      %1707 = vmatpush.msra.mxu0 0.0
      %1708 = vmatpush.msra.mxu0 0.0
      %1709 = vmatpush.msra.mxu0 0.0
      %1710 = vmatpush.msra.mxu0 0.0
      %1711 = vmatpush.msra.mxu0 0.0
      %1712 = vmatpush.msra.mxu0 0.0
      %1713 = vmatpush.msra.mxu0 0.0
      %1714 = vmatpush.msra.mxu0 %v1670
      %1715 = vmatmul.f32.gmra.mxu0 %v1677
      %v1716 = vpop.f32.mrf.mxu0
      %v1717 = vadd.f32 0.0, %v1716
      %1718 = vdwg.mxu0
      %v1719 = vadd.f32 %v1663, %v1697
      %v1720 = vadd.f32 %v1664, %v1717
      %1721 = vrot.lane.b32.xlu0 %v1139, 2
      %v1722 = vpop.permute.xlu0 %1721
      %1723 = vrot.lane.b32.xlu0 %v1140, 2
      %v1724 = vpop.permute.xlu0 %1723
      %vm1725 = vcmask 15360
      %v1726 = vsel %vm1725, %v1722, %v1724
      %v1729 = vsel %vm1725, 0.0, %v1722
      %s1730 = scalar_lea.vmem %s4, 80
      %v1731 = vld [vmem:[%s1730] sm:$0xff]
      %v1733 = vsel %vm1183, %v1731, 0
      %1735 = vmatpush.msra.mxu0 0.0
      %1736 = vmatpush.msra.mxu0 0.0
      %1737 = vmatpush.msra.mxu0 0.0
      %1738 = vmatpush.msra.mxu0 0.0
      %1739 = vmatpush.msra.mxu0 0.0
      %1740 = vmatpush.msra.mxu0 0.0
      %1741 = vmatpush.msra.mxu0 0.0
      %1742 = vmatpush.msra.mxu0 0.0
      %1743 = vmatpush.msra.mxu0 0.0
      %1744 = vmatpush.msra.mxu0 0.0
      %1745 = vmatpush.msra.mxu0 0.0
      %1746 = vmatpush.msra.mxu0 0.0
      %1747 = vmatpush.msra.mxu0 0.0
      %1748 = vmatpush.msra.mxu0 0.0
      %1749 = vmatpush.msra.mxu0 0.0
      %1750 = vmatpush.msra.mxu0 %v1729
      %1751 = vmatmul.f32.gmra.mxu0 %v1733
      %v1752 = vpop.f32.mrf.mxu0
      %v1753 = vadd.f32 0.0, %v1752
      %1754 = vdwg.mxu0
      %1755 = vmatpush.msra.mxu0 0.0
      %1756 = vmatpush.msra.mxu0 0.0
      %1757 = vmatpush.msra.mxu0 0.0
      %1758 = vmatpush.msra.mxu0 0.0
      %1759 = vmatpush.msra.mxu0 0.0
      %1760 = vmatpush.msra.mxu0 0.0
      %1761 = vmatpush.msra.mxu0 0.0
      %1762 = vmatpush.msra.mxu0 0.0
      %1763 = vmatpush.msra.mxu0 0.0
      %1764 = vmatpush.msra.mxu0 0.0
      %1765 = vmatpush.msra.mxu0 0.0
      %1766 = vmatpush.msra.mxu0 0.0
      %1767 = vmatpush.msra.mxu0 0.0
      %1768 = vmatpush.msra.mxu0 0.0
      %1769 = vmatpush.msra.mxu0 0.0
      %1770 = vmatpush.msra.mxu0 %v1726
      %1771 = vmatmul.f32.gmra.mxu0 %v1733
      %v1772 = vpop.f32.mrf.mxu0
      %v1773 = vadd.f32 0.0, %v1772
      %1774 = vdwg.mxu0
      %v1775 = vadd.f32 %v1719, %v1753
      %v1776 = vadd.f32 %v1720, %v1773
      %1777 = vrot.lane.b32.xlu0 %v1143, 1
      %v1778 = vpop.permute.xlu0 %1777
      %1779 = vrot.lane.b32.xlu0 %v1144, 1
      %v1780 = vpop.permute.xlu0 %1779
      %v1781 = vsel %vm771, %v1778, %v1780
      %v1784 = vsel %vm771, 0.0, %v1778
      %s1785 = scalar_lea.vmem %s4, 88
      %v1786 = vld [vmem:[%s1785] sm:$0xff]
      %v1788 = vsel %vm1183, %v1786, 0
      %1790 = vmatpush.msra.mxu0 0.0
      %1791 = vmatpush.msra.mxu0 0.0
      %1792 = vmatpush.msra.mxu0 0.0
      %1793 = vmatpush.msra.mxu0 0.0
      %1794 = vmatpush.msra.mxu0 0.0
      %1795 = vmatpush.msra.mxu0 0.0
      %1796 = vmatpush.msra.mxu0 0.0
      %1797 = vmatpush.msra.mxu0 0.0
      %1798 = vmatpush.msra.mxu0 0.0
      %1799 = vmatpush.msra.mxu0 0.0
      %1800 = vmatpush.msra.mxu0 0.0
      %1801 = vmatpush.msra.mxu0 0.0
      %1802 = vmatpush.msra.mxu0 0.0
      %1803 = vmatpush.msra.mxu0 0.0
      %1804 = vmatpush.msra.mxu0 0.0
      %1805 = vmatpush.msra.mxu0 %v1784
      %1806 = vmatmul.f32.gmra.mxu0 %v1788
      %v1807 = vpop.f32.mrf.mxu0
      %v1808 = vadd.f32 0.0, %v1807
      %1809 = vdwg.mxu0
      %1810 = vmatpush.msra.mxu0 0.0
      %1811 = vmatpush.msra.mxu0 0.0
      %1812 = vmatpush.msra.mxu0 0.0
      %1813 = vmatpush.msra.mxu0 0.0
      %1814 = vmatpush.msra.mxu0 0.0
      %1815 = vmatpush.msra.mxu0 0.0
      %1816 = vmatpush.msra.mxu0 0.0
      %1817 = vmatpush.msra.mxu0 0.0
      %1818 = vmatpush.msra.mxu0 0.0
      %1819 = vmatpush.msra.mxu0 0.0
      %1820 = vmatpush.msra.mxu0 0.0
      %1821 = vmatpush.msra.mxu0 0.0
      %1822 = vmatpush.msra.mxu0 0.0
      %1823 = vmatpush.msra.mxu0 0.0
      %1824 = vmatpush.msra.mxu0 0.0
      %1825 = vmatpush.msra.mxu0 %v1781
      %1826 = vmatmul.f32.gmra.mxu0 %v1788
      %v1827 = vpop.f32.mrf.mxu0
      %v1828 = vadd.f32 0.0, %v1827
      %1829 = vdwg.mxu0
      %v1830 = vadd.f32 %v1775, %v1808
      %v1831 = vadd.f32 %v1776, %v1828
      %s1832 = scalar_lea.vmem %s4, 96
      %v1833 = vld [vmem:[%s1832] sm:$0xff]
      %v1835 = vsel %vm1183, %v1833, 0
      %1837 = vmatpush.msra.mxu0 0.0
      %1838 = vmatpush.msra.mxu0 0.0
      %1839 = vmatpush.msra.mxu0 0.0
      %1840 = vmatpush.msra.mxu0 0.0
      %1841 = vmatpush.msra.mxu0 0.0
      %1842 = vmatpush.msra.mxu0 0.0
      %1843 = vmatpush.msra.mxu0 0.0
      %1844 = vmatpush.msra.mxu0 0.0
      %1845 = vmatpush.msra.mxu0 0.0
      %1846 = vmatpush.msra.mxu0 0.0
      %1847 = vmatpush.msra.mxu0 0.0
      %1848 = vmatpush.msra.mxu0 0.0
      %1849 = vmatpush.msra.mxu0 0.0
      %1850 = vmatpush.msra.mxu0 0.0
      %1851 = vmatpush.msra.mxu0 0.0
      %1852 = vmatpush.msra.mxu0 %v1131
      %1853 = vmatmul.f32.gmra.mxu0 %v1835
      %v1854 = vpop.f32.mrf.mxu0
      %v1855 = vadd.f32 0.0, %v1854
      %1856 = vdwg.mxu0
      %1857 = vmatpush.msra.mxu0 0.0
      %1858 = vmatpush.msra.mxu0 0.0
      %1859 = vmatpush.msra.mxu0 0.0
      %1860 = vmatpush.msra.mxu0 0.0
      %1861 = vmatpush.msra.mxu0 0.0
      %1862 = vmatpush.msra.mxu0 0.0
      %1863 = vmatpush.msra.mxu0 0.0
      %1864 = vmatpush.msra.mxu0 0.0
      %1865 = vmatpush.msra.mxu0 0.0
      %1866 = vmatpush.msra.mxu0 0.0
      %1867 = vmatpush.msra.mxu0 0.0
      %1868 = vmatpush.msra.mxu0 0.0
      %1869 = vmatpush.msra.mxu0 0.0
      %1870 = vmatpush.msra.mxu0 0.0
      %1871 = vmatpush.msra.mxu0 0.0
      %1872 = vmatpush.msra.mxu0 %v1132
      %1873 = vmatmul.f32.gmra.mxu0 %v1835
      %v1874 = vpop.f32.mrf.mxu0
      %v1875 = vadd.f32 0.0, %v1874
      %1876 = vdwg.mxu0
      %v1877 = vadd.f32 %v1830, %v1855
      %v1878 = vadd.f32 %v1831, %v1875
      %1879 = vrot.lane.b32.xlu0 %v1147, 127
      %v1880 = vpop.permute.xlu0 %1879
      %1881 = vrot.lane.b32.xlu0 %v1148, 127
      %v1882 = vpop.permute.xlu0 %1881
      %v1883 = vsel %vm888, %v1880, %v1882
      %v1886 = vsel %vm888, %v1882, 0.0
      %s1887 = scalar_lea.vmem %s4, 104
      %v1888 = vld [vmem:[%s1887] sm:$0xff]
      %v1890 = vsel %vm1183, %v1888, 0
      %1892 = vmatpush.msra.mxu0 0.0
      %1893 = vmatpush.msra.mxu0 0.0
      %1894 = vmatpush.msra.mxu0 0.0
      %1895 = vmatpush.msra.mxu0 0.0
      %1896 = vmatpush.msra.mxu0 0.0
      %1897 = vmatpush.msra.mxu0 0.0
      %1898 = vmatpush.msra.mxu0 0.0
      %1899 = vmatpush.msra.mxu0 0.0
      %1900 = vmatpush.msra.mxu0 0.0
      %1901 = vmatpush.msra.mxu0 0.0
      %1902 = vmatpush.msra.mxu0 0.0
      %1903 = vmatpush.msra.mxu0 0.0
      %1904 = vmatpush.msra.mxu0 0.0
      %1905 = vmatpush.msra.mxu0 0.0
      %1906 = vmatpush.msra.mxu0 0.0
      %1907 = vmatpush.msra.mxu0 %v1883
      %1908 = vmatmul.f32.gmra.mxu0 %v1890
      %v1909 = vpop.f32.mrf.mxu0
      %v1910 = vadd.f32 0.0, %v1909
      %1911 = vdwg.mxu0
      %1912 = vmatpush.msra.mxu0 0.0
      %1913 = vmatpush.msra.mxu0 0.0
      %1914 = vmatpush.msra.mxu0 0.0
      %1915 = vmatpush.msra.mxu0 0.0
      %1916 = vmatpush.msra.mxu0 0.0
      %1917 = vmatpush.msra.mxu0 0.0
      %1918 = vmatpush.msra.mxu0 0.0
      %1919 = vmatpush.msra.mxu0 0.0
      %1920 = vmatpush.msra.mxu0 0.0
      %1921 = vmatpush.msra.mxu0 0.0
      %1922 = vmatpush.msra.mxu0 0.0
      %1923 = vmatpush.msra.mxu0 0.0
      %1924 = vmatpush.msra.mxu0 0.0
      %1925 = vmatpush.msra.mxu0 0.0
      %1926 = vmatpush.msra.mxu0 0.0
      %1927 = vmatpush.msra.mxu0 %v1886
      %1928 = vmatmul.f32.gmra.mxu0 %v1890
      %v1929 = vpop.f32.mrf.mxu0
      %v1930 = vadd.f32 0.0, %v1929
      %1931 = vdwg.mxu0
      %v1932 = vadd.f32 %v1877, %v1910
      %v1933 = vadd.f32 %v1878, %v1930
      %1934 = vrot.lane.b32.xlu0 %v1156, 126
      %v1935 = vpop.permute.xlu0 %1934
      %1936 = vrot.lane.b32.xlu0 %v1157, 126
      %v1937 = vpop.permute.xlu0 %1936
      %vm1938 = vcmask 1031168
      %v1939 = vsel %vm1938, %v1935, %v1937
      %v1942 = vsel %vm1938, %v1937, 0.0
      %s1943 = scalar_lea.vmem %s4, 112
      %v1944 = vld [vmem:[%s1943] sm:$0xff]
      %v1946 = vsel %vm1183, %v1944, 0
      %1948 = vmatpush.msra.mxu0 0.0
      %1949 = vmatpush.msra.mxu0 0.0
      %1950 = vmatpush.msra.mxu0 0.0
      %1951 = vmatpush.msra.mxu0 0.0
      %1952 = vmatpush.msra.mxu0 0.0
      %1953 = vmatpush.msra.mxu0 0.0
      %1954 = vmatpush.msra.mxu0 0.0
      %1955 = vmatpush.msra.mxu0 0.0
      %1956 = vmatpush.msra.mxu0 0.0
      %1957 = vmatpush.msra.mxu0 0.0
      %1958 = vmatpush.msra.mxu0 0.0
      %1959 = vmatpush.msra.mxu0 0.0
      %1960 = vmatpush.msra.mxu0 0.0
      %1961 = vmatpush.msra.mxu0 0.0
      %1962 = vmatpush.msra.mxu0 0.0
      %1963 = vmatpush.msra.mxu0 %v1939
      %1964 = vmatmul.f32.gmra.mxu0 %v1946
      %v1965 = vpop.f32.mrf.mxu0
      %v1966 = vadd.f32 0.0, %v1965
      %1967 = vdwg.mxu0
      %1968 = vmatpush.msra.mxu0 0.0
      %1969 = vmatpush.msra.mxu0 0.0
      %1970 = vmatpush.msra.mxu0 0.0
      %1971 = vmatpush.msra.mxu0 0.0
      %1972 = vmatpush.msra.mxu0 0.0
      %1973 = vmatpush.msra.mxu0 0.0
      %1974 = vmatpush.msra.mxu0 0.0
      %1975 = vmatpush.msra.mxu0 0.0
      %1976 = vmatpush.msra.mxu0 0.0
      %1977 = vmatpush.msra.mxu0 0.0
      %1978 = vmatpush.msra.mxu0 0.0
      %1979 = vmatpush.msra.mxu0 0.0
      %1980 = vmatpush.msra.mxu0 0.0
      %1981 = vmatpush.msra.mxu0 0.0
      %1982 = vmatpush.msra.mxu0 0.0
      %1983 = vmatpush.msra.mxu0 %v1942
      %1984 = vmatmul.f32.gmra.mxu0 %v1946
      %v1985 = vpop.f32.mrf.mxu0
      %v1986 = vadd.f32 0.0, %v1985
      %1987 = vdwg.mxu0
      %v1988 = vadd.f32 %v1932, %v1966
      %v1989 = vadd.f32 %v1933, %v1986
      %1990 = vrot.lane.b32.xlu0 %v1139, 114
      %v1991 = vpop.permute.xlu0 %1990
      %1992 = vrot.lane.b32.xlu0 %v1140, 114
      %v1993 = vpop.permute.xlu0 %1992
      %vm1994 = vcmask 932864
      %v1995 = vsel %vm1994, %v1991, %v1993
      %v1998 = vsel %vm1994, %v1993, 0.0
      %s1999 = scalar_lea.vmem %s4, 120
      %v2000 = vld [vmem:[%s1999] sm:$0xff]
      %v2002 = vsel %vm1183, %v2000, 0
      %2004 = vmatpush.msra.mxu0 0.0
      %2005 = vmatpush.msra.mxu0 0.0
      %2006 = vmatpush.msra.mxu0 0.0
      %2007 = vmatpush.msra.mxu0 0.0
      %2008 = vmatpush.msra.mxu0 0.0
      %2009 = vmatpush.msra.mxu0 0.0
      %2010 = vmatpush.msra.mxu0 0.0
      %2011 = vmatpush.msra.mxu0 0.0
      %2012 = vmatpush.msra.mxu0 0.0
      %2013 = vmatpush.msra.mxu0 0.0
      %2014 = vmatpush.msra.mxu0 0.0
      %2015 = vmatpush.msra.mxu0 0.0
      %2016 = vmatpush.msra.mxu0 0.0
      %2017 = vmatpush.msra.mxu0 0.0
      %2018 = vmatpush.msra.mxu0 0.0
      %2019 = vmatpush.msra.mxu0 %v1995
      %2020 = vmatmul.f32.gmra.mxu0 %v2002
      %v2021 = vpop.f32.mrf.mxu0
      %v2022 = vadd.f32 0.0, %v2021
      %2023 = vdwg.mxu0
      %2024 = vmatpush.msra.mxu0 0.0
      %2025 = vmatpush.msra.mxu0 0.0
      %2026 = vmatpush.msra.mxu0 0.0
      %2027 = vmatpush.msra.mxu0 0.0
      %2028 = vmatpush.msra.mxu0 0.0
      %2029 = vmatpush.msra.mxu0 0.0
      %2030 = vmatpush.msra.mxu0 0.0
      %2031 = vmatpush.msra.mxu0 0.0
      %2032 = vmatpush.msra.mxu0 0.0
      %2033 = vmatpush.msra.mxu0 0.0
      %2034 = vmatpush.msra.mxu0 0.0
      %2035 = vmatpush.msra.mxu0 0.0
      %2036 = vmatpush.msra.mxu0 0.0
      %2037 = vmatpush.msra.mxu0 0.0
      %2038 = vmatpush.msra.mxu0 0.0
      %2039 = vmatpush.msra.mxu0 %v1998
      %2040 = vmatmul.f32.gmra.mxu0 %v2002
      %v2041 = vpop.f32.mrf.mxu0
      %v2042 = vadd.f32 0.0, %v2041
      %2043 = vdwg.mxu0
      %v2044 = vadd.f32 %v1988, %v2022
      %v2045 = vadd.f32 %v1989, %v2042
      %2046 = vrot.lane.b32.xlu0 %v1143, 113
      %v2047 = vpop.permute.xlu0 %2046
      %2048 = vrot.lane.b32.xlu0 %v1144, 113
      %v2049 = vpop.permute.xlu0 %2048
      %v2050 = vsel %vm951, %v2047, %v2049
      %v2053 = vsel %vm951, %v2049, 0.0
      %s2054 = scalar_lea.vmem %s4, 128
      %v2055 = vld [vmem:[%s2054] sm:$0xff]
      %v2057 = vsel %vm1183, %v2055, 0
      %2059 = vmatpush.msra.mxu0 0.0
      %2060 = vmatpush.msra.mxu0 0.0
      %2061 = vmatpush.msra.mxu0 0.0
      %2062 = vmatpush.msra.mxu0 0.0
      %2063 = vmatpush.msra.mxu0 0.0
      %2064 = vmatpush.msra.mxu0 0.0
      %2065 = vmatpush.msra.mxu0 0.0
      %2066 = vmatpush.msra.mxu0 0.0
      %2067 = vmatpush.msra.mxu0 0.0
      %2068 = vmatpush.msra.mxu0 0.0
      %2069 = vmatpush.msra.mxu0 0.0
      %2070 = vmatpush.msra.mxu0 0.0
      %2071 = vmatpush.msra.mxu0 0.0
      %2072 = vmatpush.msra.mxu0 0.0
      %2073 = vmatpush.msra.mxu0 0.0
      %2074 = vmatpush.msra.mxu0 %v2050
      %2075 = vmatmul.f32.gmra.mxu0 %v2057
      %v2076 = vpop.f32.mrf.mxu0
      %v2077 = vadd.f32 0.0, %v2076
      %2078 = vdwg.mxu0
      %2079 = vmatpush.msra.mxu0 0.0
      %2080 = vmatpush.msra.mxu0 0.0
      %2081 = vmatpush.msra.mxu0 0.0
      %2082 = vmatpush.msra.mxu0 0.0
      %2083 = vmatpush.msra.mxu0 0.0
      %2084 = vmatpush.msra.mxu0 0.0
      %2085 = vmatpush.msra.mxu0 0.0
      %2086 = vmatpush.msra.mxu0 0.0
      %2087 = vmatpush.msra.mxu0 0.0
      %2088 = vmatpush.msra.mxu0 0.0
      %2089 = vmatpush.msra.mxu0 0.0
      %2090 = vmatpush.msra.mxu0 0.0
      %2091 = vmatpush.msra.mxu0 0.0
      %2092 = vmatpush.msra.mxu0 0.0
      %2093 = vmatpush.msra.mxu0 0.0
      %2094 = vmatpush.msra.mxu0 %v2053
      %2095 = vmatmul.f32.gmra.mxu0 %v2057
      %v2096 = vpop.f32.mrf.mxu0
      %v2097 = vadd.f32 0.0, %v2096
      %2098 = vdwg.mxu0
      %v2099 = vadd.f32 %v2044, %v2077
      %v2100 = vadd.f32 %v2045, %v2097
      %2101 = vrot.lane.b32.xlu0 %v1131, 112
      %v2102 = vpop.permute.xlu0 %2101
      %2103 = vrot.lane.b32.xlu0 %v1132, 112
      %v2104 = vpop.permute.xlu0 %2103
      %v2105 = vsel %vm1014, %v2102, %v2104
      %v2108 = vsel %vm1014, %v2104, 0.0
      %s2109 = scalar_lea.vmem %s4, 136
      %v2110 = vld [vmem:[%s2109] sm:$0xff]
      %v2112 = vsel %vm1183, %v2110, 0
      %2114 = vmatpush.msra.mxu0 0.0
      %2115 = vmatpush.msra.mxu0 0.0
      %2116 = vmatpush.msra.mxu0 0.0
      %2117 = vmatpush.msra.mxu0 0.0
      %2118 = vmatpush.msra.mxu0 0.0
      %2119 = vmatpush.msra.mxu0 0.0
      %2120 = vmatpush.msra.mxu0 0.0
      %2121 = vmatpush.msra.mxu0 0.0
      %2122 = vmatpush.msra.mxu0 0.0
      %2123 = vmatpush.msra.mxu0 0.0
      %2124 = vmatpush.msra.mxu0 0.0
      %2125 = vmatpush.msra.mxu0 0.0
      %2126 = vmatpush.msra.mxu0 0.0
      %2127 = vmatpush.msra.mxu0 0.0
      %2128 = vmatpush.msra.mxu0 0.0
      %2129 = vmatpush.msra.mxu0 %v2105
      %2130 = vmatmul.f32.gmra.mxu0 %v2112
      %v2131 = vpop.f32.mrf.mxu0
      %v2132 = vadd.f32 0.0, %v2131
      %2133 = vdwg.mxu0
      %2134 = vmatpush.msra.mxu0 0.0
      %2135 = vmatpush.msra.mxu0 0.0
      %2136 = vmatpush.msra.mxu0 0.0
      %2137 = vmatpush.msra.mxu0 0.0
      %2138 = vmatpush.msra.mxu0 0.0
      %2139 = vmatpush.msra.mxu0 0.0
      %2140 = vmatpush.msra.mxu0 0.0
      %2141 = vmatpush.msra.mxu0 0.0
      %2142 = vmatpush.msra.mxu0 0.0
      %2143 = vmatpush.msra.mxu0 0.0
      %2144 = vmatpush.msra.mxu0 0.0
      %2145 = vmatpush.msra.mxu0 0.0
      %2146 = vmatpush.msra.mxu0 0.0
      %2147 = vmatpush.msra.mxu0 0.0
      %2148 = vmatpush.msra.mxu0 0.0
      %2149 = vmatpush.msra.mxu0 %v2108
      %2150 = vmatmul.f32.gmra.mxu0 %v2112
      %v2151 = vpop.f32.mrf.mxu0
      %v2152 = vadd.f32 0.0, %v2151
      %2153 = vdwg.mxu0
      %v2154 = vadd.f32 %v2099, %v2132
      %v2155 = vadd.f32 %v2100, %v2152
      %2156 = vrot.lane.b32.xlu0 %v1147, 111
      %v2157 = vpop.permute.xlu0 %2156
      %2158 = vrot.lane.b32.xlu0 %v1148, 111
      %v2159 = vpop.permute.xlu0 %2158
      %v2160 = vsel %vm1077, %v2157, %v2159
      %v2163 = vsel %vm1077, %v2159, 0.0
      %s2164 = scalar_lea.vmem %s4, 144
      %v2165 = vld [vmem:[%s2164] sm:$0xff]
      %v2167 = vsel %vm1183, %v2165, 0
      %2169 = vmatpush.msra.mxu0 0.0
      %2170 = vmatpush.msra.mxu0 0.0
      %2171 = vmatpush.msra.mxu0 0.0
      %2172 = vmatpush.msra.mxu0 0.0
      %2173 = vmatpush.msra.mxu0 0.0
      %2174 = vmatpush.msra.mxu0 0.0
      %2175 = vmatpush.msra.mxu0 0.0
      %2176 = vmatpush.msra.mxu0 0.0
      %2177 = vmatpush.msra.mxu0 0.0
      %2178 = vmatpush.msra.mxu0 0.0
      %2179 = vmatpush.msra.mxu0 0.0
      %2180 = vmatpush.msra.mxu0 0.0
      %2181 = vmatpush.msra.mxu0 0.0
      %2182 = vmatpush.msra.mxu0 0.0
      %2183 = vmatpush.msra.mxu0 0.0
      %2184 = vmatpush.msra.mxu0 %v2160
      %2185 = vmatmul.f32.gmra.mxu0 %v2167
      %v2186 = vpop.f32.mrf.mxu0
      %v2187 = vadd.f32 0.0, %v2186
      %2188 = vdwg.mxu0
      %2189 = vmatpush.msra.mxu0 0.0
      %2190 = vmatpush.msra.mxu0 0.0
      %2191 = vmatpush.msra.mxu0 0.0
      %2192 = vmatpush.msra.mxu0 0.0
      %2193 = vmatpush.msra.mxu0 0.0
      %2194 = vmatpush.msra.mxu0 0.0
      %2195 = vmatpush.msra.mxu0 0.0
      %2196 = vmatpush.msra.mxu0 0.0
      %2197 = vmatpush.msra.mxu0 0.0
      %2198 = vmatpush.msra.mxu0 0.0
      %2199 = vmatpush.msra.mxu0 0.0
      %2200 = vmatpush.msra.mxu0 0.0
      %2201 = vmatpush.msra.mxu0 0.0
      %2202 = vmatpush.msra.mxu0 0.0
      %2203 = vmatpush.msra.mxu0 0.0
      %2204 = vmatpush.msra.mxu0 %v2163
      %2205 = vmatmul.f32.gmra.mxu0 %v2167
      %v2206 = vpop.f32.mrf.mxu0
      %v2207 = vadd.f32 0.0, %v2206
      %2208 = vdwg.mxu0
      %v2209 = vadd.f32 %v2154, %v2187
      %v2210 = vadd.f32 %v2155, %v2207
      %2211 = vrot.lane.b32.xlu0 %v1156, 110
      %v2212 = vpop.permute.xlu0 %2211
      %2213 = vrot.lane.b32.xlu0 %v1157, 110
      %v2214 = vpop.permute.xlu0 %2213
      %vm2215 = vcmask 900096
      %v2216 = vsel %vm2215, %v2212, %v2214
      %v2219 = vsel %vm2215, %v2214, 0.0
      %s2220 = scalar_lea.vmem %s4, 152
      %v2221 = vld [vmem:[%s2220] sm:$0xff]
      %v2223 = vsel %vm1183, %v2221, 0
      %2225 = vmatpush.msra.mxu0 0.0
      %2226 = vmatpush.msra.mxu0 0.0
      %2227 = vmatpush.msra.mxu0 0.0
      %2228 = vmatpush.msra.mxu0 0.0
      %2229 = vmatpush.msra.mxu0 0.0
      %2230 = vmatpush.msra.mxu0 0.0
      %2231 = vmatpush.msra.mxu0 0.0
      %2232 = vmatpush.msra.mxu0 0.0
      %2233 = vmatpush.msra.mxu0 0.0
      %2234 = vmatpush.msra.mxu0 0.0
      %2235 = vmatpush.msra.mxu0 0.0
      %2236 = vmatpush.msra.mxu0 0.0
      %2237 = vmatpush.msra.mxu0 0.0
      %2238 = vmatpush.msra.mxu0 0.0
      %2239 = vmatpush.msra.mxu0 0.0
      %2240 = vmatpush.msra.mxu0 %v2216
      %2241 = vmatmul.f32.gmra.mxu0 %v2223
      %v2242 = vpop.f32.mrf.mxu0
      %v2243 = vadd.f32 0.0, %v2242
      %2244 = vdwg.mxu0
      %2245 = vmatpush.msra.mxu0 0.0
      %2246 = vmatpush.msra.mxu0 0.0
      %2247 = vmatpush.msra.mxu0 0.0
      %2248 = vmatpush.msra.mxu0 0.0
      %2249 = vmatpush.msra.mxu0 0.0
      %2250 = vmatpush.msra.mxu0 0.0
      %2251 = vmatpush.msra.mxu0 0.0
      %2252 = vmatpush.msra.mxu0 0.0
      %2253 = vmatpush.msra.mxu0 0.0
      %2254 = vmatpush.msra.mxu0 0.0
      %2255 = vmatpush.msra.mxu0 0.0
      %2256 = vmatpush.msra.mxu0 0.0
      %2257 = vmatpush.msra.mxu0 0.0
      %2258 = vmatpush.msra.mxu0 0.0
      %2259 = vmatpush.msra.mxu0 0.0
      %2260 = vmatpush.msra.mxu0 %v2219
      %2261 = vmatmul.f32.gmra.mxu0 %v2223
      %v2262 = vpop.f32.mrf.mxu0
      %v2263 = vadd.f32 0.0, %v2262
      %2264 = vdwg.mxu0
      %v2265 = vadd.f32 %v2209, %v2243
      %v2266 = vadd.f32 %v2210, %v2263
      %2267 = vrot.lane.b32.xlu0 %v1139, 98
      %v2268 = vpop.permute.xlu0 %2267
      %2269 = vrot.lane.b32.xlu0 %v1140, 98
      %v2270 = vpop.permute.xlu0 %2269
      %vm2271 = vcmask 801792
      %v2272 = vsel %vm2271, %v2268, %v2270
      %v2275 = vsel %vm2271, %v2270, 0.0
      %s2276 = scalar_lea.vmem %s4, 160
      %v2277 = vld [vmem:[%s2276] sm:$0xff]
      %v2279 = vsel %vm1183, %v2277, 0
      %2281 = vmatpush.msra.mxu0 0.0
      %2282 = vmatpush.msra.mxu0 0.0
      %2283 = vmatpush.msra.mxu0 0.0
      %2284 = vmatpush.msra.mxu0 0.0
      %2285 = vmatpush.msra.mxu0 0.0
      %2286 = vmatpush.msra.mxu0 0.0
      %2287 = vmatpush.msra.mxu0 0.0
      %2288 = vmatpush.msra.mxu0 0.0
      %2289 = vmatpush.msra.mxu0 0.0
      %2290 = vmatpush.msra.mxu0 0.0
      %2291 = vmatpush.msra.mxu0 0.0
      %2292 = vmatpush.msra.mxu0 0.0
      %2293 = vmatpush.msra.mxu0 0.0
      %2294 = vmatpush.msra.mxu0 0.0
      %2295 = vmatpush.msra.mxu0 0.0
      %2296 = vmatpush.msra.mxu0 %v2272
      %2297 = vmatmul.f32.gmra.mxu0 %v2279
      %v2298 = vpop.f32.mrf.mxu0
      %v2299 = vadd.f32 0.0, %v2298
      %2300 = vdwg.mxu0
      %2301 = vmatpush.msra.mxu0 0.0
      %2302 = vmatpush.msra.mxu0 0.0
      %2303 = vmatpush.msra.mxu0 0.0
      %2304 = vmatpush.msra.mxu0 0.0
      %2305 = vmatpush.msra.mxu0 0.0
      %2306 = vmatpush.msra.mxu0 0.0
      %2307 = vmatpush.msra.mxu0 0.0
      %2308 = vmatpush.msra.mxu0 0.0
      %2309 = vmatpush.msra.mxu0 0.0
      %2310 = vmatpush.msra.mxu0 0.0
      %2311 = vmatpush.msra.mxu0 0.0
      %2312 = vmatpush.msra.mxu0 0.0
      %2313 = vmatpush.msra.mxu0 0.0
      %2314 = vmatpush.msra.mxu0 0.0
      %2315 = vmatpush.msra.mxu0 0.0
      %2316 = vmatpush.msra.mxu0 %v2275
      %2317 = vmatmul.f32.gmra.mxu0 %v2279
      %v2318 = vpop.f32.mrf.mxu0
      %v2319 = vadd.f32 0.0, %v2318
      %2320 = vdwg.mxu0
      %v2321 = vadd.f32 %v2265, %v2299
      %v2322 = vadd.f32 %v2266, %v2319
      %2323 = vrot.lane.b32.xlu0 %v1143, 97
      %v2324 = vpop.permute.xlu0 %2323
      %2325 = vrot.lane.b32.xlu0 %v1144, 97
      %v2326 = vpop.permute.xlu0 %2325
      %vm2327 = vcmask 793600
      %v2328 = vsel %vm2327, %v2324, %v2326
      %v2331 = vsel %vm2327, %v2326, 0.0
      %s2332 = scalar_lea.vmem %s4, 168
      %v2333 = vld [vmem:[%s2332] sm:$0xff]
      %v2335 = vsel %vm1183, %v2333, 0
      %2337 = vmatpush.msra.mxu0 0.0
      %2338 = vmatpush.msra.mxu0 0.0
      %2339 = vmatpush.msra.mxu0 0.0
      %2340 = vmatpush.msra.mxu0 0.0
      %2341 = vmatpush.msra.mxu0 0.0
      %2342 = vmatpush.msra.mxu0 0.0
      %2343 = vmatpush.msra.mxu0 0.0
      %2344 = vmatpush.msra.mxu0 0.0
      %2345 = vmatpush.msra.mxu0 0.0
      %2346 = vmatpush.msra.mxu0 0.0
      %2347 = vmatpush.msra.mxu0 0.0
      %2348 = vmatpush.msra.mxu0 0.0
      %2349 = vmatpush.msra.mxu0 0.0
      %2350 = vmatpush.msra.mxu0 0.0
      %2351 = vmatpush.msra.mxu0 0.0
      %2352 = vmatpush.msra.mxu0 %v2328
      %2353 = vmatmul.f32.gmra.mxu0 %v2335
      %v2354 = vpop.f32.mrf.mxu0
      %v2355 = vadd.f32 0.0, %v2354
      %2356 = vdwg.mxu0
      %2357 = vmatpush.msra.mxu0 0.0
      %2358 = vmatpush.msra.mxu0 0.0
      %2359 = vmatpush.msra.mxu0 0.0
      %2360 = vmatpush.msra.mxu0 0.0
      %2361 = vmatpush.msra.mxu0 0.0
      %2362 = vmatpush.msra.mxu0 0.0
      %2363 = vmatpush.msra.mxu0 0.0
      %2364 = vmatpush.msra.mxu0 0.0
      %2365 = vmatpush.msra.mxu0 0.0
      %2366 = vmatpush.msra.mxu0 0.0
      %2367 = vmatpush.msra.mxu0 0.0
      %2368 = vmatpush.msra.mxu0 0.0
      %2369 = vmatpush.msra.mxu0 0.0
      %2370 = vmatpush.msra.mxu0 0.0
      %2371 = vmatpush.msra.mxu0 0.0
      %2372 = vmatpush.msra.mxu0 %v2331
      %2373 = vmatmul.f32.gmra.mxu0 %v2335
      %v2374 = vpop.f32.mrf.mxu0
      %v2375 = vadd.f32 0.0, %v2374
      %2376 = vdwg.mxu0
      %v2377 = vadd.f32 %v2321, %v2355
      %v2378 = vadd.f32 %v2322, %v2375
      %2379 = vrot.lane.b32.xlu0 %v1131, 96
      %v2380 = vpop.permute.xlu0 %2379
      %2381 = vrot.lane.b32.xlu0 %v1132, 96
      %v2382 = vpop.permute.xlu0 %2381
      %vm2383 = vcmask 785408
      %v2384 = vsel %vm2383, %v2380, %v2382
      %v2387 = vsel %vm2383, %v2382, 0.0
      %s2388 = scalar_lea.vmem %s4, 176
      %v2389 = vld [vmem:[%s2388] sm:$0xff]
      %v2391 = vsel %vm1183, %v2389, 0
      %2393 = vmatpush.msra.mxu0 0.0
      %2394 = vmatpush.msra.mxu0 0.0
      %2395 = vmatpush.msra.mxu0 0.0
      %2396 = vmatpush.msra.mxu0 0.0
      %2397 = vmatpush.msra.mxu0 0.0
      %2398 = vmatpush.msra.mxu0 0.0
      %2399 = vmatpush.msra.mxu0 0.0
      %2400 = vmatpush.msra.mxu0 0.0
      %2401 = vmatpush.msra.mxu0 0.0
      %2402 = vmatpush.msra.mxu0 0.0
      %2403 = vmatpush.msra.mxu0 0.0
      %2404 = vmatpush.msra.mxu0 0.0
      %2405 = vmatpush.msra.mxu0 0.0
      %2406 = vmatpush.msra.mxu0 0.0
      %2407 = vmatpush.msra.mxu0 0.0
      %2408 = vmatpush.msra.mxu0 %v2384
      %2409 = vmatmul.f32.gmra.mxu0 %v2391
      %v2410 = vpop.f32.mrf.mxu0
      %v2411 = vadd.f32 0.0, %v2410
      %2412 = vdwg.mxu0
      %2413 = vmatpush.msra.mxu0 0.0
      %2414 = vmatpush.msra.mxu0 0.0
      %2415 = vmatpush.msra.mxu0 0.0
      %2416 = vmatpush.msra.mxu0 0.0
      %2417 = vmatpush.msra.mxu0 0.0
      %2418 = vmatpush.msra.mxu0 0.0
      %2419 = vmatpush.msra.mxu0 0.0
      %2420 = vmatpush.msra.mxu0 0.0
      %2421 = vmatpush.msra.mxu0 0.0
      %2422 = vmatpush.msra.mxu0 0.0
      %2423 = vmatpush.msra.mxu0 0.0
      %2424 = vmatpush.msra.mxu0 0.0
      %2425 = vmatpush.msra.mxu0 0.0
      %2426 = vmatpush.msra.mxu0 0.0
      %2427 = vmatpush.msra.mxu0 0.0
      %2428 = vmatpush.msra.mxu0 %v2387
      %2429 = vmatmul.f32.gmra.mxu0 %v2391
      %v2430 = vpop.f32.mrf.mxu0
      %v2431 = vadd.f32 0.0, %v2430
      %2432 = vdwg.mxu0
      %v2433 = vadd.f32 %v2377, %v2411
      %v2434 = vadd.f32 %v2378, %v2431
      %2435 = vrot.lane.b32.xlu0 %v1147, 95
      %v2436 = vpop.permute.xlu0 %2435
      %2437 = vrot.lane.b32.xlu0 %v1148, 95
      %v2438 = vpop.permute.xlu0 %2437
      %vm2439 = vcmask 777216
      %v2440 = vsel %vm2439, %v2436, %v2438
      %v2443 = vsel %vm2439, %v2438, 0.0
      %s2444 = scalar_lea.vmem %s4, 184
      %v2445 = vld [vmem:[%s2444] sm:$0xff]
      %v2447 = vsel %vm1183, %v2445, 0
      %2449 = vmatpush.msra.mxu0 0.0
      %2450 = vmatpush.msra.mxu0 0.0
      %2451 = vmatpush.msra.mxu0 0.0
      %2452 = vmatpush.msra.mxu0 0.0
      %2453 = vmatpush.msra.mxu0 0.0
      %2454 = vmatpush.msra.mxu0 0.0
      %2455 = vmatpush.msra.mxu0 0.0
      %2456 = vmatpush.msra.mxu0 0.0
      %2457 = vmatpush.msra.mxu0 0.0
      %2458 = vmatpush.msra.mxu0 0.0
      %2459 = vmatpush.msra.mxu0 0.0
      %2460 = vmatpush.msra.mxu0 0.0
      %2461 = vmatpush.msra.mxu0 0.0
      %2462 = vmatpush.msra.mxu0 0.0
      %2463 = vmatpush.msra.mxu0 0.0
      %2464 = vmatpush.msra.mxu0 %v2440
      %2465 = vmatmul.f32.gmra.mxu0 %v2447
      %v2466 = vpop.f32.mrf.mxu0
      %v2467 = vadd.f32 0.0, %v2466
      %2468 = vdwg.mxu0
      %2469 = vmatpush.msra.mxu0 0.0
      %2470 = vmatpush.msra.mxu0 0.0
      %2471 = vmatpush.msra.mxu0 0.0
      %2472 = vmatpush.msra.mxu0 0.0
      %2473 = vmatpush.msra.mxu0 0.0
      %2474 = vmatpush.msra.mxu0 0.0
      %2475 = vmatpush.msra.mxu0 0.0
      %2476 = vmatpush.msra.mxu0 0.0
      %2477 = vmatpush.msra.mxu0 0.0
      %2478 = vmatpush.msra.mxu0 0.0
      %2479 = vmatpush.msra.mxu0 0.0
      %2480 = vmatpush.msra.mxu0 0.0
      %2481 = vmatpush.msra.mxu0 0.0
      %2482 = vmatpush.msra.mxu0 0.0
      %2483 = vmatpush.msra.mxu0 0.0
      %2484 = vmatpush.msra.mxu0 %v2443
      %2485 = vmatmul.f32.gmra.mxu0 %v2447
      %v2486 = vpop.f32.mrf.mxu0
      %v2487 = vadd.f32 0.0, %v2486
      %2488 = vdwg.mxu0
      %v2489 = vadd.f32 %v2433, %v2467
      %v2490 = vadd.f32 %v2434, %v2487
      %2491 = vrot.lane.b32.xlu0 %v1156, 94
      %v2492 = vpop.permute.xlu0 %2491
      %2493 = vrot.lane.b32.xlu0 %v1157, 94
      %v2494 = vpop.permute.xlu0 %2493
      %vm2495 = vcmask 769024
      %v2496 = vsel %vm2495, %v2492, %v2494
      %v2499 = vsel %vm2495, %v2494, 0.0
      %s2500 = scalar_lea.vmem %s4, 192
      %v2501 = vld [vmem:[%s2500] sm:$0xff]
      %v2503 = vsel %vm1183, %v2501, 0
      %2505 = vmatpush.msra.mxu0 0.0
      %2506 = vmatpush.msra.mxu0 0.0
      %2507 = vmatpush.msra.mxu0 0.0
      %2508 = vmatpush.msra.mxu0 0.0
      %2509 = vmatpush.msra.mxu0 0.0
      %2510 = vmatpush.msra.mxu0 0.0
      %2511 = vmatpush.msra.mxu0 0.0
      %2512 = vmatpush.msra.mxu0 0.0
      %2513 = vmatpush.msra.mxu0 0.0
      %2514 = vmatpush.msra.mxu0 0.0
      %2515 = vmatpush.msra.mxu0 0.0
      %2516 = vmatpush.msra.mxu0 0.0
      %2517 = vmatpush.msra.mxu0 0.0
      %2518 = vmatpush.msra.mxu0 0.0
      %2519 = vmatpush.msra.mxu0 0.0
      %2520 = vmatpush.msra.mxu0 %v2496
      %2521 = vmatmul.f32.gmra.mxu0 %v2503
      %v2522 = vpop.f32.mrf.mxu0
      %v2523 = vadd.f32 0.0, %v2522
      %2524 = vdwg.mxu0
      %2525 = vmatpush.msra.mxu0 0.0
      %2526 = vmatpush.msra.mxu0 0.0
      %2527 = vmatpush.msra.mxu0 0.0
      %2528 = vmatpush.msra.mxu0 0.0
      %2529 = vmatpush.msra.mxu0 0.0
      %2530 = vmatpush.msra.mxu0 0.0
      %2531 = vmatpush.msra.mxu0 0.0
      %2532 = vmatpush.msra.mxu0 0.0
      %2533 = vmatpush.msra.mxu0 0.0
      %2534 = vmatpush.msra.mxu0 0.0
      %2535 = vmatpush.msra.mxu0 0.0
      %2536 = vmatpush.msra.mxu0 0.0
      %2537 = vmatpush.msra.mxu0 0.0
      %2538 = vmatpush.msra.mxu0 0.0
      %2539 = vmatpush.msra.mxu0 0.0
      %2540 = vmatpush.msra.mxu0 %v2499
      %2541 = vmatmul.f32.gmra.mxu0 %v2503
      %v2542 = vpop.f32.mrf.mxu0
      %v2543 = vadd.f32 0.0, %v2542
      %2544 = vdwg.mxu0
      %v2545 = vadd.f32 %v2489, %v2523
      %v2546 = vadd.f32 %v2490, %v2543
      %v2547 = vld [vmem:[%s5] sm:$0xff]
      %v2549 = vsel %vm1183, %v2547, 0
      %2551 = vmatpush.msra.mxu0 0.0
      %2552 = vmatpush.msra.mxu0 0.0
      %2553 = vmatpush.msra.mxu0 0.0
      %2554 = vmatpush.msra.mxu0 0.0
      %2555 = vmatpush.msra.mxu0 0.0
      %2556 = vmatpush.msra.mxu0 0.0
      %2557 = vmatpush.msra.mxu0 0.0
      %2558 = vmatpush.msra.mxu0 0.0
      %2559 = vmatpush.msra.mxu0 0.0
      %2560 = vmatpush.msra.mxu0 0.0
      %2561 = vmatpush.msra.mxu0 0.0
      %2562 = vmatpush.msra.mxu0 0.0
      %2563 = vmatpush.msra.mxu0 0.0
      %2564 = vmatpush.msra.mxu0 0.0
      %2565 = vmatpush.msra.mxu0 0.0
      %2566 = vmatpush.msra.mxu0 %v2545
      %2567 = vmatmul.f32.gmra.mxu0 %v2549
      %v2568 = vpop.f32.mrf.mxu0
      %v2569 = vadd.f32 0.0, %v2568
      %2570 = vdwg.mxu0
      %2571 = vmatpush.msra.mxu0 0.0
      %2572 = vmatpush.msra.mxu0 0.0
      %2573 = vmatpush.msra.mxu0 0.0
      %2574 = vmatpush.msra.mxu0 0.0
      %2575 = vmatpush.msra.mxu0 0.0
      %2576 = vmatpush.msra.mxu0 0.0
      %2577 = vmatpush.msra.mxu0 0.0
      %2578 = vmatpush.msra.mxu0 0.0
      %2579 = vmatpush.msra.mxu0 0.0
      %2580 = vmatpush.msra.mxu0 0.0
      %2581 = vmatpush.msra.mxu0 0.0
      %2582 = vmatpush.msra.mxu0 0.0
      %2583 = vmatpush.msra.mxu0 0.0
      %2584 = vmatpush.msra.mxu0 0.0
      %2585 = vmatpush.msra.mxu0 0.0
      %2586 = vmatpush.msra.mxu0 %v2546
      %2587 = vmatmul.f32.gmra.mxu0 %v2549
      %v2588 = vpop.f32.mrf.mxu0
      %v2589 = vadd.f32 0.0, %v2588
      %2590 = vdwg.mxu0
      %vm2591 = vcmp.ge.f32.partialorder %v2569, 0.0
      %vm2592 = vcmp.ge.f32.partialorder %v2589, 0.0
      %v2593 = vmul.f32 %v2569, 0.01
      %v2594 = vmul.f32 %v2589, 0.01
      %v2595 = vsel %vm2591, %v2569, %v2593
      %v2596 = vsel %vm2592, %v2589, %v2594
      %v2597 = vmul.f32 %v2595, %v1135
      %v2598 = vmul.f32 %v2596, %v1136
      %v2599 = vmul.f32 %v2595, %v560
      %v2600 = vmul.f32 %v2596, %v561
      %v2601 = vmul.f32 %v2595, %v570
      %v2602 = vmul.f32 %v2596, %v571
      %v2603 = vmul.f32 %v2595, %v1152
      %v2604 = vmul.f32 %v2596, %v1153
      %2607 = vrot.lane.b32.xlu0 %v2597, 34
      %v2608 = vpop.permute.xlu0 %2607
      %2609 = vrot.lane.b32.xlu0 %v2598, 34
      %v2610 = vpop.permute.xlu0 %2609
      %v2611 = vsel %vm1164, %v2608, %v2610
      %v2614 = vsel %vm1164, 0.0, %v2608
      %v2615 = vld [vmem:[%s6] sm:$0xff]
      %2618 = vrot.lane.b32.xlu0 %v2599, 33
      %v2619 = vpop.permute.xlu0 %2618
      %2620 = vrot.lane.b32.xlu0 %v2600, 33
      %v2621 = vpop.permute.xlu0 %2620
      %v2622 = vsel %vm1176, %v2619, %v2621
      %v2625 = vsel %vm1176, 0.0, %v2619
      %s2626 = scalar_lea.vmem %s6, 8
      %v2627 = vld [vmem:[%s2626] sm:$0xff]
      %v2629 = vsel %vm1183, %v2627, 0
      %2631 = vmatpush.msra.mxu0 0.0
      %2632 = vmatpush.msra.mxu0 0.0
      %2633 = vmatpush.msra.mxu0 0.0
      %2634 = vmatpush.msra.mxu0 0.0
      %2635 = vmatpush.msra.mxu0 0.0
      %2636 = vmatpush.msra.mxu0 0.0
      %2637 = vmatpush.msra.mxu0 0.0
      %2638 = vmatpush.msra.mxu0 0.0
      %2639 = vmatpush.msra.mxu0 0.0
      %2640 = vmatpush.msra.mxu0 0.0
      %2641 = vmatpush.msra.mxu0 0.0
      %2642 = vmatpush.msra.mxu0 0.0
      %2643 = vmatpush.msra.mxu0 0.0
      %2644 = vmatpush.msra.mxu0 0.0
      %2645 = vmatpush.msra.mxu0 0.0
      %2646 = vmatpush.msra.mxu0 %v2625
      %2647 = vmatmul.f32.gmra.mxu0 %v2629
      %v2648 = vpop.f32.mrf.mxu0
      %v2649 = vadd.f32 0.0, %v2648
      %2650 = vdwg.mxu0
      %2651 = vmatpush.msra.mxu0 0.0
      %2652 = vmatpush.msra.mxu0 0.0
      %2653 = vmatpush.msra.mxu0 0.0
      %2654 = vmatpush.msra.mxu0 0.0
      %2655 = vmatpush.msra.mxu0 0.0
      %2656 = vmatpush.msra.mxu0 0.0
      %2657 = vmatpush.msra.mxu0 0.0
      %2658 = vmatpush.msra.mxu0 0.0
      %2659 = vmatpush.msra.mxu0 0.0
      %2660 = vmatpush.msra.mxu0 0.0
      %2661 = vmatpush.msra.mxu0 0.0
      %2662 = vmatpush.msra.mxu0 0.0
      %2663 = vmatpush.msra.mxu0 0.0
      %2664 = vmatpush.msra.mxu0 0.0
      %2665 = vmatpush.msra.mxu0 0.0
      %2666 = vmatpush.msra.mxu0 %v2622
      %2667 = vmatmul.f32.gmra.mxu0 %v2629
      %v2668 = vpop.f32.mrf.mxu0
      %v2669 = vadd.f32 0.0, %v2668
      %2670 = vdwg.mxu0
      %v2672 = vsel %vm1183, %v2615, 0
      %2674 = vmatpush.msra.mxu0 0.0
      %2675 = vmatpush.msra.mxu0 0.0
      %2676 = vmatpush.msra.mxu0 0.0
      %2677 = vmatpush.msra.mxu0 0.0
      %2678 = vmatpush.msra.mxu0 0.0
      %2679 = vmatpush.msra.mxu0 0.0
      %2680 = vmatpush.msra.mxu0 0.0
      %2681 = vmatpush.msra.mxu0 0.0
      %2682 = vmatpush.msra.mxu0 0.0
      %2683 = vmatpush.msra.mxu0 0.0
      %2684 = vmatpush.msra.mxu0 0.0
      %2685 = vmatpush.msra.mxu0 0.0
      %2686 = vmatpush.msra.mxu0 0.0
      %2687 = vmatpush.msra.mxu0 0.0
      %2688 = vmatpush.msra.mxu0 0.0
      %2689 = vmatpush.msra.mxu0 %v2614
      %2690 = vmatmul.f32.gmra.mxu0 %v2672
      %v2691 = vpop.f32.mrf.mxu0
      %v2692 = vadd.f32 %v2649, %v2691
      %2693 = vdwg.mxu0
      %2694 = vmatpush.msra.mxu0 0.0
      %2695 = vmatpush.msra.mxu0 0.0
      %2696 = vmatpush.msra.mxu0 0.0
      %2697 = vmatpush.msra.mxu0 0.0
      %2698 = vmatpush.msra.mxu0 0.0
      %2699 = vmatpush.msra.mxu0 0.0
      %2700 = vmatpush.msra.mxu0 0.0
      %2701 = vmatpush.msra.mxu0 0.0
      %2702 = vmatpush.msra.mxu0 0.0
      %2703 = vmatpush.msra.mxu0 0.0
      %2704 = vmatpush.msra.mxu0 0.0
      %2705 = vmatpush.msra.mxu0 0.0
      %2706 = vmatpush.msra.mxu0 0.0
      %2707 = vmatpush.msra.mxu0 0.0
      %2708 = vmatpush.msra.mxu0 0.0
      %2709 = vmatpush.msra.mxu0 %v2611
      %2710 = vmatmul.f32.gmra.mxu0 %v2672
      %v2711 = vpop.f32.mrf.mxu0
      %v2712 = vadd.f32 %v2669, %v2711
      %2713 = vdwg.mxu0
      %2716 = vrot.lane.b32.xlu0 %v2595, 32
      %v2717 = vpop.permute.xlu0 %2716
      %2718 = vrot.lane.b32.xlu0 %v2596, 32
      %v2719 = vpop.permute.xlu0 %2718
      %v2720 = vsel %vm1276, %v2717, %v2719
      %v2723 = vsel %vm1276, 0.0, %v2717
      %s2724 = scalar_lea.vmem %s6, 16
      %v2725 = vld [vmem:[%s2724] sm:$0xff]
      %v2727 = vsel %vm1183, %v2725, 0
      %2729 = vmatpush.msra.mxu0 0.0
      %2730 = vmatpush.msra.mxu0 0.0
      %2731 = vmatpush.msra.mxu0 0.0
      %2732 = vmatpush.msra.mxu0 0.0
      %2733 = vmatpush.msra.mxu0 0.0
      %2734 = vmatpush.msra.mxu0 0.0
      %2735 = vmatpush.msra.mxu0 0.0
      %2736 = vmatpush.msra.mxu0 0.0
      %2737 = vmatpush.msra.mxu0 0.0
      %2738 = vmatpush.msra.mxu0 0.0
      %2739 = vmatpush.msra.mxu0 0.0
      %2740 = vmatpush.msra.mxu0 0.0
      %2741 = vmatpush.msra.mxu0 0.0
      %2742 = vmatpush.msra.mxu0 0.0
      %2743 = vmatpush.msra.mxu0 0.0
      %2744 = vmatpush.msra.mxu0 %v2723
      %2745 = vmatmul.f32.gmra.mxu0 %v2727
      %v2746 = vpop.f32.mrf.mxu0
      %v2747 = vadd.f32 0.0, %v2746
      %2748 = vdwg.mxu0
      %2749 = vmatpush.msra.mxu0 0.0
      %2750 = vmatpush.msra.mxu0 0.0
      %2751 = vmatpush.msra.mxu0 0.0
      %2752 = vmatpush.msra.mxu0 0.0
      %2753 = vmatpush.msra.mxu0 0.0
      %2754 = vmatpush.msra.mxu0 0.0
      %2755 = vmatpush.msra.mxu0 0.0
      %2756 = vmatpush.msra.mxu0 0.0
      %2757 = vmatpush.msra.mxu0 0.0
      %2758 = vmatpush.msra.mxu0 0.0
      %2759 = vmatpush.msra.mxu0 0.0
      %2760 = vmatpush.msra.mxu0 0.0
      %2761 = vmatpush.msra.mxu0 0.0
      %2762 = vmatpush.msra.mxu0 0.0
      %2763 = vmatpush.msra.mxu0 0.0
      %2764 = vmatpush.msra.mxu0 %v2720
      %2765 = vmatmul.f32.gmra.mxu0 %v2727
      %v2766 = vpop.f32.mrf.mxu0
      %v2767 = vadd.f32 0.0, %v2766
      %2768 = vdwg.mxu0
      %v2769 = vadd.f32 %v2692, %v2747
      %v2770 = vadd.f32 %v2712, %v2767
      %2773 = vrot.lane.b32.xlu0 %v2601, 31
      %v2774 = vpop.permute.xlu0 %2773
      %2775 = vrot.lane.b32.xlu0 %v2602, 31
      %v2776 = vpop.permute.xlu0 %2775
      %v2777 = vsel %vm1334, %v2774, %v2776
      %v2780 = vsel %vm1334, 0.0, %v2774
      %s2781 = scalar_lea.vmem %s6, 24
      %v2782 = vld [vmem:[%s2781] sm:$0xff]
      %v2784 = vsel %vm1183, %v2782, 0
      %2786 = vmatpush.msra.mxu0 0.0
      %2787 = vmatpush.msra.mxu0 0.0
      %2788 = vmatpush.msra.mxu0 0.0
      %2789 = vmatpush.msra.mxu0 0.0
      %2790 = vmatpush.msra.mxu0 0.0
      %2791 = vmatpush.msra.mxu0 0.0
      %2792 = vmatpush.msra.mxu0 0.0
      %2793 = vmatpush.msra.mxu0 0.0
      %2794 = vmatpush.msra.mxu0 0.0
      %2795 = vmatpush.msra.mxu0 0.0
      %2796 = vmatpush.msra.mxu0 0.0
      %2797 = vmatpush.msra.mxu0 0.0
      %2798 = vmatpush.msra.mxu0 0.0
      %2799 = vmatpush.msra.mxu0 0.0
      %2800 = vmatpush.msra.mxu0 0.0
      %2801 = vmatpush.msra.mxu0 %v2780
      %2802 = vmatmul.f32.gmra.mxu0 %v2784
      %v2803 = vpop.f32.mrf.mxu0
      %v2804 = vadd.f32 0.0, %v2803
      %2805 = vdwg.mxu0
      %2806 = vmatpush.msra.mxu0 0.0
      %2807 = vmatpush.msra.mxu0 0.0
      %2808 = vmatpush.msra.mxu0 0.0
      %2809 = vmatpush.msra.mxu0 0.0
      %2810 = vmatpush.msra.mxu0 0.0
      %2811 = vmatpush.msra.mxu0 0.0
      %2812 = vmatpush.msra.mxu0 0.0
      %2813 = vmatpush.msra.mxu0 0.0
      %2814 = vmatpush.msra.mxu0 0.0
      %2815 = vmatpush.msra.mxu0 0.0
      %2816 = vmatpush.msra.mxu0 0.0
      %2817 = vmatpush.msra.mxu0 0.0
      %2818 = vmatpush.msra.mxu0 0.0
      %2819 = vmatpush.msra.mxu0 0.0
      %2820 = vmatpush.msra.mxu0 0.0
      %2821 = vmatpush.msra.mxu0 %v2777
      %2822 = vmatmul.f32.gmra.mxu0 %v2784
      %v2823 = vpop.f32.mrf.mxu0
      %v2824 = vadd.f32 0.0, %v2823
      %2825 = vdwg.mxu0
      %v2826 = vadd.f32 %v2769, %v2804
      %v2827 = vadd.f32 %v2770, %v2824
      %2830 = vrot.lane.b32.xlu0 %v2603, 30
      %v2831 = vpop.permute.xlu0 %2830
      %2832 = vrot.lane.b32.xlu0 %v2604, 30
      %v2833 = vpop.permute.xlu0 %2832
      %v2834 = vsel %vm1392, %v2831, %v2833
      %v2837 = vsel %vm1392, 0.0, %v2831
      %s2838 = scalar_lea.vmem %s6, 32
      %v2839 = vld [vmem:[%s2838] sm:$0xff]
      %v2841 = vsel %vm1183, %v2839, 0
      %2843 = vmatpush.msra.mxu0 0.0
      %2844 = vmatpush.msra.mxu0 0.0
      %2845 = vmatpush.msra.mxu0 0.0
      %2846 = vmatpush.msra.mxu0 0.0
      %2847 = vmatpush.msra.mxu0 0.0
      %2848 = vmatpush.msra.mxu0 0.0
      %2849 = vmatpush.msra.mxu0 0.0
      %2850 = vmatpush.msra.mxu0 0.0
      %2851 = vmatpush.msra.mxu0 0.0
      %2852 = vmatpush.msra.mxu0 0.0
      %2853 = vmatpush.msra.mxu0 0.0
      %2854 = vmatpush.msra.mxu0 0.0
      %2855 = vmatpush.msra.mxu0 0.0
      %2856 = vmatpush.msra.mxu0 0.0
      %2857 = vmatpush.msra.mxu0 0.0
      %2858 = vmatpush.msra.mxu0 %v2837
      %2859 = vmatmul.f32.gmra.mxu0 %v2841
      %v2860 = vpop.f32.mrf.mxu0
      %v2861 = vadd.f32 0.0, %v2860
      %2862 = vdwg.mxu0
      %2863 = vmatpush.msra.mxu0 0.0
      %2864 = vmatpush.msra.mxu0 0.0
      %2865 = vmatpush.msra.mxu0 0.0
      %2866 = vmatpush.msra.mxu0 0.0
      %2867 = vmatpush.msra.mxu0 0.0
      %2868 = vmatpush.msra.mxu0 0.0
      %2869 = vmatpush.msra.mxu0 0.0
      %2870 = vmatpush.msra.mxu0 0.0
      %2871 = vmatpush.msra.mxu0 0.0
      %2872 = vmatpush.msra.mxu0 0.0
      %2873 = vmatpush.msra.mxu0 0.0
      %2874 = vmatpush.msra.mxu0 0.0
      %2875 = vmatpush.msra.mxu0 0.0
      %2876 = vmatpush.msra.mxu0 0.0
      %2877 = vmatpush.msra.mxu0 0.0
      %2878 = vmatpush.msra.mxu0 %v2834
      %2879 = vmatmul.f32.gmra.mxu0 %v2841
      %v2880 = vpop.f32.mrf.mxu0
      %v2881 = vadd.f32 0.0, %v2880
      %2882 = vdwg.mxu0
      %v2883 = vadd.f32 %v2826, %v2861
      %v2884 = vadd.f32 %v2827, %v2881
      %2885 = vrot.lane.b32.xlu0 %v2597, 18
      %v2886 = vpop.permute.xlu0 %2885
      %2887 = vrot.lane.b32.xlu0 %v2598, 18
      %v2888 = vpop.permute.xlu0 %2887
      %v2889 = vsel %vm1448, %v2886, %v2888
      %v2892 = vsel %vm1448, 0.0, %v2886
      %s2893 = scalar_lea.vmem %s6, 40
      %v2894 = vld [vmem:[%s2893] sm:$0xff]
      %v2896 = vsel %vm1183, %v2894, 0
      %2898 = vmatpush.msra.mxu0 0.0
      %2899 = vmatpush.msra.mxu0 0.0
      %2900 = vmatpush.msra.mxu0 0.0
      %2901 = vmatpush.msra.mxu0 0.0
      %2902 = vmatpush.msra.mxu0 0.0
      %2903 = vmatpush.msra.mxu0 0.0
      %2904 = vmatpush.msra.mxu0 0.0
      %2905 = vmatpush.msra.mxu0 0.0
      %2906 = vmatpush.msra.mxu0 0.0
      %2907 = vmatpush.msra.mxu0 0.0
      %2908 = vmatpush.msra.mxu0 0.0
      %2909 = vmatpush.msra.mxu0 0.0
      %2910 = vmatpush.msra.mxu0 0.0
      %2911 = vmatpush.msra.mxu0 0.0
      %2912 = vmatpush.msra.mxu0 0.0
      %2913 = vmatpush.msra.mxu0 %v2892
      %2914 = vmatmul.f32.gmra.mxu0 %v2896
      %v2915 = vpop.f32.mrf.mxu0
      %v2916 = vadd.f32 0.0, %v2915
      %2917 = vdwg.mxu0
      %2918 = vmatpush.msra.mxu0 0.0
      %2919 = vmatpush.msra.mxu0 0.0
      %2920 = vmatpush.msra.mxu0 0.0
      %2921 = vmatpush.msra.mxu0 0.0
      %2922 = vmatpush.msra.mxu0 0.0
      %2923 = vmatpush.msra.mxu0 0.0
      %2924 = vmatpush.msra.mxu0 0.0
      %2925 = vmatpush.msra.mxu0 0.0
      %2926 = vmatpush.msra.mxu0 0.0
      %2927 = vmatpush.msra.mxu0 0.0
      %2928 = vmatpush.msra.mxu0 0.0
      %2929 = vmatpush.msra.mxu0 0.0
      %2930 = vmatpush.msra.mxu0 0.0
      %2931 = vmatpush.msra.mxu0 0.0
      %2932 = vmatpush.msra.mxu0 0.0
      %2933 = vmatpush.msra.mxu0 %v2889
      %2934 = vmatmul.f32.gmra.mxu0 %v2896
      %v2935 = vpop.f32.mrf.mxu0
      %v2936 = vadd.f32 0.0, %v2935
      %2937 = vdwg.mxu0
      %v2938 = vadd.f32 %v2883, %v2916
      %v2939 = vadd.f32 %v2884, %v2936
      %2940 = vrot.lane.b32.xlu0 %v2599, 17
      %v2941 = vpop.permute.xlu0 %2940
      %2942 = vrot.lane.b32.xlu0 %v2600, 17
      %v2943 = vpop.permute.xlu0 %2942
      %v2944 = vsel %vm584, %v2941, %v2943
      %v2947 = vsel %vm584, 0.0, %v2941
      %s2948 = scalar_lea.vmem %s6, 48
      %v2949 = vld [vmem:[%s2948] sm:$0xff]
      %v2951 = vsel %vm1183, %v2949, 0
      %2953 = vmatpush.msra.mxu0 0.0
      %2954 = vmatpush.msra.mxu0 0.0
      %2955 = vmatpush.msra.mxu0 0.0
      %2956 = vmatpush.msra.mxu0 0.0
      %2957 = vmatpush.msra.mxu0 0.0
      %2958 = vmatpush.msra.mxu0 0.0
      %2959 = vmatpush.msra.mxu0 0.0
      %2960 = vmatpush.msra.mxu0 0.0
      %2961 = vmatpush.msra.mxu0 0.0
      %2962 = vmatpush.msra.mxu0 0.0
      %2963 = vmatpush.msra.mxu0 0.0
      %2964 = vmatpush.msra.mxu0 0.0
      %2965 = vmatpush.msra.mxu0 0.0
      %2966 = vmatpush.msra.mxu0 0.0
      %2967 = vmatpush.msra.mxu0 0.0
      %2968 = vmatpush.msra.mxu0 %v2947
      %2969 = vmatmul.f32.gmra.mxu0 %v2951
      %v2970 = vpop.f32.mrf.mxu0
      %v2971 = vadd.f32 0.0, %v2970
      %2972 = vdwg.mxu0
      %2973 = vmatpush.msra.mxu0 0.0
      %2974 = vmatpush.msra.mxu0 0.0
      %2975 = vmatpush.msra.mxu0 0.0
      %2976 = vmatpush.msra.mxu0 0.0
      %2977 = vmatpush.msra.mxu0 0.0
      %2978 = vmatpush.msra.mxu0 0.0
      %2979 = vmatpush.msra.mxu0 0.0
      %2980 = vmatpush.msra.mxu0 0.0
      %2981 = vmatpush.msra.mxu0 0.0
      %2982 = vmatpush.msra.mxu0 0.0
      %2983 = vmatpush.msra.mxu0 0.0
      %2984 = vmatpush.msra.mxu0 0.0
      %2985 = vmatpush.msra.mxu0 0.0
      %2986 = vmatpush.msra.mxu0 0.0
      %2987 = vmatpush.msra.mxu0 0.0
      %2988 = vmatpush.msra.mxu0 %v2944
      %2989 = vmatmul.f32.gmra.mxu0 %v2951
      %v2990 = vpop.f32.mrf.mxu0
      %v2991 = vadd.f32 0.0, %v2990
      %2992 = vdwg.mxu0
      %v2993 = vadd.f32 %v2938, %v2971
      %v2994 = vadd.f32 %v2939, %v2991
      %2995 = vrot.lane.b32.xlu0 %v2595, 16
      %v2996 = vpop.permute.xlu0 %2995
      %2997 = vrot.lane.b32.xlu0 %v2596, 16
      %v2998 = vpop.permute.xlu0 %2997
      %v2999 = vsel %vm597, %v2996, %v2998
      %v3002 = vsel %vm597, 0.0, %v2996
      %s3003 = scalar_lea.vmem %s6, 56
      %v3004 = vld [vmem:[%s3003] sm:$0xff]
      %v3006 = vsel %vm1183, %v3004, 0
      %3008 = vmatpush.msra.mxu0 0.0
      %3009 = vmatpush.msra.mxu0 0.0
      %3010 = vmatpush.msra.mxu0 0.0
      %3011 = vmatpush.msra.mxu0 0.0
      %3012 = vmatpush.msra.mxu0 0.0
      %3013 = vmatpush.msra.mxu0 0.0
      %3014 = vmatpush.msra.mxu0 0.0
      %3015 = vmatpush.msra.mxu0 0.0
      %3016 = vmatpush.msra.mxu0 0.0
      %3017 = vmatpush.msra.mxu0 0.0
      %3018 = vmatpush.msra.mxu0 0.0
      %3019 = vmatpush.msra.mxu0 0.0
      %3020 = vmatpush.msra.mxu0 0.0
      %3021 = vmatpush.msra.mxu0 0.0
      %3022 = vmatpush.msra.mxu0 0.0
      %3023 = vmatpush.msra.mxu0 %v3002
      %3024 = vmatmul.f32.gmra.mxu0 %v3006
      %v3025 = vpop.f32.mrf.mxu0
      %v3026 = vadd.f32 0.0, %v3025
      %3027 = vdwg.mxu0
      %3028 = vmatpush.msra.mxu0 0.0
      %3029 = vmatpush.msra.mxu0 0.0
      %3030 = vmatpush.msra.mxu0 0.0
      %3031 = vmatpush.msra.mxu0 0.0
      %3032 = vmatpush.msra.mxu0 0.0
      %3033 = vmatpush.msra.mxu0 0.0
      %3034 = vmatpush.msra.mxu0 0.0
      %3035 = vmatpush.msra.mxu0 0.0
      %3036 = vmatpush.msra.mxu0 0.0
      %3037 = vmatpush.msra.mxu0 0.0
      %3038 = vmatpush.msra.mxu0 0.0
      %3039 = vmatpush.msra.mxu0 0.0
      %3040 = vmatpush.msra.mxu0 0.0
      %3041 = vmatpush.msra.mxu0 0.0
      %3042 = vmatpush.msra.mxu0 0.0
      %3043 = vmatpush.msra.mxu0 %v2999
      %3044 = vmatmul.f32.gmra.mxu0 %v3006
      %v3045 = vpop.f32.mrf.mxu0
      %v3046 = vadd.f32 0.0, %v3045
      %3047 = vdwg.mxu0
      %v3048 = vadd.f32 %v2993, %v3026
      %v3049 = vadd.f32 %v2994, %v3046
      %3050 = vrot.lane.b32.xlu0 %v2601, 15
      %v3051 = vpop.permute.xlu0 %3050
      %3052 = vrot.lane.b32.xlu0 %v2602, 15
      %v3053 = vpop.permute.xlu0 %3052
      %v3054 = vsel %vm708, %v3051, %v3053
      %v3057 = vsel %vm708, 0.0, %v3051
      %s3058 = scalar_lea.vmem %s6, 64
      %v3059 = vld [vmem:[%s3058] sm:$0xff]
      %v3061 = vsel %vm1183, %v3059, 0
      %3063 = vmatpush.msra.mxu0 0.0
      %3064 = vmatpush.msra.mxu0 0.0
      %3065 = vmatpush.msra.mxu0 0.0
      %3066 = vmatpush.msra.mxu0 0.0
      %3067 = vmatpush.msra.mxu0 0.0
      %3068 = vmatpush.msra.mxu0 0.0
      %3069 = vmatpush.msra.mxu0 0.0
      %3070 = vmatpush.msra.mxu0 0.0
      %3071 = vmatpush.msra.mxu0 0.0
      %3072 = vmatpush.msra.mxu0 0.0
      %3073 = vmatpush.msra.mxu0 0.0
      %3074 = vmatpush.msra.mxu0 0.0
      %3075 = vmatpush.msra.mxu0 0.0
      %3076 = vmatpush.msra.mxu0 0.0
      %3077 = vmatpush.msra.mxu0 0.0
      %3078 = vmatpush.msra.mxu0 %v3057
      %3079 = vmatmul.f32.gmra.mxu0 %v3061
      %v3080 = vpop.f32.mrf.mxu0
      %v3081 = vadd.f32 0.0, %v3080
      %3082 = vdwg.mxu0
      %3083 = vmatpush.msra.mxu0 0.0
      %3084 = vmatpush.msra.mxu0 0.0
      %3085 = vmatpush.msra.mxu0 0.0
      %3086 = vmatpush.msra.mxu0 0.0
      %3087 = vmatpush.msra.mxu0 0.0
      %3088 = vmatpush.msra.mxu0 0.0
      %3089 = vmatpush.msra.mxu0 0.0
      %3090 = vmatpush.msra.mxu0 0.0
      %3091 = vmatpush.msra.mxu0 0.0
      %3092 = vmatpush.msra.mxu0 0.0
      %3093 = vmatpush.msra.mxu0 0.0
      %3094 = vmatpush.msra.mxu0 0.0
      %3095 = vmatpush.msra.mxu0 0.0
      %3096 = vmatpush.msra.mxu0 0.0
      %3097 = vmatpush.msra.mxu0 0.0
      %3098 = vmatpush.msra.mxu0 %v3054
      %3099 = vmatmul.f32.gmra.mxu0 %v3061
      %v3100 = vpop.f32.mrf.mxu0
      %v3101 = vadd.f32 0.0, %v3100
      %3102 = vdwg.mxu0
      %v3103 = vadd.f32 %v3048, %v3081
      %v3104 = vadd.f32 %v3049, %v3101
      %3105 = vrot.lane.b32.xlu0 %v2603, 14
      %v3106 = vpop.permute.xlu0 %3105
      %3107 = vrot.lane.b32.xlu0 %v2604, 14
      %v3108 = vpop.permute.xlu0 %3107
      %v3109 = vsel %vm1669, %v3106, %v3108
      %v3112 = vsel %vm1669, 0.0, %v3106
      %s3113 = scalar_lea.vmem %s6, 72
      %v3114 = vld [vmem:[%s3113] sm:$0xff]
      %v3116 = vsel %vm1183, %v3114, 0
      %3118 = vmatpush.msra.mxu0 0.0
      %3119 = vmatpush.msra.mxu0 0.0
      %3120 = vmatpush.msra.mxu0 0.0
      %3121 = vmatpush.msra.mxu0 0.0
      %3122 = vmatpush.msra.mxu0 0.0
      %3123 = vmatpush.msra.mxu0 0.0
      %3124 = vmatpush.msra.mxu0 0.0
      %3125 = vmatpush.msra.mxu0 0.0
      %3126 = vmatpush.msra.mxu0 0.0
      %3127 = vmatpush.msra.mxu0 0.0
      %3128 = vmatpush.msra.mxu0 0.0
      %3129 = vmatpush.msra.mxu0 0.0
      %3130 = vmatpush.msra.mxu0 0.0
      %3131 = vmatpush.msra.mxu0 0.0
      %3132 = vmatpush.msra.mxu0 0.0
      %3133 = vmatpush.msra.mxu0 %v3112
      %3134 = vmatmul.f32.gmra.mxu0 %v3116
      %v3135 = vpop.f32.mrf.mxu0
      %v3136 = vadd.f32 0.0, %v3135
      %3137 = vdwg.mxu0
      %3138 = vmatpush.msra.mxu0 0.0
      %3139 = vmatpush.msra.mxu0 0.0
      %3140 = vmatpush.msra.mxu0 0.0
      %3141 = vmatpush.msra.mxu0 0.0
      %3142 = vmatpush.msra.mxu0 0.0
      %3143 = vmatpush.msra.mxu0 0.0
      %3144 = vmatpush.msra.mxu0 0.0
      %3145 = vmatpush.msra.mxu0 0.0
      %3146 = vmatpush.msra.mxu0 0.0
      %3147 = vmatpush.msra.mxu0 0.0
      %3148 = vmatpush.msra.mxu0 0.0
      %3149 = vmatpush.msra.mxu0 0.0
      %3150 = vmatpush.msra.mxu0 0.0
      %3151 = vmatpush.msra.mxu0 0.0
      %3152 = vmatpush.msra.mxu0 0.0
      %3153 = vmatpush.msra.mxu0 %v3109
      %3154 = vmatmul.f32.gmra.mxu0 %v3116
      %v3155 = vpop.f32.mrf.mxu0
      %v3156 = vadd.f32 0.0, %v3155
      %3157 = vdwg.mxu0
      %v3158 = vadd.f32 %v3103, %v3136
      %v3159 = vadd.f32 %v3104, %v3156
      %3160 = vrot.lane.b32.xlu0 %v2597, 2
      %v3161 = vpop.permute.xlu0 %3160
      %3162 = vrot.lane.b32.xlu0 %v2598, 2
      %v3163 = vpop.permute.xlu0 %3162
      %v3164 = vsel %vm1725, %v3161, %v3163
      %v3167 = vsel %vm1725, 0.0, %v3161
      %s3168 = scalar_lea.vmem %s6, 80
      %v3169 = vld [vmem:[%s3168] sm:$0xff]
      %v3171 = vsel %vm1183, %v3169, 0
      %3173 = vmatpush.msra.mxu0 0.0
      %3174 = vmatpush.msra.mxu0 0.0
      %3175 = vmatpush.msra.mxu0 0.0
      %3176 = vmatpush.msra.mxu0 0.0
      %3177 = vmatpush.msra.mxu0 0.0
      %3178 = vmatpush.msra.mxu0 0.0
      %3179 = vmatpush.msra.mxu0 0.0
      %3180 = vmatpush.msra.mxu0 0.0
      %3181 = vmatpush.msra.mxu0 0.0
      %3182 = vmatpush.msra.mxu0 0.0
      %3183 = vmatpush.msra.mxu0 0.0
      %3184 = vmatpush.msra.mxu0 0.0
      %3185 = vmatpush.msra.mxu0 0.0
      %3186 = vmatpush.msra.mxu0 0.0
      %3187 = vmatpush.msra.mxu0 0.0
      %3188 = vmatpush.msra.mxu0 %v3167
      %3189 = vmatmul.f32.gmra.mxu0 %v3171
      %v3190 = vpop.f32.mrf.mxu0
      %v3191 = vadd.f32 0.0, %v3190
      %3192 = vdwg.mxu0
      %3193 = vmatpush.msra.mxu0 0.0
      %3194 = vmatpush.msra.mxu0 0.0
      %3195 = vmatpush.msra.mxu0 0.0
      %3196 = vmatpush.msra.mxu0 0.0
      %3197 = vmatpush.msra.mxu0 0.0
      %3198 = vmatpush.msra.mxu0 0.0
      %3199 = vmatpush.msra.mxu0 0.0
      %3200 = vmatpush.msra.mxu0 0.0
      %3201 = vmatpush.msra.mxu0 0.0
      %3202 = vmatpush.msra.mxu0 0.0
      %3203 = vmatpush.msra.mxu0 0.0
      %3204 = vmatpush.msra.mxu0 0.0
      %3205 = vmatpush.msra.mxu0 0.0
      %3206 = vmatpush.msra.mxu0 0.0
      %3207 = vmatpush.msra.mxu0 0.0
      %3208 = vmatpush.msra.mxu0 %v3164
      %3209 = vmatmul.f32.gmra.mxu0 %v3171
      %v3210 = vpop.f32.mrf.mxu0
      %v3211 = vadd.f32 0.0, %v3210
      %3212 = vdwg.mxu0
      %v3213 = vadd.f32 %v3158, %v3191
      %v3214 = vadd.f32 %v3159, %v3211
      %3215 = vrot.lane.b32.xlu0 %v2599, 1
      %v3216 = vpop.permute.xlu0 %3215
      %3217 = vrot.lane.b32.xlu0 %v2600, 1
      %v3218 = vpop.permute.xlu0 %3217
      %v3219 = vsel %vm771, %v3216, %v3218
      %v3222 = vsel %vm771, 0.0, %v3216
      %s3223 = scalar_lea.vmem %s6, 88
      %v3224 = vld [vmem:[%s3223] sm:$0xff]
      %v3226 = vsel %vm1183, %v3224, 0
      %3228 = vmatpush.msra.mxu0 0.0
      %3229 = vmatpush.msra.mxu0 0.0
      %3230 = vmatpush.msra.mxu0 0.0
      %3231 = vmatpush.msra.mxu0 0.0
      %3232 = vmatpush.msra.mxu0 0.0
      %3233 = vmatpush.msra.mxu0 0.0
      %3234 = vmatpush.msra.mxu0 0.0
      %3235 = vmatpush.msra.mxu0 0.0
      %3236 = vmatpush.msra.mxu0 0.0
      %3237 = vmatpush.msra.mxu0 0.0
      %3238 = vmatpush.msra.mxu0 0.0
      %3239 = vmatpush.msra.mxu0 0.0
      %3240 = vmatpush.msra.mxu0 0.0
      %3241 = vmatpush.msra.mxu0 0.0
      %3242 = vmatpush.msra.mxu0 0.0
      %3243 = vmatpush.msra.mxu0 %v3222
      %3244 = vmatmul.f32.gmra.mxu0 %v3226
      %v3245 = vpop.f32.mrf.mxu0
      %v3246 = vadd.f32 0.0, %v3245
      %3247 = vdwg.mxu0
      %3248 = vmatpush.msra.mxu0 0.0
      %3249 = vmatpush.msra.mxu0 0.0
      %3250 = vmatpush.msra.mxu0 0.0
      %3251 = vmatpush.msra.mxu0 0.0
      %3252 = vmatpush.msra.mxu0 0.0
      %3253 = vmatpush.msra.mxu0 0.0
      %3254 = vmatpush.msra.mxu0 0.0
      %3255 = vmatpush.msra.mxu0 0.0
      %3256 = vmatpush.msra.mxu0 0.0
      %3257 = vmatpush.msra.mxu0 0.0
      %3258 = vmatpush.msra.mxu0 0.0
      %3259 = vmatpush.msra.mxu0 0.0
      %3260 = vmatpush.msra.mxu0 0.0
      %3261 = vmatpush.msra.mxu0 0.0
      %3262 = vmatpush.msra.mxu0 0.0
      %3263 = vmatpush.msra.mxu0 %v3219
      %3264 = vmatmul.f32.gmra.mxu0 %v3226
      %v3265 = vpop.f32.mrf.mxu0
      %v3266 = vadd.f32 0.0, %v3265
      %3267 = vdwg.mxu0
      %v3268 = vadd.f32 %v3213, %v3246
      %v3269 = vadd.f32 %v3214, %v3266
      %s3270 = scalar_lea.vmem %s6, 96
      %v3271 = vld [vmem:[%s3270] sm:$0xff]
      %v3273 = vsel %vm1183, %v3271, 0
      %3275 = vmatpush.msra.mxu0 0.0
      %3276 = vmatpush.msra.mxu0 0.0
      %3277 = vmatpush.msra.mxu0 0.0
      %3278 = vmatpush.msra.mxu0 0.0
      %3279 = vmatpush.msra.mxu0 0.0
      %3280 = vmatpush.msra.mxu0 0.0
      %3281 = vmatpush.msra.mxu0 0.0
      %3282 = vmatpush.msra.mxu0 0.0
      %3283 = vmatpush.msra.mxu0 0.0
      %3284 = vmatpush.msra.mxu0 0.0
      %3285 = vmatpush.msra.mxu0 0.0
      %3286 = vmatpush.msra.mxu0 0.0
      %3287 = vmatpush.msra.mxu0 0.0
      %3288 = vmatpush.msra.mxu0 0.0
      %3289 = vmatpush.msra.mxu0 0.0
      %3290 = vmatpush.msra.mxu0 %v2595
      %3291 = vmatmul.f32.gmra.mxu0 %v3273
      %v3292 = vpop.f32.mrf.mxu0
      %v3293 = vadd.f32 0.0, %v3292
      %3294 = vdwg.mxu0
      %3295 = vmatpush.msra.mxu0 0.0
      %3296 = vmatpush.msra.mxu0 0.0
      %3297 = vmatpush.msra.mxu0 0.0
      %3298 = vmatpush.msra.mxu0 0.0
      %3299 = vmatpush.msra.mxu0 0.0
      %3300 = vmatpush.msra.mxu0 0.0
      %3301 = vmatpush.msra.mxu0 0.0
      %3302 = vmatpush.msra.mxu0 0.0
      %3303 = vmatpush.msra.mxu0 0.0
      %3304 = vmatpush.msra.mxu0 0.0
      %3305 = vmatpush.msra.mxu0 0.0
      %3306 = vmatpush.msra.mxu0 0.0
      %3307 = vmatpush.msra.mxu0 0.0
      %3308 = vmatpush.msra.mxu0 0.0
      %3309 = vmatpush.msra.mxu0 0.0
      %3310 = vmatpush.msra.mxu0 %v2596
      %3311 = vmatmul.f32.gmra.mxu0 %v3273
      %v3312 = vpop.f32.mrf.mxu0
      %v3313 = vadd.f32 0.0, %v3312
      %3314 = vdwg.mxu0
      %v3315 = vadd.f32 %v3268, %v3293
      %v3316 = vadd.f32 %v3269, %v3313
      %3317 = vrot.lane.b32.xlu0 %v2601, 127
      %v3318 = vpop.permute.xlu0 %3317
      %3319 = vrot.lane.b32.xlu0 %v2602, 127
      %v3320 = vpop.permute.xlu0 %3319
      %v3321 = vsel %vm888, %v3318, %v3320
      %v3324 = vsel %vm888, %v3320, 0.0
      %s3325 = scalar_lea.vmem %s6, 104
      %v3326 = vld [vmem:[%s3325] sm:$0xff]
      %v3328 = vsel %vm1183, %v3326, 0
      %3330 = vmatpush.msra.mxu0 0.0
      %3331 = vmatpush.msra.mxu0 0.0
      %3332 = vmatpush.msra.mxu0 0.0
      %3333 = vmatpush.msra.mxu0 0.0
      %3334 = vmatpush.msra.mxu0 0.0
      %3335 = vmatpush.msra.mxu0 0.0
      %3336 = vmatpush.msra.mxu0 0.0
      %3337 = vmatpush.msra.mxu0 0.0
      %3338 = vmatpush.msra.mxu0 0.0
      %3339 = vmatpush.msra.mxu0 0.0
      %3340 = vmatpush.msra.mxu0 0.0
      %3341 = vmatpush.msra.mxu0 0.0
      %3342 = vmatpush.msra.mxu0 0.0
      %3343 = vmatpush.msra.mxu0 0.0
      %3344 = vmatpush.msra.mxu0 0.0
      %3345 = vmatpush.msra.mxu0 %v3321
      %3346 = vmatmul.f32.gmra.mxu0 %v3328
      %v3347 = vpop.f32.mrf.mxu0
      %v3348 = vadd.f32 0.0, %v3347
      %3349 = vdwg.mxu0
      %3350 = vmatpush.msra.mxu0 0.0
      %3351 = vmatpush.msra.mxu0 0.0
      %3352 = vmatpush.msra.mxu0 0.0
      %3353 = vmatpush.msra.mxu0 0.0
      %3354 = vmatpush.msra.mxu0 0.0
      %3355 = vmatpush.msra.mxu0 0.0
      %3356 = vmatpush.msra.mxu0 0.0
      %3357 = vmatpush.msra.mxu0 0.0
      %3358 = vmatpush.msra.mxu0 0.0
      %3359 = vmatpush.msra.mxu0 0.0
      %3360 = vmatpush.msra.mxu0 0.0
      %3361 = vmatpush.msra.mxu0 0.0
      %3362 = vmatpush.msra.mxu0 0.0
      %3363 = vmatpush.msra.mxu0 0.0
      %3364 = vmatpush.msra.mxu0 0.0
      %3365 = vmatpush.msra.mxu0 %v3324
      %3366 = vmatmul.f32.gmra.mxu0 %v3328
      %v3367 = vpop.f32.mrf.mxu0
      %v3368 = vadd.f32 0.0, %v3367
      %3369 = vdwg.mxu0
      %v3370 = vadd.f32 %v3315, %v3348
      %v3371 = vadd.f32 %v3316, %v3368
      %3372 = vrot.lane.b32.xlu0 %v2603, 126
      %v3373 = vpop.permute.xlu0 %3372
      %3374 = vrot.lane.b32.xlu0 %v2604, 126
      %v3375 = vpop.permute.xlu0 %3374
      %v3376 = vsel %vm1938, %v3373, %v3375
      %v3379 = vsel %vm1938, %v3375, 0.0
      %s3380 = scalar_lea.vmem %s6, 112
      %v3381 = vld [vmem:[%s3380] sm:$0xff]
      %v3383 = vsel %vm1183, %v3381, 0
      %3385 = vmatpush.msra.mxu0 0.0
      %3386 = vmatpush.msra.mxu0 0.0
      %3387 = vmatpush.msra.mxu0 0.0
      %3388 = vmatpush.msra.mxu0 0.0
      %3389 = vmatpush.msra.mxu0 0.0
      %3390 = vmatpush.msra.mxu0 0.0
      %3391 = vmatpush.msra.mxu0 0.0
      %3392 = vmatpush.msra.mxu0 0.0
      %3393 = vmatpush.msra.mxu0 0.0
      %3394 = vmatpush.msra.mxu0 0.0
      %3395 = vmatpush.msra.mxu0 0.0
      %3396 = vmatpush.msra.mxu0 0.0
      %3397 = vmatpush.msra.mxu0 0.0
      %3398 = vmatpush.msra.mxu0 0.0
      %3399 = vmatpush.msra.mxu0 0.0
      %3400 = vmatpush.msra.mxu0 %v3376
      %3401 = vmatmul.f32.gmra.mxu0 %v3383
      %v3402 = vpop.f32.mrf.mxu0
      %v3403 = vadd.f32 0.0, %v3402
      %3404 = vdwg.mxu0
      %3405 = vmatpush.msra.mxu0 0.0
      %3406 = vmatpush.msra.mxu0 0.0
      %3407 = vmatpush.msra.mxu0 0.0
      %3408 = vmatpush.msra.mxu0 0.0
      %3409 = vmatpush.msra.mxu0 0.0
      %3410 = vmatpush.msra.mxu0 0.0
      %3411 = vmatpush.msra.mxu0 0.0
      %3412 = vmatpush.msra.mxu0 0.0
      %3413 = vmatpush.msra.mxu0 0.0
      %3414 = vmatpush.msra.mxu0 0.0
      %3415 = vmatpush.msra.mxu0 0.0
      %3416 = vmatpush.msra.mxu0 0.0
      %3417 = vmatpush.msra.mxu0 0.0
      %3418 = vmatpush.msra.mxu0 0.0
      %3419 = vmatpush.msra.mxu0 0.0
      %3420 = vmatpush.msra.mxu0 %v3379
      %3421 = vmatmul.f32.gmra.mxu0 %v3383
      %v3422 = vpop.f32.mrf.mxu0
      %v3423 = vadd.f32 0.0, %v3422
      %3424 = vdwg.mxu0
      %v3425 = vadd.f32 %v3370, %v3403
      %v3426 = vadd.f32 %v3371, %v3423
      %3427 = vrot.lane.b32.xlu0 %v2597, 114
      %v3428 = vpop.permute.xlu0 %3427
      %3429 = vrot.lane.b32.xlu0 %v2598, 114
      %v3430 = vpop.permute.xlu0 %3429
      %v3431 = vsel %vm1994, %v3428, %v3430
      %v3434 = vsel %vm1994, %v3430, 0.0
      %s3435 = scalar_lea.vmem %s6, 120
      %v3436 = vld [vmem:[%s3435] sm:$0xff]
      %v3438 = vsel %vm1183, %v3436, 0
      %3440 = vmatpush.msra.mxu0 0.0
      %3441 = vmatpush.msra.mxu0 0.0
      %3442 = vmatpush.msra.mxu0 0.0
      %3443 = vmatpush.msra.mxu0 0.0
      %3444 = vmatpush.msra.mxu0 0.0
      %3445 = vmatpush.msra.mxu0 0.0
      %3446 = vmatpush.msra.mxu0 0.0
      %3447 = vmatpush.msra.mxu0 0.0
      %3448 = vmatpush.msra.mxu0 0.0
      %3449 = vmatpush.msra.mxu0 0.0
      %3450 = vmatpush.msra.mxu0 0.0
      %3451 = vmatpush.msra.mxu0 0.0
      %3452 = vmatpush.msra.mxu0 0.0
      %3453 = vmatpush.msra.mxu0 0.0
      %3454 = vmatpush.msra.mxu0 0.0
      %3455 = vmatpush.msra.mxu0 %v3431
      %3456 = vmatmul.f32.gmra.mxu0 %v3438
      %v3457 = vpop.f32.mrf.mxu0
      %v3458 = vadd.f32 0.0, %v3457
      %3459 = vdwg.mxu0
      %3460 = vmatpush.msra.mxu0 0.0
      %3461 = vmatpush.msra.mxu0 0.0
      %3462 = vmatpush.msra.mxu0 0.0
      %3463 = vmatpush.msra.mxu0 0.0
      %3464 = vmatpush.msra.mxu0 0.0
      %3465 = vmatpush.msra.mxu0 0.0
      %3466 = vmatpush.msra.mxu0 0.0
      %3467 = vmatpush.msra.mxu0 0.0
      %3468 = vmatpush.msra.mxu0 0.0
      %3469 = vmatpush.msra.mxu0 0.0
      %3470 = vmatpush.msra.mxu0 0.0
      %3471 = vmatpush.msra.mxu0 0.0
      %3472 = vmatpush.msra.mxu0 0.0
      %3473 = vmatpush.msra.mxu0 0.0
      %3474 = vmatpush.msra.mxu0 0.0
      %3475 = vmatpush.msra.mxu0 %v3434
      %3476 = vmatmul.f32.gmra.mxu0 %v3438
      %v3477 = vpop.f32.mrf.mxu0
      %v3478 = vadd.f32 0.0, %v3477
      %3479 = vdwg.mxu0
      %v3480 = vadd.f32 %v3425, %v3458
      %v3481 = vadd.f32 %v3426, %v3478
      %3482 = vrot.lane.b32.xlu0 %v2599, 113
      %v3483 = vpop.permute.xlu0 %3482
      %3484 = vrot.lane.b32.xlu0 %v2600, 113
      %v3485 = vpop.permute.xlu0 %3484
      %v3486 = vsel %vm951, %v3483, %v3485
      %v3489 = vsel %vm951, %v3485, 0.0
      %s3490 = scalar_lea.vmem %s6, 128
      %v3491 = vld [vmem:[%s3490] sm:$0xff]
      %v3493 = vsel %vm1183, %v3491, 0
      %3495 = vmatpush.msra.mxu0 0.0
      %3496 = vmatpush.msra.mxu0 0.0
      %3497 = vmatpush.msra.mxu0 0.0
      %3498 = vmatpush.msra.mxu0 0.0
      %3499 = vmatpush.msra.mxu0 0.0
      %3500 = vmatpush.msra.mxu0 0.0
      %3501 = vmatpush.msra.mxu0 0.0
      %3502 = vmatpush.msra.mxu0 0.0
      %3503 = vmatpush.msra.mxu0 0.0
      %3504 = vmatpush.msra.mxu0 0.0
      %3505 = vmatpush.msra.mxu0 0.0
      %3506 = vmatpush.msra.mxu0 0.0
      %3507 = vmatpush.msra.mxu0 0.0
      %3508 = vmatpush.msra.mxu0 0.0
      %3509 = vmatpush.msra.mxu0 0.0
      %3510 = vmatpush.msra.mxu0 %v3486
      %3511 = vmatmul.f32.gmra.mxu0 %v3493
      %v3512 = vpop.f32.mrf.mxu0
      %v3513 = vadd.f32 0.0, %v3512
      %3514 = vdwg.mxu0
      %3515 = vmatpush.msra.mxu0 0.0
      %3516 = vmatpush.msra.mxu0 0.0
      %3517 = vmatpush.msra.mxu0 0.0
      %3518 = vmatpush.msra.mxu0 0.0
      %3519 = vmatpush.msra.mxu0 0.0
      %3520 = vmatpush.msra.mxu0 0.0
      %3521 = vmatpush.msra.mxu0 0.0
      %3522 = vmatpush.msra.mxu0 0.0
      %3523 = vmatpush.msra.mxu0 0.0
      %3524 = vmatpush.msra.mxu0 0.0
      %3525 = vmatpush.msra.mxu0 0.0
      %3526 = vmatpush.msra.mxu0 0.0
      %3527 = vmatpush.msra.mxu0 0.0
      %3528 = vmatpush.msra.mxu0 0.0
      %3529 = vmatpush.msra.mxu0 0.0
      %3530 = vmatpush.msra.mxu0 %v3489
      %3531 = vmatmul.f32.gmra.mxu0 %v3493
      %v3532 = vpop.f32.mrf.mxu0
      %v3533 = vadd.f32 0.0, %v3532
      %3534 = vdwg.mxu0
      %v3535 = vadd.f32 %v3480, %v3513
      %v3536 = vadd.f32 %v3481, %v3533
      %3537 = vrot.lane.b32.xlu0 %v2595, 112
      %v3538 = vpop.permute.xlu0 %3537
      %3539 = vrot.lane.b32.xlu0 %v2596, 112
      %v3540 = vpop.permute.xlu0 %3539
      %v3541 = vsel %vm1014, %v3538, %v3540
      %v3544 = vsel %vm1014, %v3540, 0.0
      %s3545 = scalar_lea.vmem %s6, 136
      %v3546 = vld [vmem:[%s3545] sm:$0xff]
      %v3548 = vsel %vm1183, %v3546, 0
      %3550 = vmatpush.msra.mxu0 0.0
      %3551 = vmatpush.msra.mxu0 0.0
      %3552 = vmatpush.msra.mxu0 0.0
      %3553 = vmatpush.msra.mxu0 0.0
      %3554 = vmatpush.msra.mxu0 0.0
      %3555 = vmatpush.msra.mxu0 0.0
      %3556 = vmatpush.msra.mxu0 0.0
      %3557 = vmatpush.msra.mxu0 0.0
      %3558 = vmatpush.msra.mxu0 0.0
      %3559 = vmatpush.msra.mxu0 0.0
      %3560 = vmatpush.msra.mxu0 0.0
      %3561 = vmatpush.msra.mxu0 0.0
      %3562 = vmatpush.msra.mxu0 0.0
      %3563 = vmatpush.msra.mxu0 0.0
      %3564 = vmatpush.msra.mxu0 0.0
      %3565 = vmatpush.msra.mxu0 %v3541
      %3566 = vmatmul.f32.gmra.mxu0 %v3548
      %v3567 = vpop.f32.mrf.mxu0
      %v3568 = vadd.f32 0.0, %v3567
      %3569 = vdwg.mxu0
      %3570 = vmatpush.msra.mxu0 0.0
      %3571 = vmatpush.msra.mxu0 0.0
      %3572 = vmatpush.msra.mxu0 0.0
      %3573 = vmatpush.msra.mxu0 0.0
      %3574 = vmatpush.msra.mxu0 0.0
      %3575 = vmatpush.msra.mxu0 0.0
      %3576 = vmatpush.msra.mxu0 0.0
      %3577 = vmatpush.msra.mxu0 0.0
      %3578 = vmatpush.msra.mxu0 0.0
      %3579 = vmatpush.msra.mxu0 0.0
      %3580 = vmatpush.msra.mxu0 0.0
      %3581 = vmatpush.msra.mxu0 0.0
      %3582 = vmatpush.msra.mxu0 0.0
      %3583 = vmatpush.msra.mxu0 0.0
      %3584 = vmatpush.msra.mxu0 0.0
      %3585 = vmatpush.msra.mxu0 %v3544
      %3586 = vmatmul.f32.gmra.mxu0 %v3548
      %v3587 = vpop.f32.mrf.mxu0
      %v3588 = vadd.f32 0.0, %v3587
      %3589 = vdwg.mxu0
      %v3590 = vadd.f32 %v3535, %v3568
      %v3591 = vadd.f32 %v3536, %v3588
      %3592 = vrot.lane.b32.xlu0 %v2601, 111
      %v3593 = vpop.permute.xlu0 %3592
      %3594 = vrot.lane.b32.xlu0 %v2602, 111
      %v3595 = vpop.permute.xlu0 %3594
      %v3596 = vsel %vm1077, %v3593, %v3595
      %v3599 = vsel %vm1077, %v3595, 0.0
      %s3600 = scalar_lea.vmem %s6, 144
      %v3601 = vld [vmem:[%s3600] sm:$0xff]
      %v3603 = vsel %vm1183, %v3601, 0
      %3605 = vmatpush.msra.mxu0 0.0
      %3606 = vmatpush.msra.mxu0 0.0
      %3607 = vmatpush.msra.mxu0 0.0
      %3608 = vmatpush.msra.mxu0 0.0
      %3609 = vmatpush.msra.mxu0 0.0
      %3610 = vmatpush.msra.mxu0 0.0
      %3611 = vmatpush.msra.mxu0 0.0
      %3612 = vmatpush.msra.mxu0 0.0
      %3613 = vmatpush.msra.mxu0 0.0
      %3614 = vmatpush.msra.mxu0 0.0
      %3615 = vmatpush.msra.mxu0 0.0
      %3616 = vmatpush.msra.mxu0 0.0
      %3617 = vmatpush.msra.mxu0 0.0
      %3618 = vmatpush.msra.mxu0 0.0
      %3619 = vmatpush.msra.mxu0 0.0
      %3620 = vmatpush.msra.mxu0 %v3596
      %3621 = vmatmul.f32.gmra.mxu0 %v3603
      %v3622 = vpop.f32.mrf.mxu0
      %v3623 = vadd.f32 0.0, %v3622
      %3624 = vdwg.mxu0
      %3625 = vmatpush.msra.mxu0 0.0
      %3626 = vmatpush.msra.mxu0 0.0
      %3627 = vmatpush.msra.mxu0 0.0
      %3628 = vmatpush.msra.mxu0 0.0
      %3629 = vmatpush.msra.mxu0 0.0
      %3630 = vmatpush.msra.mxu0 0.0
      %3631 = vmatpush.msra.mxu0 0.0
      %3632 = vmatpush.msra.mxu0 0.0
      %3633 = vmatpush.msra.mxu0 0.0
      %3634 = vmatpush.msra.mxu0 0.0
      %3635 = vmatpush.msra.mxu0 0.0
      %3636 = vmatpush.msra.mxu0 0.0
      %3637 = vmatpush.msra.mxu0 0.0
      %3638 = vmatpush.msra.mxu0 0.0
      %3639 = vmatpush.msra.mxu0 0.0
      %3640 = vmatpush.msra.mxu0 %v3599
      %3641 = vmatmul.f32.gmra.mxu0 %v3603
      %v3642 = vpop.f32.mrf.mxu0
      %v3643 = vadd.f32 0.0, %v3642
      %3644 = vdwg.mxu0
      %v3645 = vadd.f32 %v3590, %v3623
      %v3646 = vadd.f32 %v3591, %v3643
      %3647 = vrot.lane.b32.xlu0 %v2603, 110
      %v3648 = vpop.permute.xlu0 %3647
      %3649 = vrot.lane.b32.xlu0 %v2604, 110
      %v3650 = vpop.permute.xlu0 %3649
      %v3651 = vsel %vm2215, %v3648, %v3650
      %v3654 = vsel %vm2215, %v3650, 0.0
      %s3655 = scalar_lea.vmem %s6, 152
      %v3656 = vld [vmem:[%s3655] sm:$0xff]
      %v3658 = vsel %vm1183, %v3656, 0
      %3660 = vmatpush.msra.mxu0 0.0
      %3661 = vmatpush.msra.mxu0 0.0
      %3662 = vmatpush.msra.mxu0 0.0
      %3663 = vmatpush.msra.mxu0 0.0
      %3664 = vmatpush.msra.mxu0 0.0
      %3665 = vmatpush.msra.mxu0 0.0
      %3666 = vmatpush.msra.mxu0 0.0
      %3667 = vmatpush.msra.mxu0 0.0
      %3668 = vmatpush.msra.mxu0 0.0
      %3669 = vmatpush.msra.mxu0 0.0
      %3670 = vmatpush.msra.mxu0 0.0
      %3671 = vmatpush.msra.mxu0 0.0
      %3672 = vmatpush.msra.mxu0 0.0
      %3673 = vmatpush.msra.mxu0 0.0
      %3674 = vmatpush.msra.mxu0 0.0
      %3675 = vmatpush.msra.mxu0 %v3651
      %3676 = vmatmul.f32.gmra.mxu0 %v3658
      %v3677 = vpop.f32.mrf.mxu0
      %v3678 = vadd.f32 0.0, %v3677
      %3679 = vdwg.mxu0
      %3680 = vmatpush.msra.mxu0 0.0
      %3681 = vmatpush.msra.mxu0 0.0
      %3682 = vmatpush.msra.mxu0 0.0
      %3683 = vmatpush.msra.mxu0 0.0
      %3684 = vmatpush.msra.mxu0 0.0
      %3685 = vmatpush.msra.mxu0 0.0
      %3686 = vmatpush.msra.mxu0 0.0
      %3687 = vmatpush.msra.mxu0 0.0
      %3688 = vmatpush.msra.mxu0 0.0
      %3689 = vmatpush.msra.mxu0 0.0
      %3690 = vmatpush.msra.mxu0 0.0
      %3691 = vmatpush.msra.mxu0 0.0
      %3692 = vmatpush.msra.mxu0 0.0
      %3693 = vmatpush.msra.mxu0 0.0
      %3694 = vmatpush.msra.mxu0 0.0
      %3695 = vmatpush.msra.mxu0 %v3654
      %3696 = vmatmul.f32.gmra.mxu0 %v3658
      %v3697 = vpop.f32.mrf.mxu0
      %v3698 = vadd.f32 0.0, %v3697
      %3699 = vdwg.mxu0
      %v3700 = vadd.f32 %v3645, %v3678
      %v3701 = vadd.f32 %v3646, %v3698
      %3702 = vrot.lane.b32.xlu0 %v2597, 98
      %v3703 = vpop.permute.xlu0 %3702
      %3704 = vrot.lane.b32.xlu0 %v2598, 98
      %v3705 = vpop.permute.xlu0 %3704
      %v3706 = vsel %vm2271, %v3703, %v3705
      %v3709 = vsel %vm2271, %v3705, 0.0
      %s3710 = scalar_lea.vmem %s6, 160
      %v3711 = vld [vmem:[%s3710] sm:$0xff]
      %v3713 = vsel %vm1183, %v3711, 0
      %3715 = vmatpush.msra.mxu0 0.0
      %3716 = vmatpush.msra.mxu0 0.0
      %3717 = vmatpush.msra.mxu0 0.0
      %3718 = vmatpush.msra.mxu0 0.0
      %3719 = vmatpush.msra.mxu0 0.0
      %3720 = vmatpush.msra.mxu0 0.0
      %3721 = vmatpush.msra.mxu0 0.0
      %3722 = vmatpush.msra.mxu0 0.0
      %3723 = vmatpush.msra.mxu0 0.0
      %3724 = vmatpush.msra.mxu0 0.0
      %3725 = vmatpush.msra.mxu0 0.0
      %3726 = vmatpush.msra.mxu0 0.0
      %3727 = vmatpush.msra.mxu0 0.0
      %3728 = vmatpush.msra.mxu0 0.0
      %3729 = vmatpush.msra.mxu0 0.0
      %3730 = vmatpush.msra.mxu0 %v3706
      %3731 = vmatmul.f32.gmra.mxu0 %v3713
      %v3732 = vpop.f32.mrf.mxu0
      %v3733 = vadd.f32 0.0, %v3732
      %3734 = vdwg.mxu0
      %3735 = vmatpush.msra.mxu0 0.0
      %3736 = vmatpush.msra.mxu0 0.0
      %3737 = vmatpush.msra.mxu0 0.0
      %3738 = vmatpush.msra.mxu0 0.0
      %3739 = vmatpush.msra.mxu0 0.0
      %3740 = vmatpush.msra.mxu0 0.0
      %3741 = vmatpush.msra.mxu0 0.0
      %3742 = vmatpush.msra.mxu0 0.0
      %3743 = vmatpush.msra.mxu0 0.0
      %3744 = vmatpush.msra.mxu0 0.0
      %3745 = vmatpush.msra.mxu0 0.0
      %3746 = vmatpush.msra.mxu0 0.0
      %3747 = vmatpush.msra.mxu0 0.0
      %3748 = vmatpush.msra.mxu0 0.0
      %3749 = vmatpush.msra.mxu0 0.0
      %3750 = vmatpush.msra.mxu0 %v3709
      %3751 = vmatmul.f32.gmra.mxu0 %v3713
      %v3752 = vpop.f32.mrf.mxu0
      %v3753 = vadd.f32 0.0, %v3752
      %3754 = vdwg.mxu0
      %v3755 = vadd.f32 %v3700, %v3733
      %v3756 = vadd.f32 %v3701, %v3753
      %3757 = vrot.lane.b32.xlu0 %v2599, 97
      %v3758 = vpop.permute.xlu0 %3757
      %3759 = vrot.lane.b32.xlu0 %v2600, 97
      %v3760 = vpop.permute.xlu0 %3759
      %v3761 = vsel %vm2327, %v3758, %v3760
      %v3764 = vsel %vm2327, %v3760, 0.0
      %s3765 = scalar_lea.vmem %s6, 168
      %v3766 = vld [vmem:[%s3765] sm:$0xff]
      %v3768 = vsel %vm1183, %v3766, 0
      %3770 = vmatpush.msra.mxu0 0.0
      %3771 = vmatpush.msra.mxu0 0.0
      %3772 = vmatpush.msra.mxu0 0.0
      %3773 = vmatpush.msra.mxu0 0.0
      %3774 = vmatpush.msra.mxu0 0.0
      %3775 = vmatpush.msra.mxu0 0.0
      %3776 = vmatpush.msra.mxu0 0.0
      %3777 = vmatpush.msra.mxu0 0.0
      %3778 = vmatpush.msra.mxu0 0.0
      %3779 = vmatpush.msra.mxu0 0.0
      %3780 = vmatpush.msra.mxu0 0.0
      %3781 = vmatpush.msra.mxu0 0.0
      %3782 = vmatpush.msra.mxu0 0.0
      %3783 = vmatpush.msra.mxu0 0.0
      %3784 = vmatpush.msra.mxu0 0.0
      %3785 = vmatpush.msra.mxu0 %v3761
      %3786 = vmatmul.f32.gmra.mxu0 %v3768
      %v3787 = vpop.f32.mrf.mxu0
      %v3788 = vadd.f32 0.0, %v3787
      %3789 = vdwg.mxu0
      %3790 = vmatpush.msra.mxu0 0.0
      %3791 = vmatpush.msra.mxu0 0.0
      %3792 = vmatpush.msra.mxu0 0.0
      %3793 = vmatpush.msra.mxu0 0.0
      %3794 = vmatpush.msra.mxu0 0.0
      %3795 = vmatpush.msra.mxu0 0.0
      %3796 = vmatpush.msra.mxu0 0.0
      %3797 = vmatpush.msra.mxu0 0.0
      %3798 = vmatpush.msra.mxu0 0.0
      %3799 = vmatpush.msra.mxu0 0.0
      %3800 = vmatpush.msra.mxu0 0.0
      %3801 = vmatpush.msra.mxu0 0.0
      %3802 = vmatpush.msra.mxu0 0.0
      %3803 = vmatpush.msra.mxu0 0.0
      %3804 = vmatpush.msra.mxu0 0.0
      %3805 = vmatpush.msra.mxu0 %v3764
      %3806 = vmatmul.f32.gmra.mxu0 %v3768
      %v3807 = vpop.f32.mrf.mxu0
      %v3808 = vadd.f32 0.0, %v3807
      %3809 = vdwg.mxu0
      %v3810 = vadd.f32 %v3755, %v3788
      %v3811 = vadd.f32 %v3756, %v3808
      %3812 = vrot.lane.b32.xlu0 %v2595, 96
      %v3813 = vpop.permute.xlu0 %3812
      %3814 = vrot.lane.b32.xlu0 %v2596, 96
      %v3815 = vpop.permute.xlu0 %3814
      %v3816 = vsel %vm2383, %v3813, %v3815
      %v3819 = vsel %vm2383, %v3815, 0.0
      %s3820 = scalar_lea.vmem %s6, 176
      %v3821 = vld [vmem:[%s3820] sm:$0xff]
      %v3823 = vsel %vm1183, %v3821, 0
      %3825 = vmatpush.msra.mxu0 0.0
      %3826 = vmatpush.msra.mxu0 0.0
      %3827 = vmatpush.msra.mxu0 0.0
      %3828 = vmatpush.msra.mxu0 0.0
      %3829 = vmatpush.msra.mxu0 0.0
      %3830 = vmatpush.msra.mxu0 0.0
      %3831 = vmatpush.msra.mxu0 0.0
      %3832 = vmatpush.msra.mxu0 0.0
      %3833 = vmatpush.msra.mxu0 0.0
      %3834 = vmatpush.msra.mxu0 0.0
      %3835 = vmatpush.msra.mxu0 0.0
      %3836 = vmatpush.msra.mxu0 0.0
      %3837 = vmatpush.msra.mxu0 0.0
      %3838 = vmatpush.msra.mxu0 0.0
      %3839 = vmatpush.msra.mxu0 0.0
      %3840 = vmatpush.msra.mxu0 %v3816
      %3841 = vmatmul.f32.gmra.mxu0 %v3823
      %v3842 = vpop.f32.mrf.mxu0
      %v3843 = vadd.f32 0.0, %v3842
      %3844 = vdwg.mxu0
      %3845 = vmatpush.msra.mxu0 0.0
      %3846 = vmatpush.msra.mxu0 0.0
      %3847 = vmatpush.msra.mxu0 0.0
      %3848 = vmatpush.msra.mxu0 0.0
      %3849 = vmatpush.msra.mxu0 0.0
      %3850 = vmatpush.msra.mxu0 0.0
      %3851 = vmatpush.msra.mxu0 0.0
      %3852 = vmatpush.msra.mxu0 0.0
      %3853 = vmatpush.msra.mxu0 0.0
      %3854 = vmatpush.msra.mxu0 0.0
      %3855 = vmatpush.msra.mxu0 0.0
      %3856 = vmatpush.msra.mxu0 0.0
      %3857 = vmatpush.msra.mxu0 0.0
      %3858 = vmatpush.msra.mxu0 0.0
      %3859 = vmatpush.msra.mxu0 0.0
      %3860 = vmatpush.msra.mxu0 %v3819
      %3861 = vmatmul.f32.gmra.mxu0 %v3823
      %v3862 = vpop.f32.mrf.mxu0
      %v3863 = vadd.f32 0.0, %v3862
      %3864 = vdwg.mxu0
      %v3865 = vadd.f32 %v3810, %v3843
      %v3866 = vadd.f32 %v3811, %v3863
      %3867 = vrot.lane.b32.xlu0 %v2601, 95
      %v3868 = vpop.permute.xlu0 %3867
      %3869 = vrot.lane.b32.xlu0 %v2602, 95
      %v3870 = vpop.permute.xlu0 %3869
      %v3871 = vsel %vm2439, %v3868, %v3870
      %v3874 = vsel %vm2439, %v3870, 0.0
      %s3875 = scalar_lea.vmem %s6, 184
      %v3876 = vld [vmem:[%s3875] sm:$0xff]
      %v3878 = vsel %vm1183, %v3876, 0
      %3880 = vmatpush.msra.mxu0 0.0
      %3881 = vmatpush.msra.mxu0 0.0
      %3882 = vmatpush.msra.mxu0 0.0
      %3883 = vmatpush.msra.mxu0 0.0
      %3884 = vmatpush.msra.mxu0 0.0
      %3885 = vmatpush.msra.mxu0 0.0
      %3886 = vmatpush.msra.mxu0 0.0
      %3887 = vmatpush.msra.mxu0 0.0
      %3888 = vmatpush.msra.mxu0 0.0
      %3889 = vmatpush.msra.mxu0 0.0
      %3890 = vmatpush.msra.mxu0 0.0
      %3891 = vmatpush.msra.mxu0 0.0
      %3892 = vmatpush.msra.mxu0 0.0
      %3893 = vmatpush.msra.mxu0 0.0
      %3894 = vmatpush.msra.mxu0 0.0
      %3895 = vmatpush.msra.mxu0 %v3871
      %3896 = vmatmul.f32.gmra.mxu0 %v3878
      %v3897 = vpop.f32.mrf.mxu0
      %v3898 = vadd.f32 0.0, %v3897
      %3899 = vdwg.mxu0
      %3900 = vmatpush.msra.mxu0 0.0
      %3901 = vmatpush.msra.mxu0 0.0
      %3902 = vmatpush.msra.mxu0 0.0
      %3903 = vmatpush.msra.mxu0 0.0
      %3904 = vmatpush.msra.mxu0 0.0
      %3905 = vmatpush.msra.mxu0 0.0
      %3906 = vmatpush.msra.mxu0 0.0
      %3907 = vmatpush.msra.mxu0 0.0
      %3908 = vmatpush.msra.mxu0 0.0
      %3909 = vmatpush.msra.mxu0 0.0
      %3910 = vmatpush.msra.mxu0 0.0
      %3911 = vmatpush.msra.mxu0 0.0
      %3912 = vmatpush.msra.mxu0 0.0
      %3913 = vmatpush.msra.mxu0 0.0
      %3914 = vmatpush.msra.mxu0 0.0
      %3915 = vmatpush.msra.mxu0 %v3874
      %3916 = vmatmul.f32.gmra.mxu0 %v3878
      %v3917 = vpop.f32.mrf.mxu0
      %v3918 = vadd.f32 0.0, %v3917
      %3919 = vdwg.mxu0
      %v3920 = vadd.f32 %v3865, %v3898
      %v3921 = vadd.f32 %v3866, %v3918
      %3922 = vrot.lane.b32.xlu0 %v2603, 94
      %v3923 = vpop.permute.xlu0 %3922
      %3924 = vrot.lane.b32.xlu0 %v2604, 94
      %v3925 = vpop.permute.xlu0 %3924
      %v3926 = vsel %vm2495, %v3923, %v3925
      %v3929 = vsel %vm2495, %v3925, 0.0
      %s3930 = scalar_lea.vmem %s6, 192
      %v3931 = vld [vmem:[%s3930] sm:$0xff]
      %v3933 = vsel %vm1183, %v3931, 0
      %3935 = vmatpush.msra.mxu0 0.0
      %3936 = vmatpush.msra.mxu0 0.0
      %3937 = vmatpush.msra.mxu0 0.0
      %3938 = vmatpush.msra.mxu0 0.0
      %3939 = vmatpush.msra.mxu0 0.0
      %3940 = vmatpush.msra.mxu0 0.0
      %3941 = vmatpush.msra.mxu0 0.0
      %3942 = vmatpush.msra.mxu0 0.0
      %3943 = vmatpush.msra.mxu0 0.0
      %3944 = vmatpush.msra.mxu0 0.0
      %3945 = vmatpush.msra.mxu0 0.0
      %3946 = vmatpush.msra.mxu0 0.0
      %3947 = vmatpush.msra.mxu0 0.0
      %3948 = vmatpush.msra.mxu0 0.0
      %3949 = vmatpush.msra.mxu0 0.0
      %3950 = vmatpush.msra.mxu0 %v3926
      %3951 = vmatmul.f32.gmra.mxu0 %v3933
      %v3952 = vpop.f32.mrf.mxu0
      %v3953 = vadd.f32 0.0, %v3952
      %3954 = vdwg.mxu0
      %3955 = vmatpush.msra.mxu0 0.0
      %3956 = vmatpush.msra.mxu0 0.0
      %3957 = vmatpush.msra.mxu0 0.0
      %3958 = vmatpush.msra.mxu0 0.0
      %3959 = vmatpush.msra.mxu0 0.0
      %3960 = vmatpush.msra.mxu0 0.0
      %3961 = vmatpush.msra.mxu0 0.0
      %3962 = vmatpush.msra.mxu0 0.0
      %3963 = vmatpush.msra.mxu0 0.0
      %3964 = vmatpush.msra.mxu0 0.0
      %3965 = vmatpush.msra.mxu0 0.0
      %3966 = vmatpush.msra.mxu0 0.0
      %3967 = vmatpush.msra.mxu0 0.0
      %3968 = vmatpush.msra.mxu0 0.0
      %3969 = vmatpush.msra.mxu0 0.0
      %3970 = vmatpush.msra.mxu0 %v3929
      %3971 = vmatmul.f32.gmra.mxu0 %v3933
      %v3972 = vpop.f32.mrf.mxu0
      %v3973 = vadd.f32 0.0, %v3972
      %3974 = vdwg.mxu0
      %v3975 = vadd.f32 %v3920, %v3953
      %v3976 = vadd.f32 %v3921, %v3973
      %v3977 = vld [vmem:[%s7] sm:$0xff]
      %v3979 = vsel %vm1183, %v3977, 0
      %3981 = vmatpush.msra.mxu0 0.0
      %3982 = vmatpush.msra.mxu0 0.0
      %3983 = vmatpush.msra.mxu0 0.0
      %3984 = vmatpush.msra.mxu0 0.0
      %3985 = vmatpush.msra.mxu0 0.0
      %3986 = vmatpush.msra.mxu0 0.0
      %3987 = vmatpush.msra.mxu0 0.0
      %3988 = vmatpush.msra.mxu0 0.0
      %3989 = vmatpush.msra.mxu0 0.0
      %3990 = vmatpush.msra.mxu0 0.0
      %3991 = vmatpush.msra.mxu0 0.0
      %3992 = vmatpush.msra.mxu0 0.0
      %3993 = vmatpush.msra.mxu0 0.0
      %3994 = vmatpush.msra.mxu0 0.0
      %3995 = vmatpush.msra.mxu0 0.0
      %3996 = vmatpush.msra.mxu0 %v3975
      %3997 = vmatmul.f32.gmra.mxu0 %v3979
      %v3998 = vpop.f32.mrf.mxu0
      %v3999 = vadd.f32 0.0, %v3998
      %4000 = vdwg.mxu0
      %4001 = vmatpush.msra.mxu0 0.0
      %4002 = vmatpush.msra.mxu0 0.0
      %4003 = vmatpush.msra.mxu0 0.0
      %4004 = vmatpush.msra.mxu0 0.0
      %4005 = vmatpush.msra.mxu0 0.0
      %4006 = vmatpush.msra.mxu0 0.0
      %4007 = vmatpush.msra.mxu0 0.0
      %4008 = vmatpush.msra.mxu0 0.0
      %4009 = vmatpush.msra.mxu0 0.0
      %4010 = vmatpush.msra.mxu0 0.0
      %4011 = vmatpush.msra.mxu0 0.0
      %4012 = vmatpush.msra.mxu0 0.0
      %4013 = vmatpush.msra.mxu0 0.0
      %4014 = vmatpush.msra.mxu0 0.0
      %4015 = vmatpush.msra.mxu0 0.0
      %4016 = vmatpush.msra.mxu0 %v3976
      %4017 = vmatmul.f32.gmra.mxu0 %v3979
      %v4018 = vpop.f32.mrf.mxu0
      %v4019 = vadd.f32 0.0, %v4018
      %4020 = vdwg.mxu0
      %v4021 = vadd.f32 %v1131, %v3999
      %v4022 = vadd.f32 %v1132, %v4019
      %vm4023 = vcmp.ge.f32.partialorder %v4021, 0.0
      %vm4024 = vcmp.ge.f32.partialorder %v4022, 0.0
      %v4025 = vmul.f32 %v4021, 0.01
      %v4026 = vmul.f32 %v4022, 0.01
      %v4027 = vsel %vm4023, %v4021, %v4025
      %v4028 = vsel %vm4024, %v4022, %v4026
      %v4029 = vmul.f32 %v4027, %v560
      %v4030 = vmul.f32 %v4028, %v561
      %v4031 = vmul.f32 %v4027, %v570
      %v4032 = vmul.f32 %v4028, %v571
      %4035 = vrot.lane.b32.xlu0 %v4029, 17
      %v4036 = vpop.permute.xlu0 %4035
      %4037 = vrot.lane.b32.xlu0 %v4030, 17
      %v4038 = vpop.permute.xlu0 %4037
      %v4039 = vsel %vm584, %v4036, %v4038
      %v4042 = vsel %vm584, 0.0, %v4036
      %v4043 = vld [vmem:[%s8] sm:$0xf]
      %4046 = vrot.lane.b32.xlu0 %v4027, 16
      %v4047 = vpop.permute.xlu0 %4046
      %4048 = vrot.lane.b32.xlu0 %v4028, 16
      %v4049 = vpop.permute.xlu0 %4048
      %v4050 = vsel %vm597, %v4047, %v4049
      %v4053 = vsel %vm597, 0.0, %v4047
      %s4054 = scalar_lea.vmem %s8, 4
      %v4055 = vld [vmem:[%s4054] sm:$0xf]
      %v4057 = vsel %vm1183, %v4055, 0
      %4059 = vmatpush.msra.mxu0 0.0
      %4060 = vmatpush.msra.mxu0 0.0
      %4061 = vmatpush.msra.mxu0 0.0
      %4062 = vmatpush.msra.mxu0 0.0
      %4063 = vmatpush.msra.mxu0 0.0
      %4064 = vmatpush.msra.mxu0 0.0
      %4065 = vmatpush.msra.mxu0 0.0
      %4066 = vmatpush.msra.mxu0 0.0
      %4067 = vmatpush.msra.mxu0 0.0
      %4068 = vmatpush.msra.mxu0 0.0
      %4069 = vmatpush.msra.mxu0 0.0
      %4070 = vmatpush.msra.mxu0 0.0
      %4071 = vmatpush.msra.mxu0 0.0
      %4072 = vmatpush.msra.mxu0 0.0
      %4073 = vmatpush.msra.mxu0 0.0
      %4074 = vmatpush.msra.mxu0 %v4053
      %4075 = vmatmul.f32.gmra.mxu0 %v4057
      %v4076 = vpop.f32.mrf.mxu0
      %v4077 = vadd.f32 0.0, %v4076
      %4078 = vdwg.mxu0
      %4079 = vmatpush.msra.mxu0 0.0
      %4080 = vmatpush.msra.mxu0 0.0
      %4081 = vmatpush.msra.mxu0 0.0
      %4082 = vmatpush.msra.mxu0 0.0
      %4083 = vmatpush.msra.mxu0 0.0
      %4084 = vmatpush.msra.mxu0 0.0
      %4085 = vmatpush.msra.mxu0 0.0
      %4086 = vmatpush.msra.mxu0 0.0
      %4087 = vmatpush.msra.mxu0 0.0
      %4088 = vmatpush.msra.mxu0 0.0
      %4089 = vmatpush.msra.mxu0 0.0
      %4090 = vmatpush.msra.mxu0 0.0
      %4091 = vmatpush.msra.mxu0 0.0
      %4092 = vmatpush.msra.mxu0 0.0
      %4093 = vmatpush.msra.mxu0 0.0
      %4094 = vmatpush.msra.mxu0 %v4050
      %4095 = vmatmul.f32.gmra.mxu0 %v4057
      %v4096 = vpop.f32.mrf.mxu0
      %v4097 = vadd.f32 0.0, %v4096
      %4098 = vdwg.mxu0
      %v4100 = vsel %vm1183, %v4043, 0
      %4102 = vmatpush.msra.mxu0 0.0
      %4103 = vmatpush.msra.mxu0 0.0
      %4104 = vmatpush.msra.mxu0 0.0
      %4105 = vmatpush.msra.mxu0 0.0
      %4106 = vmatpush.msra.mxu0 0.0
      %4107 = vmatpush.msra.mxu0 0.0
      %4108 = vmatpush.msra.mxu0 0.0
      %4109 = vmatpush.msra.mxu0 0.0
      %4110 = vmatpush.msra.mxu0 0.0
      %4111 = vmatpush.msra.mxu0 0.0
      %4112 = vmatpush.msra.mxu0 0.0
      %4113 = vmatpush.msra.mxu0 0.0
      %4114 = vmatpush.msra.mxu0 0.0
      %4115 = vmatpush.msra.mxu0 0.0
      %4116 = vmatpush.msra.mxu0 0.0
      %4117 = vmatpush.msra.mxu0 %v4042
      %4118 = vmatmul.f32.gmra.mxu0 %v4100
      %v4119 = vpop.f32.mrf.mxu0
      %v4120 = vadd.f32 %v4077, %v4119
      %4121 = vdwg.mxu0
      %4122 = vmatpush.msra.mxu0 0.0
      %4123 = vmatpush.msra.mxu0 0.0
      %4124 = vmatpush.msra.mxu0 0.0
      %4125 = vmatpush.msra.mxu0 0.0
      %4126 = vmatpush.msra.mxu0 0.0
      %4127 = vmatpush.msra.mxu0 0.0
      %4128 = vmatpush.msra.mxu0 0.0
      %4129 = vmatpush.msra.mxu0 0.0
      %4130 = vmatpush.msra.mxu0 0.0
      %4131 = vmatpush.msra.mxu0 0.0
      %4132 = vmatpush.msra.mxu0 0.0
      %4133 = vmatpush.msra.mxu0 0.0
      %4134 = vmatpush.msra.mxu0 0.0
      %4135 = vmatpush.msra.mxu0 0.0
      %4136 = vmatpush.msra.mxu0 0.0
      %4137 = vmatpush.msra.mxu0 %v4039
      %4138 = vmatmul.f32.gmra.mxu0 %v4100
      %v4139 = vpop.f32.mrf.mxu0
      %v4140 = vadd.f32 %v4097, %v4139
      %4141 = vdwg.mxu0
      %4144 = vrot.lane.b32.xlu0 %v4031, 15
      %v4145 = vpop.permute.xlu0 %4144
      %4146 = vrot.lane.b32.xlu0 %v4032, 15
      %v4147 = vpop.permute.xlu0 %4146
      %v4148 = vsel %vm708, %v4145, %v4147
      %v4151 = vsel %vm708, 0.0, %v4145
      %s4152 = scalar_lea.vmem %s8, 8
      %v4153 = vld [vmem:[%s4152] sm:$0xf]
      %v4155 = vsel %vm1183, %v4153, 0
      %4157 = vmatpush.msra.mxu0 0.0
      %4158 = vmatpush.msra.mxu0 0.0
      %4159 = vmatpush.msra.mxu0 0.0
      %4160 = vmatpush.msra.mxu0 0.0
      %4161 = vmatpush.msra.mxu0 0.0
      %4162 = vmatpush.msra.mxu0 0.0
      %4163 = vmatpush.msra.mxu0 0.0
      %4164 = vmatpush.msra.mxu0 0.0
      %4165 = vmatpush.msra.mxu0 0.0
      %4166 = vmatpush.msra.mxu0 0.0
      %4167 = vmatpush.msra.mxu0 0.0
      %4168 = vmatpush.msra.mxu0 0.0
      %4169 = vmatpush.msra.mxu0 0.0
      %4170 = vmatpush.msra.mxu0 0.0
      %4171 = vmatpush.msra.mxu0 0.0
      %4172 = vmatpush.msra.mxu0 %v4151
      %4173 = vmatmul.f32.gmra.mxu0 %v4155
      %v4174 = vpop.f32.mrf.mxu0
      %v4175 = vadd.f32 0.0, %v4174
      %4176 = vdwg.mxu0
      %4177 = vmatpush.msra.mxu0 0.0
      %4178 = vmatpush.msra.mxu0 0.0
      %4179 = vmatpush.msra.mxu0 0.0
      %4180 = vmatpush.msra.mxu0 0.0
      %4181 = vmatpush.msra.mxu0 0.0
      %4182 = vmatpush.msra.mxu0 0.0
      %4183 = vmatpush.msra.mxu0 0.0
      %4184 = vmatpush.msra.mxu0 0.0
      %4185 = vmatpush.msra.mxu0 0.0
      %4186 = vmatpush.msra.mxu0 0.0
      %4187 = vmatpush.msra.mxu0 0.0
      %4188 = vmatpush.msra.mxu0 0.0
      %4189 = vmatpush.msra.mxu0 0.0
      %4190 = vmatpush.msra.mxu0 0.0
      %4191 = vmatpush.msra.mxu0 0.0
      %4192 = vmatpush.msra.mxu0 %v4148
      %4193 = vmatmul.f32.gmra.mxu0 %v4155
      %v4194 = vpop.f32.mrf.mxu0
      %v4195 = vadd.f32 0.0, %v4194
      %4196 = vdwg.mxu0
      %v4197 = vadd.f32 %v4120, %v4175
      %v4198 = vadd.f32 %v4140, %v4195
      %4199 = vrot.lane.b32.xlu0 %v4029, 1
      %v4200 = vpop.permute.xlu0 %4199
      %4201 = vrot.lane.b32.xlu0 %v4030, 1
      %v4202 = vpop.permute.xlu0 %4201
      %v4203 = vsel %vm771, %v4200, %v4202
      %v4206 = vsel %vm771, 0.0, %v4200
      %s4207 = scalar_lea.vmem %s8, 12
      %v4208 = vld [vmem:[%s4207] sm:$0xf]
      %v4210 = vsel %vm1183, %v4208, 0
      %4212 = vmatpush.msra.mxu0 0.0
      %4213 = vmatpush.msra.mxu0 0.0
      %4214 = vmatpush.msra.mxu0 0.0
      %4215 = vmatpush.msra.mxu0 0.0
      %4216 = vmatpush.msra.mxu0 0.0
      %4217 = vmatpush.msra.mxu0 0.0
      %4218 = vmatpush.msra.mxu0 0.0
      %4219 = vmatpush.msra.mxu0 0.0
      %4220 = vmatpush.msra.mxu0 0.0
      %4221 = vmatpush.msra.mxu0 0.0
      %4222 = vmatpush.msra.mxu0 0.0
      %4223 = vmatpush.msra.mxu0 0.0
      %4224 = vmatpush.msra.mxu0 0.0
      %4225 = vmatpush.msra.mxu0 0.0
      %4226 = vmatpush.msra.mxu0 0.0
      %4227 = vmatpush.msra.mxu0 %v4206
      %4228 = vmatmul.f32.gmra.mxu0 %v4210
      %v4229 = vpop.f32.mrf.mxu0
      %v4230 = vadd.f32 0.0, %v4229
      %4231 = vdwg.mxu0
      %4232 = vmatpush.msra.mxu0 0.0
      %4233 = vmatpush.msra.mxu0 0.0
      %4234 = vmatpush.msra.mxu0 0.0
      %4235 = vmatpush.msra.mxu0 0.0
      %4236 = vmatpush.msra.mxu0 0.0
      %4237 = vmatpush.msra.mxu0 0.0
      %4238 = vmatpush.msra.mxu0 0.0
      %4239 = vmatpush.msra.mxu0 0.0
      %4240 = vmatpush.msra.mxu0 0.0
      %4241 = vmatpush.msra.mxu0 0.0
      %4242 = vmatpush.msra.mxu0 0.0
      %4243 = vmatpush.msra.mxu0 0.0
      %4244 = vmatpush.msra.mxu0 0.0
      %4245 = vmatpush.msra.mxu0 0.0
      %4246 = vmatpush.msra.mxu0 0.0
      %4247 = vmatpush.msra.mxu0 %v4203
      %4248 = vmatmul.f32.gmra.mxu0 %v4210
      %v4249 = vpop.f32.mrf.mxu0
      %v4250 = vadd.f32 0.0, %v4249
      %4251 = vdwg.mxu0
      %v4252 = vadd.f32 %v4197, %v4230
      %v4253 = vadd.f32 %v4198, %v4250
      %s4254 = scalar_lea.vmem %s8, 16
      %v4255 = vld [vmem:[%s4254] sm:$0xf]
      %v4257 = vsel %vm1183, %v4255, 0
      %4259 = vmatpush.msra.mxu0 0.0
      %4260 = vmatpush.msra.mxu0 0.0
      %4261 = vmatpush.msra.mxu0 0.0
      %4262 = vmatpush.msra.mxu0 0.0
      %4263 = vmatpush.msra.mxu0 0.0
      %4264 = vmatpush.msra.mxu0 0.0
      %4265 = vmatpush.msra.mxu0 0.0
      %4266 = vmatpush.msra.mxu0 0.0
      %4267 = vmatpush.msra.mxu0 0.0
      %4268 = vmatpush.msra.mxu0 0.0
      %4269 = vmatpush.msra.mxu0 0.0
      %4270 = vmatpush.msra.mxu0 0.0
      %4271 = vmatpush.msra.mxu0 0.0
      %4272 = vmatpush.msra.mxu0 0.0
      %4273 = vmatpush.msra.mxu0 0.0
      %4274 = vmatpush.msra.mxu0 %v4027
      %4275 = vmatmul.f32.gmra.mxu0 %v4257
      %v4276 = vpop.f32.mrf.mxu0
      %v4277 = vadd.f32 0.0, %v4276
      %4278 = vdwg.mxu0
      %4279 = vmatpush.msra.mxu0 0.0
      %4280 = vmatpush.msra.mxu0 0.0
      %4281 = vmatpush.msra.mxu0 0.0
      %4282 = vmatpush.msra.mxu0 0.0
      %4283 = vmatpush.msra.mxu0 0.0
      %4284 = vmatpush.msra.mxu0 0.0
      %4285 = vmatpush.msra.mxu0 0.0
      %4286 = vmatpush.msra.mxu0 0.0
      %4287 = vmatpush.msra.mxu0 0.0
      %4288 = vmatpush.msra.mxu0 0.0
      %4289 = vmatpush.msra.mxu0 0.0
      %4290 = vmatpush.msra.mxu0 0.0
      %4291 = vmatpush.msra.mxu0 0.0
      %4292 = vmatpush.msra.mxu0 0.0
      %4293 = vmatpush.msra.mxu0 0.0
      %4294 = vmatpush.msra.mxu0 %v4028
      %4295 = vmatmul.f32.gmra.mxu0 %v4257
      %v4296 = vpop.f32.mrf.mxu0
      %v4297 = vadd.f32 0.0, %v4296
      %4298 = vdwg.mxu0
      %v4299 = vadd.f32 %v4252, %v4277
      %v4300 = vadd.f32 %v4253, %v4297
      %4301 = vrot.lane.b32.xlu0 %v4031, 127
      %v4302 = vpop.permute.xlu0 %4301
      %4303 = vrot.lane.b32.xlu0 %v4032, 127
      %v4304 = vpop.permute.xlu0 %4303
      %v4305 = vsel %vm888, %v4302, %v4304
      %v4308 = vsel %vm888, %v4304, 0.0
      %s4309 = scalar_lea.vmem %s8, 20
      %v4310 = vld [vmem:[%s4309] sm:$0xf]
      %v4312 = vsel %vm1183, %v4310, 0
      %4314 = vmatpush.msra.mxu0 0.0
      %4315 = vmatpush.msra.mxu0 0.0
      %4316 = vmatpush.msra.mxu0 0.0
      %4317 = vmatpush.msra.mxu0 0.0
      %4318 = vmatpush.msra.mxu0 0.0
      %4319 = vmatpush.msra.mxu0 0.0
      %4320 = vmatpush.msra.mxu0 0.0
      %4321 = vmatpush.msra.mxu0 0.0
      %4322 = vmatpush.msra.mxu0 0.0
      %4323 = vmatpush.msra.mxu0 0.0
      %4324 = vmatpush.msra.mxu0 0.0
      %4325 = vmatpush.msra.mxu0 0.0
      %4326 = vmatpush.msra.mxu0 0.0
      %4327 = vmatpush.msra.mxu0 0.0
      %4328 = vmatpush.msra.mxu0 0.0
      %4329 = vmatpush.msra.mxu0 %v4305
      %4330 = vmatmul.f32.gmra.mxu0 %v4312
      %v4331 = vpop.f32.mrf.mxu0
      %v4332 = vadd.f32 0.0, %v4331
      %4333 = vdwg.mxu0
      %4334 = vmatpush.msra.mxu0 0.0
      %4335 = vmatpush.msra.mxu0 0.0
      %4336 = vmatpush.msra.mxu0 0.0
      %4337 = vmatpush.msra.mxu0 0.0
      %4338 = vmatpush.msra.mxu0 0.0
      %4339 = vmatpush.msra.mxu0 0.0
      %4340 = vmatpush.msra.mxu0 0.0
      %4341 = vmatpush.msra.mxu0 0.0
      %4342 = vmatpush.msra.mxu0 0.0
      %4343 = vmatpush.msra.mxu0 0.0
      %4344 = vmatpush.msra.mxu0 0.0
      %4345 = vmatpush.msra.mxu0 0.0
      %4346 = vmatpush.msra.mxu0 0.0
      %4347 = vmatpush.msra.mxu0 0.0
      %4348 = vmatpush.msra.mxu0 0.0
      %4349 = vmatpush.msra.mxu0 %v4308
      %4350 = vmatmul.f32.gmra.mxu0 %v4312
      %v4351 = vpop.f32.mrf.mxu0
      %v4352 = vadd.f32 0.0, %v4351
      %4353 = vdwg.mxu0
      %v4354 = vadd.f32 %v4299, %v4332
      %v4355 = vadd.f32 %v4300, %v4352
      %4356 = vrot.lane.b32.xlu0 %v4029, 113
      %v4357 = vpop.permute.xlu0 %4356
      %4358 = vrot.lane.b32.xlu0 %v4030, 113
      %v4359 = vpop.permute.xlu0 %4358
      %v4360 = vsel %vm951, %v4357, %v4359
      %v4363 = vsel %vm951, %v4359, 0.0
      %s4364 = scalar_lea.vmem %s8, 24
      %v4365 = vld [vmem:[%s4364] sm:$0xf]
      %v4367 = vsel %vm1183, %v4365, 0
      %4369 = vmatpush.msra.mxu0 0.0
      %4370 = vmatpush.msra.mxu0 0.0
      %4371 = vmatpush.msra.mxu0 0.0
      %4372 = vmatpush.msra.mxu0 0.0
      %4373 = vmatpush.msra.mxu0 0.0
      %4374 = vmatpush.msra.mxu0 0.0
      %4375 = vmatpush.msra.mxu0 0.0
      %4376 = vmatpush.msra.mxu0 0.0
      %4377 = vmatpush.msra.mxu0 0.0
      %4378 = vmatpush.msra.mxu0 0.0
      %4379 = vmatpush.msra.mxu0 0.0
      %4380 = vmatpush.msra.mxu0 0.0
      %4381 = vmatpush.msra.mxu0 0.0
      %4382 = vmatpush.msra.mxu0 0.0
      %4383 = vmatpush.msra.mxu0 0.0
      %4384 = vmatpush.msra.mxu0 %v4360
      %4385 = vmatmul.f32.gmra.mxu0 %v4367
      %v4386 = vpop.f32.mrf.mxu0
      %v4387 = vadd.f32 0.0, %v4386
      %4388 = vdwg.mxu0
      %4389 = vmatpush.msra.mxu0 0.0
      %4390 = vmatpush.msra.mxu0 0.0
      %4391 = vmatpush.msra.mxu0 0.0
      %4392 = vmatpush.msra.mxu0 0.0
      %4393 = vmatpush.msra.mxu0 0.0
      %4394 = vmatpush.msra.mxu0 0.0
      %4395 = vmatpush.msra.mxu0 0.0
      %4396 = vmatpush.msra.mxu0 0.0
      %4397 = vmatpush.msra.mxu0 0.0
      %4398 = vmatpush.msra.mxu0 0.0
      %4399 = vmatpush.msra.mxu0 0.0
      %4400 = vmatpush.msra.mxu0 0.0
      %4401 = vmatpush.msra.mxu0 0.0
      %4402 = vmatpush.msra.mxu0 0.0
      %4403 = vmatpush.msra.mxu0 0.0
      %4404 = vmatpush.msra.mxu0 %v4363
      %4405 = vmatmul.f32.gmra.mxu0 %v4367
      %v4406 = vpop.f32.mrf.mxu0
      %v4407 = vadd.f32 0.0, %v4406
      %4408 = vdwg.mxu0
      %v4409 = vadd.f32 %v4354, %v4387
      %v4410 = vadd.f32 %v4355, %v4407
      %4411 = vrot.lane.b32.xlu0 %v4027, 112
      %v4412 = vpop.permute.xlu0 %4411
      %4413 = vrot.lane.b32.xlu0 %v4028, 112
      %v4414 = vpop.permute.xlu0 %4413
      %v4415 = vsel %vm1014, %v4412, %v4414
      %v4418 = vsel %vm1014, %v4414, 0.0
      %s4419 = scalar_lea.vmem %s8, 28
      %v4420 = vld [vmem:[%s4419] sm:$0xf]
      %v4422 = vsel %vm1183, %v4420, 0
      %4424 = vmatpush.msra.mxu0 0.0
      %4425 = vmatpush.msra.mxu0 0.0
      %4426 = vmatpush.msra.mxu0 0.0
      %4427 = vmatpush.msra.mxu0 0.0
      %4428 = vmatpush.msra.mxu0 0.0
      %4429 = vmatpush.msra.mxu0 0.0
      %4430 = vmatpush.msra.mxu0 0.0
      %4431 = vmatpush.msra.mxu0 0.0
      %4432 = vmatpush.msra.mxu0 0.0
      %4433 = vmatpush.msra.mxu0 0.0
      %4434 = vmatpush.msra.mxu0 0.0
      %4435 = vmatpush.msra.mxu0 0.0
      %4436 = vmatpush.msra.mxu0 0.0
      %4437 = vmatpush.msra.mxu0 0.0
      %4438 = vmatpush.msra.mxu0 0.0
      %4439 = vmatpush.msra.mxu0 %v4415
      %4440 = vmatmul.f32.gmra.mxu0 %v4422
      %v4441 = vpop.f32.mrf.mxu0
      %v4442 = vadd.f32 0.0, %v4441
      %4443 = vdwg.mxu0
      %4444 = vmatpush.msra.mxu0 0.0
      %4445 = vmatpush.msra.mxu0 0.0
      %4446 = vmatpush.msra.mxu0 0.0
      %4447 = vmatpush.msra.mxu0 0.0
      %4448 = vmatpush.msra.mxu0 0.0
      %4449 = vmatpush.msra.mxu0 0.0
      %4450 = vmatpush.msra.mxu0 0.0
      %4451 = vmatpush.msra.mxu0 0.0
      %4452 = vmatpush.msra.mxu0 0.0
      %4453 = vmatpush.msra.mxu0 0.0
      %4454 = vmatpush.msra.mxu0 0.0
      %4455 = vmatpush.msra.mxu0 0.0
      %4456 = vmatpush.msra.mxu0 0.0
      %4457 = vmatpush.msra.mxu0 0.0
      %4458 = vmatpush.msra.mxu0 0.0
      %4459 = vmatpush.msra.mxu0 %v4418
      %4460 = vmatmul.f32.gmra.mxu0 %v4422
      %v4461 = vpop.f32.mrf.mxu0
      %v4462 = vadd.f32 0.0, %v4461
      %4463 = vdwg.mxu0
      %v4464 = vadd.f32 %v4409, %v4442
      %v4465 = vadd.f32 %v4410, %v4462
      %4466 = vrot.lane.b32.xlu0 %v4031, 111
      %v4467 = vpop.permute.xlu0 %4466
      %4468 = vrot.lane.b32.xlu0 %v4032, 111
      %v4469 = vpop.permute.xlu0 %4468
      %v4470 = vsel %vm1077, %v4467, %v4469
      %v4473 = vsel %vm1077, %v4469, 0.0
      %s4474 = scalar_lea.vmem %s8, 32
      %v4475 = vld [vmem:[%s4474] sm:$0xf]
      %v4477 = vsel %vm1183, %v4475, 0
      %4479 = vmatpush.msra.mxu0 0.0
      %4480 = vmatpush.msra.mxu0 0.0
      %4481 = vmatpush.msra.mxu0 0.0
      %4482 = vmatpush.msra.mxu0 0.0
      %4483 = vmatpush.msra.mxu0 0.0
      %4484 = vmatpush.msra.mxu0 0.0
      %4485 = vmatpush.msra.mxu0 0.0
      %4486 = vmatpush.msra.mxu0 0.0
      %4487 = vmatpush.msra.mxu0 0.0
      %4488 = vmatpush.msra.mxu0 0.0
      %4489 = vmatpush.msra.mxu0 0.0
      %4490 = vmatpush.msra.mxu0 0.0
      %4491 = vmatpush.msra.mxu0 0.0
      %4492 = vmatpush.msra.mxu0 0.0
      %4493 = vmatpush.msra.mxu0 0.0
      %4494 = vmatpush.msra.mxu0 %v4470
      %4495 = vmatmul.f32.gmra.mxu0 %v4477
      %v4496 = vpop.f32.mrf.mxu0
      %v4497 = vadd.f32 0.0, %v4496
      %4498 = vdwg.mxu0
      %4499 = vmatpush.msra.mxu0 0.0
      %4500 = vmatpush.msra.mxu0 0.0
      %4501 = vmatpush.msra.mxu0 0.0
      %4502 = vmatpush.msra.mxu0 0.0
      %4503 = vmatpush.msra.mxu0 0.0
      %4504 = vmatpush.msra.mxu0 0.0
      %4505 = vmatpush.msra.mxu0 0.0
      %4506 = vmatpush.msra.mxu0 0.0
      %4507 = vmatpush.msra.mxu0 0.0
      %4508 = vmatpush.msra.mxu0 0.0
      %4509 = vmatpush.msra.mxu0 0.0
      %4510 = vmatpush.msra.mxu0 0.0
      %4511 = vmatpush.msra.mxu0 0.0
      %4512 = vmatpush.msra.mxu0 0.0
      %4513 = vmatpush.msra.mxu0 0.0
      %4514 = vmatpush.msra.mxu0 %v4473
      %4515 = vmatmul.f32.gmra.mxu0 %v4477
      %v4516 = vpop.f32.mrf.mxu0
      %v4517 = vadd.f32 0.0, %v4516
      %4518 = vdwg.mxu0
      %v4519 = vadd.f32 %v4464, %v4497
      %v4520 = vadd.f32 %v4465, %v4517
      %v4523 = vrot.slane %v4520, 4
      %v4524 = vsel %vm563, %v4519, %v4523
      %v4526 = vsub.f32 %v556, %v4524
      %v4527 = vmul.f32 %v4526, %v564
      %v4528 = vmul.f32 %v4526, %v573
      %4530 = vst [vmem:[#allocation1] ss:$2 sm:$0xff] %v4527
      %v4531 = vld.sshfl [vmem:[#allocation1] sm:$0xff pattern:$0x75316420]
      %v4532 = vld.sshfl [vmem:[#allocation1 + $0x8] sm:$0xff pattern:$0x75316420]
      %4533 = vrot.lane.b32.xlu0 %v4531, 17
      %v4534 = vpop.permute.xlu0 %4533
      %4535 = vrot.lane.b32.xlu0 %v4532, 17
      %v4536 = vpop.permute.xlu0 %4535
      %v4537 = vsel %vm584, %v4534, %v4536
      %v4539 = vsel %vm584, 0.0, %v4534
      %v4540 = vld [vmem:[%s9] sm:$0xff]
      %4542 = vst [vmem:[#allocation1] ss:$2 sm:$0xff] %v4526
      %v4543 = vld.sshfl [vmem:[#allocation1] sm:$0xff pattern:$0x75316420]
      %v4544 = vld.sshfl [vmem:[#allocation1 + $0x8] sm:$0xff pattern:$0x75316420]
      %4545 = vrot.lane.b32.xlu0 %v4543, 16
      %v4546 = vpop.permute.xlu0 %4545
      %4547 = vrot.lane.b32.xlu0 %v4544, 16
      %v4548 = vpop.permute.xlu0 %4547
      %v4549 = vsel %vm597, %v4546, %v4548
      %v4551 = vsel %vm597, 0.0, %v4546
      %s4552 = scalar_lea.vmem %s9, 8
      %v4553 = vld [vmem:[%s4552] sm:$0xff]
      %v4555 = vsel %vm603, %v4553, 0
      %v4558 = vsel %vm563, %v4551, 0
      %v4560 = vsel %vm563, %v4549, 0
      %4562 = vmatpush.msra.mxu0 0.0
      %4563 = vmatpush.msra.mxu0 0.0
      %4564 = vmatpush.msra.mxu0 0.0
      %4565 = vmatpush.msra.mxu0 0.0
      %4566 = vmatpush.msra.mxu0 0.0
      %4567 = vmatpush.msra.mxu0 0.0
      %4568 = vmatpush.msra.mxu0 0.0
      %4569 = vmatpush.msra.mxu0 0.0
      %4570 = vmatpush.msra.mxu0 0.0
      %4571 = vmatpush.msra.mxu0 0.0
      %4572 = vmatpush.msra.mxu0 0.0
      %4573 = vmatpush.msra.mxu0 0.0
      %4574 = vmatpush.msra.mxu0 0.0
      %4575 = vmatpush.msra.mxu0 0.0
      %4576 = vmatpush.msra.mxu0 0.0
      %4577 = vmatpush.msra.mxu0 %v4558
      %4578 = vmatmul.f32.gmra.mxu0 %v4555
      %v4579 = vpop.f32.mrf.mxu0
      %v4580 = vadd.f32 0.0, %v4579
      %4581 = vdwg.mxu0
      %4582 = vmatpush.msra.mxu0 0.0
      %4583 = vmatpush.msra.mxu0 0.0
      %4584 = vmatpush.msra.mxu0 0.0
      %4585 = vmatpush.msra.mxu0 0.0
      %4586 = vmatpush.msra.mxu0 0.0
      %4587 = vmatpush.msra.mxu0 0.0
      %4588 = vmatpush.msra.mxu0 0.0
      %4589 = vmatpush.msra.mxu0 0.0
      %4590 = vmatpush.msra.mxu0 0.0
      %4591 = vmatpush.msra.mxu0 0.0
      %4592 = vmatpush.msra.mxu0 0.0
      %4593 = vmatpush.msra.mxu0 0.0
      %4594 = vmatpush.msra.mxu0 0.0
      %4595 = vmatpush.msra.mxu0 0.0
      %4596 = vmatpush.msra.mxu0 0.0
      %4597 = vmatpush.msra.mxu0 %v4560
      %4598 = vmatmul.f32.gmra.mxu0 %v4555
      %v4599 = vpop.f32.mrf.mxu0
      %v4600 = vadd.f32 0.0, %v4599
      %4601 = vdwg.mxu0
      %v4603 = vsel %vm603, %v4540, 0
      %v4606 = vsel %vm563, %v4539, 0
      %v4608 = vsel %vm563, %v4537, 0
      %4610 = vmatpush.msra.mxu0 0.0
      %4611 = vmatpush.msra.mxu0 0.0
      %4612 = vmatpush.msra.mxu0 0.0
      %4613 = vmatpush.msra.mxu0 0.0
      %4614 = vmatpush.msra.mxu0 0.0
      %4615 = vmatpush.msra.mxu0 0.0
      %4616 = vmatpush.msra.mxu0 0.0
      %4617 = vmatpush.msra.mxu0 0.0
      %4618 = vmatpush.msra.mxu0 0.0
      %4619 = vmatpush.msra.mxu0 0.0
      %4620 = vmatpush.msra.mxu0 0.0
      %4621 = vmatpush.msra.mxu0 0.0
      %4622 = vmatpush.msra.mxu0 0.0
      %4623 = vmatpush.msra.mxu0 0.0
      %4624 = vmatpush.msra.mxu0 0.0
      %4625 = vmatpush.msra.mxu0 %v4606
      %4626 = vmatmul.f32.gmra.mxu0 %v4603
      %v4627 = vpop.f32.mrf.mxu0
      %v4628 = vadd.f32 %v4580, %v4627
      %4629 = vdwg.mxu0
      %4630 = vmatpush.msra.mxu0 0.0
      %4631 = vmatpush.msra.mxu0 0.0
      %4632 = vmatpush.msra.mxu0 0.0
      %4633 = vmatpush.msra.mxu0 0.0
      %4634 = vmatpush.msra.mxu0 0.0
      %4635 = vmatpush.msra.mxu0 0.0
      %4636 = vmatpush.msra.mxu0 0.0
      %4637 = vmatpush.msra.mxu0 0.0
      %4638 = vmatpush.msra.mxu0 0.0
      %4639 = vmatpush.msra.mxu0 0.0
      %4640 = vmatpush.msra.mxu0 0.0
      %4641 = vmatpush.msra.mxu0 0.0
      %4642 = vmatpush.msra.mxu0 0.0
      %4643 = vmatpush.msra.mxu0 0.0
      %4644 = vmatpush.msra.mxu0 0.0
      %4645 = vmatpush.msra.mxu0 %v4608
      %4646 = vmatmul.f32.gmra.mxu0 %v4603
      %v4647 = vpop.f32.mrf.mxu0
      %v4648 = vadd.f32 %v4600, %v4647
      %4649 = vdwg.mxu0
      %4651 = vst [vmem:[#allocation1] ss:$2 sm:$0xff] %v4528
      %v4652 = vld.sshfl [vmem:[#allocation1] sm:$0xff pattern:$0x75316420]
      %v4653 = vld.sshfl [vmem:[#allocation1 + $0x8] sm:$0xff pattern:$0x75316420]
      %4654 = vrot.lane.b32.xlu0 %v4652, 15
      %v4655 = vpop.permute.xlu0 %4654
      %4656 = vrot.lane.b32.xlu0 %v4653, 15
      %v4657 = vpop.permute.xlu0 %4656
      %v4658 = vsel %vm708, %v4655, %v4657
      %v4660 = vsel %vm708, 0.0, %v4655
      %s4661 = scalar_lea.vmem %s9, 16
      %v4662 = vld [vmem:[%s4661] sm:$0xff]
      %v4664 = vsel %vm603, %v4662, 0
      %v4667 = vsel %vm563, %v4660, 0
      %v4669 = vsel %vm563, %v4658, 0
      %4671 = vmatpush.msra.mxu0 0.0
      %4672 = vmatpush.msra.mxu0 0.0
      %4673 = vmatpush.msra.mxu0 0.0
      %4674 = vmatpush.msra.mxu0 0.0
      %4675 = vmatpush.msra.mxu0 0.0
      %4676 = vmatpush.msra.mxu0 0.0
      %4677 = vmatpush.msra.mxu0 0.0
      %4678 = vmatpush.msra.mxu0 0.0
      %4679 = vmatpush.msra.mxu0 0.0
      %4680 = vmatpush.msra.mxu0 0.0
      %4681 = vmatpush.msra.mxu0 0.0
      %4682 = vmatpush.msra.mxu0 0.0
      %4683 = vmatpush.msra.mxu0 0.0
      %4684 = vmatpush.msra.mxu0 0.0
      %4685 = vmatpush.msra.mxu0 0.0
      %4686 = vmatpush.msra.mxu0 %v4667
      %4687 = vmatmul.f32.gmra.mxu0 %v4664
      %v4688 = vpop.f32.mrf.mxu0
      %v4689 = vadd.f32 0.0, %v4688
      %4690 = vdwg.mxu0
      %4691 = vmatpush.msra.mxu0 0.0
      %4692 = vmatpush.msra.mxu0 0.0
      %4693 = vmatpush.msra.mxu0 0.0
      %4694 = vmatpush.msra.mxu0 0.0
      %4695 = vmatpush.msra.mxu0 0.0
      %4696 = vmatpush.msra.mxu0 0.0
      %4697 = vmatpush.msra.mxu0 0.0
      %4698 = vmatpush.msra.mxu0 0.0
      %4699 = vmatpush.msra.mxu0 0.0
      %4700 = vmatpush.msra.mxu0 0.0
      %4701 = vmatpush.msra.mxu0 0.0
      %4702 = vmatpush.msra.mxu0 0.0
      %4703 = vmatpush.msra.mxu0 0.0
      %4704 = vmatpush.msra.mxu0 0.0
      %4705 = vmatpush.msra.mxu0 0.0
      %4706 = vmatpush.msra.mxu0 %v4669
      %4707 = vmatmul.f32.gmra.mxu0 %v4664
      %v4708 = vpop.f32.mrf.mxu0
      %v4709 = vadd.f32 0.0, %v4708
      %4710 = vdwg.mxu0
      %v4711 = vadd.f32 %v4628, %v4689
      %v4712 = vadd.f32 %v4648, %v4709
      %4713 = vst [vmem:[#allocation1] ss:$2 sm:$0xff] %v4527
      %v4714 = vld.sshfl [vmem:[#allocation1] sm:$0xff pattern:$0x75316420]
      %v4715 = vld.sshfl [vmem:[#allocation1 + $0x8] sm:$0xff pattern:$0x75316420]
      %4716 = vrot.lane.b32.xlu0 %v4714, 1
      %v4717 = vpop.permute.xlu0 %4716
      %4718 = vrot.lane.b32.xlu0 %v4715, 1
      %v4719 = vpop.permute.xlu0 %4718
      %v4720 = vsel %vm771, %v4717, %v4719
      %v4722 = vsel %vm771, 0.0, %v4717
      %s4723 = scalar_lea.vmem %s9, 24
      %v4724 = vld [vmem:[%s4723] sm:$0xff]
      %v4726 = vsel %vm603, %v4724, 0
      %v4729 = vsel %vm563, %v4722, 0
      %v4731 = vsel %vm563, %v4720, 0
      %4733 = vmatpush.msra.mxu0 0.0
      %4734 = vmatpush.msra.mxu0 0.0
      %4735 = vmatpush.msra.mxu0 0.0
      %4736 = vmatpush.msra.mxu0 0.0
      %4737 = vmatpush.msra.mxu0 0.0
      %4738 = vmatpush.msra.mxu0 0.0
      %4739 = vmatpush.msra.mxu0 0.0
      %4740 = vmatpush.msra.mxu0 0.0
      %4741 = vmatpush.msra.mxu0 0.0
      %4742 = vmatpush.msra.mxu0 0.0
      %4743 = vmatpush.msra.mxu0 0.0
      %4744 = vmatpush.msra.mxu0 0.0
      %4745 = vmatpush.msra.mxu0 0.0
      %4746 = vmatpush.msra.mxu0 0.0
      %4747 = vmatpush.msra.mxu0 0.0
      %4748 = vmatpush.msra.mxu0 %v4729
      %4749 = vmatmul.f32.gmra.mxu0 %v4726
      %v4750 = vpop.f32.mrf.mxu0
      %v4751 = vadd.f32 0.0, %v4750
      %4752 = vdwg.mxu0
      %4753 = vmatpush.msra.mxu0 0.0
      %4754 = vmatpush.msra.mxu0 0.0
      %4755 = vmatpush.msra.mxu0 0.0
      %4756 = vmatpush.msra.mxu0 0.0
      %4757 = vmatpush.msra.mxu0 0.0
      %4758 = vmatpush.msra.mxu0 0.0
      %4759 = vmatpush.msra.mxu0 0.0
      %4760 = vmatpush.msra.mxu0 0.0
      %4761 = vmatpush.msra.mxu0 0.0
      %4762 = vmatpush.msra.mxu0 0.0
      %4763 = vmatpush.msra.mxu0 0.0
      %4764 = vmatpush.msra.mxu0 0.0
      %4765 = vmatpush.msra.mxu0 0.0
      %4766 = vmatpush.msra.mxu0 0.0
      %4767 = vmatpush.msra.mxu0 0.0
      %4768 = vmatpush.msra.mxu0 %v4731
      %4769 = vmatmul.f32.gmra.mxu0 %v4726
      %v4770 = vpop.f32.mrf.mxu0
      %v4771 = vadd.f32 0.0, %v4770
      %4772 = vdwg.mxu0
      %v4773 = vadd.f32 %v4711, %v4751
      %v4774 = vadd.f32 %v4712, %v4771
      %s4775 = scalar_lea.vmem %s9, 32
      %v4776 = vld [vmem:[%s4775] sm:$0xff]
      %4777 = vst [vmem:[#allocation1] ss:$2 sm:$0xff] %v4526
      %v4778 = vld.sshfl [vmem:[#allocation1] sm:$0xff pattern:$0x75316420]
      %v4779 = vld.sshfl [vmem:[#allocation1 + $0x8] sm:$0xff pattern:$0x75316420]
      %v4781 = vsel %vm603, %v4776, 0
      %v4783 = vsel %vm563, %v4778, 0
      %v4785 = vsel %vm563, %v4779, 0
      %4787 = vmatpush.msra.mxu0 0.0
      %4788 = vmatpush.msra.mxu0 0.0
      %4789 = vmatpush.msra.mxu0 0.0
      %4790 = vmatpush.msra.mxu0 0.0
      %4791 = vmatpush.msra.mxu0 0.0
      %4792 = vmatpush.msra.mxu0 0.0
      %4793 = vmatpush.msra.mxu0 0.0
      %4794 = vmatpush.msra.mxu0 0.0
      %4795 = vmatpush.msra.mxu0 0.0
      %4796 = vmatpush.msra.mxu0 0.0
      %4797 = vmatpush.msra.mxu0 0.0
      %4798 = vmatpush.msra.mxu0 0.0
      %4799 = vmatpush.msra.mxu0 0.0
      %4800 = vmatpush.msra.mxu0 0.0
      %4801 = vmatpush.msra.mxu0 0.0
      %4802 = vmatpush.msra.mxu0 %v4783
      %4803 = vmatmul.f32.gmra.mxu0 %v4781
      %v4804 = vpop.f32.mrf.mxu0
      %v4805 = vadd.f32 0.0, %v4804
      %4806 = vdwg.mxu0
      %4807 = vmatpush.msra.mxu0 0.0
      %4808 = vmatpush.msra.mxu0 0.0
      %4809 = vmatpush.msra.mxu0 0.0
      %4810 = vmatpush.msra.mxu0 0.0
      %4811 = vmatpush.msra.mxu0 0.0
      %4812 = vmatpush.msra.mxu0 0.0
      %4813 = vmatpush.msra.mxu0 0.0
      %4814 = vmatpush.msra.mxu0 0.0
      %4815 = vmatpush.msra.mxu0 0.0
      %4816 = vmatpush.msra.mxu0 0.0
      %4817 = vmatpush.msra.mxu0 0.0
      %4818 = vmatpush.msra.mxu0 0.0
      %4819 = vmatpush.msra.mxu0 0.0
      %4820 = vmatpush.msra.mxu0 0.0
      %4821 = vmatpush.msra.mxu0 0.0
      %4822 = vmatpush.msra.mxu0 %v4785
      %4823 = vmatmul.f32.gmra.mxu0 %v4781
      %v4824 = vpop.f32.mrf.mxu0
      %v4825 = vadd.f32 0.0, %v4824
      %4826 = vdwg.mxu0
      %v4827 = vadd.f32 %v4773, %v4805
      %v4828 = vadd.f32 %v4774, %v4825
      %4829 = vst [vmem:[#allocation1] ss:$2 sm:$0xff] %v4528
      %v4830 = vld.sshfl [vmem:[#allocation1] sm:$0xff pattern:$0x75316420]
      %v4831 = vld.sshfl [vmem:[#allocation1 + $0x8] sm:$0xff pattern:$0x75316420]
      %4832 = vrot.lane.b32.xlu0 %v4830, 127
      %v4833 = vpop.permute.xlu0 %4832
      %4834 = vrot.lane.b32.xlu0 %v4831, 127
      %v4835 = vpop.permute.xlu0 %4834
      %v4836 = vsel %vm888, %v4833, %v4835
      %v4838 = vsel %vm888, %v4835, 0.0
      %s4839 = scalar_lea.vmem %s9, 40
      %v4840 = vld [vmem:[%s4839] sm:$0xff]
      %v4842 = vsel %vm603, %v4840, 0
      %v4844 = vsel %vm563, %v4836, 0
      %v4847 = vsel %vm563, %v4838, 0
      %4849 = vmatpush.msra.mxu0 0.0
      %4850 = vmatpush.msra.mxu0 0.0
      %4851 = vmatpush.msra.mxu0 0.0
      %4852 = vmatpush.msra.mxu0 0.0
      %4853 = vmatpush.msra.mxu0 0.0
      %4854 = vmatpush.msra.mxu0 0.0
      %4855 = vmatpush.msra.mxu0 0.0
      %4856 = vmatpush.msra.mxu0 0.0
      %4857 = vmatpush.msra.mxu0 0.0
      %4858 = vmatpush.msra.mxu0 0.0
      %4859 = vmatpush.msra.mxu0 0.0
      %4860 = vmatpush.msra.mxu0 0.0
      %4861 = vmatpush.msra.mxu0 0.0
      %4862 = vmatpush.msra.mxu0 0.0
      %4863 = vmatpush.msra.mxu0 0.0
      %4864 = vmatpush.msra.mxu0 %v4844
      %4865 = vmatmul.f32.gmra.mxu0 %v4842
      %v4866 = vpop.f32.mrf.mxu0
      %v4867 = vadd.f32 0.0, %v4866
      %4868 = vdwg.mxu0
      %4869 = vmatpush.msra.mxu0 0.0
      %4870 = vmatpush.msra.mxu0 0.0
      %4871 = vmatpush.msra.mxu0 0.0
      %4872 = vmatpush.msra.mxu0 0.0
      %4873 = vmatpush.msra.mxu0 0.0
      %4874 = vmatpush.msra.mxu0 0.0
      %4875 = vmatpush.msra.mxu0 0.0
      %4876 = vmatpush.msra.mxu0 0.0
      %4877 = vmatpush.msra.mxu0 0.0
      %4878 = vmatpush.msra.mxu0 0.0
      %4879 = vmatpush.msra.mxu0 0.0
      %4880 = vmatpush.msra.mxu0 0.0
      %4881 = vmatpush.msra.mxu0 0.0
      %4882 = vmatpush.msra.mxu0 0.0
      %4883 = vmatpush.msra.mxu0 0.0
      %4884 = vmatpush.msra.mxu0 %v4847
      %4885 = vmatmul.f32.gmra.mxu0 %v4842
      %v4886 = vpop.f32.mrf.mxu0
      %v4887 = vadd.f32 0.0, %v4886
      %4888 = vdwg.mxu0
      %v4889 = vadd.f32 %v4827, %v4867
      %v4890 = vadd.f32 %v4828, %v4887
      %4891 = vst [vmem:[#allocation1] ss:$2 sm:$0xff] %v4527
      %v4892 = vld.sshfl [vmem:[#allocation1] sm:$0xff pattern:$0x75316420]
      %v4893 = vld.sshfl [vmem:[#allocation1 + $0x8] sm:$0xff pattern:$0x75316420]
      %4894 = vrot.lane.b32.xlu0 %v4892, 113
      %v4895 = vpop.permute.xlu0 %4894
      %4896 = vrot.lane.b32.xlu0 %v4893, 113
      %v4897 = vpop.permute.xlu0 %4896
      %v4898 = vsel %vm951, %v4895, %v4897
      %v4900 = vsel %vm951, %v4897, 0.0
      %s4901 = scalar_lea.vmem %s9, 48
      %v4902 = vld [vmem:[%s4901] sm:$0xff]
      %v4904 = vsel %vm603, %v4902, 0
      %v4906 = vsel %vm563, %v4898, 0
      %v4909 = vsel %vm563, %v4900, 0
      %4911 = vmatpush.msra.mxu0 0.0
      %4912 = vmatpush.msra.mxu0 0.0
      %4913 = vmatpush.msra.mxu0 0.0
      %4914 = vmatpush.msra.mxu0 0.0
      %4915 = vmatpush.msra.mxu0 0.0
      %4916 = vmatpush.msra.mxu0 0.0
      %4917 = vmatpush.msra.mxu0 0.0
      %4918 = vmatpush.msra.mxu0 0.0
      %4919 = vmatpush.msra.mxu0 0.0
      %4920 = vmatpush.msra.mxu0 0.0
      %4921 = vmatpush.msra.mxu0 0.0
      %4922 = vmatpush.msra.mxu0 0.0
      %4923 = vmatpush.msra.mxu0 0.0
      %4924 = vmatpush.msra.mxu0 0.0
      %4925 = vmatpush.msra.mxu0 0.0
      %4926 = vmatpush.msra.mxu0 %v4906
      %4927 = vmatmul.f32.gmra.mxu0 %v4904
      %v4928 = vpop.f32.mrf.mxu0
      %v4929 = vadd.f32 0.0, %v4928
      %4930 = vdwg.mxu0
      %4931 = vmatpush.msra.mxu0 0.0
      %4932 = vmatpush.msra.mxu0 0.0
      %4933 = vmatpush.msra.mxu0 0.0
      %4934 = vmatpush.msra.mxu0 0.0
      %4935 = vmatpush.msra.mxu0 0.0
      %4936 = vmatpush.msra.mxu0 0.0
      %4937 = vmatpush.msra.mxu0 0.0
      %4938 = vmatpush.msra.mxu0 0.0
      %4939 = vmatpush.msra.mxu0 0.0
      %4940 = vmatpush.msra.mxu0 0.0
      %4941 = vmatpush.msra.mxu0 0.0
      %4942 = vmatpush.msra.mxu0 0.0
      %4943 = vmatpush.msra.mxu0 0.0
      %4944 = vmatpush.msra.mxu0 0.0
      %4945 = vmatpush.msra.mxu0 0.0
      %4946 = vmatpush.msra.mxu0 %v4909
      %4947 = vmatmul.f32.gmra.mxu0 %v4904
      %v4948 = vpop.f32.mrf.mxu0
      %v4949 = vadd.f32 0.0, %v4948
      %4950 = vdwg.mxu0
      %v4951 = vadd.f32 %v4889, %v4929
      %v4952 = vadd.f32 %v4890, %v4949
      %4953 = vst [vmem:[#allocation1] ss:$2 sm:$0xff] %v4526
      %v4954 = vld.sshfl [vmem:[#allocation1] sm:$0xff pattern:$0x75316420]
      %v4955 = vld.sshfl [vmem:[#allocation1 + $0x8] sm:$0xff pattern:$0x75316420]
      %4956 = vrot.lane.b32.xlu0 %v4954, 112
      %v4957 = vpop.permute.xlu0 %4956
      %4958 = vrot.lane.b32.xlu0 %v4955, 112
      %v4959 = vpop.permute.xlu0 %4958
      %v4960 = vsel %vm1014, %v4957, %v4959
      %v4962 = vsel %vm1014, %v4959, 0.0
      %s4963 = scalar_lea.vmem %s9, 56
      %v4964 = vld [vmem:[%s4963] sm:$0xff]
      %v4966 = vsel %vm603, %v4964, 0
      %v4968 = vsel %vm563, %v4960, 0
      %v4971 = vsel %vm563, %v4962, 0
      %4973 = vmatpush.msra.mxu0 0.0
      %4974 = vmatpush.msra.mxu0 0.0
      %4975 = vmatpush.msra.mxu0 0.0
      %4976 = vmatpush.msra.mxu0 0.0
      %4977 = vmatpush.msra.mxu0 0.0
      %4978 = vmatpush.msra.mxu0 0.0
      %4979 = vmatpush.msra.mxu0 0.0
      %4980 = vmatpush.msra.mxu0 0.0
      %4981 = vmatpush.msra.mxu0 0.0
      %4982 = vmatpush.msra.mxu0 0.0
      %4983 = vmatpush.msra.mxu0 0.0
      %4984 = vmatpush.msra.mxu0 0.0
      %4985 = vmatpush.msra.mxu0 0.0
      %4986 = vmatpush.msra.mxu0 0.0
      %4987 = vmatpush.msra.mxu0 0.0
      %4988 = vmatpush.msra.mxu0 %v4968
      %4989 = vmatmul.f32.gmra.mxu0 %v4966
      %v4990 = vpop.f32.mrf.mxu0
      %v4991 = vadd.f32 0.0, %v4990
      %4992 = vdwg.mxu0
      %4993 = vmatpush.msra.mxu0 0.0
      %4994 = vmatpush.msra.mxu0 0.0
      %4995 = vmatpush.msra.mxu0 0.0
      %4996 = vmatpush.msra.mxu0 0.0
      %4997 = vmatpush.msra.mxu0 0.0
      %4998 = vmatpush.msra.mxu0 0.0
      %4999 = vmatpush.msra.mxu0 0.0
      %5000 = vmatpush.msra.mxu0 0.0
      %5001 = vmatpush.msra.mxu0 0.0
      %5002 = vmatpush.msra.mxu0 0.0
      %5003 = vmatpush.msra.mxu0 0.0
      %5004 = vmatpush.msra.mxu0 0.0
      %5005 = vmatpush.msra.mxu0 0.0
      %5006 = vmatpush.msra.mxu0 0.0
      %5007 = vmatpush.msra.mxu0 0.0
      %5008 = vmatpush.msra.mxu0 %v4971
      %5009 = vmatmul.f32.gmra.mxu0 %v4966
      %v5010 = vpop.f32.mrf.mxu0
      %v5011 = vadd.f32 0.0, %v5010
      %5012 = vdwg.mxu0
      %v5013 = vadd.f32 %v4951, %v4991
      %v5014 = vadd.f32 %v4952, %v5011
      %5015 = vst [vmem:[#allocation1] ss:$2 sm:$0xff] %v4528
      %v5016 = vld.sshfl [vmem:[#allocation1] sm:$0xff pattern:$0x75316420]
      %v5017 = vld.sshfl [vmem:[#allocation1 + $0x8] sm:$0xff pattern:$0x75316420]
      %5018 = vrot.lane.b32.xlu0 %v5016, 111
      %v5019 = vpop.permute.xlu0 %5018
      %5020 = vrot.lane.b32.xlu0 %v5017, 111
      %v5021 = vpop.permute.xlu0 %5020
      %v5022 = vsel %vm1077, %v5019, %v5021
      %v5024 = vsel %vm1077, %v5021, 0.0
      %s5025 = scalar_lea.vmem %s9, 64
      %v5026 = vld [vmem:[%s5025] sm:$0xff]
      %v5028 = vsel %vm603, %v5026, 0
      %v5030 = vsel %vm563, %v5022, 0
      %v5033 = vsel %vm563, %v5024, 0
      %5035 = vmatpush.msra.mxu0 0.0
      %5036 = vmatpush.msra.mxu0 0.0
      %5037 = vmatpush.msra.mxu0 0.0
      %5038 = vmatpush.msra.mxu0 0.0
      %5039 = vmatpush.msra.mxu0 0.0
      %5040 = vmatpush.msra.mxu0 0.0
      %5041 = vmatpush.msra.mxu0 0.0
      %5042 = vmatpush.msra.mxu0 0.0
      %5043 = vmatpush.msra.mxu0 0.0
      %5044 = vmatpush.msra.mxu0 0.0
      %5045 = vmatpush.msra.mxu0 0.0
      %5046 = vmatpush.msra.mxu0 0.0
      %5047 = vmatpush.msra.mxu0 0.0
      %5048 = vmatpush.msra.mxu0 0.0
      %5049 = vmatpush.msra.mxu0 0.0
      %5050 = vmatpush.msra.mxu0 %v5030
      %5051 = vmatmul.f32.gmra.mxu0 %v5028
      %v5052 = vpop.f32.mrf.mxu0
      %v5053 = vadd.f32 0.0, %v5052
      %5054 = vdwg.mxu0
      %5055 = vmatpush.msra.mxu0 0.0
      %5056 = vmatpush.msra.mxu0 0.0
      %5057 = vmatpush.msra.mxu0 0.0
      %5058 = vmatpush.msra.mxu0 0.0
      %5059 = vmatpush.msra.mxu0 0.0
      %5060 = vmatpush.msra.mxu0 0.0
      %5061 = vmatpush.msra.mxu0 0.0
      %5062 = vmatpush.msra.mxu0 0.0
      %5063 = vmatpush.msra.mxu0 0.0
      %5064 = vmatpush.msra.mxu0 0.0
      %5065 = vmatpush.msra.mxu0 0.0
      %5066 = vmatpush.msra.mxu0 0.0
      %5067 = vmatpush.msra.mxu0 0.0
      %5068 = vmatpush.msra.mxu0 0.0
      %5069 = vmatpush.msra.mxu0 0.0
      %5070 = vmatpush.msra.mxu0 %v5033
      %5071 = vmatmul.f32.gmra.mxu0 %v5028
      %v5072 = vpop.f32.mrf.mxu0
      %v5073 = vadd.f32 0.0, %v5072
      %5074 = vdwg.mxu0
      %v5075 = vadd.f32 %v5013, %v5053
      %v5076 = vadd.f32 %v5014, %v5073
      %v5077 = vmul.f32 %v5075, %v1135
      %v5078 = vmul.f32 %v5076, %v1136
      %v5079 = vmul.f32 %v5075, %v560
      %v5080 = vmul.f32 %v5076, %v561
      %v5081 = vmul.f32 %v5075, %v570
      %v5082 = vmul.f32 %v5076, %v571
      %v5083 = vmul.f32 %v5075, %v1152
      %v5084 = vmul.f32 %v5076, %v1153
      %5087 = vrot.lane.b32.xlu0 %v5077, 34
      %v5088 = vpop.permute.xlu0 %5087
      %5089 = vrot.lane.b32.xlu0 %v5078, 34
      %v5090 = vpop.permute.xlu0 %5089
      %v5091 = vsel %vm1164, %v5088, %v5090
      %v5094 = vsel %vm1164, 0.0, %v5088
      %v5095 = vld [vmem:[%s10] sm:$0xff]
      %5098 = vrot.lane.b32.xlu0 %v5079, 33
      %v5099 = vpop.permute.xlu0 %5098
      %5100 = vrot.lane.b32.xlu0 %v5080, 33
      %v5101 = vpop.permute.xlu0 %5100
      %v5102 = vsel %vm1176, %v5099, %v5101
      %v5105 = vsel %vm1176, 0.0, %v5099
      %s5106 = scalar_lea.vmem %s10, 8
      %v5107 = vld [vmem:[%s5106] sm:$0xff]
      %v5109 = vsel %vm1183, %v5107, 0
      %5111 = vmatpush.msra.mxu0 0.0
      %5112 = vmatpush.msra.mxu0 0.0
      %5113 = vmatpush.msra.mxu0 0.0
      %5114 = vmatpush.msra.mxu0 0.0
      %5115 = vmatpush.msra.mxu0 0.0
      %5116 = vmatpush.msra.mxu0 0.0
      %5117 = vmatpush.msra.mxu0 0.0
      %5118 = vmatpush.msra.mxu0 0.0
      %5119 = vmatpush.msra.mxu0 0.0
      %5120 = vmatpush.msra.mxu0 0.0
      %5121 = vmatpush.msra.mxu0 0.0
      %5122 = vmatpush.msra.mxu0 0.0
      %5123 = vmatpush.msra.mxu0 0.0
      %5124 = vmatpush.msra.mxu0 0.0
      %5125 = vmatpush.msra.mxu0 0.0
      %5126 = vmatpush.msra.mxu0 %v5105
      %5127 = vmatmul.f32.gmra.mxu0 %v5109
      %v5128 = vpop.f32.mrf.mxu0
      %v5129 = vadd.f32 0.0, %v5128
      %5130 = vdwg.mxu0
      %5131 = vmatpush.msra.mxu0 0.0
      %5132 = vmatpush.msra.mxu0 0.0
      %5133 = vmatpush.msra.mxu0 0.0
      %5134 = vmatpush.msra.mxu0 0.0
      %5135 = vmatpush.msra.mxu0 0.0
      %5136 = vmatpush.msra.mxu0 0.0
      %5137 = vmatpush.msra.mxu0 0.0
      %5138 = vmatpush.msra.mxu0 0.0
      %5139 = vmatpush.msra.mxu0 0.0
      %5140 = vmatpush.msra.mxu0 0.0
      %5141 = vmatpush.msra.mxu0 0.0
      %5142 = vmatpush.msra.mxu0 0.0
      %5143 = vmatpush.msra.mxu0 0.0
      %5144 = vmatpush.msra.mxu0 0.0
      %5145 = vmatpush.msra.mxu0 0.0
      %5146 = vmatpush.msra.mxu0 %v5102
      %5147 = vmatmul.f32.gmra.mxu0 %v5109
      %v5148 = vpop.f32.mrf.mxu0
      %v5149 = vadd.f32 0.0, %v5148
      %5150 = vdwg.mxu0
      %v5152 = vsel %vm1183, %v5095, 0
      %5154 = vmatpush.msra.mxu0 0.0
      %5155 = vmatpush.msra.mxu0 0.0
      %5156 = vmatpush.msra.mxu0 0.0
      %5157 = vmatpush.msra.mxu0 0.0
      %5158 = vmatpush.msra.mxu0 0.0
      %5159 = vmatpush.msra.mxu0 0.0
      %5160 = vmatpush.msra.mxu0 0.0
      %5161 = vmatpush.msra.mxu0 0.0
      %5162 = vmatpush.msra.mxu0 0.0
      %5163 = vmatpush.msra.mxu0 0.0
      %5164 = vmatpush.msra.mxu0 0.0
      %5165 = vmatpush.msra.mxu0 0.0
      %5166 = vmatpush.msra.mxu0 0.0
      %5167 = vmatpush.msra.mxu0 0.0
      %5168 = vmatpush.msra.mxu0 0.0
      %5169 = vmatpush.msra.mxu0 %v5094
      %5170 = vmatmul.f32.gmra.mxu0 %v5152
      %v5171 = vpop.f32.mrf.mxu0
      %v5172 = vadd.f32 %v5129, %v5171
      %5173 = vdwg.mxu0
      %5174 = vmatpush.msra.mxu0 0.0
      %5175 = vmatpush.msra.mxu0 0.0
      %5176 = vmatpush.msra.mxu0 0.0
      %5177 = vmatpush.msra.mxu0 0.0
      %5178 = vmatpush.msra.mxu0 0.0
      %5179 = vmatpush.msra.mxu0 0.0
      %5180 = vmatpush.msra.mxu0 0.0
      %5181 = vmatpush.msra.mxu0 0.0
      %5182 = vmatpush.msra.mxu0 0.0
      %5183 = vmatpush.msra.mxu0 0.0
      %5184 = vmatpush.msra.mxu0 0.0
      %5185 = vmatpush.msra.mxu0 0.0
      %5186 = vmatpush.msra.mxu0 0.0
      %5187 = vmatpush.msra.mxu0 0.0
      %5188 = vmatpush.msra.mxu0 0.0
      %5189 = vmatpush.msra.mxu0 %v5091
      %5190 = vmatmul.f32.gmra.mxu0 %v5152
      %v5191 = vpop.f32.mrf.mxu0
      %v5192 = vadd.f32 %v5149, %v5191
      %5193 = vdwg.mxu0
      %5196 = vrot.lane.b32.xlu0 %v5075, 32
      %v5197 = vpop.permute.xlu0 %5196
      %5198 = vrot.lane.b32.xlu0 %v5076, 32
      %v5199 = vpop.permute.xlu0 %5198
      %v5200 = vsel %vm1276, %v5197, %v5199
      %v5203 = vsel %vm1276, 0.0, %v5197
      %s5204 = scalar_lea.vmem %s10, 16
      %v5205 = vld [vmem:[%s5204] sm:$0xff]
      %v5207 = vsel %vm1183, %v5205, 0
      %5209 = vmatpush.msra.mxu0 0.0
      %5210 = vmatpush.msra.mxu0 0.0
      %5211 = vmatpush.msra.mxu0 0.0
      %5212 = vmatpush.msra.mxu0 0.0
      %5213 = vmatpush.msra.mxu0 0.0
      %5214 = vmatpush.msra.mxu0 0.0
      %5215 = vmatpush.msra.mxu0 0.0
      %5216 = vmatpush.msra.mxu0 0.0
      %5217 = vmatpush.msra.mxu0 0.0
      %5218 = vmatpush.msra.mxu0 0.0
      %5219 = vmatpush.msra.mxu0 0.0
      %5220 = vmatpush.msra.mxu0 0.0
      %5221 = vmatpush.msra.mxu0 0.0
      %5222 = vmatpush.msra.mxu0 0.0
      %5223 = vmatpush.msra.mxu0 0.0
      %5224 = vmatpush.msra.mxu0 %v5203
      %5225 = vmatmul.f32.gmra.mxu0 %v5207
      %v5226 = vpop.f32.mrf.mxu0
      %v5227 = vadd.f32 0.0, %v5226
      %5228 = vdwg.mxu0
      %5229 = vmatpush.msra.mxu0 0.0
      %5230 = vmatpush.msra.mxu0 0.0
      %5231 = vmatpush.msra.mxu0 0.0
      %5232 = vmatpush.msra.mxu0 0.0
      %5233 = vmatpush.msra.mxu0 0.0
      %5234 = vmatpush.msra.mxu0 0.0
      %5235 = vmatpush.msra.mxu0 0.0
      %5236 = vmatpush.msra.mxu0 0.0
      %5237 = vmatpush.msra.mxu0 0.0
      %5238 = vmatpush.msra.mxu0 0.0
      %5239 = vmatpush.msra.mxu0 0.0
      %5240 = vmatpush.msra.mxu0 0.0
      %5241 = vmatpush.msra.mxu0 0.0
      %5242 = vmatpush.msra.mxu0 0.0
      %5243 = vmatpush.msra.mxu0 0.0
      %5244 = vmatpush.msra.mxu0 %v5200
      %5245 = vmatmul.f32.gmra.mxu0 %v5207
      %v5246 = vpop.f32.mrf.mxu0
      %v5247 = vadd.f32 0.0, %v5246
      %5248 = vdwg.mxu0
      %v5249 = vadd.f32 %v5172, %v5227
      %v5250 = vadd.f32 %v5192, %v5247
      %5253 = vrot.lane.b32.xlu0 %v5081, 31
      %v5254 = vpop.permute.xlu0 %5253
      %5255 = vrot.lane.b32.xlu0 %v5082, 31
      %v5256 = vpop.permute.xlu0 %5255
      %v5257 = vsel %vm1334, %v5254, %v5256
      %v5260 = vsel %vm1334, 0.0, %v5254
      %s5261 = scalar_lea.vmem %s10, 24
      %v5262 = vld [vmem:[%s5261] sm:$0xff]
      %v5264 = vsel %vm1183, %v5262, 0
      %5266 = vmatpush.msra.mxu0 0.0
      %5267 = vmatpush.msra.mxu0 0.0
      %5268 = vmatpush.msra.mxu0 0.0
      %5269 = vmatpush.msra.mxu0 0.0
      %5270 = vmatpush.msra.mxu0 0.0
      %5271 = vmatpush.msra.mxu0 0.0
      %5272 = vmatpush.msra.mxu0 0.0
      %5273 = vmatpush.msra.mxu0 0.0
      %5274 = vmatpush.msra.mxu0 0.0
      %5275 = vmatpush.msra.mxu0 0.0
      %5276 = vmatpush.msra.mxu0 0.0
      %5277 = vmatpush.msra.mxu0 0.0
      %5278 = vmatpush.msra.mxu0 0.0
      %5279 = vmatpush.msra.mxu0 0.0
      %5280 = vmatpush.msra.mxu0 0.0
      %5281 = vmatpush.msra.mxu0 %v5260
      %5282 = vmatmul.f32.gmra.mxu0 %v5264
      %v5283 = vpop.f32.mrf.mxu0
      %v5284 = vadd.f32 0.0, %v5283
      %5285 = vdwg.mxu0
      %5286 = vmatpush.msra.mxu0 0.0
      %5287 = vmatpush.msra.mxu0 0.0
      %5288 = vmatpush.msra.mxu0 0.0
      %5289 = vmatpush.msra.mxu0 0.0
      %5290 = vmatpush.msra.mxu0 0.0
      %5291 = vmatpush.msra.mxu0 0.0
      %5292 = vmatpush.msra.mxu0 0.0
      %5293 = vmatpush.msra.mxu0 0.0
      %5294 = vmatpush.msra.mxu0 0.0
      %5295 = vmatpush.msra.mxu0 0.0
      %5296 = vmatpush.msra.mxu0 0.0
      %5297 = vmatpush.msra.mxu0 0.0
      %5298 = vmatpush.msra.mxu0 0.0
      %5299 = vmatpush.msra.mxu0 0.0
      %5300 = vmatpush.msra.mxu0 0.0
      %5301 = vmatpush.msra.mxu0 %v5257
      %5302 = vmatmul.f32.gmra.mxu0 %v5264
      %v5303 = vpop.f32.mrf.mxu0
      %v5304 = vadd.f32 0.0, %v5303
      %5305 = vdwg.mxu0
      %v5306 = vadd.f32 %v5249, %v5284
      %v5307 = vadd.f32 %v5250, %v5304
      %5310 = vrot.lane.b32.xlu0 %v5083, 30
      %v5311 = vpop.permute.xlu0 %5310
      %5312 = vrot.lane.b32.xlu0 %v5084, 30
      %v5313 = vpop.permute.xlu0 %5312
      %v5314 = vsel %vm1392, %v5311, %v5313
      %v5317 = vsel %vm1392, 0.0, %v5311
      %s5318 = scalar_lea.vmem %s10, 32
      %v5319 = vld [vmem:[%s5318] sm:$0xff]
      %v5321 = vsel %vm1183, %v5319, 0
      %5323 = vmatpush.msra.mxu0 0.0
      %5324 = vmatpush.msra.mxu0 0.0
      %5325 = vmatpush.msra.mxu0 0.0
      %5326 = vmatpush.msra.mxu0 0.0
      %5327 = vmatpush.msra.mxu0 0.0
      %5328 = vmatpush.msra.mxu0 0.0
      %5329 = vmatpush.msra.mxu0 0.0
      %5330 = vmatpush.msra.mxu0 0.0
      %5331 = vmatpush.msra.mxu0 0.0
      %5332 = vmatpush.msra.mxu0 0.0
      %5333 = vmatpush.msra.mxu0 0.0
      %5334 = vmatpush.msra.mxu0 0.0
      %5335 = vmatpush.msra.mxu0 0.0
      %5336 = vmatpush.msra.mxu0 0.0
      %5337 = vmatpush.msra.mxu0 0.0
      %5338 = vmatpush.msra.mxu0 %v5317
      %5339 = vmatmul.f32.gmra.mxu0 %v5321
      %v5340 = vpop.f32.mrf.mxu0
      %v5341 = vadd.f32 0.0, %v5340
      %5342 = vdwg.mxu0
      %5343 = vmatpush.msra.mxu0 0.0
      %5344 = vmatpush.msra.mxu0 0.0
      %5345 = vmatpush.msra.mxu0 0.0
      %5346 = vmatpush.msra.mxu0 0.0
      %5347 = vmatpush.msra.mxu0 0.0
      %5348 = vmatpush.msra.mxu0 0.0
      %5349 = vmatpush.msra.mxu0 0.0
      %5350 = vmatpush.msra.mxu0 0.0
      %5351 = vmatpush.msra.mxu0 0.0
      %5352 = vmatpush.msra.mxu0 0.0
      %5353 = vmatpush.msra.mxu0 0.0
      %5354 = vmatpush.msra.mxu0 0.0
      %5355 = vmatpush.msra.mxu0 0.0
      %5356 = vmatpush.msra.mxu0 0.0
      %5357 = vmatpush.msra.mxu0 0.0
      %5358 = vmatpush.msra.mxu0 %v5314
      %5359 = vmatmul.f32.gmra.mxu0 %v5321
      %v5360 = vpop.f32.mrf.mxu0
      %v5361 = vadd.f32 0.0, %v5360
      %5362 = vdwg.mxu0
      %v5363 = vadd.f32 %v5306, %v5341
      %v5364 = vadd.f32 %v5307, %v5361
      %5365 = vrot.lane.b32.xlu0 %v5077, 18
      %v5366 = vpop.permute.xlu0 %5365
      %5367 = vrot.lane.b32.xlu0 %v5078, 18
      %v5368 = vpop.permute.xlu0 %5367
      %v5369 = vsel %vm1448, %v5366, %v5368
      %v5372 = vsel %vm1448, 0.0, %v5366
      %s5373 = scalar_lea.vmem %s10, 40
      %v5374 = vld [vmem:[%s5373] sm:$0xff]
      %v5376 = vsel %vm1183, %v5374, 0
      %5378 = vmatpush.msra.mxu0 0.0
      %5379 = vmatpush.msra.mxu0 0.0
      %5380 = vmatpush.msra.mxu0 0.0
      %5381 = vmatpush.msra.mxu0 0.0
      %5382 = vmatpush.msra.mxu0 0.0
      %5383 = vmatpush.msra.mxu0 0.0
      %5384 = vmatpush.msra.mxu0 0.0
      %5385 = vmatpush.msra.mxu0 0.0
      %5386 = vmatpush.msra.mxu0 0.0
      %5387 = vmatpush.msra.mxu0 0.0
      %5388 = vmatpush.msra.mxu0 0.0
      %5389 = vmatpush.msra.mxu0 0.0
      %5390 = vmatpush.msra.mxu0 0.0
      %5391 = vmatpush.msra.mxu0 0.0
      %5392 = vmatpush.msra.mxu0 0.0
      %5393 = vmatpush.msra.mxu0 %v5372
      %5394 = vmatmul.f32.gmra.mxu0 %v5376
      %v5395 = vpop.f32.mrf.mxu0
      %v5396 = vadd.f32 0.0, %v5395
      %5397 = vdwg.mxu0
      %5398 = vmatpush.msra.mxu0 0.0
      %5399 = vmatpush.msra.mxu0 0.0
      %5400 = vmatpush.msra.mxu0 0.0
      %5401 = vmatpush.msra.mxu0 0.0
      %5402 = vmatpush.msra.mxu0 0.0
      %5403 = vmatpush.msra.mxu0 0.0
      %5404 = vmatpush.msra.mxu0 0.0
      %5405 = vmatpush.msra.mxu0 0.0
      %5406 = vmatpush.msra.mxu0 0.0
      %5407 = vmatpush.msra.mxu0 0.0
      %5408 = vmatpush.msra.mxu0 0.0
      %5409 = vmatpush.msra.mxu0 0.0
      %5410 = vmatpush.msra.mxu0 0.0
      %5411 = vmatpush.msra.mxu0 0.0
      %5412 = vmatpush.msra.mxu0 0.0
      %5413 = vmatpush.msra.mxu0 %v5369
      %5414 = vmatmul.f32.gmra.mxu0 %v5376
      %v5415 = vpop.f32.mrf.mxu0
      %v5416 = vadd.f32 0.0, %v5415
      %5417 = vdwg.mxu0
      %v5418 = vadd.f32 %v5363, %v5396
      %v5419 = vadd.f32 %v5364, %v5416
      %5420 = vrot.lane.b32.xlu0 %v5079, 17
      %v5421 = vpop.permute.xlu0 %5420
      %5422 = vrot.lane.b32.xlu0 %v5080, 17
      %v5423 = vpop.permute.xlu0 %5422
      %v5424 = vsel %vm584, %v5421, %v5423
      %v5427 = vsel %vm584, 0.0, %v5421
      %s5428 = scalar_lea.vmem %s10, 48
      %v5429 = vld [vmem:[%s5428] sm:$0xff]
      %v5431 = vsel %vm1183, %v5429, 0
      %5433 = vmatpush.msra.mxu0 0.0
      %5434 = vmatpush.msra.mxu0 0.0
      %5435 = vmatpush.msra.mxu0 0.0
      %5436 = vmatpush.msra.mxu0 0.0
      %5437 = vmatpush.msra.mxu0 0.0
      %5438 = vmatpush.msra.mxu0 0.0
      %5439 = vmatpush.msra.mxu0 0.0
      %5440 = vmatpush.msra.mxu0 0.0
      %5441 = vmatpush.msra.mxu0 0.0
      %5442 = vmatpush.msra.mxu0 0.0
      %5443 = vmatpush.msra.mxu0 0.0
      %5444 = vmatpush.msra.mxu0 0.0
      %5445 = vmatpush.msra.mxu0 0.0
      %5446 = vmatpush.msra.mxu0 0.0
      %5447 = vmatpush.msra.mxu0 0.0
      %5448 = vmatpush.msra.mxu0 %v5427
      %5449 = vmatmul.f32.gmra.mxu0 %v5431
      %v5450 = vpop.f32.mrf.mxu0
      %v5451 = vadd.f32 0.0, %v5450
      %5452 = vdwg.mxu0
      %5453 = vmatpush.msra.mxu0 0.0
      %5454 = vmatpush.msra.mxu0 0.0
      %5455 = vmatpush.msra.mxu0 0.0
      %5456 = vmatpush.msra.mxu0 0.0
      %5457 = vmatpush.msra.mxu0 0.0
      %5458 = vmatpush.msra.mxu0 0.0
      %5459 = vmatpush.msra.mxu0 0.0
      %5460 = vmatpush.msra.mxu0 0.0
      %5461 = vmatpush.msra.mxu0 0.0
      %5462 = vmatpush.msra.mxu0 0.0
      %5463 = vmatpush.msra.mxu0 0.0
      %5464 = vmatpush.msra.mxu0 0.0
      %5465 = vmatpush.msra.mxu0 0.0
      %5466 = vmatpush.msra.mxu0 0.0
      %5467 = vmatpush.msra.mxu0 0.0
      %5468 = vmatpush.msra.mxu0 %v5424
      %5469 = vmatmul.f32.gmra.mxu0 %v5431
      %v5470 = vpop.f32.mrf.mxu0
      %v5471 = vadd.f32 0.0, %v5470
      %5472 = vdwg.mxu0
      %v5473 = vadd.f32 %v5418, %v5451
      %v5474 = vadd.f32 %v5419, %v5471
      %5475 = vrot.lane.b32.xlu0 %v5075, 16
      %v5476 = vpop.permute.xlu0 %5475
      %5477 = vrot.lane.b32.xlu0 %v5076, 16
      %v5478 = vpop.permute.xlu0 %5477
      %v5479 = vsel %vm597, %v5476, %v5478
      %v5482 = vsel %vm597, 0.0, %v5476
      %s5483 = scalar_lea.vmem %s10, 56
      %v5484 = vld [vmem:[%s5483] sm:$0xff]
      %v5486 = vsel %vm1183, %v5484, 0
      %5488 = vmatpush.msra.mxu0 0.0
      %5489 = vmatpush.msra.mxu0 0.0
      %5490 = vmatpush.msra.mxu0 0.0
      %5491 = vmatpush.msra.mxu0 0.0
      %5492 = vmatpush.msra.mxu0 0.0
      %5493 = vmatpush.msra.mxu0 0.0
      %5494 = vmatpush.msra.mxu0 0.0
      %5495 = vmatpush.msra.mxu0 0.0
      %5496 = vmatpush.msra.mxu0 0.0
      %5497 = vmatpush.msra.mxu0 0.0
      %5498 = vmatpush.msra.mxu0 0.0
      %5499 = vmatpush.msra.mxu0 0.0
      %5500 = vmatpush.msra.mxu0 0.0
      %5501 = vmatpush.msra.mxu0 0.0
      %5502 = vmatpush.msra.mxu0 0.0
      %5503 = vmatpush.msra.mxu0 %v5482
      %5504 = vmatmul.f32.gmra.mxu0 %v5486
      %v5505 = vpop.f32.mrf.mxu0
      %v5506 = vadd.f32 0.0, %v5505
      %5507 = vdwg.mxu0
      %5508 = vmatpush.msra.mxu0 0.0
      %5509 = vmatpush.msra.mxu0 0.0
      %5510 = vmatpush.msra.mxu0 0.0
      %5511 = vmatpush.msra.mxu0 0.0
      %5512 = vmatpush.msra.mxu0 0.0
      %5513 = vmatpush.msra.mxu0 0.0
      %5514 = vmatpush.msra.mxu0 0.0
      %5515 = vmatpush.msra.mxu0 0.0
      %5516 = vmatpush.msra.mxu0 0.0
      %5517 = vmatpush.msra.mxu0 0.0
      %5518 = vmatpush.msra.mxu0 0.0
      %5519 = vmatpush.msra.mxu0 0.0
      %5520 = vmatpush.msra.mxu0 0.0
      %5521 = vmatpush.msra.mxu0 0.0
      %5522 = vmatpush.msra.mxu0 0.0
      %5523 = vmatpush.msra.mxu0 %v5479
      %5524 = vmatmul.f32.gmra.mxu0 %v5486
      %v5525 = vpop.f32.mrf.mxu0
      %v5526 = vadd.f32 0.0, %v5525
      %5527 = vdwg.mxu0
      %v5528 = vadd.f32 %v5473, %v5506
      %v5529 = vadd.f32 %v5474, %v5526
      %5530 = vrot.lane.b32.xlu0 %v5081, 15
      %v5531 = vpop.permute.xlu0 %5530
      %5532 = vrot.lane.b32.xlu0 %v5082, 15
      %v5533 = vpop.permute.xlu0 %5532
      %v5534 = vsel %vm708, %v5531, %v5533
      %v5537 = vsel %vm708, 0.0, %v5531
      %s5538 = scalar_lea.vmem %s10, 64
      %v5539 = vld [vmem:[%s5538] sm:$0xff]
      %v5541 = vsel %vm1183, %v5539, 0
      %5543 = vmatpush.msra.mxu0 0.0
      %5544 = vmatpush.msra.mxu0 0.0
      %5545 = vmatpush.msra.mxu0 0.0
      %5546 = vmatpush.msra.mxu0 0.0
      %5547 = vmatpush.msra.mxu0 0.0
      %5548 = vmatpush.msra.mxu0 0.0
      %5549 = vmatpush.msra.mxu0 0.0
      %5550 = vmatpush.msra.mxu0 0.0
      %5551 = vmatpush.msra.mxu0 0.0
      %5552 = vmatpush.msra.mxu0 0.0
      %5553 = vmatpush.msra.mxu0 0.0
      %5554 = vmatpush.msra.mxu0 0.0
      %5555 = vmatpush.msra.mxu0 0.0
      %5556 = vmatpush.msra.mxu0 0.0
      %5557 = vmatpush.msra.mxu0 0.0
      %5558 = vmatpush.msra.mxu0 %v5537
      %5559 = vmatmul.f32.gmra.mxu0 %v5541
      %v5560 = vpop.f32.mrf.mxu0
      %v5561 = vadd.f32 0.0, %v5560
      %5562 = vdwg.mxu0
      %5563 = vmatpush.msra.mxu0 0.0
      %5564 = vmatpush.msra.mxu0 0.0
      %5565 = vmatpush.msra.mxu0 0.0
      %5566 = vmatpush.msra.mxu0 0.0
      %5567 = vmatpush.msra.mxu0 0.0
      %5568 = vmatpush.msra.mxu0 0.0
      %5569 = vmatpush.msra.mxu0 0.0
      %5570 = vmatpush.msra.mxu0 0.0
      %5571 = vmatpush.msra.mxu0 0.0
      %5572 = vmatpush.msra.mxu0 0.0
      %5573 = vmatpush.msra.mxu0 0.0
      %5574 = vmatpush.msra.mxu0 0.0
      %5575 = vmatpush.msra.mxu0 0.0
      %5576 = vmatpush.msra.mxu0 0.0
      %5577 = vmatpush.msra.mxu0 0.0
      %5578 = vmatpush.msra.mxu0 %v5534
      %5579 = vmatmul.f32.gmra.mxu0 %v5541
      %v5580 = vpop.f32.mrf.mxu0
      %v5581 = vadd.f32 0.0, %v5580
      %5582 = vdwg.mxu0
      %v5583 = vadd.f32 %v5528, %v5561
      %v5584 = vadd.f32 %v5529, %v5581
      %5585 = vrot.lane.b32.xlu0 %v5083, 14
      %v5586 = vpop.permute.xlu0 %5585
      %5587 = vrot.lane.b32.xlu0 %v5084, 14
      %v5588 = vpop.permute.xlu0 %5587
      %v5589 = vsel %vm1669, %v5586, %v5588
      %v5592 = vsel %vm1669, 0.0, %v5586
      %s5593 = scalar_lea.vmem %s10, 72
      %v5594 = vld [vmem:[%s5593] sm:$0xff]
      %v5596 = vsel %vm1183, %v5594, 0
      %5598 = vmatpush.msra.mxu0 0.0
      %5599 = vmatpush.msra.mxu0 0.0
      %5600 = vmatpush.msra.mxu0 0.0
      %5601 = vmatpush.msra.mxu0 0.0
      %5602 = vmatpush.msra.mxu0 0.0
      %5603 = vmatpush.msra.mxu0 0.0
      %5604 = vmatpush.msra.mxu0 0.0
      %5605 = vmatpush.msra.mxu0 0.0
      %5606 = vmatpush.msra.mxu0 0.0
      %5607 = vmatpush.msra.mxu0 0.0
      %5608 = vmatpush.msra.mxu0 0.0
      %5609 = vmatpush.msra.mxu0 0.0
      %5610 = vmatpush.msra.mxu0 0.0
      %5611 = vmatpush.msra.mxu0 0.0
      %5612 = vmatpush.msra.mxu0 0.0
      %5613 = vmatpush.msra.mxu0 %v5592
      %5614 = vmatmul.f32.gmra.mxu0 %v5596
      %v5615 = vpop.f32.mrf.mxu0
      %v5616 = vadd.f32 0.0, %v5615
      %5617 = vdwg.mxu0
      %5618 = vmatpush.msra.mxu0 0.0
      %5619 = vmatpush.msra.mxu0 0.0
      %5620 = vmatpush.msra.mxu0 0.0
      %5621 = vmatpush.msra.mxu0 0.0
      %5622 = vmatpush.msra.mxu0 0.0
      %5623 = vmatpush.msra.mxu0 0.0
      %5624 = vmatpush.msra.mxu0 0.0
      %5625 = vmatpush.msra.mxu0 0.0
      %5626 = vmatpush.msra.mxu0 0.0
      %5627 = vmatpush.msra.mxu0 0.0
      %5628 = vmatpush.msra.mxu0 0.0
      %5629 = vmatpush.msra.mxu0 0.0
      %5630 = vmatpush.msra.mxu0 0.0
      %5631 = vmatpush.msra.mxu0 0.0
      %5632 = vmatpush.msra.mxu0 0.0
      %5633 = vmatpush.msra.mxu0 %v5589
      %5634 = vmatmul.f32.gmra.mxu0 %v5596
      %v5635 = vpop.f32.mrf.mxu0
      %v5636 = vadd.f32 0.0, %v5635
      %5637 = vdwg.mxu0
      %v5638 = vadd.f32 %v5583, %v5616
      %v5639 = vadd.f32 %v5584, %v5636
      %5640 = vrot.lane.b32.xlu0 %v5077, 2
      %v5641 = vpop.permute.xlu0 %5640
      %5642 = vrot.lane.b32.xlu0 %v5078, 2
      %v5643 = vpop.permute.xlu0 %5642
      %v5644 = vsel %vm1725, %v5641, %v5643
      %v5647 = vsel %vm1725, 0.0, %v5641
      %s5648 = scalar_lea.vmem %s10, 80
      %v5649 = vld [vmem:[%s5648] sm:$0xff]
      %v5651 = vsel %vm1183, %v5649, 0
      %5653 = vmatpush.msra.mxu0 0.0
      %5654 = vmatpush.msra.mxu0 0.0
      %5655 = vmatpush.msra.mxu0 0.0
      %5656 = vmatpush.msra.mxu0 0.0
      %5657 = vmatpush.msra.mxu0 0.0
      %5658 = vmatpush.msra.mxu0 0.0
      %5659 = vmatpush.msra.mxu0 0.0
      %5660 = vmatpush.msra.mxu0 0.0
      %5661 = vmatpush.msra.mxu0 0.0
      %5662 = vmatpush.msra.mxu0 0.0
      %5663 = vmatpush.msra.mxu0 0.0
      %5664 = vmatpush.msra.mxu0 0.0
      %5665 = vmatpush.msra.mxu0 0.0
      %5666 = vmatpush.msra.mxu0 0.0
      %5667 = vmatpush.msra.mxu0 0.0
      %5668 = vmatpush.msra.mxu0 %v5647
      %5669 = vmatmul.f32.gmra.mxu0 %v5651
      %v5670 = vpop.f32.mrf.mxu0
      %v5671 = vadd.f32 0.0, %v5670
      %5672 = vdwg.mxu0
      %5673 = vmatpush.msra.mxu0 0.0
      %5674 = vmatpush.msra.mxu0 0.0
      %5675 = vmatpush.msra.mxu0 0.0
      %5676 = vmatpush.msra.mxu0 0.0
      %5677 = vmatpush.msra.mxu0 0.0
      %5678 = vmatpush.msra.mxu0 0.0
      %5679 = vmatpush.msra.mxu0 0.0
      %5680 = vmatpush.msra.mxu0 0.0
      %5681 = vmatpush.msra.mxu0 0.0
      %5682 = vmatpush.msra.mxu0 0.0
      %5683 = vmatpush.msra.mxu0 0.0
      %5684 = vmatpush.msra.mxu0 0.0
      %5685 = vmatpush.msra.mxu0 0.0
      %5686 = vmatpush.msra.mxu0 0.0
      %5687 = vmatpush.msra.mxu0 0.0
      %5688 = vmatpush.msra.mxu0 %v5644
      %5689 = vmatmul.f32.gmra.mxu0 %v5651
      %v5690 = vpop.f32.mrf.mxu0
      %v5691 = vadd.f32 0.0, %v5690
      %5692 = vdwg.mxu0
      %v5693 = vadd.f32 %v5638, %v5671
      %v5694 = vadd.f32 %v5639, %v5691
      %5695 = vrot.lane.b32.xlu0 %v5079, 1
      %v5696 = vpop.permute.xlu0 %5695
      %5697 = vrot.lane.b32.xlu0 %v5080, 1
      %v5698 = vpop.permute.xlu0 %5697
      %v5699 = vsel %vm771, %v5696, %v5698
      %v5702 = vsel %vm771, 0.0, %v5696
      %s5703 = scalar_lea.vmem %s10, 88
      %v5704 = vld [vmem:[%s5703] sm:$0xff]
      %v5706 = vsel %vm1183, %v5704, 0
      %5708 = vmatpush.msra.mxu0 0.0
      %5709 = vmatpush.msra.mxu0 0.0
      %5710 = vmatpush.msra.mxu0 0.0
      %5711 = vmatpush.msra.mxu0 0.0
      %5712 = vmatpush.msra.mxu0 0.0
      %5713 = vmatpush.msra.mxu0 0.0
      %5714 = vmatpush.msra.mxu0 0.0
      %5715 = vmatpush.msra.mxu0 0.0
      %5716 = vmatpush.msra.mxu0 0.0
      %5717 = vmatpush.msra.mxu0 0.0
      %5718 = vmatpush.msra.mxu0 0.0
      %5719 = vmatpush.msra.mxu0 0.0
      %5720 = vmatpush.msra.mxu0 0.0
      %5721 = vmatpush.msra.mxu0 0.0
      %5722 = vmatpush.msra.mxu0 0.0
      %5723 = vmatpush.msra.mxu0 %v5702
      %5724 = vmatmul.f32.gmra.mxu0 %v5706
      %v5725 = vpop.f32.mrf.mxu0
      %v5726 = vadd.f32 0.0, %v5725
      %5727 = vdwg.mxu0
      %5728 = vmatpush.msra.mxu0 0.0
      %5729 = vmatpush.msra.mxu0 0.0
      %5730 = vmatpush.msra.mxu0 0.0
      %5731 = vmatpush.msra.mxu0 0.0
      %5732 = vmatpush.msra.mxu0 0.0
      %5733 = vmatpush.msra.mxu0 0.0
      %5734 = vmatpush.msra.mxu0 0.0
      %5735 = vmatpush.msra.mxu0 0.0
      %5736 = vmatpush.msra.mxu0 0.0
      %5737 = vmatpush.msra.mxu0 0.0
      %5738 = vmatpush.msra.mxu0 0.0
      %5739 = vmatpush.msra.mxu0 0.0
      %5740 = vmatpush.msra.mxu0 0.0
      %5741 = vmatpush.msra.mxu0 0.0
      %5742 = vmatpush.msra.mxu0 0.0
      %5743 = vmatpush.msra.mxu0 %v5699
      %5744 = vmatmul.f32.gmra.mxu0 %v5706
      %v5745 = vpop.f32.mrf.mxu0
      %v5746 = vadd.f32 0.0, %v5745
      %5747 = vdwg.mxu0
      %v5748 = vadd.f32 %v5693, %v5726
      %v5749 = vadd.f32 %v5694, %v5746
      %s5750 = scalar_lea.vmem %s10, 96
      %v5751 = vld [vmem:[%s5750] sm:$0xff]
      %v5753 = vsel %vm1183, %v5751, 0
      %5755 = vmatpush.msra.mxu0 0.0
      %5756 = vmatpush.msra.mxu0 0.0
      %5757 = vmatpush.msra.mxu0 0.0
      %5758 = vmatpush.msra.mxu0 0.0
      %5759 = vmatpush.msra.mxu0 0.0
      %5760 = vmatpush.msra.mxu0 0.0
      %5761 = vmatpush.msra.mxu0 0.0
      %5762 = vmatpush.msra.mxu0 0.0
      %5763 = vmatpush.msra.mxu0 0.0
      %5764 = vmatpush.msra.mxu0 0.0
      %5765 = vmatpush.msra.mxu0 0.0
      %5766 = vmatpush.msra.mxu0 0.0
      %5767 = vmatpush.msra.mxu0 0.0
      %5768 = vmatpush.msra.mxu0 0.0
      %5769 = vmatpush.msra.mxu0 0.0
      %5770 = vmatpush.msra.mxu0 %v5075
      %5771 = vmatmul.f32.gmra.mxu0 %v5753
      %v5772 = vpop.f32.mrf.mxu0
      %v5773 = vadd.f32 0.0, %v5772
      %5774 = vdwg.mxu0
      %5775 = vmatpush.msra.mxu0 0.0
      %5776 = vmatpush.msra.mxu0 0.0
      %5777 = vmatpush.msra.mxu0 0.0
      %5778 = vmatpush.msra.mxu0 0.0
      %5779 = vmatpush.msra.mxu0 0.0
      %5780 = vmatpush.msra.mxu0 0.0
      %5781 = vmatpush.msra.mxu0 0.0
      %5782 = vmatpush.msra.mxu0 0.0
      %5783 = vmatpush.msra.mxu0 0.0
      %5784 = vmatpush.msra.mxu0 0.0
      %5785 = vmatpush.msra.mxu0 0.0
      %5786 = vmatpush.msra.mxu0 0.0
      %5787 = vmatpush.msra.mxu0 0.0
      %5788 = vmatpush.msra.mxu0 0.0
      %5789 = vmatpush.msra.mxu0 0.0
      %5790 = vmatpush.msra.mxu0 %v5076
      %5791 = vmatmul.f32.gmra.mxu0 %v5753
      %v5792 = vpop.f32.mrf.mxu0
      %v5793 = vadd.f32 0.0, %v5792
      %5794 = vdwg.mxu0
      %v5795 = vadd.f32 %v5748, %v5773
      %v5796 = vadd.f32 %v5749, %v5793
      %5797 = vrot.lane.b32.xlu0 %v5081, 127
      %v5798 = vpop.permute.xlu0 %5797
      %5799 = vrot.lane.b32.xlu0 %v5082, 127
      %v5800 = vpop.permute.xlu0 %5799
      %v5801 = vsel %vm888, %v5798, %v5800
      %v5804 = vsel %vm888, %v5800, 0.0
      %s5805 = scalar_lea.vmem %s10, 104
      %v5806 = vld [vmem:[%s5805] sm:$0xff]
      %v5808 = vsel %vm1183, %v5806, 0
      %5810 = vmatpush.msra.mxu0 0.0
      %5811 = vmatpush.msra.mxu0 0.0
      %5812 = vmatpush.msra.mxu0 0.0
      %5813 = vmatpush.msra.mxu0 0.0
      %5814 = vmatpush.msra.mxu0 0.0
      %5815 = vmatpush.msra.mxu0 0.0
      %5816 = vmatpush.msra.mxu0 0.0
      %5817 = vmatpush.msra.mxu0 0.0
      %5818 = vmatpush.msra.mxu0 0.0
      %5819 = vmatpush.msra.mxu0 0.0
      %5820 = vmatpush.msra.mxu0 0.0
      %5821 = vmatpush.msra.mxu0 0.0
      %5822 = vmatpush.msra.mxu0 0.0
      %5823 = vmatpush.msra.mxu0 0.0
      %5824 = vmatpush.msra.mxu0 0.0
      %5825 = vmatpush.msra.mxu0 %v5801
      %5826 = vmatmul.f32.gmra.mxu0 %v5808
      %v5827 = vpop.f32.mrf.mxu0
      %v5828 = vadd.f32 0.0, %v5827
      %5829 = vdwg.mxu0
      %5830 = vmatpush.msra.mxu0 0.0
      %5831 = vmatpush.msra.mxu0 0.0
      %5832 = vmatpush.msra.mxu0 0.0
      %5833 = vmatpush.msra.mxu0 0.0
      %5834 = vmatpush.msra.mxu0 0.0
      %5835 = vmatpush.msra.mxu0 0.0
      %5836 = vmatpush.msra.mxu0 0.0
      %5837 = vmatpush.msra.mxu0 0.0
      %5838 = vmatpush.msra.mxu0 0.0
      %5839 = vmatpush.msra.mxu0 0.0
      %5840 = vmatpush.msra.mxu0 0.0
      %5841 = vmatpush.msra.mxu0 0.0
      %5842 = vmatpush.msra.mxu0 0.0
      %5843 = vmatpush.msra.mxu0 0.0
      %5844 = vmatpush.msra.mxu0 0.0
      %5845 = vmatpush.msra.mxu0 %v5804
      %5846 = vmatmul.f32.gmra.mxu0 %v5808
      %v5847 = vpop.f32.mrf.mxu0
      %v5848 = vadd.f32 0.0, %v5847
      %5849 = vdwg.mxu0
      %v5850 = vadd.f32 %v5795, %v5828
      %v5851 = vadd.f32 %v5796, %v5848
      %5852 = vrot.lane.b32.xlu0 %v5083, 126
      %v5853 = vpop.permute.xlu0 %5852
      %5854 = vrot.lane.b32.xlu0 %v5084, 126
      %v5855 = vpop.permute.xlu0 %5854
      %v5856 = vsel %vm1938, %v5853, %v5855
      %v5859 = vsel %vm1938, %v5855, 0.0
      %s5860 = scalar_lea.vmem %s10, 112
      %v5861 = vld [vmem:[%s5860] sm:$0xff]
      %v5863 = vsel %vm1183, %v5861, 0
      %5865 = vmatpush.msra.mxu0 0.0
      %5866 = vmatpush.msra.mxu0 0.0
      %5867 = vmatpush.msra.mxu0 0.0
      %5868 = vmatpush.msra.mxu0 0.0
      %5869 = vmatpush.msra.mxu0 0.0
      %5870 = vmatpush.msra.mxu0 0.0
      %5871 = vmatpush.msra.mxu0 0.0
      %5872 = vmatpush.msra.mxu0 0.0
      %5873 = vmatpush.msra.mxu0 0.0
      %5874 = vmatpush.msra.mxu0 0.0
      %5875 = vmatpush.msra.mxu0 0.0
      %5876 = vmatpush.msra.mxu0 0.0
      %5877 = vmatpush.msra.mxu0 0.0
      %5878 = vmatpush.msra.mxu0 0.0
      %5879 = vmatpush.msra.mxu0 0.0
      %5880 = vmatpush.msra.mxu0 %v5856
      %5881 = vmatmul.f32.gmra.mxu0 %v5863
      %v5882 = vpop.f32.mrf.mxu0
      %v5883 = vadd.f32 0.0, %v5882
      %5884 = vdwg.mxu0
      %5885 = vmatpush.msra.mxu0 0.0
      %5886 = vmatpush.msra.mxu0 0.0
      %5887 = vmatpush.msra.mxu0 0.0
      %5888 = vmatpush.msra.mxu0 0.0
      %5889 = vmatpush.msra.mxu0 0.0
      %5890 = vmatpush.msra.mxu0 0.0
      %5891 = vmatpush.msra.mxu0 0.0
      %5892 = vmatpush.msra.mxu0 0.0
      %5893 = vmatpush.msra.mxu0 0.0
      %5894 = vmatpush.msra.mxu0 0.0
      %5895 = vmatpush.msra.mxu0 0.0
      %5896 = vmatpush.msra.mxu0 0.0
      %5897 = vmatpush.msra.mxu0 0.0
      %5898 = vmatpush.msra.mxu0 0.0
      %5899 = vmatpush.msra.mxu0 0.0
      %5900 = vmatpush.msra.mxu0 %v5859
      %5901 = vmatmul.f32.gmra.mxu0 %v5863
      %v5902 = vpop.f32.mrf.mxu0
      %v5903 = vadd.f32 0.0, %v5902
      %5904 = vdwg.mxu0
      %v5905 = vadd.f32 %v5850, %v5883
      %v5906 = vadd.f32 %v5851, %v5903
      %5907 = vrot.lane.b32.xlu0 %v5077, 114
      %v5908 = vpop.permute.xlu0 %5907
      %5909 = vrot.lane.b32.xlu0 %v5078, 114
      %v5910 = vpop.permute.xlu0 %5909
      %v5911 = vsel %vm1994, %v5908, %v5910
      %v5914 = vsel %vm1994, %v5910, 0.0
      %s5915 = scalar_lea.vmem %s10, 120
      %v5916 = vld [vmem:[%s5915] sm:$0xff]
      %v5918 = vsel %vm1183, %v5916, 0
      %5920 = vmatpush.msra.mxu0 0.0
      %5921 = vmatpush.msra.mxu0 0.0
      %5922 = vmatpush.msra.mxu0 0.0
      %5923 = vmatpush.msra.mxu0 0.0
      %5924 = vmatpush.msra.mxu0 0.0
      %5925 = vmatpush.msra.mxu0 0.0
      %5926 = vmatpush.msra.mxu0 0.0
      %5927 = vmatpush.msra.mxu0 0.0
      %5928 = vmatpush.msra.mxu0 0.0
      %5929 = vmatpush.msra.mxu0 0.0
      %5930 = vmatpush.msra.mxu0 0.0
      %5931 = vmatpush.msra.mxu0 0.0
      %5932 = vmatpush.msra.mxu0 0.0
      %5933 = vmatpush.msra.mxu0 0.0
      %5934 = vmatpush.msra.mxu0 0.0
      %5935 = vmatpush.msra.mxu0 %v5911
      %5936 = vmatmul.f32.gmra.mxu0 %v5918
      %v5937 = vpop.f32.mrf.mxu0
      %v5938 = vadd.f32 0.0, %v5937
      %5939 = vdwg.mxu0
      %5940 = vmatpush.msra.mxu0 0.0
      %5941 = vmatpush.msra.mxu0 0.0
      %5942 = vmatpush.msra.mxu0 0.0
      %5943 = vmatpush.msra.mxu0 0.0
      %5944 = vmatpush.msra.mxu0 0.0
      %5945 = vmatpush.msra.mxu0 0.0
      %5946 = vmatpush.msra.mxu0 0.0
      %5947 = vmatpush.msra.mxu0 0.0
      %5948 = vmatpush.msra.mxu0 0.0
      %5949 = vmatpush.msra.mxu0 0.0
      %5950 = vmatpush.msra.mxu0 0.0
      %5951 = vmatpush.msra.mxu0 0.0
      %5952 = vmatpush.msra.mxu0 0.0
      %5953 = vmatpush.msra.mxu0 0.0
      %5954 = vmatpush.msra.mxu0 0.0
      %5955 = vmatpush.msra.mxu0 %v5914
      %5956 = vmatmul.f32.gmra.mxu0 %v5918
      %v5957 = vpop.f32.mrf.mxu0
      %v5958 = vadd.f32 0.0, %v5957
      %5959 = vdwg.mxu0
      %v5960 = vadd.f32 %v5905, %v5938
      %v5961 = vadd.f32 %v5906, %v5958
      %5962 = vrot.lane.b32.xlu0 %v5079, 113
      %v5963 = vpop.permute.xlu0 %5962
      %5964 = vrot.lane.b32.xlu0 %v5080, 113
      %v5965 = vpop.permute.xlu0 %5964
      %v5966 = vsel %vm951, %v5963, %v5965
      %v5969 = vsel %vm951, %v5965, 0.0
      %s5970 = scalar_lea.vmem %s10, 128
      %v5971 = vld [vmem:[%s5970] sm:$0xff]
      %v5973 = vsel %vm1183, %v5971, 0
      %5975 = vmatpush.msra.mxu0 0.0
      %5976 = vmatpush.msra.mxu0 0.0
      %5977 = vmatpush.msra.mxu0 0.0
      %5978 = vmatpush.msra.mxu0 0.0
      %5979 = vmatpush.msra.mxu0 0.0
      %5980 = vmatpush.msra.mxu0 0.0
      %5981 = vmatpush.msra.mxu0 0.0
      %5982 = vmatpush.msra.mxu0 0.0
      %5983 = vmatpush.msra.mxu0 0.0
      %5984 = vmatpush.msra.mxu0 0.0
      %5985 = vmatpush.msra.mxu0 0.0
      %5986 = vmatpush.msra.mxu0 0.0
      %5987 = vmatpush.msra.mxu0 0.0
      %5988 = vmatpush.msra.mxu0 0.0
      %5989 = vmatpush.msra.mxu0 0.0
      %5990 = vmatpush.msra.mxu0 %v5966
      %5991 = vmatmul.f32.gmra.mxu0 %v5973
      %v5992 = vpop.f32.mrf.mxu0
      %v5993 = vadd.f32 0.0, %v5992
      %5994 = vdwg.mxu0
      %5995 = vmatpush.msra.mxu0 0.0
      %5996 = vmatpush.msra.mxu0 0.0
      %5997 = vmatpush.msra.mxu0 0.0
      %5998 = vmatpush.msra.mxu0 0.0
      %5999 = vmatpush.msra.mxu0 0.0
      %6000 = vmatpush.msra.mxu0 0.0
      %6001 = vmatpush.msra.mxu0 0.0
      %6002 = vmatpush.msra.mxu0 0.0
      %6003 = vmatpush.msra.mxu0 0.0
      %6004 = vmatpush.msra.mxu0 0.0
      %6005 = vmatpush.msra.mxu0 0.0
      %6006 = vmatpush.msra.mxu0 0.0
      %6007 = vmatpush.msra.mxu0 0.0
      %6008 = vmatpush.msra.mxu0 0.0
      %6009 = vmatpush.msra.mxu0 0.0
      %6010 = vmatpush.msra.mxu0 %v5969
      %6011 = vmatmul.f32.gmra.mxu0 %v5973
      %v6012 = vpop.f32.mrf.mxu0
      %v6013 = vadd.f32 0.0, %v6012
      %6014 = vdwg.mxu0
      %v6015 = vadd.f32 %v5960, %v5993
      %v6016 = vadd.f32 %v5961, %v6013
      %6017 = vrot.lane.b32.xlu0 %v5075, 112
      %v6018 = vpop.permute.xlu0 %6017
      %6019 = vrot.lane.b32.xlu0 %v5076, 112
      %v6020 = vpop.permute.xlu0 %6019
      %v6021 = vsel %vm1014, %v6018, %v6020
      %v6024 = vsel %vm1014, %v6020, 0.0
      %s6025 = scalar_lea.vmem %s10, 136
      %v6026 = vld [vmem:[%s6025] sm:$0xff]
      %v6028 = vsel %vm1183, %v6026, 0
      %6030 = vmatpush.msra.mxu0 0.0
      %6031 = vmatpush.msra.mxu0 0.0
      %6032 = vmatpush.msra.mxu0 0.0
      %6033 = vmatpush.msra.mxu0 0.0
      %6034 = vmatpush.msra.mxu0 0.0
      %6035 = vmatpush.msra.mxu0 0.0
      %6036 = vmatpush.msra.mxu0 0.0
      %6037 = vmatpush.msra.mxu0 0.0
      %6038 = vmatpush.msra.mxu0 0.0
      %6039 = vmatpush.msra.mxu0 0.0
      %6040 = vmatpush.msra.mxu0 0.0
      %6041 = vmatpush.msra.mxu0 0.0
      %6042 = vmatpush.msra.mxu0 0.0
      %6043 = vmatpush.msra.mxu0 0.0
      %6044 = vmatpush.msra.mxu0 0.0
      %6045 = vmatpush.msra.mxu0 %v6021
      %6046 = vmatmul.f32.gmra.mxu0 %v6028
      %v6047 = vpop.f32.mrf.mxu0
      %v6048 = vadd.f32 0.0, %v6047
      %6049 = vdwg.mxu0
      %6050 = vmatpush.msra.mxu0 0.0
      %6051 = vmatpush.msra.mxu0 0.0
      %6052 = vmatpush.msra.mxu0 0.0
      %6053 = vmatpush.msra.mxu0 0.0
      %6054 = vmatpush.msra.mxu0 0.0
      %6055 = vmatpush.msra.mxu0 0.0
      %6056 = vmatpush.msra.mxu0 0.0
      %6057 = vmatpush.msra.mxu0 0.0
      %6058 = vmatpush.msra.mxu0 0.0
      %6059 = vmatpush.msra.mxu0 0.0
      %6060 = vmatpush.msra.mxu0 0.0
      %6061 = vmatpush.msra.mxu0 0.0
      %6062 = vmatpush.msra.mxu0 0.0
      %6063 = vmatpush.msra.mxu0 0.0
      %6064 = vmatpush.msra.mxu0 0.0
      %6065 = vmatpush.msra.mxu0 %v6024
      %6066 = vmatmul.f32.gmra.mxu0 %v6028
      %v6067 = vpop.f32.mrf.mxu0
      %v6068 = vadd.f32 0.0, %v6067
      %6069 = vdwg.mxu0
      %v6070 = vadd.f32 %v6015, %v6048
      %v6071 = vadd.f32 %v6016, %v6068
      %6072 = vrot.lane.b32.xlu0 %v5081, 111
      %v6073 = vpop.permute.xlu0 %6072
      %6074 = vrot.lane.b32.xlu0 %v5082, 111
      %v6075 = vpop.permute.xlu0 %6074
      %v6076 = vsel %vm1077, %v6073, %v6075
      %v6079 = vsel %vm1077, %v6075, 0.0
      %s6080 = scalar_lea.vmem %s10, 144
      %v6081 = vld [vmem:[%s6080] sm:$0xff]
      %v6083 = vsel %vm1183, %v6081, 0
      %6085 = vmatpush.msra.mxu0 0.0
      %6086 = vmatpush.msra.mxu0 0.0
      %6087 = vmatpush.msra.mxu0 0.0
      %6088 = vmatpush.msra.mxu0 0.0
      %6089 = vmatpush.msra.mxu0 0.0
      %6090 = vmatpush.msra.mxu0 0.0
      %6091 = vmatpush.msra.mxu0 0.0
      %6092 = vmatpush.msra.mxu0 0.0
      %6093 = vmatpush.msra.mxu0 0.0
      %6094 = vmatpush.msra.mxu0 0.0
      %6095 = vmatpush.msra.mxu0 0.0
      %6096 = vmatpush.msra.mxu0 0.0
      %6097 = vmatpush.msra.mxu0 0.0
      %6098 = vmatpush.msra.mxu0 0.0
      %6099 = vmatpush.msra.mxu0 0.0
      %6100 = vmatpush.msra.mxu0 %v6076
      %6101 = vmatmul.f32.gmra.mxu0 %v6083
      %v6102 = vpop.f32.mrf.mxu0
      %v6103 = vadd.f32 0.0, %v6102
      %6104 = vdwg.mxu0
      %6105 = vmatpush.msra.mxu0 0.0
      %6106 = vmatpush.msra.mxu0 0.0
      %6107 = vmatpush.msra.mxu0 0.0
      %6108 = vmatpush.msra.mxu0 0.0
      %6109 = vmatpush.msra.mxu0 0.0
      %6110 = vmatpush.msra.mxu0 0.0
      %6111 = vmatpush.msra.mxu0 0.0
      %6112 = vmatpush.msra.mxu0 0.0
      %6113 = vmatpush.msra.mxu0 0.0
      %6114 = vmatpush.msra.mxu0 0.0
      %6115 = vmatpush.msra.mxu0 0.0
      %6116 = vmatpush.msra.mxu0 0.0
      %6117 = vmatpush.msra.mxu0 0.0
      %6118 = vmatpush.msra.mxu0 0.0
      %6119 = vmatpush.msra.mxu0 0.0
      %6120 = vmatpush.msra.mxu0 %v6079
      %6121 = vmatmul.f32.gmra.mxu0 %v6083
      %v6122 = vpop.f32.mrf.mxu0
      %v6123 = vadd.f32 0.0, %v6122
      %6124 = vdwg.mxu0
      %v6125 = vadd.f32 %v6070, %v6103
      %v6126 = vadd.f32 %v6071, %v6123
      %6127 = vrot.lane.b32.xlu0 %v5083, 110
      %v6128 = vpop.permute.xlu0 %6127
      %6129 = vrot.lane.b32.xlu0 %v5084, 110
      %v6130 = vpop.permute.xlu0 %6129
      %v6131 = vsel %vm2215, %v6128, %v6130
      %v6134 = vsel %vm2215, %v6130, 0.0
      %s6135 = scalar_lea.vmem %s10, 152
      %v6136 = vld [vmem:[%s6135] sm:$0xff]
      %v6138 = vsel %vm1183, %v6136, 0
      %6140 = vmatpush.msra.mxu0 0.0
      %6141 = vmatpush.msra.mxu0 0.0
      %6142 = vmatpush.msra.mxu0 0.0
      %6143 = vmatpush.msra.mxu0 0.0
      %6144 = vmatpush.msra.mxu0 0.0
      %6145 = vmatpush.msra.mxu0 0.0
      %6146 = vmatpush.msra.mxu0 0.0
      %6147 = vmatpush.msra.mxu0 0.0
      %6148 = vmatpush.msra.mxu0 0.0
      %6149 = vmatpush.msra.mxu0 0.0
      %6150 = vmatpush.msra.mxu0 0.0
      %6151 = vmatpush.msra.mxu0 0.0
      %6152 = vmatpush.msra.mxu0 0.0
      %6153 = vmatpush.msra.mxu0 0.0
      %6154 = vmatpush.msra.mxu0 0.0
      %6155 = vmatpush.msra.mxu0 %v6131
      %6156 = vmatmul.f32.gmra.mxu0 %v6138
      %v6157 = vpop.f32.mrf.mxu0
      %v6158 = vadd.f32 0.0, %v6157
      %6159 = vdwg.mxu0
      %6160 = vmatpush.msra.mxu0 0.0
      %6161 = vmatpush.msra.mxu0 0.0
      %6162 = vmatpush.msra.mxu0 0.0
      %6163 = vmatpush.msra.mxu0 0.0
      %6164 = vmatpush.msra.mxu0 0.0
      %6165 = vmatpush.msra.mxu0 0.0
      %6166 = vmatpush.msra.mxu0 0.0
      %6167 = vmatpush.msra.mxu0 0.0
      %6168 = vmatpush.msra.mxu0 0.0
      %6169 = vmatpush.msra.mxu0 0.0
      %6170 = vmatpush.msra.mxu0 0.0
      %6171 = vmatpush.msra.mxu0 0.0
      %6172 = vmatpush.msra.mxu0 0.0
      %6173 = vmatpush.msra.mxu0 0.0
      %6174 = vmatpush.msra.mxu0 0.0
      %6175 = vmatpush.msra.mxu0 %v6134
      %6176 = vmatmul.f32.gmra.mxu0 %v6138
      %v6177 = vpop.f32.mrf.mxu0
      %v6178 = vadd.f32 0.0, %v6177
      %6179 = vdwg.mxu0
      %v6180 = vadd.f32 %v6125, %v6158
      %v6181 = vadd.f32 %v6126, %v6178
      %6182 = vrot.lane.b32.xlu0 %v5077, 98
      %v6183 = vpop.permute.xlu0 %6182
      %6184 = vrot.lane.b32.xlu0 %v5078, 98
      %v6185 = vpop.permute.xlu0 %6184
      %v6186 = vsel %vm2271, %v6183, %v6185
      %v6189 = vsel %vm2271, %v6185, 0.0
      %s6190 = scalar_lea.vmem %s10, 160
      %v6191 = vld [vmem:[%s6190] sm:$0xff]
      %v6193 = vsel %vm1183, %v6191, 0
      %6195 = vmatpush.msra.mxu0 0.0
      %6196 = vmatpush.msra.mxu0 0.0
      %6197 = vmatpush.msra.mxu0 0.0
      %6198 = vmatpush.msra.mxu0 0.0
      %6199 = vmatpush.msra.mxu0 0.0
      %6200 = vmatpush.msra.mxu0 0.0
      %6201 = vmatpush.msra.mxu0 0.0
      %6202 = vmatpush.msra.mxu0 0.0
      %6203 = vmatpush.msra.mxu0 0.0
      %6204 = vmatpush.msra.mxu0 0.0
      %6205 = vmatpush.msra.mxu0 0.0
      %6206 = vmatpush.msra.mxu0 0.0
      %6207 = vmatpush.msra.mxu0 0.0
      %6208 = vmatpush.msra.mxu0 0.0
      %6209 = vmatpush.msra.mxu0 0.0
      %6210 = vmatpush.msra.mxu0 %v6186
      %6211 = vmatmul.f32.gmra.mxu0 %v6193
      %v6212 = vpop.f32.mrf.mxu0
      %v6213 = vadd.f32 0.0, %v6212
      %6214 = vdwg.mxu0
      %6215 = vmatpush.msra.mxu0 0.0
      %6216 = vmatpush.msra.mxu0 0.0
      %6217 = vmatpush.msra.mxu0 0.0
      %6218 = vmatpush.msra.mxu0 0.0
      %6219 = vmatpush.msra.mxu0 0.0
      %6220 = vmatpush.msra.mxu0 0.0
      %6221 = vmatpush.msra.mxu0 0.0
      %6222 = vmatpush.msra.mxu0 0.0
      %6223 = vmatpush.msra.mxu0 0.0
      %6224 = vmatpush.msra.mxu0 0.0
      %6225 = vmatpush.msra.mxu0 0.0
      %6226 = vmatpush.msra.mxu0 0.0
      %6227 = vmatpush.msra.mxu0 0.0
      %6228 = vmatpush.msra.mxu0 0.0
      %6229 = vmatpush.msra.mxu0 0.0
      %6230 = vmatpush.msra.mxu0 %v6189
      %6231 = vmatmul.f32.gmra.mxu0 %v6193
      %v6232 = vpop.f32.mrf.mxu0
      %v6233 = vadd.f32 0.0, %v6232
      %6234 = vdwg.mxu0
      %v6235 = vadd.f32 %v6180, %v6213
      %v6236 = vadd.f32 %v6181, %v6233
      %6237 = vrot.lane.b32.xlu0 %v5079, 97
      %v6238 = vpop.permute.xlu0 %6237
      %6239 = vrot.lane.b32.xlu0 %v5080, 97
      %v6240 = vpop.permute.xlu0 %6239
      %v6241 = vsel %vm2327, %v6238, %v6240
      %v6244 = vsel %vm2327, %v6240, 0.0
      %s6245 = scalar_lea.vmem %s10, 168
      %v6246 = vld [vmem:[%s6245] sm:$0xff]
      %v6248 = vsel %vm1183, %v6246, 0
      %6250 = vmatpush.msra.mxu0 0.0
      %6251 = vmatpush.msra.mxu0 0.0
      %6252 = vmatpush.msra.mxu0 0.0
      %6253 = vmatpush.msra.mxu0 0.0
      %6254 = vmatpush.msra.mxu0 0.0
      %6255 = vmatpush.msra.mxu0 0.0
      %6256 = vmatpush.msra.mxu0 0.0
      %6257 = vmatpush.msra.mxu0 0.0
      %6258 = vmatpush.msra.mxu0 0.0
      %6259 = vmatpush.msra.mxu0 0.0
      %6260 = vmatpush.msra.mxu0 0.0
      %6261 = vmatpush.msra.mxu0 0.0
      %6262 = vmatpush.msra.mxu0 0.0
      %6263 = vmatpush.msra.mxu0 0.0
      %6264 = vmatpush.msra.mxu0 0.0
      %6265 = vmatpush.msra.mxu0 %v6241
      %6266 = vmatmul.f32.gmra.mxu0 %v6248
      %v6267 = vpop.f32.mrf.mxu0
      %v6268 = vadd.f32 0.0, %v6267
      %6269 = vdwg.mxu0
      %6270 = vmatpush.msra.mxu0 0.0
      %6271 = vmatpush.msra.mxu0 0.0
      %6272 = vmatpush.msra.mxu0 0.0
      %6273 = vmatpush.msra.mxu0 0.0
      %6274 = vmatpush.msra.mxu0 0.0
      %6275 = vmatpush.msra.mxu0 0.0
      %6276 = vmatpush.msra.mxu0 0.0
      %6277 = vmatpush.msra.mxu0 0.0
      %6278 = vmatpush.msra.mxu0 0.0
      %6279 = vmatpush.msra.mxu0 0.0
      %6280 = vmatpush.msra.mxu0 0.0
      %6281 = vmatpush.msra.mxu0 0.0
      %6282 = vmatpush.msra.mxu0 0.0
      %6283 = vmatpush.msra.mxu0 0.0
      %6284 = vmatpush.msra.mxu0 0.0
      %6285 = vmatpush.msra.mxu0 %v6244
      %6286 = vmatmul.f32.gmra.mxu0 %v6248
      %v6287 = vpop.f32.mrf.mxu0
      %v6288 = vadd.f32 0.0, %v6287
      %6289 = vdwg.mxu0
      %v6290 = vadd.f32 %v6235, %v6268
      %v6291 = vadd.f32 %v6236, %v6288
      %6292 = vrot.lane.b32.xlu0 %v5075, 96
      %v6293 = vpop.permute.xlu0 %6292
      %6294 = vrot.lane.b32.xlu0 %v5076, 96
      %v6295 = vpop.permute.xlu0 %6294
      %v6296 = vsel %vm2383, %v6293, %v6295
      %v6299 = vsel %vm2383, %v6295, 0.0
      %s6300 = scalar_lea.vmem %s10, 176
      %v6301 = vld [vmem:[%s6300] sm:$0xff]
      %v6303 = vsel %vm1183, %v6301, 0
      %6305 = vmatpush.msra.mxu0 0.0
      %6306 = vmatpush.msra.mxu0 0.0
      %6307 = vmatpush.msra.mxu0 0.0
      %6308 = vmatpush.msra.mxu0 0.0
      %6309 = vmatpush.msra.mxu0 0.0
      %6310 = vmatpush.msra.mxu0 0.0
      %6311 = vmatpush.msra.mxu0 0.0
      %6312 = vmatpush.msra.mxu0 0.0
      %6313 = vmatpush.msra.mxu0 0.0
      %6314 = vmatpush.msra.mxu0 0.0
      %6315 = vmatpush.msra.mxu0 0.0
      %6316 = vmatpush.msra.mxu0 0.0
      %6317 = vmatpush.msra.mxu0 0.0
      %6318 = vmatpush.msra.mxu0 0.0
      %6319 = vmatpush.msra.mxu0 0.0
      %6320 = vmatpush.msra.mxu0 %v6296
      %6321 = vmatmul.f32.gmra.mxu0 %v6303
      %v6322 = vpop.f32.mrf.mxu0
      %v6323 = vadd.f32 0.0, %v6322
      %6324 = vdwg.mxu0
      %6325 = vmatpush.msra.mxu0 0.0
      %6326 = vmatpush.msra.mxu0 0.0
      %6327 = vmatpush.msra.mxu0 0.0
      %6328 = vmatpush.msra.mxu0 0.0
      %6329 = vmatpush.msra.mxu0 0.0
      %6330 = vmatpush.msra.mxu0 0.0
      %6331 = vmatpush.msra.mxu0 0.0
      %6332 = vmatpush.msra.mxu0 0.0
      %6333 = vmatpush.msra.mxu0 0.0
      %6334 = vmatpush.msra.mxu0 0.0
      %6335 = vmatpush.msra.mxu0 0.0
      %6336 = vmatpush.msra.mxu0 0.0
      %6337 = vmatpush.msra.mxu0 0.0
      %6338 = vmatpush.msra.mxu0 0.0
      %6339 = vmatpush.msra.mxu0 0.0
      %6340 = vmatpush.msra.mxu0 %v6299
      %6341 = vmatmul.f32.gmra.mxu0 %v6303
      %v6342 = vpop.f32.mrf.mxu0
      %v6343 = vadd.f32 0.0, %v6342
      %6344 = vdwg.mxu0
      %v6345 = vadd.f32 %v6290, %v6323
      %v6346 = vadd.f32 %v6291, %v6343
      %6347 = vrot.lane.b32.xlu0 %v5081, 95
      %v6348 = vpop.permute.xlu0 %6347
      %6349 = vrot.lane.b32.xlu0 %v5082, 95
      %v6350 = vpop.permute.xlu0 %6349
      %v6351 = vsel %vm2439, %v6348, %v6350
      %v6354 = vsel %vm2439, %v6350, 0.0
      %s6355 = scalar_lea.vmem %s10, 184
      %v6356 = vld [vmem:[%s6355] sm:$0xff]
      %v6358 = vsel %vm1183, %v6356, 0
      %6360 = vmatpush.msra.mxu0 0.0
      %6361 = vmatpush.msra.mxu0 0.0
      %6362 = vmatpush.msra.mxu0 0.0
      %6363 = vmatpush.msra.mxu0 0.0
      %6364 = vmatpush.msra.mxu0 0.0
      %6365 = vmatpush.msra.mxu0 0.0
      %6366 = vmatpush.msra.mxu0 0.0
      %6367 = vmatpush.msra.mxu0 0.0
      %6368 = vmatpush.msra.mxu0 0.0
      %6369 = vmatpush.msra.mxu0 0.0
      %6370 = vmatpush.msra.mxu0 0.0
      %6371 = vmatpush.msra.mxu0 0.0
      %6372 = vmatpush.msra.mxu0 0.0
      %6373 = vmatpush.msra.mxu0 0.0
      %6374 = vmatpush.msra.mxu0 0.0
      %6375 = vmatpush.msra.mxu0 %v6351
      %6376 = vmatmul.f32.gmra.mxu0 %v6358
      %v6377 = vpop.f32.mrf.mxu0
      %v6378 = vadd.f32 0.0, %v6377
      %6379 = vdwg.mxu0
      %6380 = vmatpush.msra.mxu0 0.0
      %6381 = vmatpush.msra.mxu0 0.0
      %6382 = vmatpush.msra.mxu0 0.0
      %6383 = vmatpush.msra.mxu0 0.0
      %6384 = vmatpush.msra.mxu0 0.0
      %6385 = vmatpush.msra.mxu0 0.0
      %6386 = vmatpush.msra.mxu0 0.0
      %6387 = vmatpush.msra.mxu0 0.0
      %6388 = vmatpush.msra.mxu0 0.0
      %6389 = vmatpush.msra.mxu0 0.0
      %6390 = vmatpush.msra.mxu0 0.0
      %6391 = vmatpush.msra.mxu0 0.0
      %6392 = vmatpush.msra.mxu0 0.0
      %6393 = vmatpush.msra.mxu0 0.0
      %6394 = vmatpush.msra.mxu0 0.0
      %6395 = vmatpush.msra.mxu0 %v6354
      %6396 = vmatmul.f32.gmra.mxu0 %v6358
      %v6397 = vpop.f32.mrf.mxu0
      %v6398 = vadd.f32 0.0, %v6397
      %6399 = vdwg.mxu0
      %v6400 = vadd.f32 %v6345, %v6378
      %v6401 = vadd.f32 %v6346, %v6398
      %6402 = vrot.lane.b32.xlu0 %v5083, 94
      %v6403 = vpop.permute.xlu0 %6402
      %6404 = vrot.lane.b32.xlu0 %v5084, 94
      %v6405 = vpop.permute.xlu0 %6404
      %v6406 = vsel %vm2495, %v6403, %v6405
      %v6409 = vsel %vm2495, %v6405, 0.0
      %s6410 = scalar_lea.vmem %s10, 192
      %v6411 = vld [vmem:[%s6410] sm:$0xff]
      %v6413 = vsel %vm1183, %v6411, 0
      %6415 = vmatpush.msra.mxu0 0.0
      %6416 = vmatpush.msra.mxu0 0.0
      %6417 = vmatpush.msra.mxu0 0.0
      %6418 = vmatpush.msra.mxu0 0.0
      %6419 = vmatpush.msra.mxu0 0.0
      %6420 = vmatpush.msra.mxu0 0.0
      %6421 = vmatpush.msra.mxu0 0.0
      %6422 = vmatpush.msra.mxu0 0.0
      %6423 = vmatpush.msra.mxu0 0.0
      %6424 = vmatpush.msra.mxu0 0.0
      %6425 = vmatpush.msra.mxu0 0.0
      %6426 = vmatpush.msra.mxu0 0.0
      %6427 = vmatpush.msra.mxu0 0.0
      %6428 = vmatpush.msra.mxu0 0.0
      %6429 = vmatpush.msra.mxu0 0.0
      %6430 = vmatpush.msra.mxu0 %v6406
      %6431 = vmatmul.f32.gmra.mxu0 %v6413
      %v6432 = vpop.f32.mrf.mxu0
      %v6433 = vadd.f32 0.0, %v6432
      %6434 = vdwg.mxu0
      %6435 = vmatpush.msra.mxu0 0.0
      %6436 = vmatpush.msra.mxu0 0.0
      %6437 = vmatpush.msra.mxu0 0.0
      %6438 = vmatpush.msra.mxu0 0.0
      %6439 = vmatpush.msra.mxu0 0.0
      %6440 = vmatpush.msra.mxu0 0.0
      %6441 = vmatpush.msra.mxu0 0.0
      %6442 = vmatpush.msra.mxu0 0.0
      %6443 = vmatpush.msra.mxu0 0.0
      %6444 = vmatpush.msra.mxu0 0.0
      %6445 = vmatpush.msra.mxu0 0.0
      %6446 = vmatpush.msra.mxu0 0.0
      %6447 = vmatpush.msra.mxu0 0.0
      %6448 = vmatpush.msra.mxu0 0.0
      %6449 = vmatpush.msra.mxu0 0.0
      %6450 = vmatpush.msra.mxu0 %v6409
      %6451 = vmatmul.f32.gmra.mxu0 %v6413
      %v6452 = vpop.f32.mrf.mxu0
      %v6453 = vadd.f32 0.0, %v6452
      %6454 = vdwg.mxu0
      %v6455 = vadd.f32 %v6400, %v6433
      %v6456 = vadd.f32 %v6401, %v6453
      %v6457 = vld [vmem:[%s11] sm:$0xff]
      %v6459 = vsel %vm1183, %v6457, 0
      %6461 = vmatpush.msra.mxu0 0.0
      %6462 = vmatpush.msra.mxu0 0.0
      %6463 = vmatpush.msra.mxu0 0.0
      %6464 = vmatpush.msra.mxu0 0.0
      %6465 = vmatpush.msra.mxu0 0.0
      %6466 = vmatpush.msra.mxu0 0.0
      %6467 = vmatpush.msra.mxu0 0.0
      %6468 = vmatpush.msra.mxu0 0.0
      %6469 = vmatpush.msra.mxu0 0.0
      %6470 = vmatpush.msra.mxu0 0.0
      %6471 = vmatpush.msra.mxu0 0.0
      %6472 = vmatpush.msra.mxu0 0.0
      %6473 = vmatpush.msra.mxu0 0.0
      %6474 = vmatpush.msra.mxu0 0.0
      %6475 = vmatpush.msra.mxu0 0.0
      %6476 = vmatpush.msra.mxu0 %v6455
      %6477 = vmatmul.f32.gmra.mxu0 %v6459
      %v6478 = vpop.f32.mrf.mxu0
      %v6479 = vadd.f32 0.0, %v6478
      %6480 = vdwg.mxu0
      %6481 = vmatpush.msra.mxu0 0.0
      %6482 = vmatpush.msra.mxu0 0.0
      %6483 = vmatpush.msra.mxu0 0.0
      %6484 = vmatpush.msra.mxu0 0.0
      %6485 = vmatpush.msra.mxu0 0.0
      %6486 = vmatpush.msra.mxu0 0.0
      %6487 = vmatpush.msra.mxu0 0.0
      %6488 = vmatpush.msra.mxu0 0.0
      %6489 = vmatpush.msra.mxu0 0.0
      %6490 = vmatpush.msra.mxu0 0.0
      %6491 = vmatpush.msra.mxu0 0.0
      %6492 = vmatpush.msra.mxu0 0.0
      %6493 = vmatpush.msra.mxu0 0.0
      %6494 = vmatpush.msra.mxu0 0.0
      %6495 = vmatpush.msra.mxu0 0.0
      %6496 = vmatpush.msra.mxu0 %v6456
      %6497 = vmatmul.f32.gmra.mxu0 %v6459
      %v6498 = vpop.f32.mrf.mxu0
      %v6499 = vadd.f32 0.0, %v6498
      %6500 = vdwg.mxu0
      %vm6501 = vcmp.ge.f32.partialorder %v6479, 0.0
      %vm6502 = vcmp.ge.f32.partialorder %v6499, 0.0
      %v6503 = vmul.f32 %v6479, 0.01
      %v6504 = vmul.f32 %v6499, 0.01
      %v6505 = vsel %vm6501, %v6479, %v6503
      %v6506 = vsel %vm6502, %v6499, %v6504
      %v6507 = vmul.f32 %v6505, %v1135
      %v6508 = vmul.f32 %v6506, %v1136
      %v6509 = vmul.f32 %v6505, %v560
      %v6510 = vmul.f32 %v6506, %v561
      %v6511 = vmul.f32 %v6505, %v570
      %v6512 = vmul.f32 %v6506, %v571
      %v6513 = vmul.f32 %v6505, %v1152
      %v6514 = vmul.f32 %v6506, %v1153
      %6517 = vrot.lane.b32.xlu0 %v6507, 34
      %v6518 = vpop.permute.xlu0 %6517
      %6519 = vrot.lane.b32.xlu0 %v6508, 34
      %v6520 = vpop.permute.xlu0 %6519
      %v6521 = vsel %vm1164, %v6518, %v6520
      %v6524 = vsel %vm1164, 0.0, %v6518
      %v6525 = vld [vmem:[%s12] sm:$0xff]
      %6528 = vrot.lane.b32.xlu0 %v6509, 33
      %v6529 = vpop.permute.xlu0 %6528
      %6530 = vrot.lane.b32.xlu0 %v6510, 33
      %v6531 = vpop.permute.xlu0 %6530
      %v6532 = vsel %vm1176, %v6529, %v6531
      %v6535 = vsel %vm1176, 0.0, %v6529
      %s6536 = scalar_lea.vmem %s12, 8
      %v6537 = vld [vmem:[%s6536] sm:$0xff]
      %v6539 = vsel %vm1183, %v6537, 0
      %6541 = vmatpush.msra.mxu0 0.0
      %6542 = vmatpush.msra.mxu0 0.0
      %6543 = vmatpush.msra.mxu0 0.0
      %6544 = vmatpush.msra.mxu0 0.0
      %6545 = vmatpush.msra.mxu0 0.0
      %6546 = vmatpush.msra.mxu0 0.0
      %6547 = vmatpush.msra.mxu0 0.0
      %6548 = vmatpush.msra.mxu0 0.0
      %6549 = vmatpush.msra.mxu0 0.0
      %6550 = vmatpush.msra.mxu0 0.0
      %6551 = vmatpush.msra.mxu0 0.0
      %6552 = vmatpush.msra.mxu0 0.0
      %6553 = vmatpush.msra.mxu0 0.0
      %6554 = vmatpush.msra.mxu0 0.0
      %6555 = vmatpush.msra.mxu0 0.0
      %6556 = vmatpush.msra.mxu0 %v6535
      %6557 = vmatmul.f32.gmra.mxu0 %v6539
      %v6558 = vpop.f32.mrf.mxu0
      %v6559 = vadd.f32 0.0, %v6558
      %6560 = vdwg.mxu0
      %6561 = vmatpush.msra.mxu0 0.0
      %6562 = vmatpush.msra.mxu0 0.0
      %6563 = vmatpush.msra.mxu0 0.0
      %6564 = vmatpush.msra.mxu0 0.0
      %6565 = vmatpush.msra.mxu0 0.0
      %6566 = vmatpush.msra.mxu0 0.0
      %6567 = vmatpush.msra.mxu0 0.0
      %6568 = vmatpush.msra.mxu0 0.0
      %6569 = vmatpush.msra.mxu0 0.0
      %6570 = vmatpush.msra.mxu0 0.0
      %6571 = vmatpush.msra.mxu0 0.0
      %6572 = vmatpush.msra.mxu0 0.0
      %6573 = vmatpush.msra.mxu0 0.0
      %6574 = vmatpush.msra.mxu0 0.0
      %6575 = vmatpush.msra.mxu0 0.0
      %6576 = vmatpush.msra.mxu0 %v6532
      %6577 = vmatmul.f32.gmra.mxu0 %v6539
      %v6578 = vpop.f32.mrf.mxu0
      %v6579 = vadd.f32 0.0, %v6578
      %6580 = vdwg.mxu0
      %v6582 = vsel %vm1183, %v6525, 0
      %6584 = vmatpush.msra.mxu0 0.0
      %6585 = vmatpush.msra.mxu0 0.0
      %6586 = vmatpush.msra.mxu0 0.0
      %6587 = vmatpush.msra.mxu0 0.0
      %6588 = vmatpush.msra.mxu0 0.0
      %6589 = vmatpush.msra.mxu0 0.0
      %6590 = vmatpush.msra.mxu0 0.0
      %6591 = vmatpush.msra.mxu0 0.0
      %6592 = vmatpush.msra.mxu0 0.0
      %6593 = vmatpush.msra.mxu0 0.0
      %6594 = vmatpush.msra.mxu0 0.0
      %6595 = vmatpush.msra.mxu0 0.0
      %6596 = vmatpush.msra.mxu0 0.0
      %6597 = vmatpush.msra.mxu0 0.0
      %6598 = vmatpush.msra.mxu0 0.0
      %6599 = vmatpush.msra.mxu0 %v6524
      %6600 = vmatmul.f32.gmra.mxu0 %v6582
      %v6601 = vpop.f32.mrf.mxu0
      %v6602 = vadd.f32 %v6559, %v6601
      %6603 = vdwg.mxu0
      %6604 = vmatpush.msra.mxu0 0.0
      %6605 = vmatpush.msra.mxu0 0.0
      %6606 = vmatpush.msra.mxu0 0.0
      %6607 = vmatpush.msra.mxu0 0.0
      %6608 = vmatpush.msra.mxu0 0.0
      %6609 = vmatpush.msra.mxu0 0.0
      %6610 = vmatpush.msra.mxu0 0.0
      %6611 = vmatpush.msra.mxu0 0.0
      %6612 = vmatpush.msra.mxu0 0.0
      %6613 = vmatpush.msra.mxu0 0.0
      %6614 = vmatpush.msra.mxu0 0.0
      %6615 = vmatpush.msra.mxu0 0.0
      %6616 = vmatpush.msra.mxu0 0.0
      %6617 = vmatpush.msra.mxu0 0.0
      %6618 = vmatpush.msra.mxu0 0.0
      %6619 = vmatpush.msra.mxu0 %v6521
      %6620 = vmatmul.f32.gmra.mxu0 %v6582
      %v6621 = vpop.f32.mrf.mxu0
      %v6622 = vadd.f32 %v6579, %v6621
      %6623 = vdwg.mxu0
      %6626 = vrot.lane.b32.xlu0 %v6505, 32
      %v6627 = vpop.permute.xlu0 %6626
      %6628 = vrot.lane.b32.xlu0 %v6506, 32
      %v6629 = vpop.permute.xlu0 %6628
      %v6630 = vsel %vm1276, %v6627, %v6629
      %v6633 = vsel %vm1276, 0.0, %v6627
      %s6634 = scalar_lea.vmem %s12, 16
      %v6635 = vld [vmem:[%s6634] sm:$0xff]
      %v6637 = vsel %vm1183, %v6635, 0
      %6639 = vmatpush.msra.mxu0 0.0
      %6640 = vmatpush.msra.mxu0 0.0
      %6641 = vmatpush.msra.mxu0 0.0
      %6642 = vmatpush.msra.mxu0 0.0
      %6643 = vmatpush.msra.mxu0 0.0
      %6644 = vmatpush.msra.mxu0 0.0
      %6645 = vmatpush.msra.mxu0 0.0
      %6646 = vmatpush.msra.mxu0 0.0
      %6647 = vmatpush.msra.mxu0 0.0
      %6648 = vmatpush.msra.mxu0 0.0
      %6649 = vmatpush.msra.mxu0 0.0
      %6650 = vmatpush.msra.mxu0 0.0
      %6651 = vmatpush.msra.mxu0 0.0
      %6652 = vmatpush.msra.mxu0 0.0
      %6653 = vmatpush.msra.mxu0 0.0
      %6654 = vmatpush.msra.mxu0 %v6633
      %6655 = vmatmul.f32.gmra.mxu0 %v6637
      %v6656 = vpop.f32.mrf.mxu0
      %v6657 = vadd.f32 0.0, %v6656
      %6658 = vdwg.mxu0
      %6659 = vmatpush.msra.mxu0 0.0
      %6660 = vmatpush.msra.mxu0 0.0
      %6661 = vmatpush.msra.mxu0 0.0
      %6662 = vmatpush.msra.mxu0 0.0
      %6663 = vmatpush.msra.mxu0 0.0
      %6664 = vmatpush.msra.mxu0 0.0
      %6665 = vmatpush.msra.mxu0 0.0
      %6666 = vmatpush.msra.mxu0 0.0
      %6667 = vmatpush.msra.mxu0 0.0
      %6668 = vmatpush.msra.mxu0 0.0
      %6669 = vmatpush.msra.mxu0 0.0
      %6670 = vmatpush.msra.mxu0 0.0
      %6671 = vmatpush.msra.mxu0 0.0
      %6672 = vmatpush.msra.mxu0 0.0
      %6673 = vmatpush.msra.mxu0 0.0
      %6674 = vmatpush.msra.mxu0 %v6630
      %6675 = vmatmul.f32.gmra.mxu0 %v6637
      %v6676 = vpop.f32.mrf.mxu0
      %v6677 = vadd.f32 0.0, %v6676
      %6678 = vdwg.mxu0
      %v6679 = vadd.f32 %v6602, %v6657
      %v6680 = vadd.f32 %v6622, %v6677
      %6683 = vrot.lane.b32.xlu0 %v6511, 31
      %v6684 = vpop.permute.xlu0 %6683
      %6685 = vrot.lane.b32.xlu0 %v6512, 31
      %v6686 = vpop.permute.xlu0 %6685
      %v6687 = vsel %vm1334, %v6684, %v6686
      %v6690 = vsel %vm1334, 0.0, %v6684
      %s6691 = scalar_lea.vmem %s12, 24
      %v6692 = vld [vmem:[%s6691] sm:$0xff]
      %v6694 = vsel %vm1183, %v6692, 0
      %6696 = vmatpush.msra.mxu0 0.0
      %6697 = vmatpush.msra.mxu0 0.0
      %6698 = vmatpush.msra.mxu0 0.0
      %6699 = vmatpush.msra.mxu0 0.0
      %6700 = vmatpush.msra.mxu0 0.0
      %6701 = vmatpush.msra.mxu0 0.0
      %6702 = vmatpush.msra.mxu0 0.0
      %6703 = vmatpush.msra.mxu0 0.0
      %6704 = vmatpush.msra.mxu0 0.0
      %6705 = vmatpush.msra.mxu0 0.0
      %6706 = vmatpush.msra.mxu0 0.0
      %6707 = vmatpush.msra.mxu0 0.0
      %6708 = vmatpush.msra.mxu0 0.0
      %6709 = vmatpush.msra.mxu0 0.0
      %6710 = vmatpush.msra.mxu0 0.0
      %6711 = vmatpush.msra.mxu0 %v6690
      %6712 = vmatmul.f32.gmra.mxu0 %v6694
      %v6713 = vpop.f32.mrf.mxu0
      %v6714 = vadd.f32 0.0, %v6713
      %6715 = vdwg.mxu0
      %6716 = vmatpush.msra.mxu0 0.0
      %6717 = vmatpush.msra.mxu0 0.0
      %6718 = vmatpush.msra.mxu0 0.0
      %6719 = vmatpush.msra.mxu0 0.0
      %6720 = vmatpush.msra.mxu0 0.0
      %6721 = vmatpush.msra.mxu0 0.0
      %6722 = vmatpush.msra.mxu0 0.0
      %6723 = vmatpush.msra.mxu0 0.0
      %6724 = vmatpush.msra.mxu0 0.0
      %6725 = vmatpush.msra.mxu0 0.0
      %6726 = vmatpush.msra.mxu0 0.0
      %6727 = vmatpush.msra.mxu0 0.0
      %6728 = vmatpush.msra.mxu0 0.0
      %6729 = vmatpush.msra.mxu0 0.0
      %6730 = vmatpush.msra.mxu0 0.0
      %6731 = vmatpush.msra.mxu0 %v6687
      %6732 = vmatmul.f32.gmra.mxu0 %v6694
      %v6733 = vpop.f32.mrf.mxu0
      %v6734 = vadd.f32 0.0, %v6733
      %6735 = vdwg.mxu0
      %v6736 = vadd.f32 %v6679, %v6714
      %v6737 = vadd.f32 %v6680, %v6734
      %6740 = vrot.lane.b32.xlu0 %v6513, 30
      %v6741 = vpop.permute.xlu0 %6740
      %6742 = vrot.lane.b32.xlu0 %v6514, 30
      %v6743 = vpop.permute.xlu0 %6742
      %v6744 = vsel %vm1392, %v6741, %v6743
      %v6747 = vsel %vm1392, 0.0, %v6741
      %s6748 = scalar_lea.vmem %s12, 32
      %v6749 = vld [vmem:[%s6748] sm:$0xff]
      %v6751 = vsel %vm1183, %v6749, 0
      %6753 = vmatpush.msra.mxu0 0.0
      %6754 = vmatpush.msra.mxu0 0.0
      %6755 = vmatpush.msra.mxu0 0.0
      %6756 = vmatpush.msra.mxu0 0.0
      %6757 = vmatpush.msra.mxu0 0.0
      %6758 = vmatpush.msra.mxu0 0.0
      %6759 = vmatpush.msra.mxu0 0.0
      %6760 = vmatpush.msra.mxu0 0.0
      %6761 = vmatpush.msra.mxu0 0.0
      %6762 = vmatpush.msra.mxu0 0.0
      %6763 = vmatpush.msra.mxu0 0.0
      %6764 = vmatpush.msra.mxu0 0.0
      %6765 = vmatpush.msra.mxu0 0.0
      %6766 = vmatpush.msra.mxu0 0.0
      %6767 = vmatpush.msra.mxu0 0.0
      %6768 = vmatpush.msra.mxu0 %v6747
      %6769 = vmatmul.f32.gmra.mxu0 %v6751
      %v6770 = vpop.f32.mrf.mxu0
      %v6771 = vadd.f32 0.0, %v6770
      %6772 = vdwg.mxu0
      %6773 = vmatpush.msra.mxu0 0.0
      %6774 = vmatpush.msra.mxu0 0.0
      %6775 = vmatpush.msra.mxu0 0.0
      %6776 = vmatpush.msra.mxu0 0.0
      %6777 = vmatpush.msra.mxu0 0.0
      %6778 = vmatpush.msra.mxu0 0.0
      %6779 = vmatpush.msra.mxu0 0.0
      %6780 = vmatpush.msra.mxu0 0.0
      %6781 = vmatpush.msra.mxu0 0.0
      %6782 = vmatpush.msra.mxu0 0.0
      %6783 = vmatpush.msra.mxu0 0.0
      %6784 = vmatpush.msra.mxu0 0.0
      %6785 = vmatpush.msra.mxu0 0.0
      %6786 = vmatpush.msra.mxu0 0.0
      %6787 = vmatpush.msra.mxu0 0.0
      %6788 = vmatpush.msra.mxu0 %v6744
      %6789 = vmatmul.f32.gmra.mxu0 %v6751
      %v6790 = vpop.f32.mrf.mxu0
      %v6791 = vadd.f32 0.0, %v6790
      %6792 = vdwg.mxu0
      %v6793 = vadd.f32 %v6736, %v6771
      %v6794 = vadd.f32 %v6737, %v6791
      %6795 = vrot.lane.b32.xlu0 %v6507, 18
      %v6796 = vpop.permute.xlu0 %6795
      %6797 = vrot.lane.b32.xlu0 %v6508, 18
      %v6798 = vpop.permute.xlu0 %6797
      %v6799 = vsel %vm1448, %v6796, %v6798
      %v6802 = vsel %vm1448, 0.0, %v6796
      %s6803 = scalar_lea.vmem %s12, 40
      %v6804 = vld [vmem:[%s6803] sm:$0xff]
      %v6806 = vsel %vm1183, %v6804, 0
      %6808 = vmatpush.msra.mxu0 0.0
      %6809 = vmatpush.msra.mxu0 0.0
      %6810 = vmatpush.msra.mxu0 0.0
      %6811 = vmatpush.msra.mxu0 0.0
      %6812 = vmatpush.msra.mxu0 0.0
      %6813 = vmatpush.msra.mxu0 0.0
      %6814 = vmatpush.msra.mxu0 0.0
      %6815 = vmatpush.msra.mxu0 0.0
      %6816 = vmatpush.msra.mxu0 0.0
      %6817 = vmatpush.msra.mxu0 0.0
      %6818 = vmatpush.msra.mxu0 0.0
      %6819 = vmatpush.msra.mxu0 0.0
      %6820 = vmatpush.msra.mxu0 0.0
      %6821 = vmatpush.msra.mxu0 0.0
      %6822 = vmatpush.msra.mxu0 0.0
      %6823 = vmatpush.msra.mxu0 %v6802
      %6824 = vmatmul.f32.gmra.mxu0 %v6806
      %v6825 = vpop.f32.mrf.mxu0
      %v6826 = vadd.f32 0.0, %v6825
      %6827 = vdwg.mxu0
      %6828 = vmatpush.msra.mxu0 0.0
      %6829 = vmatpush.msra.mxu0 0.0
      %6830 = vmatpush.msra.mxu0 0.0
      %6831 = vmatpush.msra.mxu0 0.0
      %6832 = vmatpush.msra.mxu0 0.0
      %6833 = vmatpush.msra.mxu0 0.0
      %6834 = vmatpush.msra.mxu0 0.0
      %6835 = vmatpush.msra.mxu0 0.0
      %6836 = vmatpush.msra.mxu0 0.0
      %6837 = vmatpush.msra.mxu0 0.0
      %6838 = vmatpush.msra.mxu0 0.0
      %6839 = vmatpush.msra.mxu0 0.0
      %6840 = vmatpush.msra.mxu0 0.0
      %6841 = vmatpush.msra.mxu0 0.0
      %6842 = vmatpush.msra.mxu0 0.0
      %6843 = vmatpush.msra.mxu0 %v6799
      %6844 = vmatmul.f32.gmra.mxu0 %v6806
      %v6845 = vpop.f32.mrf.mxu0
      %v6846 = vadd.f32 0.0, %v6845
      %6847 = vdwg.mxu0
      %v6848 = vadd.f32 %v6793, %v6826
      %v6849 = vadd.f32 %v6794, %v6846
      %6850 = vrot.lane.b32.xlu0 %v6509, 17
      %v6851 = vpop.permute.xlu0 %6850
      %6852 = vrot.lane.b32.xlu0 %v6510, 17
      %v6853 = vpop.permute.xlu0 %6852
      %v6854 = vsel %vm584, %v6851, %v6853
      %v6857 = vsel %vm584, 0.0, %v6851
      %s6858 = scalar_lea.vmem %s12, 48
      %v6859 = vld [vmem:[%s6858] sm:$0xff]
      %v6861 = vsel %vm1183, %v6859, 0
      %6863 = vmatpush.msra.mxu0 0.0
      %6864 = vmatpush.msra.mxu0 0.0
      %6865 = vmatpush.msra.mxu0 0.0
      %6866 = vmatpush.msra.mxu0 0.0
      %6867 = vmatpush.msra.mxu0 0.0
      %6868 = vmatpush.msra.mxu0 0.0
      %6869 = vmatpush.msra.mxu0 0.0
      %6870 = vmatpush.msra.mxu0 0.0
      %6871 = vmatpush.msra.mxu0 0.0
      %6872 = vmatpush.msra.mxu0 0.0
      %6873 = vmatpush.msra.mxu0 0.0
      %6874 = vmatpush.msra.mxu0 0.0
      %6875 = vmatpush.msra.mxu0 0.0
      %6876 = vmatpush.msra.mxu0 0.0
      %6877 = vmatpush.msra.mxu0 0.0
      %6878 = vmatpush.msra.mxu0 %v6857
      %6879 = vmatmul.f32.gmra.mxu0 %v6861
      %v6880 = vpop.f32.mrf.mxu0
      %v6881 = vadd.f32 0.0, %v6880
      %6882 = vdwg.mxu0
      %6883 = vmatpush.msra.mxu0 0.0
      %6884 = vmatpush.msra.mxu0 0.0
      %6885 = vmatpush.msra.mxu0 0.0
      %6886 = vmatpush.msra.mxu0 0.0
      %6887 = vmatpush.msra.mxu0 0.0
      %6888 = vmatpush.msra.mxu0 0.0
      %6889 = vmatpush.msra.mxu0 0.0
      %6890 = vmatpush.msra.mxu0 0.0
      %6891 = vmatpush.msra.mxu0 0.0
      %6892 = vmatpush.msra.mxu0 0.0
      %6893 = vmatpush.msra.mxu0 0.0
      %6894 = vmatpush.msra.mxu0 0.0
      %6895 = vmatpush.msra.mxu0 0.0
      %6896 = vmatpush.msra.mxu0 0.0
      %6897 = vmatpush.msra.mxu0 0.0
      %6898 = vmatpush.msra.mxu0 %v6854
      %6899 = vmatmul.f32.gmra.mxu0 %v6861
      %v6900 = vpop.f32.mrf.mxu0
      %v6901 = vadd.f32 0.0, %v6900
      %6902 = vdwg.mxu0
      %v6903 = vadd.f32 %v6848, %v6881
      %v6904 = vadd.f32 %v6849, %v6901
      %6905 = vrot.lane.b32.xlu0 %v6505, 16
      %v6906 = vpop.permute.xlu0 %6905
      %6907 = vrot.lane.b32.xlu0 %v6506, 16
      %v6908 = vpop.permute.xlu0 %6907
      %v6909 = vsel %vm597, %v6906, %v6908
      %v6912 = vsel %vm597, 0.0, %v6906
      %s6913 = scalar_lea.vmem %s12, 56
      %v6914 = vld [vmem:[%s6913] sm:$0xff]
      %v6916 = vsel %vm1183, %v6914, 0
      %6918 = vmatpush.msra.mxu0 0.0
      %6919 = vmatpush.msra.mxu0 0.0
      %6920 = vmatpush.msra.mxu0 0.0
      %6921 = vmatpush.msra.mxu0 0.0
      %6922 = vmatpush.msra.mxu0 0.0
      %6923 = vmatpush.msra.mxu0 0.0
      %6924 = vmatpush.msra.mxu0 0.0
      %6925 = vmatpush.msra.mxu0 0.0
      %6926 = vmatpush.msra.mxu0 0.0
      %6927 = vmatpush.msra.mxu0 0.0
      %6928 = vmatpush.msra.mxu0 0.0
      %6929 = vmatpush.msra.mxu0 0.0
      %6930 = vmatpush.msra.mxu0 0.0
      %6931 = vmatpush.msra.mxu0 0.0
      %6932 = vmatpush.msra.mxu0 0.0
      %6933 = vmatpush.msra.mxu0 %v6912
      %6934 = vmatmul.f32.gmra.mxu0 %v6916
      %v6935 = vpop.f32.mrf.mxu0
      %v6936 = vadd.f32 0.0, %v6935
      %6937 = vdwg.mxu0
      %6938 = vmatpush.msra.mxu0 0.0
      %6939 = vmatpush.msra.mxu0 0.0
      %6940 = vmatpush.msra.mxu0 0.0
      %6941 = vmatpush.msra.mxu0 0.0
      %6942 = vmatpush.msra.mxu0 0.0
      %6943 = vmatpush.msra.mxu0 0.0
      %6944 = vmatpush.msra.mxu0 0.0
      %6945 = vmatpush.msra.mxu0 0.0
      %6946 = vmatpush.msra.mxu0 0.0
      %6947 = vmatpush.msra.mxu0 0.0
      %6948 = vmatpush.msra.mxu0 0.0
      %6949 = vmatpush.msra.mxu0 0.0
      %6950 = vmatpush.msra.mxu0 0.0
      %6951 = vmatpush.msra.mxu0 0.0
      %6952 = vmatpush.msra.mxu0 0.0
      %6953 = vmatpush.msra.mxu0 %v6909
      %6954 = vmatmul.f32.gmra.mxu0 %v6916
      %v6955 = vpop.f32.mrf.mxu0
      %v6956 = vadd.f32 0.0, %v6955
      %6957 = vdwg.mxu0
      %v6958 = vadd.f32 %v6903, %v6936
      %v6959 = vadd.f32 %v6904, %v6956
      %6960 = vrot.lane.b32.xlu0 %v6511, 15
      %v6961 = vpop.permute.xlu0 %6960
      %6962 = vrot.lane.b32.xlu0 %v6512, 15
      %v6963 = vpop.permute.xlu0 %6962
      %v6964 = vsel %vm708, %v6961, %v6963
      %v6967 = vsel %vm708, 0.0, %v6961
      %s6968 = scalar_lea.vmem %s12, 64
      %v6969 = vld [vmem:[%s6968] sm:$0xff]
      %v6971 = vsel %vm1183, %v6969, 0
      %6973 = vmatpush.msra.mxu0 0.0
      %6974 = vmatpush.msra.mxu0 0.0
      %6975 = vmatpush.msra.mxu0 0.0
      %6976 = vmatpush.msra.mxu0 0.0
      %6977 = vmatpush.msra.mxu0 0.0
      %6978 = vmatpush.msra.mxu0 0.0
      %6979 = vmatpush.msra.mxu0 0.0
      %6980 = vmatpush.msra.mxu0 0.0
      %6981 = vmatpush.msra.mxu0 0.0
      %6982 = vmatpush.msra.mxu0 0.0
      %6983 = vmatpush.msra.mxu0 0.0
      %6984 = vmatpush.msra.mxu0 0.0
      %6985 = vmatpush.msra.mxu0 0.0
      %6986 = vmatpush.msra.mxu0 0.0
      %6987 = vmatpush.msra.mxu0 0.0
      %6988 = vmatpush.msra.mxu0 %v6967
      %6989 = vmatmul.f32.gmra.mxu0 %v6971
      %v6990 = vpop.f32.mrf.mxu0
      %v6991 = vadd.f32 0.0, %v6990
      %6992 = vdwg.mxu0
      %6993 = vmatpush.msra.mxu0 0.0
      %6994 = vmatpush.msra.mxu0 0.0
      %6995 = vmatpush.msra.mxu0 0.0
      %6996 = vmatpush.msra.mxu0 0.0
      %6997 = vmatpush.msra.mxu0 0.0
      %6998 = vmatpush.msra.mxu0 0.0
      %6999 = vmatpush.msra.mxu0 0.0
      %7000 = vmatpush.msra.mxu0 0.0
      %7001 = vmatpush.msra.mxu0 0.0
      %7002 = vmatpush.msra.mxu0 0.0
      %7003 = vmatpush.msra.mxu0 0.0
      %7004 = vmatpush.msra.mxu0 0.0
      %7005 = vmatpush.msra.mxu0 0.0
      %7006 = vmatpush.msra.mxu0 0.0
      %7007 = vmatpush.msra.mxu0 0.0
      %7008 = vmatpush.msra.mxu0 %v6964
      %7009 = vmatmul.f32.gmra.mxu0 %v6971
      %v7010 = vpop.f32.mrf.mxu0
      %v7011 = vadd.f32 0.0, %v7010
      %7012 = vdwg.mxu0
      %v7013 = vadd.f32 %v6958, %v6991
      %v7014 = vadd.f32 %v6959, %v7011
      %7015 = vrot.lane.b32.xlu0 %v6513, 14
      %v7016 = vpop.permute.xlu0 %7015
      %7017 = vrot.lane.b32.xlu0 %v6514, 14
      %v7018 = vpop.permute.xlu0 %7017
      %v7019 = vsel %vm1669, %v7016, %v7018
      %v7022 = vsel %vm1669, 0.0, %v7016
      %s7023 = scalar_lea.vmem %s12, 72
      %v7024 = vld [vmem:[%s7023] sm:$0xff]
      %v7026 = vsel %vm1183, %v7024, 0
      %7028 = vmatpush.msra.mxu0 0.0
      %7029 = vmatpush.msra.mxu0 0.0
      %7030 = vmatpush.msra.mxu0 0.0
      %7031 = vmatpush.msra.mxu0 0.0
      %7032 = vmatpush.msra.mxu0 0.0
      %7033 = vmatpush.msra.mxu0 0.0
      %7034 = vmatpush.msra.mxu0 0.0
      %7035 = vmatpush.msra.mxu0 0.0
      %7036 = vmatpush.msra.mxu0 0.0
      %7037 = vmatpush.msra.mxu0 0.0
      %7038 = vmatpush.msra.mxu0 0.0
      %7039 = vmatpush.msra.mxu0 0.0
      %7040 = vmatpush.msra.mxu0 0.0
      %7041 = vmatpush.msra.mxu0 0.0
      %7042 = vmatpush.msra.mxu0 0.0
      %7043 = vmatpush.msra.mxu0 %v7022
      %7044 = vmatmul.f32.gmra.mxu0 %v7026
      %v7045 = vpop.f32.mrf.mxu0
      %v7046 = vadd.f32 0.0, %v7045
      %7047 = vdwg.mxu0
      %7048 = vmatpush.msra.mxu0 0.0
      %7049 = vmatpush.msra.mxu0 0.0
      %7050 = vmatpush.msra.mxu0 0.0
      %7051 = vmatpush.msra.mxu0 0.0
      %7052 = vmatpush.msra.mxu0 0.0
      %7053 = vmatpush.msra.mxu0 0.0
      %7054 = vmatpush.msra.mxu0 0.0
      %7055 = vmatpush.msra.mxu0 0.0
      %7056 = vmatpush.msra.mxu0 0.0
      %7057 = vmatpush.msra.mxu0 0.0
      %7058 = vmatpush.msra.mxu0 0.0
      %7059 = vmatpush.msra.mxu0 0.0
      %7060 = vmatpush.msra.mxu0 0.0
      %7061 = vmatpush.msra.mxu0 0.0
      %7062 = vmatpush.msra.mxu0 0.0
      %7063 = vmatpush.msra.mxu0 %v7019
      %7064 = vmatmul.f32.gmra.mxu0 %v7026
      %v7065 = vpop.f32.mrf.mxu0
      %v7066 = vadd.f32 0.0, %v7065
      %7067 = vdwg.mxu0
      %v7068 = vadd.f32 %v7013, %v7046
      %v7069 = vadd.f32 %v7014, %v7066
      %7070 = vrot.lane.b32.xlu0 %v6507, 2
      %v7071 = vpop.permute.xlu0 %7070
      %7072 = vrot.lane.b32.xlu0 %v6508, 2
      %v7073 = vpop.permute.xlu0 %7072
      %v7074 = vsel %vm1725, %v7071, %v7073
      %v7077 = vsel %vm1725, 0.0, %v7071
      %s7078 = scalar_lea.vmem %s12, 80
      %v7079 = vld [vmem:[%s7078] sm:$0xff]
      %v7081 = vsel %vm1183, %v7079, 0
      %7083 = vmatpush.msra.mxu0 0.0
      %7084 = vmatpush.msra.mxu0 0.0
      %7085 = vmatpush.msra.mxu0 0.0
      %7086 = vmatpush.msra.mxu0 0.0
      %7087 = vmatpush.msra.mxu0 0.0
      %7088 = vmatpush.msra.mxu0 0.0
      %7089 = vmatpush.msra.mxu0 0.0
      %7090 = vmatpush.msra.mxu0 0.0
      %7091 = vmatpush.msra.mxu0 0.0
      %7092 = vmatpush.msra.mxu0 0.0
      %7093 = vmatpush.msra.mxu0 0.0
      %7094 = vmatpush.msra.mxu0 0.0
      %7095 = vmatpush.msra.mxu0 0.0
      %7096 = vmatpush.msra.mxu0 0.0
      %7097 = vmatpush.msra.mxu0 0.0
      %7098 = vmatpush.msra.mxu0 %v7077
      %7099 = vmatmul.f32.gmra.mxu0 %v7081
      %v7100 = vpop.f32.mrf.mxu0
      %v7101 = vadd.f32 0.0, %v7100
      %7102 = vdwg.mxu0
      %7103 = vmatpush.msra.mxu0 0.0
      %7104 = vmatpush.msra.mxu0 0.0
      %7105 = vmatpush.msra.mxu0 0.0
      %7106 = vmatpush.msra.mxu0 0.0
      %7107 = vmatpush.msra.mxu0 0.0
      %7108 = vmatpush.msra.mxu0 0.0
      %7109 = vmatpush.msra.mxu0 0.0
      %7110 = vmatpush.msra.mxu0 0.0
      %7111 = vmatpush.msra.mxu0 0.0
      %7112 = vmatpush.msra.mxu0 0.0
      %7113 = vmatpush.msra.mxu0 0.0
      %7114 = vmatpush.msra.mxu0 0.0
      %7115 = vmatpush.msra.mxu0 0.0
      %7116 = vmatpush.msra.mxu0 0.0
      %7117 = vmatpush.msra.mxu0 0.0
      %7118 = vmatpush.msra.mxu0 %v7074
      %7119 = vmatmul.f32.gmra.mxu0 %v7081
      %v7120 = vpop.f32.mrf.mxu0
      %v7121 = vadd.f32 0.0, %v7120
      %7122 = vdwg.mxu0
      %v7123 = vadd.f32 %v7068, %v7101
      %v7124 = vadd.f32 %v7069, %v7121
      %7125 = vrot.lane.b32.xlu0 %v6509, 1
      %v7126 = vpop.permute.xlu0 %7125
      %7127 = vrot.lane.b32.xlu0 %v6510, 1
      %v7128 = vpop.permute.xlu0 %7127
      %v7129 = vsel %vm771, %v7126, %v7128
      %v7132 = vsel %vm771, 0.0, %v7126
      %s7133 = scalar_lea.vmem %s12, 88
      %v7134 = vld [vmem:[%s7133] sm:$0xff]
      %v7136 = vsel %vm1183, %v7134, 0
      %7138 = vmatpush.msra.mxu0 0.0
      %7139 = vmatpush.msra.mxu0 0.0
      %7140 = vmatpush.msra.mxu0 0.0
      %7141 = vmatpush.msra.mxu0 0.0
      %7142 = vmatpush.msra.mxu0 0.0
      %7143 = vmatpush.msra.mxu0 0.0
      %7144 = vmatpush.msra.mxu0 0.0
      %7145 = vmatpush.msra.mxu0 0.0
      %7146 = vmatpush.msra.mxu0 0.0
      %7147 = vmatpush.msra.mxu0 0.0
      %7148 = vmatpush.msra.mxu0 0.0
      %7149 = vmatpush.msra.mxu0 0.0
      %7150 = vmatpush.msra.mxu0 0.0
      %7151 = vmatpush.msra.mxu0 0.0
      %7152 = vmatpush.msra.mxu0 0.0
      %7153 = vmatpush.msra.mxu0 %v7132
      %7154 = vmatmul.f32.gmra.mxu0 %v7136
      %v7155 = vpop.f32.mrf.mxu0
      %v7156 = vadd.f32 0.0, %v7155
      %7157 = vdwg.mxu0
      %7158 = vmatpush.msra.mxu0 0.0
      %7159 = vmatpush.msra.mxu0 0.0
      %7160 = vmatpush.msra.mxu0 0.0
      %7161 = vmatpush.msra.mxu0 0.0
      %7162 = vmatpush.msra.mxu0 0.0
      %7163 = vmatpush.msra.mxu0 0.0
      %7164 = vmatpush.msra.mxu0 0.0
      %7165 = vmatpush.msra.mxu0 0.0
      %7166 = vmatpush.msra.mxu0 0.0
      %7167 = vmatpush.msra.mxu0 0.0
      %7168 = vmatpush.msra.mxu0 0.0
      %7169 = vmatpush.msra.mxu0 0.0
      %7170 = vmatpush.msra.mxu0 0.0
      %7171 = vmatpush.msra.mxu0 0.0
      %7172 = vmatpush.msra.mxu0 0.0
      %7173 = vmatpush.msra.mxu0 %v7129
      %7174 = vmatmul.f32.gmra.mxu0 %v7136
      %v7175 = vpop.f32.mrf.mxu0
      %v7176 = vadd.f32 0.0, %v7175
      %7177 = vdwg.mxu0
      %v7178 = vadd.f32 %v7123, %v7156
      %v7179 = vadd.f32 %v7124, %v7176
      %s7180 = scalar_lea.vmem %s12, 96
      %v7181 = vld [vmem:[%s7180] sm:$0xff]
      %v7183 = vsel %vm1183, %v7181, 0
      %7185 = vmatpush.msra.mxu0 0.0
      %7186 = vmatpush.msra.mxu0 0.0
      %7187 = vmatpush.msra.mxu0 0.0
      %7188 = vmatpush.msra.mxu0 0.0
      %7189 = vmatpush.msra.mxu0 0.0
      %7190 = vmatpush.msra.mxu0 0.0
      %7191 = vmatpush.msra.mxu0 0.0
      %7192 = vmatpush.msra.mxu0 0.0
      %7193 = vmatpush.msra.mxu0 0.0
      %7194 = vmatpush.msra.mxu0 0.0
      %7195 = vmatpush.msra.mxu0 0.0
      %7196 = vmatpush.msra.mxu0 0.0
      %7197 = vmatpush.msra.mxu0 0.0
      %7198 = vmatpush.msra.mxu0 0.0
      %7199 = vmatpush.msra.mxu0 0.0
      %7200 = vmatpush.msra.mxu0 %v6505
      %7201 = vmatmul.f32.gmra.mxu0 %v7183
      %v7202 = vpop.f32.mrf.mxu0
      %v7203 = vadd.f32 0.0, %v7202
      %7204 = vdwg.mxu0
      %7205 = vmatpush.msra.mxu0 0.0
      %7206 = vmatpush.msra.mxu0 0.0
      %7207 = vmatpush.msra.mxu0 0.0
      %7208 = vmatpush.msra.mxu0 0.0
      %7209 = vmatpush.msra.mxu0 0.0
      %7210 = vmatpush.msra.mxu0 0.0
      %7211 = vmatpush.msra.mxu0 0.0
      %7212 = vmatpush.msra.mxu0 0.0
      %7213 = vmatpush.msra.mxu0 0.0
      %7214 = vmatpush.msra.mxu0 0.0
      %7215 = vmatpush.msra.mxu0 0.0
      %7216 = vmatpush.msra.mxu0 0.0
      %7217 = vmatpush.msra.mxu0 0.0
      %7218 = vmatpush.msra.mxu0 0.0
      %7219 = vmatpush.msra.mxu0 0.0
      %7220 = vmatpush.msra.mxu0 %v6506
      %7221 = vmatmul.f32.gmra.mxu0 %v7183
      %v7222 = vpop.f32.mrf.mxu0
      %v7223 = vadd.f32 0.0, %v7222
      %7224 = vdwg.mxu0
      %v7225 = vadd.f32 %v7178, %v7203
      %v7226 = vadd.f32 %v7179, %v7223
      %7227 = vrot.lane.b32.xlu0 %v6511, 127
      %v7228 = vpop.permute.xlu0 %7227
      %7229 = vrot.lane.b32.xlu0 %v6512, 127
      %v7230 = vpop.permute.xlu0 %7229
      %v7231 = vsel %vm888, %v7228, %v7230
      %v7234 = vsel %vm888, %v7230, 0.0
      %s7235 = scalar_lea.vmem %s12, 104
      %v7236 = vld [vmem:[%s7235] sm:$0xff]
      %v7238 = vsel %vm1183, %v7236, 0
      %7240 = vmatpush.msra.mxu0 0.0
      %7241 = vmatpush.msra.mxu0 0.0
      %7242 = vmatpush.msra.mxu0 0.0
      %7243 = vmatpush.msra.mxu0 0.0
      %7244 = vmatpush.msra.mxu0 0.0
      %7245 = vmatpush.msra.mxu0 0.0
      %7246 = vmatpush.msra.mxu0 0.0
      %7247 = vmatpush.msra.mxu0 0.0
      %7248 = vmatpush.msra.mxu0 0.0
      %7249 = vmatpush.msra.mxu0 0.0
      %7250 = vmatpush.msra.mxu0 0.0
      %7251 = vmatpush.msra.mxu0 0.0
      %7252 = vmatpush.msra.mxu0 0.0
      %7253 = vmatpush.msra.mxu0 0.0
      %7254 = vmatpush.msra.mxu0 0.0
      %7255 = vmatpush.msra.mxu0 %v7231
      %7256 = vmatmul.f32.gmra.mxu0 %v7238
      %v7257 = vpop.f32.mrf.mxu0
      %v7258 = vadd.f32 0.0, %v7257
      %7259 = vdwg.mxu0
      %7260 = vmatpush.msra.mxu0 0.0
      %7261 = vmatpush.msra.mxu0 0.0
      %7262 = vmatpush.msra.mxu0 0.0
      %7263 = vmatpush.msra.mxu0 0.0
      %7264 = vmatpush.msra.mxu0 0.0
      %7265 = vmatpush.msra.mxu0 0.0
      %7266 = vmatpush.msra.mxu0 0.0
      %7267 = vmatpush.msra.mxu0 0.0
      %7268 = vmatpush.msra.mxu0 0.0
      %7269 = vmatpush.msra.mxu0 0.0
      %7270 = vmatpush.msra.mxu0 0.0
      %7271 = vmatpush.msra.mxu0 0.0
      %7272 = vmatpush.msra.mxu0 0.0
      %7273 = vmatpush.msra.mxu0 0.0
      %7274 = vmatpush.msra.mxu0 0.0
      %7275 = vmatpush.msra.mxu0 %v7234
      %7276 = vmatmul.f32.gmra.mxu0 %v7238
      %v7277 = vpop.f32.mrf.mxu0
      %v7278 = vadd.f32 0.0, %v7277
      %7279 = vdwg.mxu0
      %v7280 = vadd.f32 %v7225, %v7258
      %v7281 = vadd.f32 %v7226, %v7278
      %7282 = vrot.lane.b32.xlu0 %v6513, 126
      %v7283 = vpop.permute.xlu0 %7282
      %7284 = vrot.lane.b32.xlu0 %v6514, 126
      %v7285 = vpop.permute.xlu0 %7284
      %v7286 = vsel %vm1938, %v7283, %v7285
      %v7289 = vsel %vm1938, %v7285, 0.0
      %s7290 = scalar_lea.vmem %s12, 112
      %v7291 = vld [vmem:[%s7290] sm:$0xff]
      %v7293 = vsel %vm1183, %v7291, 0
      %7295 = vmatpush.msra.mxu0 0.0
      %7296 = vmatpush.msra.mxu0 0.0
      %7297 = vmatpush.msra.mxu0 0.0
      %7298 = vmatpush.msra.mxu0 0.0
      %7299 = vmatpush.msra.mxu0 0.0
      %7300 = vmatpush.msra.mxu0 0.0
      %7301 = vmatpush.msra.mxu0 0.0
      %7302 = vmatpush.msra.mxu0 0.0
      %7303 = vmatpush.msra.mxu0 0.0
      %7304 = vmatpush.msra.mxu0 0.0
      %7305 = vmatpush.msra.mxu0 0.0
      %7306 = vmatpush.msra.mxu0 0.0
      %7307 = vmatpush.msra.mxu0 0.0
      %7308 = vmatpush.msra.mxu0 0.0
      %7309 = vmatpush.msra.mxu0 0.0
      %7310 = vmatpush.msra.mxu0 %v7286
      %7311 = vmatmul.f32.gmra.mxu0 %v7293
      %v7312 = vpop.f32.mrf.mxu0
      %v7313 = vadd.f32 0.0, %v7312
      %7314 = vdwg.mxu0
      %7315 = vmatpush.msra.mxu0 0.0
      %7316 = vmatpush.msra.mxu0 0.0
      %7317 = vmatpush.msra.mxu0 0.0
      %7318 = vmatpush.msra.mxu0 0.0
      %7319 = vmatpush.msra.mxu0 0.0
      %7320 = vmatpush.msra.mxu0 0.0
      %7321 = vmatpush.msra.mxu0 0.0
      %7322 = vmatpush.msra.mxu0 0.0
      %7323 = vmatpush.msra.mxu0 0.0
      %7324 = vmatpush.msra.mxu0 0.0
      %7325 = vmatpush.msra.mxu0 0.0
      %7326 = vmatpush.msra.mxu0 0.0
      %7327 = vmatpush.msra.mxu0 0.0
      %7328 = vmatpush.msra.mxu0 0.0
      %7329 = vmatpush.msra.mxu0 0.0
      %7330 = vmatpush.msra.mxu0 %v7289
      %7331 = vmatmul.f32.gmra.mxu0 %v7293
      %v7332 = vpop.f32.mrf.mxu0
      %v7333 = vadd.f32 0.0, %v7332
      %7334 = vdwg.mxu0
      %v7335 = vadd.f32 %v7280, %v7313
      %v7336 = vadd.f32 %v7281, %v7333
      %7337 = vrot.lane.b32.xlu0 %v6507, 114
      %v7338 = vpop.permute.xlu0 %7337
      %7339 = vrot.lane.b32.xlu0 %v6508, 114
      %v7340 = vpop.permute.xlu0 %7339
      %v7341 = vsel %vm1994, %v7338, %v7340
      %v7344 = vsel %vm1994, %v7340, 0.0
      %s7345 = scalar_lea.vmem %s12, 120
      %v7346 = vld [vmem:[%s7345] sm:$0xff]
      %v7348 = vsel %vm1183, %v7346, 0
      %7350 = vmatpush.msra.mxu0 0.0
      %7351 = vmatpush.msra.mxu0 0.0
      %7352 = vmatpush.msra.mxu0 0.0
      %7353 = vmatpush.msra.mxu0 0.0
      %7354 = vmatpush.msra.mxu0 0.0
      %7355 = vmatpush.msra.mxu0 0.0
      %7356 = vmatpush.msra.mxu0 0.0
      %7357 = vmatpush.msra.mxu0 0.0
      %7358 = vmatpush.msra.mxu0 0.0
      %7359 = vmatpush.msra.mxu0 0.0
      %7360 = vmatpush.msra.mxu0 0.0
      %7361 = vmatpush.msra.mxu0 0.0
      %7362 = vmatpush.msra.mxu0 0.0
      %7363 = vmatpush.msra.mxu0 0.0
      %7364 = vmatpush.msra.mxu0 0.0
      %7365 = vmatpush.msra.mxu0 %v7341
      %7366 = vmatmul.f32.gmra.mxu0 %v7348
      %v7367 = vpop.f32.mrf.mxu0
      %v7368 = vadd.f32 0.0, %v7367
      %7369 = vdwg.mxu0
      %7370 = vmatpush.msra.mxu0 0.0
      %7371 = vmatpush.msra.mxu0 0.0
      %7372 = vmatpush.msra.mxu0 0.0
      %7373 = vmatpush.msra.mxu0 0.0
      %7374 = vmatpush.msra.mxu0 0.0
      %7375 = vmatpush.msra.mxu0 0.0
      %7376 = vmatpush.msra.mxu0 0.0
      %7377 = vmatpush.msra.mxu0 0.0
      %7378 = vmatpush.msra.mxu0 0.0
      %7379 = vmatpush.msra.mxu0 0.0
      %7380 = vmatpush.msra.mxu0 0.0
      %7381 = vmatpush.msra.mxu0 0.0
      %7382 = vmatpush.msra.mxu0 0.0
      %7383 = vmatpush.msra.mxu0 0.0
      %7384 = vmatpush.msra.mxu0 0.0
      %7385 = vmatpush.msra.mxu0 %v7344
      %7386 = vmatmul.f32.gmra.mxu0 %v7348
      %v7387 = vpop.f32.mrf.mxu0
      %v7388 = vadd.f32 0.0, %v7387
      %7389 = vdwg.mxu0
      %v7390 = vadd.f32 %v7335, %v7368
      %v7391 = vadd.f32 %v7336, %v7388
      %7392 = vrot.lane.b32.xlu0 %v6509, 113
      %v7393 = vpop.permute.xlu0 %7392
      %7394 = vrot.lane.b32.xlu0 %v6510, 113
      %v7395 = vpop.permute.xlu0 %7394
      %v7396 = vsel %vm951, %v7393, %v7395
      %v7399 = vsel %vm951, %v7395, 0.0
      %s7400 = scalar_lea.vmem %s12, 128
      %v7401 = vld [vmem:[%s7400] sm:$0xff]
      %v7403 = vsel %vm1183, %v7401, 0
      %7405 = vmatpush.msra.mxu0 0.0
      %7406 = vmatpush.msra.mxu0 0.0
      %7407 = vmatpush.msra.mxu0 0.0
      %7408 = vmatpush.msra.mxu0 0.0
      %7409 = vmatpush.msra.mxu0 0.0
      %7410 = vmatpush.msra.mxu0 0.0
      %7411 = vmatpush.msra.mxu0 0.0
      %7412 = vmatpush.msra.mxu0 0.0
      %7413 = vmatpush.msra.mxu0 0.0
      %7414 = vmatpush.msra.mxu0 0.0
      %7415 = vmatpush.msra.mxu0 0.0
      %7416 = vmatpush.msra.mxu0 0.0
      %7417 = vmatpush.msra.mxu0 0.0
      %7418 = vmatpush.msra.mxu0 0.0
      %7419 = vmatpush.msra.mxu0 0.0
      %7420 = vmatpush.msra.mxu0 %v7396
      %7421 = vmatmul.f32.gmra.mxu0 %v7403
      %v7422 = vpop.f32.mrf.mxu0
      %v7423 = vadd.f32 0.0, %v7422
      %7424 = vdwg.mxu0
      %7425 = vmatpush.msra.mxu0 0.0
      %7426 = vmatpush.msra.mxu0 0.0
      %7427 = vmatpush.msra.mxu0 0.0
      %7428 = vmatpush.msra.mxu0 0.0
      %7429 = vmatpush.msra.mxu0 0.0
      %7430 = vmatpush.msra.mxu0 0.0
      %7431 = vmatpush.msra.mxu0 0.0
      %7432 = vmatpush.msra.mxu0 0.0
      %7433 = vmatpush.msra.mxu0 0.0
      %7434 = vmatpush.msra.mxu0 0.0
      %7435 = vmatpush.msra.mxu0 0.0
      %7436 = vmatpush.msra.mxu0 0.0
      %7437 = vmatpush.msra.mxu0 0.0
      %7438 = vmatpush.msra.mxu0 0.0
      %7439 = vmatpush.msra.mxu0 0.0
      %7440 = vmatpush.msra.mxu0 %v7399
      %7441 = vmatmul.f32.gmra.mxu0 %v7403
      %v7442 = vpop.f32.mrf.mxu0
      %v7443 = vadd.f32 0.0, %v7442
      %7444 = vdwg.mxu0
      %v7445 = vadd.f32 %v7390, %v7423
      %v7446 = vadd.f32 %v7391, %v7443
      %7447 = vrot.lane.b32.xlu0 %v6505, 112
      %v7448 = vpop.permute.xlu0 %7447
      %7449 = vrot.lane.b32.xlu0 %v6506, 112
      %v7450 = vpop.permute.xlu0 %7449
      %v7451 = vsel %vm1014, %v7448, %v7450
      %v7454 = vsel %vm1014, %v7450, 0.0
      %s7455 = scalar_lea.vmem %s12, 136
      %v7456 = vld [vmem:[%s7455] sm:$0xff]
      %v7458 = vsel %vm1183, %v7456, 0
      %7460 = vmatpush.msra.mxu0 0.0
      %7461 = vmatpush.msra.mxu0 0.0
      %7462 = vmatpush.msra.mxu0 0.0
      %7463 = vmatpush.msra.mxu0 0.0
      %7464 = vmatpush.msra.mxu0 0.0
      %7465 = vmatpush.msra.mxu0 0.0
      %7466 = vmatpush.msra.mxu0 0.0
      %7467 = vmatpush.msra.mxu0 0.0
      %7468 = vmatpush.msra.mxu0 0.0
      %7469 = vmatpush.msra.mxu0 0.0
      %7470 = vmatpush.msra.mxu0 0.0
      %7471 = vmatpush.msra.mxu0 0.0
      %7472 = vmatpush.msra.mxu0 0.0
      %7473 = vmatpush.msra.mxu0 0.0
      %7474 = vmatpush.msra.mxu0 0.0
      %7475 = vmatpush.msra.mxu0 %v7451
      %7476 = vmatmul.f32.gmra.mxu0 %v7458
      %v7477 = vpop.f32.mrf.mxu0
      %v7478 = vadd.f32 0.0, %v7477
      %7479 = vdwg.mxu0
      %7480 = vmatpush.msra.mxu0 0.0
      %7481 = vmatpush.msra.mxu0 0.0
      %7482 = vmatpush.msra.mxu0 0.0
      %7483 = vmatpush.msra.mxu0 0.0
      %7484 = vmatpush.msra.mxu0 0.0
      %7485 = vmatpush.msra.mxu0 0.0
      %7486 = vmatpush.msra.mxu0 0.0
      %7487 = vmatpush.msra.mxu0 0.0
      %7488 = vmatpush.msra.mxu0 0.0
      %7489 = vmatpush.msra.mxu0 0.0
      %7490 = vmatpush.msra.mxu0 0.0
      %7491 = vmatpush.msra.mxu0 0.0
      %7492 = vmatpush.msra.mxu0 0.0
      %7493 = vmatpush.msra.mxu0 0.0
      %7494 = vmatpush.msra.mxu0 0.0
      %7495 = vmatpush.msra.mxu0 %v7454
      %7496 = vmatmul.f32.gmra.mxu0 %v7458
      %v7497 = vpop.f32.mrf.mxu0
      %v7498 = vadd.f32 0.0, %v7497
      %7499 = vdwg.mxu0
      %v7500 = vadd.f32 %v7445, %v7478
      %v7501 = vadd.f32 %v7446, %v7498
      %7502 = vrot.lane.b32.xlu0 %v6511, 111
      %v7503 = vpop.permute.xlu0 %7502
      %7504 = vrot.lane.b32.xlu0 %v6512, 111
      %v7505 = vpop.permute.xlu0 %7504
      %v7506 = vsel %vm1077, %v7503, %v7505
      %v7509 = vsel %vm1077, %v7505, 0.0
      %s7510 = scalar_lea.vmem %s12, 144
      %v7511 = vld [vmem:[%s7510] sm:$0xff]
      %v7513 = vsel %vm1183, %v7511, 0
      %7515 = vmatpush.msra.mxu0 0.0
      %7516 = vmatpush.msra.mxu0 0.0
      %7517 = vmatpush.msra.mxu0 0.0
      %7518 = vmatpush.msra.mxu0 0.0
      %7519 = vmatpush.msra.mxu0 0.0
      %7520 = vmatpush.msra.mxu0 0.0
      %7521 = vmatpush.msra.mxu0 0.0
      %7522 = vmatpush.msra.mxu0 0.0
      %7523 = vmatpush.msra.mxu0 0.0
      %7524 = vmatpush.msra.mxu0 0.0
      %7525 = vmatpush.msra.mxu0 0.0
      %7526 = vmatpush.msra.mxu0 0.0
      %7527 = vmatpush.msra.mxu0 0.0
      %7528 = vmatpush.msra.mxu0 0.0
      %7529 = vmatpush.msra.mxu0 0.0
      %7530 = vmatpush.msra.mxu0 %v7506
      %7531 = vmatmul.f32.gmra.mxu0 %v7513
      %v7532 = vpop.f32.mrf.mxu0
      %v7533 = vadd.f32 0.0, %v7532
      %7534 = vdwg.mxu0
      %7535 = vmatpush.msra.mxu0 0.0
      %7536 = vmatpush.msra.mxu0 0.0
      %7537 = vmatpush.msra.mxu0 0.0
      %7538 = vmatpush.msra.mxu0 0.0
      %7539 = vmatpush.msra.mxu0 0.0
      %7540 = vmatpush.msra.mxu0 0.0
      %7541 = vmatpush.msra.mxu0 0.0
      %7542 = vmatpush.msra.mxu0 0.0
      %7543 = vmatpush.msra.mxu0 0.0
      %7544 = vmatpush.msra.mxu0 0.0
      %7545 = vmatpush.msra.mxu0 0.0
      %7546 = vmatpush.msra.mxu0 0.0
      %7547 = vmatpush.msra.mxu0 0.0
      %7548 = vmatpush.msra.mxu0 0.0
      %7549 = vmatpush.msra.mxu0 0.0
      %7550 = vmatpush.msra.mxu0 %v7509
      %7551 = vmatmul.f32.gmra.mxu0 %v7513
      %v7552 = vpop.f32.mrf.mxu0
      %v7553 = vadd.f32 0.0, %v7552
      %7554 = vdwg.mxu0
      %v7555 = vadd.f32 %v7500, %v7533
      %v7556 = vadd.f32 %v7501, %v7553
      %7557 = vrot.lane.b32.xlu0 %v6513, 110
      %v7558 = vpop.permute.xlu0 %7557
      %7559 = vrot.lane.b32.xlu0 %v6514, 110
      %v7560 = vpop.permute.xlu0 %7559
      %v7561 = vsel %vm2215, %v7558, %v7560
      %v7564 = vsel %vm2215, %v7560, 0.0
      %s7565 = scalar_lea.vmem %s12, 152
      %v7566 = vld [vmem:[%s7565] sm:$0xff]
      %v7568 = vsel %vm1183, %v7566, 0
      %7570 = vmatpush.msra.mxu0 0.0
      %7571 = vmatpush.msra.mxu0 0.0
      %7572 = vmatpush.msra.mxu0 0.0
      %7573 = vmatpush.msra.mxu0 0.0
      %7574 = vmatpush.msra.mxu0 0.0
      %7575 = vmatpush.msra.mxu0 0.0
      %7576 = vmatpush.msra.mxu0 0.0
      %7577 = vmatpush.msra.mxu0 0.0
      %7578 = vmatpush.msra.mxu0 0.0
      %7579 = vmatpush.msra.mxu0 0.0
      %7580 = vmatpush.msra.mxu0 0.0
      %7581 = vmatpush.msra.mxu0 0.0
      %7582 = vmatpush.msra.mxu0 0.0
      %7583 = vmatpush.msra.mxu0 0.0
      %7584 = vmatpush.msra.mxu0 0.0
      %7585 = vmatpush.msra.mxu0 %v7561
      %7586 = vmatmul.f32.gmra.mxu0 %v7568
      %v7587 = vpop.f32.mrf.mxu0
      %v7588 = vadd.f32 0.0, %v7587
      %7589 = vdwg.mxu0
      %7590 = vmatpush.msra.mxu0 0.0
      %7591 = vmatpush.msra.mxu0 0.0
      %7592 = vmatpush.msra.mxu0 0.0
      %7593 = vmatpush.msra.mxu0 0.0
      %7594 = vmatpush.msra.mxu0 0.0
      %7595 = vmatpush.msra.mxu0 0.0
      %7596 = vmatpush.msra.mxu0 0.0
      %7597 = vmatpush.msra.mxu0 0.0
      %7598 = vmatpush.msra.mxu0 0.0
      %7599 = vmatpush.msra.mxu0 0.0
      %7600 = vmatpush.msra.mxu0 0.0
      %7601 = vmatpush.msra.mxu0 0.0
      %7602 = vmatpush.msra.mxu0 0.0
      %7603 = vmatpush.msra.mxu0 0.0
      %7604 = vmatpush.msra.mxu0 0.0
      %7605 = vmatpush.msra.mxu0 %v7564
      %7606 = vmatmul.f32.gmra.mxu0 %v7568
      %v7607 = vpop.f32.mrf.mxu0
      %v7608 = vadd.f32 0.0, %v7607
      %7609 = vdwg.mxu0
      %v7610 = vadd.f32 %v7555, %v7588
      %v7611 = vadd.f32 %v7556, %v7608
      %7612 = vrot.lane.b32.xlu0 %v6507, 98
      %v7613 = vpop.permute.xlu0 %7612
      %7614 = vrot.lane.b32.xlu0 %v6508, 98
      %v7615 = vpop.permute.xlu0 %7614
      %v7616 = vsel %vm2271, %v7613, %v7615
      %v7619 = vsel %vm2271, %v7615, 0.0
      %s7620 = scalar_lea.vmem %s12, 160
      %v7621 = vld [vmem:[%s7620] sm:$0xff]
      %v7623 = vsel %vm1183, %v7621, 0
      %7625 = vmatpush.msra.mxu0 0.0
      %7626 = vmatpush.msra.mxu0 0.0
      %7627 = vmatpush.msra.mxu0 0.0
      %7628 = vmatpush.msra.mxu0 0.0
      %7629 = vmatpush.msra.mxu0 0.0
      %7630 = vmatpush.msra.mxu0 0.0
      %7631 = vmatpush.msra.mxu0 0.0
      %7632 = vmatpush.msra.mxu0 0.0
      %7633 = vmatpush.msra.mxu0 0.0
      %7634 = vmatpush.msra.mxu0 0.0
      %7635 = vmatpush.msra.mxu0 0.0
      %7636 = vmatpush.msra.mxu0 0.0
      %7637 = vmatpush.msra.mxu0 0.0
      %7638 = vmatpush.msra.mxu0 0.0
      %7639 = vmatpush.msra.mxu0 0.0
      %7640 = vmatpush.msra.mxu0 %v7616
      %7641 = vmatmul.f32.gmra.mxu0 %v7623
      %v7642 = vpop.f32.mrf.mxu0
      %v7643 = vadd.f32 0.0, %v7642
      %7644 = vdwg.mxu0
      %7645 = vmatpush.msra.mxu0 0.0
      %7646 = vmatpush.msra.mxu0 0.0
      %7647 = vmatpush.msra.mxu0 0.0
      %7648 = vmatpush.msra.mxu0 0.0
      %7649 = vmatpush.msra.mxu0 0.0
      %7650 = vmatpush.msra.mxu0 0.0
      %7651 = vmatpush.msra.mxu0 0.0
      %7652 = vmatpush.msra.mxu0 0.0
      %7653 = vmatpush.msra.mxu0 0.0
      %7654 = vmatpush.msra.mxu0 0.0
      %7655 = vmatpush.msra.mxu0 0.0
      %7656 = vmatpush.msra.mxu0 0.0
      %7657 = vmatpush.msra.mxu0 0.0
      %7658 = vmatpush.msra.mxu0 0.0
      %7659 = vmatpush.msra.mxu0 0.0
      %7660 = vmatpush.msra.mxu0 %v7619
      %7661 = vmatmul.f32.gmra.mxu0 %v7623
      %v7662 = vpop.f32.mrf.mxu0
      %v7663 = vadd.f32 0.0, %v7662
      %7664 = vdwg.mxu0
      %v7665 = vadd.f32 %v7610, %v7643
      %v7666 = vadd.f32 %v7611, %v7663
      %7667 = vrot.lane.b32.xlu0 %v6509, 97
      %v7668 = vpop.permute.xlu0 %7667
      %7669 = vrot.lane.b32.xlu0 %v6510, 97
      %v7670 = vpop.permute.xlu0 %7669
      %v7671 = vsel %vm2327, %v7668, %v7670
      %v7674 = vsel %vm2327, %v7670, 0.0
      %s7675 = scalar_lea.vmem %s12, 168
      %v7676 = vld [vmem:[%s7675] sm:$0xff]
      %v7678 = vsel %vm1183, %v7676, 0
      %7680 = vmatpush.msra.mxu0 0.0
      %7681 = vmatpush.msra.mxu0 0.0
      %7682 = vmatpush.msra.mxu0 0.0
      %7683 = vmatpush.msra.mxu0 0.0
      %7684 = vmatpush.msra.mxu0 0.0
      %7685 = vmatpush.msra.mxu0 0.0
      %7686 = vmatpush.msra.mxu0 0.0
      %7687 = vmatpush.msra.mxu0 0.0
      %7688 = vmatpush.msra.mxu0 0.0
      %7689 = vmatpush.msra.mxu0 0.0
      %7690 = vmatpush.msra.mxu0 0.0
      %7691 = vmatpush.msra.mxu0 0.0
      %7692 = vmatpush.msra.mxu0 0.0
      %7693 = vmatpush.msra.mxu0 0.0
      %7694 = vmatpush.msra.mxu0 0.0
      %7695 = vmatpush.msra.mxu0 %v7671
      %7696 = vmatmul.f32.gmra.mxu0 %v7678
      %v7697 = vpop.f32.mrf.mxu0
      %v7698 = vadd.f32 0.0, %v7697
      %7699 = vdwg.mxu0
      %7700 = vmatpush.msra.mxu0 0.0
      %7701 = vmatpush.msra.mxu0 0.0
      %7702 = vmatpush.msra.mxu0 0.0
      %7703 = vmatpush.msra.mxu0 0.0
      %7704 = vmatpush.msra.mxu0 0.0
      %7705 = vmatpush.msra.mxu0 0.0
      %7706 = vmatpush.msra.mxu0 0.0
      %7707 = vmatpush.msra.mxu0 0.0
      %7708 = vmatpush.msra.mxu0 0.0
      %7709 = vmatpush.msra.mxu0 0.0
      %7710 = vmatpush.msra.mxu0 0.0
      %7711 = vmatpush.msra.mxu0 0.0
      %7712 = vmatpush.msra.mxu0 0.0
      %7713 = vmatpush.msra.mxu0 0.0
      %7714 = vmatpush.msra.mxu0 0.0
      %7715 = vmatpush.msra.mxu0 %v7674
      %7716 = vmatmul.f32.gmra.mxu0 %v7678
      %v7717 = vpop.f32.mrf.mxu0
      %v7718 = vadd.f32 0.0, %v7717
      %7719 = vdwg.mxu0
      %v7720 = vadd.f32 %v7665, %v7698
      %v7721 = vadd.f32 %v7666, %v7718
      %7722 = vrot.lane.b32.xlu0 %v6505, 96
      %v7723 = vpop.permute.xlu0 %7722
      %7724 = vrot.lane.b32.xlu0 %v6506, 96
      %v7725 = vpop.permute.xlu0 %7724
      %v7726 = vsel %vm2383, %v7723, %v7725
      %v7729 = vsel %vm2383, %v7725, 0.0
      %s7730 = scalar_lea.vmem %s12, 176
      %v7731 = vld [vmem:[%s7730] sm:$0xff]
      %v7733 = vsel %vm1183, %v7731, 0
      %7735 = vmatpush.msra.mxu0 0.0
      %7736 = vmatpush.msra.mxu0 0.0
      %7737 = vmatpush.msra.mxu0 0.0
      %7738 = vmatpush.msra.mxu0 0.0
      %7739 = vmatpush.msra.mxu0 0.0
      %7740 = vmatpush.msra.mxu0 0.0
      %7741 = vmatpush.msra.mxu0 0.0
      %7742 = vmatpush.msra.mxu0 0.0
      %7743 = vmatpush.msra.mxu0 0.0
      %7744 = vmatpush.msra.mxu0 0.0
      %7745 = vmatpush.msra.mxu0 0.0
      %7746 = vmatpush.msra.mxu0 0.0
      %7747 = vmatpush.msra.mxu0 0.0
      %7748 = vmatpush.msra.mxu0 0.0
      %7749 = vmatpush.msra.mxu0 0.0
      %7750 = vmatpush.msra.mxu0 %v7726
      %7751 = vmatmul.f32.gmra.mxu0 %v7733
      %v7752 = vpop.f32.mrf.mxu0
      %v7753 = vadd.f32 0.0, %v7752
      %7754 = vdwg.mxu0
      %7755 = vmatpush.msra.mxu0 0.0
      %7756 = vmatpush.msra.mxu0 0.0
      %7757 = vmatpush.msra.mxu0 0.0
      %7758 = vmatpush.msra.mxu0 0.0
      %7759 = vmatpush.msra.mxu0 0.0
      %7760 = vmatpush.msra.mxu0 0.0
      %7761 = vmatpush.msra.mxu0 0.0
      %7762 = vmatpush.msra.mxu0 0.0
      %7763 = vmatpush.msra.mxu0 0.0
      %7764 = vmatpush.msra.mxu0 0.0
      %7765 = vmatpush.msra.mxu0 0.0
      %7766 = vmatpush.msra.mxu0 0.0
      %7767 = vmatpush.msra.mxu0 0.0
      %7768 = vmatpush.msra.mxu0 0.0
      %7769 = vmatpush.msra.mxu0 0.0
      %7770 = vmatpush.msra.mxu0 %v7729
      %7771 = vmatmul.f32.gmra.mxu0 %v7733
      %v7772 = vpop.f32.mrf.mxu0
      %v7773 = vadd.f32 0.0, %v7772
      %7774 = vdwg.mxu0
      %v7775 = vadd.f32 %v7720, %v7753
      %v7776 = vadd.f32 %v7721, %v7773
      %7777 = vrot.lane.b32.xlu0 %v6511, 95
      %v7778 = vpop.permute.xlu0 %7777
      %7779 = vrot.lane.b32.xlu0 %v6512, 95
      %v7780 = vpop.permute.xlu0 %7779
      %v7781 = vsel %vm2439, %v7778, %v7780
      %v7784 = vsel %vm2439, %v7780, 0.0
      %s7785 = scalar_lea.vmem %s12, 184
      %v7786 = vld [vmem:[%s7785] sm:$0xff]
      %v7788 = vsel %vm1183, %v7786, 0
      %7790 = vmatpush.msra.mxu0 0.0
      %7791 = vmatpush.msra.mxu0 0.0
      %7792 = vmatpush.msra.mxu0 0.0
      %7793 = vmatpush.msra.mxu0 0.0
      %7794 = vmatpush.msra.mxu0 0.0
      %7795 = vmatpush.msra.mxu0 0.0
      %7796 = vmatpush.msra.mxu0 0.0
      %7797 = vmatpush.msra.mxu0 0.0
      %7798 = vmatpush.msra.mxu0 0.0
      %7799 = vmatpush.msra.mxu0 0.0
      %7800 = vmatpush.msra.mxu0 0.0
      %7801 = vmatpush.msra.mxu0 0.0
      %7802 = vmatpush.msra.mxu0 0.0
      %7803 = vmatpush.msra.mxu0 0.0
      %7804 = vmatpush.msra.mxu0 0.0
      %7805 = vmatpush.msra.mxu0 %v7781
      %7806 = vmatmul.f32.gmra.mxu0 %v7788
      %v7807 = vpop.f32.mrf.mxu0
      %v7808 = vadd.f32 0.0, %v7807
      %7809 = vdwg.mxu0
      %7810 = vmatpush.msra.mxu0 0.0
      %7811 = vmatpush.msra.mxu0 0.0
      %7812 = vmatpush.msra.mxu0 0.0
      %7813 = vmatpush.msra.mxu0 0.0
      %7814 = vmatpush.msra.mxu0 0.0
      %7815 = vmatpush.msra.mxu0 0.0
      %7816 = vmatpush.msra.mxu0 0.0
      %7817 = vmatpush.msra.mxu0 0.0
      %7818 = vmatpush.msra.mxu0 0.0
      %7819 = vmatpush.msra.mxu0 0.0
      %7820 = vmatpush.msra.mxu0 0.0
      %7821 = vmatpush.msra.mxu0 0.0
      %7822 = vmatpush.msra.mxu0 0.0
      %7823 = vmatpush.msra.mxu0 0.0
      %7824 = vmatpush.msra.mxu0 0.0
      %7825 = vmatpush.msra.mxu0 %v7784
      %7826 = vmatmul.f32.gmra.mxu0 %v7788
      %v7827 = vpop.f32.mrf.mxu0
      %v7828 = vadd.f32 0.0, %v7827
      %7829 = vdwg.mxu0
      %v7830 = vadd.f32 %v7775, %v7808
      %v7831 = vadd.f32 %v7776, %v7828
      %7832 = vrot.lane.b32.xlu0 %v6513, 94
      %v7833 = vpop.permute.xlu0 %7832
      %7834 = vrot.lane.b32.xlu0 %v6514, 94
      %v7835 = vpop.permute.xlu0 %7834
      %v7836 = vsel %vm2495, %v7833, %v7835
      %v7839 = vsel %vm2495, %v7835, 0.0
      %s7840 = scalar_lea.vmem %s12, 192
      %v7841 = vld [vmem:[%s7840] sm:$0xff]
      %v7843 = vsel %vm1183, %v7841, 0
      %7845 = vmatpush.msra.mxu0 0.0
      %7846 = vmatpush.msra.mxu0 0.0
      %7847 = vmatpush.msra.mxu0 0.0
      %7848 = vmatpush.msra.mxu0 0.0
      %7849 = vmatpush.msra.mxu0 0.0
      %7850 = vmatpush.msra.mxu0 0.0
      %7851 = vmatpush.msra.mxu0 0.0
      %7852 = vmatpush.msra.mxu0 0.0
      %7853 = vmatpush.msra.mxu0 0.0
      %7854 = vmatpush.msra.mxu0 0.0
      %7855 = vmatpush.msra.mxu0 0.0
      %7856 = vmatpush.msra.mxu0 0.0
      %7857 = vmatpush.msra.mxu0 0.0
      %7858 = vmatpush.msra.mxu0 0.0
      %7859 = vmatpush.msra.mxu0 0.0
      %7860 = vmatpush.msra.mxu0 %v7836
      %7861 = vmatmul.f32.gmra.mxu0 %v7843
      %v7862 = vpop.f32.mrf.mxu0
      %v7863 = vadd.f32 0.0, %v7862
      %7864 = vdwg.mxu0
      %7865 = vmatpush.msra.mxu0 0.0
      %7866 = vmatpush.msra.mxu0 0.0
      %7867 = vmatpush.msra.mxu0 0.0
      %7868 = vmatpush.msra.mxu0 0.0
      %7869 = vmatpush.msra.mxu0 0.0
      %7870 = vmatpush.msra.mxu0 0.0
      %7871 = vmatpush.msra.mxu0 0.0
      %7872 = vmatpush.msra.mxu0 0.0
      %7873 = vmatpush.msra.mxu0 0.0
      %7874 = vmatpush.msra.mxu0 0.0
      %7875 = vmatpush.msra.mxu0 0.0
      %7876 = vmatpush.msra.mxu0 0.0
      %7877 = vmatpush.msra.mxu0 0.0
      %7878 = vmatpush.msra.mxu0 0.0
      %7879 = vmatpush.msra.mxu0 0.0
      %7880 = vmatpush.msra.mxu0 %v7839
      %7881 = vmatmul.f32.gmra.mxu0 %v7843
      %v7882 = vpop.f32.mrf.mxu0
      %v7883 = vadd.f32 0.0, %v7882
      %7884 = vdwg.mxu0
      %v7885 = vadd.f32 %v7830, %v7863
      %v7886 = vadd.f32 %v7831, %v7883
      %v7887 = vld [vmem:[%s13] sm:$0xff]
      %v7889 = vsel %vm1183, %v7887, 0
      %7891 = vmatpush.msra.mxu0 0.0
      %7892 = vmatpush.msra.mxu0 0.0
      %7893 = vmatpush.msra.mxu0 0.0
      %7894 = vmatpush.msra.mxu0 0.0
      %7895 = vmatpush.msra.mxu0 0.0
      %7896 = vmatpush.msra.mxu0 0.0
      %7897 = vmatpush.msra.mxu0 0.0
      %7898 = vmatpush.msra.mxu0 0.0
      %7899 = vmatpush.msra.mxu0 0.0
      %7900 = vmatpush.msra.mxu0 0.0
      %7901 = vmatpush.msra.mxu0 0.0
      %7902 = vmatpush.msra.mxu0 0.0
      %7903 = vmatpush.msra.mxu0 0.0
      %7904 = vmatpush.msra.mxu0 0.0
      %7905 = vmatpush.msra.mxu0 0.0
      %7906 = vmatpush.msra.mxu0 %v7885
      %7907 = vmatmul.f32.gmra.mxu0 %v7889
      %v7908 = vpop.f32.mrf.mxu0
      %v7909 = vadd.f32 0.0, %v7908
      %7910 = vdwg.mxu0
      %7911 = vmatpush.msra.mxu0 0.0
      %7912 = vmatpush.msra.mxu0 0.0
      %7913 = vmatpush.msra.mxu0 0.0
      %7914 = vmatpush.msra.mxu0 0.0
      %7915 = vmatpush.msra.mxu0 0.0
      %7916 = vmatpush.msra.mxu0 0.0
      %7917 = vmatpush.msra.mxu0 0.0
      %7918 = vmatpush.msra.mxu0 0.0
      %7919 = vmatpush.msra.mxu0 0.0
      %7920 = vmatpush.msra.mxu0 0.0
      %7921 = vmatpush.msra.mxu0 0.0
      %7922 = vmatpush.msra.mxu0 0.0
      %7923 = vmatpush.msra.mxu0 0.0
      %7924 = vmatpush.msra.mxu0 0.0
      %7925 = vmatpush.msra.mxu0 0.0
      %7926 = vmatpush.msra.mxu0 %v7886
      %7927 = vmatmul.f32.gmra.mxu0 %v7889
      %v7928 = vpop.f32.mrf.mxu0
      %v7929 = vadd.f32 0.0, %v7928
      %7930 = vdwg.mxu0
      %v7931 = vadd.f32 %v5075, %v7909
      %v7932 = vadd.f32 %v5076, %v7929
      %vm7933 = vcmp.ge.f32.partialorder %v7931, 0.0
      %vm7934 = vcmp.ge.f32.partialorder %v7932, 0.0
      %v7935 = vmul.f32 %v7931, 0.01
      %v7936 = vmul.f32 %v7932, 0.01
      %v7937 = vsel %vm7933, %v7931, %v7935
      %v7938 = vsel %vm7934, %v7932, %v7936
      %v7939 = vmul.f32 %v7937, %v560
      %v7940 = vmul.f32 %v7938, %v561
      %v7941 = vmul.f32 %v7937, %v570
      %v7942 = vmul.f32 %v7938, %v571
      %7945 = vrot.lane.b32.xlu0 %v7939, 17
      %v7946 = vpop.permute.xlu0 %7945
      %7947 = vrot.lane.b32.xlu0 %v7940, 17
      %v7948 = vpop.permute.xlu0 %7947
      %v7949 = vsel %vm584, %v7946, %v7948
      %v7952 = vsel %vm584, 0.0, %v7946
      %v7953 = vld [vmem:[%s14] sm:$0xf]
      %7956 = vrot.lane.b32.xlu0 %v7937, 16
      %v7957 = vpop.permute.xlu0 %7956
      %7958 = vrot.lane.b32.xlu0 %v7938, 16
      %v7959 = vpop.permute.xlu0 %7958
      %v7960 = vsel %vm597, %v7957, %v7959
      %v7963 = vsel %vm597, 0.0, %v7957
      %s7964 = scalar_lea.vmem %s14, 4
      %v7965 = vld [vmem:[%s7964] sm:$0xf]
      %v7967 = vsel %vm1183, %v7965, 0
      %7969 = vmatpush.msra.mxu0 0.0
      %7970 = vmatpush.msra.mxu0 0.0
      %7971 = vmatpush.msra.mxu0 0.0
      %7972 = vmatpush.msra.mxu0 0.0
      %7973 = vmatpush.msra.mxu0 0.0
      %7974 = vmatpush.msra.mxu0 0.0
      %7975 = vmatpush.msra.mxu0 0.0
      %7976 = vmatpush.msra.mxu0 0.0
      %7977 = vmatpush.msra.mxu0 0.0
      %7978 = vmatpush.msra.mxu0 0.0
      %7979 = vmatpush.msra.mxu0 0.0
      %7980 = vmatpush.msra.mxu0 0.0
      %7981 = vmatpush.msra.mxu0 0.0
      %7982 = vmatpush.msra.mxu0 0.0
      %7983 = vmatpush.msra.mxu0 0.0
      %7984 = vmatpush.msra.mxu0 %v7963
      %7985 = vmatmul.f32.gmra.mxu0 %v7967
      %v7986 = vpop.f32.mrf.mxu0
      %v7987 = vadd.f32 0.0, %v7986
      %7988 = vdwg.mxu0
      %7989 = vmatpush.msra.mxu0 0.0
      %7990 = vmatpush.msra.mxu0 0.0
      %7991 = vmatpush.msra.mxu0 0.0
      %7992 = vmatpush.msra.mxu0 0.0
      %7993 = vmatpush.msra.mxu0 0.0
      %7994 = vmatpush.msra.mxu0 0.0
      %7995 = vmatpush.msra.mxu0 0.0
      %7996 = vmatpush.msra.mxu0 0.0
      %7997 = vmatpush.msra.mxu0 0.0
      %7998 = vmatpush.msra.mxu0 0.0
      %7999 = vmatpush.msra.mxu0 0.0
      %8000 = vmatpush.msra.mxu0 0.0
      %8001 = vmatpush.msra.mxu0 0.0
      %8002 = vmatpush.msra.mxu0 0.0
      %8003 = vmatpush.msra.mxu0 0.0
      %8004 = vmatpush.msra.mxu0 %v7960
      %8005 = vmatmul.f32.gmra.mxu0 %v7967
      %v8006 = vpop.f32.mrf.mxu0
      %v8007 = vadd.f32 0.0, %v8006
      %8008 = vdwg.mxu0
      %v8010 = vsel %vm1183, %v7953, 0
      %8012 = vmatpush.msra.mxu0 0.0
      %8013 = vmatpush.msra.mxu0 0.0
      %8014 = vmatpush.msra.mxu0 0.0
      %8015 = vmatpush.msra.mxu0 0.0
      %8016 = vmatpush.msra.mxu0 0.0
      %8017 = vmatpush.msra.mxu0 0.0
      %8018 = vmatpush.msra.mxu0 0.0
      %8019 = vmatpush.msra.mxu0 0.0
      %8020 = vmatpush.msra.mxu0 0.0
      %8021 = vmatpush.msra.mxu0 0.0
      %8022 = vmatpush.msra.mxu0 0.0
      %8023 = vmatpush.msra.mxu0 0.0
      %8024 = vmatpush.msra.mxu0 0.0
      %8025 = vmatpush.msra.mxu0 0.0
      %8026 = vmatpush.msra.mxu0 0.0
      %8027 = vmatpush.msra.mxu0 %v7952
      %8028 = vmatmul.f32.gmra.mxu0 %v8010
      %v8029 = vpop.f32.mrf.mxu0
      %v8030 = vadd.f32 %v7987, %v8029
      %8031 = vdwg.mxu0
      %8032 = vmatpush.msra.mxu0 0.0
      %8033 = vmatpush.msra.mxu0 0.0
      %8034 = vmatpush.msra.mxu0 0.0
      %8035 = vmatpush.msra.mxu0 0.0
      %8036 = vmatpush.msra.mxu0 0.0
      %8037 = vmatpush.msra.mxu0 0.0
      %8038 = vmatpush.msra.mxu0 0.0
      %8039 = vmatpush.msra.mxu0 0.0
      %8040 = vmatpush.msra.mxu0 0.0
      %8041 = vmatpush.msra.mxu0 0.0
      %8042 = vmatpush.msra.mxu0 0.0
      %8043 = vmatpush.msra.mxu0 0.0
      %8044 = vmatpush.msra.mxu0 0.0
      %8045 = vmatpush.msra.mxu0 0.0
      %8046 = vmatpush.msra.mxu0 0.0
      %8047 = vmatpush.msra.mxu0 %v7949
      %8048 = vmatmul.f32.gmra.mxu0 %v8010
      %v8049 = vpop.f32.mrf.mxu0
      %v8050 = vadd.f32 %v8007, %v8049
      %8051 = vdwg.mxu0
      %8054 = vrot.lane.b32.xlu0 %v7941, 15
      %v8055 = vpop.permute.xlu0 %8054
      %8056 = vrot.lane.b32.xlu0 %v7942, 15
      %v8057 = vpop.permute.xlu0 %8056
      %v8058 = vsel %vm708, %v8055, %v8057
      %v8061 = vsel %vm708, 0.0, %v8055
      %s8062 = scalar_lea.vmem %s14, 8
      %v8063 = vld [vmem:[%s8062] sm:$0xf]
      %v8065 = vsel %vm1183, %v8063, 0
      %8067 = vmatpush.msra.mxu0 0.0
      %8068 = vmatpush.msra.mxu0 0.0
      %8069 = vmatpush.msra.mxu0 0.0
      %8070 = vmatpush.msra.mxu0 0.0
      %8071 = vmatpush.msra.mxu0 0.0
      %8072 = vmatpush.msra.mxu0 0.0
      %8073 = vmatpush.msra.mxu0 0.0
      %8074 = vmatpush.msra.mxu0 0.0
      %8075 = vmatpush.msra.mxu0 0.0
      %8076 = vmatpush.msra.mxu0 0.0
      %8077 = vmatpush.msra.mxu0 0.0
      %8078 = vmatpush.msra.mxu0 0.0
      %8079 = vmatpush.msra.mxu0 0.0
      %8080 = vmatpush.msra.mxu0 0.0
      %8081 = vmatpush.msra.mxu0 0.0
      %8082 = vmatpush.msra.mxu0 %v8061
      %8083 = vmatmul.f32.gmra.mxu0 %v8065
      %v8084 = vpop.f32.mrf.mxu0
      %v8085 = vadd.f32 0.0, %v8084
      %8086 = vdwg.mxu0
      %8087 = vmatpush.msra.mxu0 0.0
      %8088 = vmatpush.msra.mxu0 0.0
      %8089 = vmatpush.msra.mxu0 0.0
      %8090 = vmatpush.msra.mxu0 0.0
      %8091 = vmatpush.msra.mxu0 0.0
      %8092 = vmatpush.msra.mxu0 0.0
      %8093 = vmatpush.msra.mxu0 0.0
      %8094 = vmatpush.msra.mxu0 0.0
      %8095 = vmatpush.msra.mxu0 0.0
      %8096 = vmatpush.msra.mxu0 0.0
      %8097 = vmatpush.msra.mxu0 0.0
      %8098 = vmatpush.msra.mxu0 0.0
      %8099 = vmatpush.msra.mxu0 0.0
      %8100 = vmatpush.msra.mxu0 0.0
      %8101 = vmatpush.msra.mxu0 0.0
      %8102 = vmatpush.msra.mxu0 %v8058
      %8103 = vmatmul.f32.gmra.mxu0 %v8065
      %v8104 = vpop.f32.mrf.mxu0
      %v8105 = vadd.f32 0.0, %v8104
      %8106 = vdwg.mxu0
      %v8107 = vadd.f32 %v8030, %v8085
      %v8108 = vadd.f32 %v8050, %v8105
      %8109 = vrot.lane.b32.xlu0 %v7939, 1
      %v8110 = vpop.permute.xlu0 %8109
      %8111 = vrot.lane.b32.xlu0 %v7940, 1
      %v8112 = vpop.permute.xlu0 %8111
      %v8113 = vsel %vm771, %v8110, %v8112
      %v8116 = vsel %vm771, 0.0, %v8110
      %s8117 = scalar_lea.vmem %s14, 12
      %v8118 = vld [vmem:[%s8117] sm:$0xf]
      %v8120 = vsel %vm1183, %v8118, 0
      %8122 = vmatpush.msra.mxu0 0.0
      %8123 = vmatpush.msra.mxu0 0.0
      %8124 = vmatpush.msra.mxu0 0.0
      %8125 = vmatpush.msra.mxu0 0.0
      %8126 = vmatpush.msra.mxu0 0.0
      %8127 = vmatpush.msra.mxu0 0.0
      %8128 = vmatpush.msra.mxu0 0.0
      %8129 = vmatpush.msra.mxu0 0.0
      %8130 = vmatpush.msra.mxu0 0.0
      %8131 = vmatpush.msra.mxu0 0.0
      %8132 = vmatpush.msra.mxu0 0.0
      %8133 = vmatpush.msra.mxu0 0.0
      %8134 = vmatpush.msra.mxu0 0.0
      %8135 = vmatpush.msra.mxu0 0.0
      %8136 = vmatpush.msra.mxu0 0.0
      %8137 = vmatpush.msra.mxu0 %v8116
      %8138 = vmatmul.f32.gmra.mxu0 %v8120
      %v8139 = vpop.f32.mrf.mxu0
      %v8140 = vadd.f32 0.0, %v8139
      %8141 = vdwg.mxu0
      %8142 = vmatpush.msra.mxu0 0.0
      %8143 = vmatpush.msra.mxu0 0.0
      %8144 = vmatpush.msra.mxu0 0.0
      %8145 = vmatpush.msra.mxu0 0.0
      %8146 = vmatpush.msra.mxu0 0.0
      %8147 = vmatpush.msra.mxu0 0.0
      %8148 = vmatpush.msra.mxu0 0.0
      %8149 = vmatpush.msra.mxu0 0.0
      %8150 = vmatpush.msra.mxu0 0.0
      %8151 = vmatpush.msra.mxu0 0.0
      %8152 = vmatpush.msra.mxu0 0.0
      %8153 = vmatpush.msra.mxu0 0.0
      %8154 = vmatpush.msra.mxu0 0.0
      %8155 = vmatpush.msra.mxu0 0.0
      %8156 = vmatpush.msra.mxu0 0.0
      %8157 = vmatpush.msra.mxu0 %v8113
      %8158 = vmatmul.f32.gmra.mxu0 %v8120
      %v8159 = vpop.f32.mrf.mxu0
      %v8160 = vadd.f32 0.0, %v8159
      %8161 = vdwg.mxu0
      %v8162 = vadd.f32 %v8107, %v8140
      %v8163 = vadd.f32 %v8108, %v8160
      %s8164 = scalar_lea.vmem %s14, 16
      %v8165 = vld [vmem:[%s8164] sm:$0xf]
      %v8167 = vsel %vm1183, %v8165, 0
      %8169 = vmatpush.msra.mxu0 0.0
      %8170 = vmatpush.msra.mxu0 0.0
      %8171 = vmatpush.msra.mxu0 0.0
      %8172 = vmatpush.msra.mxu0 0.0
      %8173 = vmatpush.msra.mxu0 0.0
      %8174 = vmatpush.msra.mxu0 0.0
      %8175 = vmatpush.msra.mxu0 0.0
      %8176 = vmatpush.msra.mxu0 0.0
      %8177 = vmatpush.msra.mxu0 0.0
      %8178 = vmatpush.msra.mxu0 0.0
      %8179 = vmatpush.msra.mxu0 0.0
      %8180 = vmatpush.msra.mxu0 0.0
      %8181 = vmatpush.msra.mxu0 0.0
      %8182 = vmatpush.msra.mxu0 0.0
      %8183 = vmatpush.msra.mxu0 0.0
      %8184 = vmatpush.msra.mxu0 %v7937
      %8185 = vmatmul.f32.gmra.mxu0 %v8167
      %v8186 = vpop.f32.mrf.mxu0
      %v8187 = vadd.f32 0.0, %v8186
      %8188 = vdwg.mxu0
      %8189 = vmatpush.msra.mxu0 0.0
      %8190 = vmatpush.msra.mxu0 0.0
      %8191 = vmatpush.msra.mxu0 0.0
      %8192 = vmatpush.msra.mxu0 0.0
      %8193 = vmatpush.msra.mxu0 0.0
      %8194 = vmatpush.msra.mxu0 0.0
      %8195 = vmatpush.msra.mxu0 0.0
      %8196 = vmatpush.msra.mxu0 0.0
      %8197 = vmatpush.msra.mxu0 0.0
      %8198 = vmatpush.msra.mxu0 0.0
      %8199 = vmatpush.msra.mxu0 0.0
      %8200 = vmatpush.msra.mxu0 0.0
      %8201 = vmatpush.msra.mxu0 0.0
      %8202 = vmatpush.msra.mxu0 0.0
      %8203 = vmatpush.msra.mxu0 0.0
      %8204 = vmatpush.msra.mxu0 %v7938
      %8205 = vmatmul.f32.gmra.mxu0 %v8167
      %v8206 = vpop.f32.mrf.mxu0
      %v8207 = vadd.f32 0.0, %v8206
      %8208 = vdwg.mxu0
      %v8209 = vadd.f32 %v8162, %v8187
      %v8210 = vadd.f32 %v8163, %v8207
      %8211 = vrot.lane.b32.xlu0 %v7941, 127
      %v8212 = vpop.permute.xlu0 %8211
      %8213 = vrot.lane.b32.xlu0 %v7942, 127
      %v8214 = vpop.permute.xlu0 %8213
      %v8215 = vsel %vm888, %v8212, %v8214
      %v8218 = vsel %vm888, %v8214, 0.0
      %s8219 = scalar_lea.vmem %s14, 20
      %v8220 = vld [vmem:[%s8219] sm:$0xf]
      %v8222 = vsel %vm1183, %v8220, 0
      %8224 = vmatpush.msra.mxu0 0.0
      %8225 = vmatpush.msra.mxu0 0.0
      %8226 = vmatpush.msra.mxu0 0.0
      %8227 = vmatpush.msra.mxu0 0.0
      %8228 = vmatpush.msra.mxu0 0.0
      %8229 = vmatpush.msra.mxu0 0.0
      %8230 = vmatpush.msra.mxu0 0.0
      %8231 = vmatpush.msra.mxu0 0.0
      %8232 = vmatpush.msra.mxu0 0.0
      %8233 = vmatpush.msra.mxu0 0.0
      %8234 = vmatpush.msra.mxu0 0.0
      %8235 = vmatpush.msra.mxu0 0.0
      %8236 = vmatpush.msra.mxu0 0.0
      %8237 = vmatpush.msra.mxu0 0.0
      %8238 = vmatpush.msra.mxu0 0.0
      %8239 = vmatpush.msra.mxu0 %v8215
      %8240 = vmatmul.f32.gmra.mxu0 %v8222
      %v8241 = vpop.f32.mrf.mxu0
      %v8242 = vadd.f32 0.0, %v8241
      %8243 = vdwg.mxu0
      %8244 = vmatpush.msra.mxu0 0.0
      %8245 = vmatpush.msra.mxu0 0.0
      %8246 = vmatpush.msra.mxu0 0.0
      %8247 = vmatpush.msra.mxu0 0.0
      %8248 = vmatpush.msra.mxu0 0.0
      %8249 = vmatpush.msra.mxu0 0.0
      %8250 = vmatpush.msra.mxu0 0.0
      %8251 = vmatpush.msra.mxu0 0.0
      %8252 = vmatpush.msra.mxu0 0.0
      %8253 = vmatpush.msra.mxu0 0.0
      %8254 = vmatpush.msra.mxu0 0.0
      %8255 = vmatpush.msra.mxu0 0.0
      %8256 = vmatpush.msra.mxu0 0.0
      %8257 = vmatpush.msra.mxu0 0.0
      %8258 = vmatpush.msra.mxu0 0.0
      %8259 = vmatpush.msra.mxu0 %v8218
      %8260 = vmatmul.f32.gmra.mxu0 %v8222
      %v8261 = vpop.f32.mrf.mxu0
      %v8262 = vadd.f32 0.0, %v8261
      %8263 = vdwg.mxu0
      %v8264 = vadd.f32 %v8209, %v8242
      %v8265 = vadd.f32 %v8210, %v8262
      %8266 = vrot.lane.b32.xlu0 %v7939, 113
      %v8267 = vpop.permute.xlu0 %8266
      %8268 = vrot.lane.b32.xlu0 %v7940, 113
      %v8269 = vpop.permute.xlu0 %8268
      %v8270 = vsel %vm951, %v8267, %v8269
      %v8273 = vsel %vm951, %v8269, 0.0
      %s8274 = scalar_lea.vmem %s14, 24
      %v8275 = vld [vmem:[%s8274] sm:$0xf]
      %v8277 = vsel %vm1183, %v8275, 0
      %8279 = vmatpush.msra.mxu0 0.0
      %8280 = vmatpush.msra.mxu0 0.0
      %8281 = vmatpush.msra.mxu0 0.0
      %8282 = vmatpush.msra.mxu0 0.0
      %8283 = vmatpush.msra.mxu0 0.0
      %8284 = vmatpush.msra.mxu0 0.0
      %8285 = vmatpush.msra.mxu0 0.0
      %8286 = vmatpush.msra.mxu0 0.0
      %8287 = vmatpush.msra.mxu0 0.0
      %8288 = vmatpush.msra.mxu0 0.0
      %8289 = vmatpush.msra.mxu0 0.0
      %8290 = vmatpush.msra.mxu0 0.0
      %8291 = vmatpush.msra.mxu0 0.0
      %8292 = vmatpush.msra.mxu0 0.0
      %8293 = vmatpush.msra.mxu0 0.0
      %8294 = vmatpush.msra.mxu0 %v8270
      %8295 = vmatmul.f32.gmra.mxu0 %v8277
      %v8296 = vpop.f32.mrf.mxu0
      %v8297 = vadd.f32 0.0, %v8296
      %8298 = vdwg.mxu0
      %8299 = vmatpush.msra.mxu0 0.0
      %8300 = vmatpush.msra.mxu0 0.0
      %8301 = vmatpush.msra.mxu0 0.0
      %8302 = vmatpush.msra.mxu0 0.0
      %8303 = vmatpush.msra.mxu0 0.0
      %8304 = vmatpush.msra.mxu0 0.0
      %8305 = vmatpush.msra.mxu0 0.0
      %8306 = vmatpush.msra.mxu0 0.0
      %8307 = vmatpush.msra.mxu0 0.0
      %8308 = vmatpush.msra.mxu0 0.0
      %8309 = vmatpush.msra.mxu0 0.0
      %8310 = vmatpush.msra.mxu0 0.0
      %8311 = vmatpush.msra.mxu0 0.0
      %8312 = vmatpush.msra.mxu0 0.0
      %8313 = vmatpush.msra.mxu0 0.0
      %8314 = vmatpush.msra.mxu0 %v8273
      %8315 = vmatmul.f32.gmra.mxu0 %v8277
      %v8316 = vpop.f32.mrf.mxu0
      %v8317 = vadd.f32 0.0, %v8316
      %8318 = vdwg.mxu0
      %v8319 = vadd.f32 %v8264, %v8297
      %v8320 = vadd.f32 %v8265, %v8317
      %8321 = vrot.lane.b32.xlu0 %v7937, 112
      %v8322 = vpop.permute.xlu0 %8321
      %8323 = vrot.lane.b32.xlu0 %v7938, 112
      %v8324 = vpop.permute.xlu0 %8323
      %v8325 = vsel %vm1014, %v8322, %v8324
      %v8328 = vsel %vm1014, %v8324, 0.0
      %s8329 = scalar_lea.vmem %s14, 28
      %v8330 = vld [vmem:[%s8329] sm:$0xf]
      %v8332 = vsel %vm1183, %v8330, 0
      %8334 = vmatpush.msra.mxu0 0.0
      %8335 = vmatpush.msra.mxu0 0.0
      %8336 = vmatpush.msra.mxu0 0.0
      %8337 = vmatpush.msra.mxu0 0.0
      %8338 = vmatpush.msra.mxu0 0.0
      %8339 = vmatpush.msra.mxu0 0.0
      %8340 = vmatpush.msra.mxu0 0.0
      %8341 = vmatpush.msra.mxu0 0.0
      %8342 = vmatpush.msra.mxu0 0.0
      %8343 = vmatpush.msra.mxu0 0.0
      %8344 = vmatpush.msra.mxu0 0.0
      %8345 = vmatpush.msra.mxu0 0.0
      %8346 = vmatpush.msra.mxu0 0.0
      %8347 = vmatpush.msra.mxu0 0.0
      %8348 = vmatpush.msra.mxu0 0.0
      %8349 = vmatpush.msra.mxu0 %v8325
      %8350 = vmatmul.f32.gmra.mxu0 %v8332
      %v8351 = vpop.f32.mrf.mxu0
      %v8352 = vadd.f32 0.0, %v8351
      %8353 = vdwg.mxu0
      %8354 = vmatpush.msra.mxu0 0.0
      %8355 = vmatpush.msra.mxu0 0.0
      %8356 = vmatpush.msra.mxu0 0.0
      %8357 = vmatpush.msra.mxu0 0.0
      %8358 = vmatpush.msra.mxu0 0.0
      %8359 = vmatpush.msra.mxu0 0.0
      %8360 = vmatpush.msra.mxu0 0.0
      %8361 = vmatpush.msra.mxu0 0.0
      %8362 = vmatpush.msra.mxu0 0.0
      %8363 = vmatpush.msra.mxu0 0.0
      %8364 = vmatpush.msra.mxu0 0.0
      %8365 = vmatpush.msra.mxu0 0.0
      %8366 = vmatpush.msra.mxu0 0.0
      %8367 = vmatpush.msra.mxu0 0.0
      %8368 = vmatpush.msra.mxu0 0.0
      %8369 = vmatpush.msra.mxu0 %v8328
      %8370 = vmatmul.f32.gmra.mxu0 %v8332
      %v8371 = vpop.f32.mrf.mxu0
      %v8372 = vadd.f32 0.0, %v8371
      %8373 = vdwg.mxu0
      %v8374 = vadd.f32 %v8319, %v8352
      %v8375 = vadd.f32 %v8320, %v8372
      %8376 = vrot.lane.b32.xlu0 %v7941, 111
      %v8377 = vpop.permute.xlu0 %8376
      %8378 = vrot.lane.b32.xlu0 %v7942, 111
      %v8379 = vpop.permute.xlu0 %8378
      %v8380 = vsel %vm1077, %v8377, %v8379
      %v8383 = vsel %vm1077, %v8379, 0.0
      %s8384 = scalar_lea.vmem %s14, 32
      %v8385 = vld [vmem:[%s8384] sm:$0xf]
      %v8387 = vsel %vm1183, %v8385, 0
      %8389 = vmatpush.msra.mxu0 0.0
      %8390 = vmatpush.msra.mxu0 0.0
      %8391 = vmatpush.msra.mxu0 0.0
      %8392 = vmatpush.msra.mxu0 0.0
      %8393 = vmatpush.msra.mxu0 0.0
      %8394 = vmatpush.msra.mxu0 0.0
      %8395 = vmatpush.msra.mxu0 0.0
      %8396 = vmatpush.msra.mxu0 0.0
      %8397 = vmatpush.msra.mxu0 0.0
      %8398 = vmatpush.msra.mxu0 0.0
      %8399 = vmatpush.msra.mxu0 0.0
      %8400 = vmatpush.msra.mxu0 0.0
      %8401 = vmatpush.msra.mxu0 0.0
      %8402 = vmatpush.msra.mxu0 0.0
      %8403 = vmatpush.msra.mxu0 0.0
      %8404 = vmatpush.msra.mxu0 %v8380
      %8405 = vmatmul.f32.gmra.mxu0 %v8387
      %v8406 = vpop.f32.mrf.mxu0
      %v8407 = vadd.f32 0.0, %v8406
      %8408 = vdwg.mxu0
      %8409 = vmatpush.msra.mxu0 0.0
      %8410 = vmatpush.msra.mxu0 0.0
      %8411 = vmatpush.msra.mxu0 0.0
      %8412 = vmatpush.msra.mxu0 0.0
      %8413 = vmatpush.msra.mxu0 0.0
      %8414 = vmatpush.msra.mxu0 0.0
      %8415 = vmatpush.msra.mxu0 0.0
      %8416 = vmatpush.msra.mxu0 0.0
      %8417 = vmatpush.msra.mxu0 0.0
      %8418 = vmatpush.msra.mxu0 0.0
      %8419 = vmatpush.msra.mxu0 0.0
      %8420 = vmatpush.msra.mxu0 0.0
      %8421 = vmatpush.msra.mxu0 0.0
      %8422 = vmatpush.msra.mxu0 0.0
      %8423 = vmatpush.msra.mxu0 0.0
      %8424 = vmatpush.msra.mxu0 %v8383
      %8425 = vmatmul.f32.gmra.mxu0 %v8387
      %v8426 = vpop.f32.mrf.mxu0
      %v8427 = vadd.f32 0.0, %v8426
      %8428 = vdwg.mxu0
      %v8429 = vadd.f32 %v8374, %v8407
      %v8430 = vadd.f32 %v8375, %v8427
      %v8433 = vrot.slane %v8430, 4
      %v8434 = vsel %vm563, %v8429, %v8433
      %v8436 = vadd.f32 %v555, %v8434
      %8437 = vst [vmem:[%s549] sm:$0xff] %v8436
      %8438 = vst [vmem:[%s554] sm:$0xff] %v4526
      %p8439 = scmp.lt.s32.totalorder %s28, 1
      %s8440 = scalar_select %p8439, %s28, 1
      %s8441 = smul.addr %s8440, 2
      %s8442 = smul.addr %s8441, 4
      %s8443 = scalar_lea.vmem %s15, %s8442
      %p8444 = scmp.lt.s32.totalorder %s28, 1
      %s8445 = scalar_select %p8444, %s28, 1
      %s8446 = smul.addr %s8445, 2
      %s8447 = smul.addr %s8446, 4
      %s8448 = scalar_lea.vmem %s16, %s8447
      // Predicated region
      $region81: #{lsr_forward.1} parent=79 // pred_check
        %p8449 = pneg %p371
      $region82: #{lsr_forward.1} parent=79 // pred_check_branch
        %8451 = sbr.rel (%p8449) target = $region84
      $region83: #{lsr_forward.1} parent=79 // pred_region
        _
      $region84: #{lsr_forward.1} parent=79 // pred_fallthru
        _
      // Predicated region
      $region85: #{lsr_forward.1} parent=79 // pred_check
        %p8452 = pneg %p397
      $region86: #{lsr_forward.1} parent=79 // pred_check_branch
        %8454 = sbr.rel (%p8452) target = $region88
      $region87: #{lsr_forward.1} parent=79 // pred_region
        _
      $region88: #{lsr_forward.1} parent=79 // pred_fallthru
        _
    $region80: #{lsr_forward.1} parent=5 // pred_fallthru
      _
    %p8455 = scmp.le.s32.totalorder 2, %s23
    // Predicated region
    $region89: #{lsr_forward.1} parent=5 // pred_check
      %p8456 = pneg %p8455
    $region90: #{lsr_forward.1} parent=5 // pred_check_branch
      %8458 = sbr.rel (%p8456) target = $region92
    $region91: #{lsr_forward.1} parent=5 // pred_region
      %s8459 = ssub.s32 %s23, 2
      // Predicated region
      $region93: #{lsr_forward.1} parent=91 // pred_check
        %p8460 = pneg %p377
      $region94: #{lsr_forward.1} parent=91 // pred_check_branch
        %8462 = sbr.rel (%p8460) target = $region96
      $region95: #{lsr_forward.1} parent=91 // pred_region
        %p8463 = scmp.lt.s32.totalorder %s29, 1
        %s8464 = scalar_select %p8463, %s29, 1
        %s8465 = smul.addr %s8464, 2
        %s8466 = smul.addr %s8465, 4
        %s8467 = scalar_lea.vmem %s15, %s8466
      $region96: #{lsr_forward.1} parent=91 // pred_fallthru
        _
      // Predicated region
      $region97: #{lsr_forward.1} parent=91 // pred_check
        %p8468 = pneg %p403
      $region98: #{lsr_forward.1} parent=91 // pred_check_branch
        %8470 = sbr.rel (%p8468) target = $region100
      $region99: #{lsr_forward.1} parent=91 // pred_region
        %p8471 = scmp.lt.s32.totalorder %s29, 1
        %s8472 = scalar_select %p8471, %s29, 1
        %s8473 = smul.addr %s8472, 2
        %s8474 = smul.addr %s8473, 4
        %s8475 = scalar_lea.vmem %s16, %s8474
      $region100: #{lsr_forward.1} parent=91 // pred_fallthru
        _
    $region92: #{lsr_forward.1} parent=5 // pred_fallthru
      _
  $region6: #{lsr_forward.1} parent=0 // loop_footer
    %s27 = sadd.s32 1, %s23
  $region7: #{lsr_forward.1} parent=0 // loop_footer_branch
    %22 = sbr.rel target = $region3
  $region8: #{lsr_forward.1} parent=0 // loop_exit
    _

</llo_original>
